<compile_context>
chip_gen: v6e
topology: v6e:2x2x1
jax: 0.10.0
libtpu: 0.0.40
codegen_flags: <defaults>
</compile_context>

<pallas_src>
import functools

import jax
import jax.numpy as jnp
from jax.experimental import pallas as pl
from jax.experimental.pallas import tpu as pltpu

EPS = 1e-5
LANE = 128
ACC_CAP = 256            # max th*wo rows of the f32 accumulator per grid step


def _round_up(x, m):
    return (x + m - 1) // m * m


def _row_tile(out_h, out_w, batch):
    """Largest divisor th of out_h with th*out_w <= ACC_CAP.

    When batch < 2, additionally require >= 2 row tiles so both v7x
    TensorCores get work (megacore); falls back to th=1 if nothing fits.
    """
    min_tiles = 2 if batch < 2 else 1
    best = 1
    for t in range(1, out_h + 1):
        if out_h % t == 0 and t * out_w <= ACC_CAP and out_h // t >= min_tiles:
            best = t
    return best


def _ds(start, size, stride):
    return pl.ds(start, size) if stride == 1 else pl.ds(start, size, stride)


# ----------------------------------------------------------------------------
# Fused BasicBlock kernel
# ----------------------------------------------------------------------------
def _make_block_kernel(th, wo, stride, project):
    """Fused kernel: conv1+bn1+relu -> conv2+bn2 -> (+shortcut) -> relu.

    Ref layout per grid step (b, rt):
      x_ref   : (1, Hin+2, Win+2, Cin_p) bf16  spatially/channel-padded image
      w1_ref  : (3, 3*Cin_p, Cm) bf16  (BN1 scale folded; (dw,cin) packed in K)
      b1_ref  : (1, Cm) f32
      w2_ref  : (3, 3*Cm, Cm)  bf16    (BN2 scale folded)
      b2_ref  : (1, Cm) f32
      [wsc_ref: (Cin_p, Cm) bf16 (BN_sc scale folded), bsc_ref: (1, Cm) f32]
      o_ref   : (1, th, wo, Cm) bf16
      out1_ref: VMEM scratch (th+2, wo+2, Cm) bf16 — conv1 tile + 1-row halo,
                never touches HBM.
    """

    def conv3x3(src_load, w_ref, n_rows):
        # src_load(dh, dw) -> (n_rows*wo, C) bf16 tap slab.
        # 3 packed-K matmuls (K = 3*C) -> 3 accumulation passes instead of 9.
        acc = None
        for dh in range(3):
            lhs = jnp.concatenate([src_load(dh, dw) for dw in range(3)],
                                  axis=-1)
            part = jnp.dot(lhs, w_ref[dh], preferred_element_type=jnp.float32)
            acc = part if acc is None else acc + part
        return acc

    def kernel(x_ref, w1_ref, b1_ref, w2_ref, b2_ref, *rest):
        if project:
            wsc_ref, bsc_ref, o_ref, out1_ref = rest
        else:
            o_ref, out1_ref = rest
        cin_p = x_ref.shape[-1]
        cm = o_ref.shape[-1]
        rt = pl.program_id(1)
        r0 = rt * th                      # first output row of this tile

        # ---- conv1 + bn1 + relu into VMEM scratch (tile + 1-row halo) -------
        out1_ref[...] = jnp.zeros_like(out1_ref)   # zero-pad borders / halos

        def conv1_rows(row_start, n_rows, scratch_row):
            def load(dh, dw):
                xs = x_ref[0, _ds(row_start * stride + dh, n_rows, stride),
                           _ds(dw, wo, stride), :]
                return xs.reshape(n_rows * wo, cin_p)

            y = conv3x3(load, w1_ref, n_rows) + b1_ref[...]
            y = jnp.maximum(y, 0.0)
            out1_ref[pl.ds(scratch_row, n_rows), pl.ds(1, wo), :] = (
                y.reshape(n_rows, wo, cm).astype(out1_ref.dtype))

        conv1_rows(r0, th, 1)                       # main rows (always valid)

        @pl.when(rt > 0)                            # top halo row
        def _():
            conv1_rows(r0 - 1, 1, 0)

        @pl.when(rt < pl.num_programs(1) - 1)       # bottom halo row
        def _():
            conv1_rows(r0 + th, 1, th + 1)

        # ---- conv2 + bn2 + shortcut + relu ----------------------------------
        def load2(dh, dw):
            s = out1_ref[pl.ds(dh, th), pl.ds(dw, wo), :]
            return s.reshape(th * wo, cm)

        y = conv3x3(load2, w2_ref, th) + b2_ref[...]

        if project:
            # 1x1 conv (stride folded into the slice) + BN, read straight from
            # the padded input — the residual never round-trips through HBM.
            rx = x_ref[0, _ds(r0 * stride + 1, th, stride),
                       _ds(1, wo, stride), :].reshape(th * wo, cin_p)
            y = y + (jnp.dot(rx, wsc_ref[...],
                             preferred_element_type=jnp.float32) + bsc_ref[...])
        else:
            rx = x_ref[0, pl.ds(r0 + 1, th), pl.ds(1, wo), :]
            y = y + rx.reshape(th * wo, cm).astype(jnp.float32)

        y = jnp.maximum(y, 0.0)
        o_ref[0] = y.reshape(th, wo, cm).astype(o_ref.dtype)

    return kernel


def _basic_block_pallas(xp, kp, *, stride, project, ho, wo, cm):
    """xp: (B, Hin+2, Win+2, Cin_p) spatially/channel-padded bf16 NHWC."""
    B, hp, wp, cin_p = xp.shape
    th = _row_tile(ho, wo, B)
    n_rt = ho // th
    kernel = _make_block_kernel(th, wo, stride, project)

    in_specs = [
        pl.BlockSpec((1, hp, wp, cin_p), lambda b, r: (b, 0, 0, 0)),
        pl.BlockSpec((3, 3 * cin_p, cm), lambda b, r: (0, 0, 0)),
        pl.BlockSpec((1, cm), lambda b, r: (0, 0)),
        pl.BlockSpec((3, 3 * cm, cm), lambda b, r: (0, 0, 0)),
        pl.BlockSpec((1, cm), lambda b, r: (0, 0)),
    ]
    args = [xp, kp["w1"], kp["b1"], kp["w2"], kp["b2"]]
    if project:
        in_specs += [
            pl.BlockSpec((cin_p, cm), lambda b, r: (0, 0)),
            pl.BlockSpec((1, cm), lambda b, r: (0, 0)),
        ]
        args += [kp["wsc"], kp["bsc"]]

    # Cost estimate: 2*M*K*N per matmul (9-tap conv1, 9-tap conv2, 1x1 shortcut).
    mm = B * ho * wo
    flops = 2 * mm * (9 * cin_p * cm + 9 * cm * cm
                      + (cin_p * cm if project else 0))
    bytes_accessed = (sum(int(a.size) * a.dtype.itemsize for a in args)
                      + mm * cm * 2)

    # Right-size VMEM: double-buffered blocks + scratch + headroom for the
    # f32 accumulator / packed-LHS temporaries (v7x has only 64 MiB total).
    blk_bytes = (hp * wp * cin_p * 2 + 9 * cin_p * cm * 2 + 9 * cm * cm * 2
                 + th * wo * cm * 2 + 3 * cm * 4)
    if project:
        blk_bytes += cin_p * cm * 2 + cm * 4
    scratch_bytes = (th + 2) * (wo + 2) * cm * 2
    vmem_limit = int(min(48 * 1024 * 1024,
                         3 * (2 * blk_bytes + scratch_bytes) + 8 * 1024 * 1024))

    return pl.pallas_call(
        kernel,
        out_shape=jax.ShapeDtypeStruct((B, ho, wo, cm), jnp.bfloat16),
        grid=(B, n_rt),
        in_specs=in_specs,
        out_specs=pl.BlockSpec((1, th, wo, cm), lambda b, r: (b, r, 0, 0)),
        scratch_shapes=[pltpu.VMEM((th + 2, wo + 2, cm), jnp.bfloat16)],
        compiler_params=pltpu.CompilerParams(
            dimension_semantics=("parallel", "parallel"),
            vmem_limit_bytes=vmem_limit),
        cost_estimate=pl.CostEstimate(flops=flops, transcendentals=0,
                                      bytes_accessed=bytes_accessed),
    )(*args)


# ----------------------------------------------------------------------------
# Parameter preparation (done ONCE, outside the per-call forward)
# ----------------------------------------------------------------------------
def fold_bn(gamma, beta, mean, var, eps=EPS):
    scale = gamma / jnp.sqrt(var + eps)
    bias = beta - mean * scale
    return scale, bias


def prepare_params(params, in_planes, planes, stride):
    """PyTorch-layout params -> kernel-ready packed/padded arrays.

    * 3x3 OIHW weights -> (3, 3*Cin_pad, Cout_pad) bf16 with the eval-mode BN
      scale folded in and the (dw, cin) taps packed into the MXU K dimension.
    * BatchNorm reduces to a per-channel f32 bias (scale lives in the weights).
    """
    cin_p = _round_up(in_planes, LANE)
    cm = _round_up(planes, LANE)

    def prep_conv_bn(w, bn, cin, cin_pad):
        scale, bias = fold_bn(*bn)
        w = jnp.transpose(w, (2, 3, 1, 0)) * scale            # (3,3,Ci,Co)*s[Co]
        w = jnp.pad(w, ((0, 0), (0, 0), (0, cin_pad - cin), (0, cm - planes)))
        w = w.reshape(3, 3 * cin_pad, cm).astype(jnp.bfloat16)
        b = jnp.pad(bias, (0, cm - planes)).reshape(1, cm).astype(jnp.float32)
        return w, b

    kp = {}
    kp["w1"], kp["b1"] = prep_conv_bn(params["w1"], params["bn1"],
                                      in_planes, cin_p)
    kp["w2"], kp["b2"] = prep_conv_bn(params["w2"], params["bn2"], planes, cm)
    if stride != 1 or in_planes != planes:
        scale, bias = fold_bn(*params["bn_sc"])
        wsc = jnp.transpose(params["wsc"], (2, 3, 1, 0)).reshape(in_planes,
                                                                 planes)
        wsc = wsc * scale
        wsc = jnp.pad(wsc, ((0, cin_p - in_planes), (0, cm - planes)))
        kp["wsc"] = wsc.astype(jnp.bfloat16)
        kp["bsc"] = jnp.pad(bias, (0, cm - planes)).reshape(1, cm).astype(
            jnp.float32)
    return kp


# ----------------------------------------------------------------------------
# BasicBlock forward (Pallas path)
# ----------------------------------------------------------------------------
def basic_block_forward(x_nchw, kparams, *, in_planes, planes, stride=1):
    x = jnp.transpose(x_nchw, (0, 2, 3, 1))                   # NCHW -> NHWC
    B, H, W, _ = x.shape
    cin_p = _round_up(in_planes, LANE)
    cm = _round_up(planes, LANE)
    ho = (H - 1) // stride + 1
    wo = (W - 1) // stride + 1
    project = (stride != 1 or in_planes != planes)

    # Spatial pad (3x3, padding=1) + lane-dense channel pad + bf16 cast.
    xp = jnp.pad(x.astype(jnp.bfloat16),
                 ((0, 0), (1, 1), (1, 1), (0, cin_p - in_planes)))

    out = _basic_block_pallas(xp, kparams, stride=stride, project=project,
                              ho=ho, wo=wo, cm=cm)
    y = out[..., :planes].astype(jnp.float32)                 # drop channel pad
    return jnp.transpose(y, (0, 3, 1, 2))                     # NHWC -> NCHW


# ----------------------------------------------------------------------------
# Pure-JAX reference (mirrors the PyTorch forward, eval-mode BN, f32)
# ----------------------------------------------------------------------------
def reference_forward(x, params, in_planes, planes, stride=1):
    def conv(x, w, s, pad):
        return jax.lax.conv_general_dilated(
            x, w, (s, s), ((pad, pad), (pad, pad)),
            dimension_numbers=("NCHW", "OIHW", "NCHW"))

    def bn(x, p):
        g, b, m, v = p
        g, b, m, v = (a[None, :, None, None] for a in (g, b, m, v))
        return (x - m) / jnp.sqrt(v + EPS) * g + b

    out = jax.nn.relu(bn(conv(x, params["w1"], stride, 1), params["bn1"]))
    out = bn(conv(out, params["w2"], 1, 1), params["bn2"])
    if stride != 1 or in_planes != planes:
        sc = bn(conv(x, params["wsc"], stride, 0), params["bn_sc"])
    else:
        sc = x
    return jax.nn.relu(out + sc)


# ----------------------------------------------------------------------------
def init_params(key, in_planes, planes, stride):
    ks = jax.random.split(key, 12)

    def bn_params(k0, k1, k2, k3, c):
        gamma = jax.random.uniform(k0, (c,), jnp.float32, 0.5, 1.5)
        beta = jax.random.normal(k1, (c,), jnp.float32) * 0.1
        mean = jax.random.normal(k2, (c,), jnp.float32) * 0.1
        var = jax.random.uniform(k3, (c,), jnp.float32, 0.5, 1.5)
        return (gamma, beta, mean, var)

    params = {
        "w1": jax.random.normal(ks[0], (planes, in_planes, 3, 3),
                                jnp.float32) * 0.1,
        "bn1": bn_params(ks[1], ks[2], ks[3], ks[4], planes),
        "w2": jax.random.normal(ks[5], (planes, planes, 3, 3),
                                jnp.float32) * 0.1,
        "bn2": bn_params(ks[6], ks[7], ks[8], ks[9], planes),
    }
    if stride != 1 or in_planes != planes:
        params["wsc"] = jax.random.normal(ks[10], (planes, in_planes, 1, 1),
                                          jnp.float32) * 0.1
        params["bn_sc"] = bn_params(ks[11], ks[2], ks[4], ks[6], planes)
    return params


if __name__ == "__main__":
    key = jax.random.PRNGKey(0)
    configs = [
        # (B, in_planes, planes, H, W, stride)
        (2, 4, 8, 32, 32, 1),   # projection shortcut, multi row-tile (halos)
        (2, 8, 8, 16, 16, 1),   # identity shortcut, single row-tile
    ]
    for (B, in_planes, planes, H, W, stride) in configs:
        kx, kp_key, key = jax.random.split(key, 3)
        x = jax.random.normal(kx, (B, in_planes, H, W), jnp.float32)  # NCHW
        params = init_params(kp_key, in_planes, planes, stride)
        kparams = prepare_params(params, in_planes, planes, stride)

        fwd = jax.jit(functools.partial(
            basic_block_forward, in_planes=in_planes, planes=planes,
            stride=stride))
        y = jax.block_until_ready(fwd(x, kparams))

        y_ref = jax.block_until_ready(
            reference_forward(x, params, in_planes, planes, stride))

        ho = (H - 1) // stride + 1
        wo = (W - 1) // stride + 1
        assert y.shape == (B, planes, ho, wo), y.shape
        err = float(jnp.max(jnp.abs(y - y_ref)))
        # bf16 MXU operands / bf16 activations with f32 accumulation:
        # tolerance loosened vs the pure-f32 reference.
        assert jnp.allclose(y, y_ref, atol=5e-2, rtol=5e-2), err

    print("KERNEL_OK")
</pallas_src>

<mosaic_0001>
module attributes {stable_mosaic.version = 11 : i64} {
  func.func @kernel(%arg0: i32, %arg1: i32, %arg2: memref<1x34x34x128xbf16, #tpu.memory_space<vmem>>, %arg3: memref<3x384x128xbf16, #tpu.memory_space<vmem>>, %arg4: memref<1x128xf32, #tpu.memory_space<vmem>>, %arg5: memref<3x384x128xbf16, #tpu.memory_space<vmem>>, %arg6: memref<1x128xf32, #tpu.memory_space<vmem>>, %arg7: memref<128x128xbf16, #tpu.memory_space<vmem>>, %arg8: memref<1x128xf32, #tpu.memory_space<vmem>>, %arg9: memref<1x8x32x128xbf16, #tpu.memory_space<vmem>>, %arg10: memref<10x34x128xbf16, #tpu.memory_space<vmem>>) attributes {dimension_semantics = [#tpu.dimension_semantics<parallel>, #tpu.dimension_semantics<parallel>], iteration_bounds = array<i64: 2, 4>, scalar_prefetch = 0 : i64, scratch_operands = 1 : i64, tpu.core_type = #tpu.core_type<tc>, window_params = [{transform_indices = @transform_0, window_bounds = array<i64: 1, 34, 34, 128>}, {pipeline_mode = #tpu.pipeline_mode<synchronous>, transform_indices = @transform_1, window_bounds = array<i64: 3, 384, 128>}, {pipeline_mode = #tpu.pipeline_mode<synchronous>, transform_indices = @transform_2, window_bounds = array<i64: 1, 128>}, {pipeline_mode = #tpu.pipeline_mode<synchronous>, transform_indices = @transform_3, window_bounds = array<i64: 3, 384, 128>}, {pipeline_mode = #tpu.pipeline_mode<synchronous>, transform_indices = @transform_4, window_bounds = array<i64: 1, 128>}, {pipeline_mode = #tpu.pipeline_mode<synchronous>, transform_indices = @transform_5, window_bounds = array<i64: 128, 128>}, {pipeline_mode = #tpu.pipeline_mode<synchronous>, transform_indices = @transform_6, window_bounds = array<i64: 1, 128>}, {transform_indices = @transform_7, window_bounds = array<i64: 1, 8, 32, 128>}]} {
    %c8_i32 = arith.constant 8 : i32
    %0 = arith.muli %arg1, %c8_i32 : i32
    %cst = arith.constant 0.000000e+00 : bf16
    %1 = vector.broadcast %cst : bf16 to vector<10x34x128xbf16>
    %c0 = arith.constant 0 : index
    %c0_0 = arith.constant 0 : index
    %c0_1 = arith.constant 0 : index
    %2 = vector.load %arg10[%c0, %c0_0, %c0_1] : memref<10x34x128xbf16, #tpu.memory_space<vmem>>, vector<10x34x128xbf16>
    tpu.vector_store %arg10[%c0, %c0_0, %c0_1], %1 {strides = array<i32>} : memref<10x34x128xbf16, #tpu.memory_space<vmem>>, vector<10x34x128xbf16>,
    %c1_i32 = arith.constant 1 : i32
    %3 = arith.muli %0, %c1_i32 : i32
    %c0_i32 = arith.constant 0 : i32
    %4 = arith.addi %3, %c0_i32 : i32
    %c0_2 = arith.constant 0 : index
    %5 = arith.index_cast %4 : i32 to index
    %c0_3 = arith.constant 0 : index
    %c0_4 = arith.constant 0 : index
    %6 = vector.load %arg2[%c0_2, %5, %c0_3, %c0_4] : memref<1x34x34x128xbf16, #tpu.memory_space<vmem>>, vector<1x8x32x128xbf16>
    %7 = vector.shape_cast %6 : vector<1x8x32x128xbf16> to vector<8x32x128xbf16>
    %8 = vector.shape_cast %7 : vector<8x32x128xbf16> to vector<256x128xbf16>
    %c1_i32_5 = arith.constant 1 : i32
    %9 = arith.muli %0, %c1_i32_5 : i32
    %c0_i32_6 = arith.constant 0 : i32
    %10 = arith.addi %9, %c0_i32_6 : i32
    %c0_7 = arith.constant 0 : index
    %11 = arith.index_cast %10 : i32 to index
    %c1 = arith.constant 1 : index
    %c0_8 = arith.constant 0 : index
    %12 = vector.load %arg2[%c0_7, %11, %c1, %c0_8] : memref<1x34x34x128xbf16, #tpu.memory_space<vmem>>, vector<1x8x32x128xbf16>
    %13 = vector.shape_cast %12 : vector<1x8x32x128xbf16> to vector<8x32x128xbf16>
    %14 = vector.shape_cast %13 : vector<8x32x128xbf16> to vector<256x128xbf16>
    %c1_i32_9 = arith.constant 1 : i32
    %15 = arith.muli %0, %c1_i32_9 : i32
    %c0_i32_10 = arith.constant 0 : i32
    %16 = arith.addi %15, %c0_i32_10 : i32
    %c0_11 = arith.constant 0 : index
    %17 = arith.index_cast %16 : i32 to index
    %c2 = arith.constant 2 : index
    %c0_12 = arith.constant 0 : index
    %18 = vector.load %arg2[%c0_11, %17, %c2, %c0_12] : memref<1x34x34x128xbf16, #tpu.memory_space<vmem>>, vector<1x8x32x128xbf16>
    %19 = vector.shape_cast %18 : vector<1x8x32x128xbf16> to vector<8x32x128xbf16>
    %20 = vector.shape_cast %19 : vector<8x32x128xbf16> to vector<256x128xbf16>
    %21 = tpu.concatenate %8, %14, %20 in 1 : vector<256x128xbf16>, vector<256x128xbf16>, vector<256x128xbf16> -> vector<256x384xbf16>
    %c0_13 = arith.constant 0 : index
    %c0_14 = arith.constant 0 : index
    %c0_15 = arith.constant 0 : index
    %22 = vector.load %arg3[%c0_13, %c0_14, %c0_15] : memref<3x384x128xbf16, #tpu.memory_space<vmem>>, vector<1x384x128xbf16>
    %23 = vector.shape_cast %22 : vector<1x384x128xbf16> to vector<384x128xbf16>
    %cst_16 = arith.constant dense<0.000000e+00> : vector<256x128xf32>
    %24 = tpu.matmul %21, %23, %cst_16 {dimension_numbers = #tpu.dot_dimension_numbers<[1], [0], [0], [1], [0, 0, 1, 1], [], []>} : vector<256x384xbf16>, vector<384x128xbf16>, vector<256x128xf32> -> vector<256x128xf32>
    %c1_i32_17 = arith.constant 1 : i32
    %25 = arith.muli %0, %c1_i32_17 : i32
    %c1_i32_18 = arith.constant 1 : i32
    %26 = arith.addi %25, %c1_i32_18 : i32
    %c0_19 = arith.constant 0 : index
    %27 = arith.index_cast %26 : i32 to index
    %c0_20 = arith.constant 0 : index
    %c0_21 = arith.constant 0 : index
    %28 = vector.load %arg2[%c0_19, %27, %c0_20, %c0_21] : memref<1x34x34x128xbf16, #tpu.memory_space<vmem>>, vector<1x8x32x128xbf16>
    %29 = vector.shape_cast %28 : vector<1x8x32x128xbf16> to vector<8x32x128xbf16>
    %30 = vector.shape_cast %29 : vector<8x32x128xbf16> to vector<256x128xbf16>
    %c1_i32_22 = arith.constant 1 : i32
    %31 = arith.muli %0, %c1_i32_22 : i32
    %c1_i32_23 = arith.constant 1 : i32
    %32 = arith.addi %31, %c1_i32_23 : i32
    %c0_24 = arith.constant 0 : index
    %33 = arith.index_cast %32 : i32 to index
    %c1_25 = arith.constant 1 : index
    %c0_26 = arith.constant 0 : index
    %34 = vector.load %arg2[%c0_24, %33, %c1_25, %c0_26] : memref<1x34x34x128xbf16, #tpu.memory_space<vmem>>, vector<1x8x32x128xbf16>
    %35 = vector.shape_cast %34 : vector<1x8x32x128xbf16> to vector<8x32x128xbf16>
    %36 = vector.shape_cast %35 : vector<8x32x128xbf16> to vector<256x128xbf16>
    %c1_i32_27 = arith.constant 1 : i32
    %37 = arith.muli %0, %c1_i32_27 : i32
    %c1_i32_28 = arith.constant 1 : i32
    %38 = arith.addi %37, %c1_i32_28 : i32
    %c0_29 = arith.constant 0 : index
    %39 = arith.index_cast %38 : i32 to index
    %c2_30 = arith.constant 2 : index
    %c0_31 = arith.constant 0 : index
    %40 = vector.load %arg2[%c0_29, %39, %c2_30, %c0_31] : memref<1x34x34x128xbf16, #tpu.memory_space<vmem>>, vector<1x8x32x128xbf16>
    %41 = vector.shape_cast %40 : vector<1x8x32x128xbf16> to vector<8x32x128xbf16>
    %42 = vector.shape_cast %41 : vector<8x32x128xbf16> to vector<256x128xbf16>
    %43 = tpu.concatenate %30, %36, %42 in 1 : vector<256x128xbf16>, vector<256x128xbf16>, vector<256x128xbf16> -> vector<256x384xbf16>
    %c1_32 = arith.constant 1 : index
    %c0_33 = arith.constant 0 : index
    %c0_34 = arith.constant 0 : index
    %44 = vector.load %arg3[%c1_32, %c0_33, %c0_34] : memref<3x384x128xbf16, #tpu.memory_space<vmem>>, vector<1x384x128xbf16>
    %45 = vector.shape_cast %44 : vector<1x384x128xbf16> to vector<384x128xbf16>
    %cst_35 = arith.constant dense<0.000000e+00> : vector<256x128xf32>
    %46 = tpu.matmul %43, %45, %cst_35 {dimension_numbers = #tpu.dot_dimension_numbers<[1], [0], [0], [1], [0, 0, 1, 1], [], []>} : vector<256x384xbf16>, vector<384x128xbf16>, vector<256x128xf32> -> vector<256x128xf32>
    %47 = arith.addf %24, %46 : vector<256x128xf32>
    %c1_i32_36 = arith.constant 1 : i32
    %48 = arith.muli %0, %c1_i32_36 : i32
    %c2_i32 = arith.constant 2 : i32
    %49 = arith.addi %48, %c2_i32 : i32
    %c0_37 = arith.constant 0 : index
    %50 = arith.index_cast %49 : i32 to index
    %c0_38 = arith.constant 0 : index
    %c0_39 = arith.constant 0 : index
    %51 = vector.load %arg2[%c0_37, %50, %c0_38, %c0_39] : memref<1x34x34x128xbf16, #tpu.memory_space<vmem>>, vector<1x8x32x128xbf16>
    %52 = vector.shape_cast %51 : vector<1x8x32x128xbf16> to vector<8x32x128xbf16>
    %53 = vector.shape_cast %52 : vector<8x32x128xbf16> to vector<256x128xbf16>
    %c1_i32_40 = arith.constant 1 : i32
    %54 = arith.muli %0, %c1_i32_40 : i32
    %c2_i32_41 = arith.constant 2 : i32
    %55 = arith.addi %54, %c2_i32_41 : i32
    %c0_42 = arith.constant 0 : index
    %56 = arith.index_cast %55 : i32 to index
    %c1_43 = arith.constant 1 : index
    %c0_44 = arith.constant 0 : index
    %57 = vector.load %arg2[%c0_42, %56, %c1_43, %c0_44] : memref<1x34x34x128xbf16, #tpu.memory_space<vmem>>, vector<1x8x32x128xbf16>
    %58 = vector.shape_cast %57 : vector<1x8x32x128xbf16> to vector<8x32x128xbf16>
    %59 = vector.shape_cast %58 : vector<8x32x128xbf16> to vector<256x128xbf16>
    %c1_i32_45 = arith.constant 1 : i32
    %60 = arith.muli %0, %c1_i32_45 : i32
    %c2_i32_46 = arith.constant 2 : i32
    %61 = arith.addi %60, %c2_i32_46 : i32
    %c0_47 = arith.constant 0 : index
    %62 = arith.index_cast %61 : i32 to index
    %c2_48 = arith.constant 2 : index
    %c0_49 = arith.constant 0 : index
    %63 = vector.load %arg2[%c0_47, %62, %c2_48, %c0_49] : memref<1x34x34x128xbf16, #tpu.memory_space<vmem>>, vector<1x8x32x128xbf16>
    %64 = vector.shape_cast %63 : vector<1x8x32x128xbf16> to vector<8x32x128xbf16>
    %65 = vector.shape_cast %64 : vector<8x32x128xbf16> to vector<256x128xbf16>
    %66 = tpu.concatenate %53, %59, %65 in 1 : vector<256x128xbf16>, vector<256x128xbf16>, vector<256x128xbf16> -> vector<256x384xbf16>
    %c2_50 = arith.constant 2 : index
    %c0_51 = arith.constant 0 : index
    %c0_52 = arith.constant 0 : index
    %67 = vector.load %arg3[%c2_50, %c0_51, %c0_52] : memref<3x384x128xbf16, #tpu.memory_space<vmem>>, vector<1x384x128xbf16>
    %68 = vector.shape_cast %67 : vector<1x384x128xbf16> to vector<384x128xbf16>
    %cst_53 = arith.constant dense<0.000000e+00> : vector<256x128xf32>
    %69 = tpu.matmul %66, %68, %cst_53 {dimension_numbers = #tpu.dot_dimension_numbers<[1], [0], [0], [1], [0, 0, 1, 1], [], []>} : vector<256x384xbf16>, vector<384x128xbf16>, vector<256x128xf32> -> vector<256x128xf32>
    %70 = arith.addf %47, %69 : vector<256x128xf32>
    %c0_54 = arith.constant 0 : index
    %c0_55 = arith.constant 0 : index
    %71 = vector.load %arg4[%c0_54, %c0_55] : memref<1x128xf32, #tpu.memory_space<vmem>>, vector<1x128xf32>
    %72 = vector.broadcast %71 : vector<1x128xf32> to vector<256x128xf32>
    %73 = arith.addf %70, %72 : vector<256x128xf32>
    %cst_56 = arith.constant 0.000000e+00 : f32
    %74 = vector.broadcast %cst_56 : f32 to vector<256x128xf32>
    %75 = arith.maximumf %73, %74 : vector<256x128xf32>
    %76 = vector.shape_cast %75 : vector<256x128xf32> to vector<8x32x128xf32>
    %77 = arith.truncf %76 : vector<8x32x128xf32> to vector<8x32x128xbf16>
    %c1_57 = arith.constant 1 : index
    %c1_58 = arith.constant 1 : index
    %c0_59 = arith.constant 0 : index
    %78 = vector.load %arg10[%c1_57, %c1_58, %c0_59] : memref<10x34x128xbf16, #tpu.memory_space<vmem>>, vector<8x32x128xbf16>
    tpu.vector_store %arg10[%c1_57, %c1_58, %c0_59], %77 {strides = array<i32>} : memref<10x34x128xbf16, #tpu.memory_space<vmem>>, vector<8x32x128xbf16>,
    %c0_i32_60 = arith.constant 0 : i32
    %79 = arith.cmpi sgt, %arg1, %c0_i32_60 : i32
    %80 = arith.extui %79 : i1 to i32
    %c0_i32_61 = arith.constant 0 : i32
    %81 = arith.cmpi ne, %80, %c0_i32_61 : i32
    scf.if %81 {
      %c1_i32_119 = arith.constant 1 : i32
      %139 = arith.subi %0, %c1_i32_119 : i32
      %c1_i32_120 = arith.constant 1 : i32
      %140 = arith.muli %139, %c1_i32_120 : i32
      %c0_i32_121 = arith.constant 0 : i32
      %141 = arith.addi %140, %c0_i32_121 : i32
      %c0_122 = arith.constant 0 : index
      %142 = arith.index_cast %141 : i32 to index
      %c0_123 = arith.constant 0 : index
      %c0_124 = arith.constant 0 : index
      %143 = vector.load %arg2[%c0_122, %142, %c0_123, %c0_124] : memref<1x34x34x128xbf16, #tpu.memory_space<vmem>>, vector<1x1x32x128xbf16>
      %144 = vector.shape_cast %143 : vector<1x1x32x128xbf16> to vector<1x32x128xbf16>
      %145 = vector.shape_cast %144 : vector<1x32x128xbf16> to vector<32x128xbf16>
      %c1_i32_125 = arith.constant 1 : i32
      %146 = arith.muli %139, %c1_i32_125 : i32
      %c0_i32_126 = arith.constant 0 : i32
      %147 = arith.addi %146, %c0_i32_126 : i32
      %c0_127 = arith.constant 0 : index
      %148 = arith.index_cast %147 : i32 to index
      %c1_128 = arith.constant 1 : index
      %c0_129 = arith.constant 0 : index
      %149 = vector.load %arg2[%c0_127, %148, %c1_128, %c0_129] : memref<1x34x34x128xbf16, #tpu.memory_space<vmem>>, vector<1x1x32x128xbf16>
      %150 = vector.shape_cast %149 : vector<1x1x32x128xbf16> to vector<1x32x128xbf16>
      %151 = vector.shape_cast %150 : vector<1x32x128xbf16> to vector<32x128xbf16>
      %c1_i32_130 = arith.constant 1 : i32
      %152 = arith.muli %139, %c1_i32_130 : i32
      %c0_i32_131 = arith.constant 0 : i32
      %153 = arith.addi %152, %c0_i32_131 : i32
      %c0_132 = arith.constant 0 : index
      %154 = arith.index_cast %153 : i32 to index
      %c2_133 = arith.constant 2 : index
      %c0_134 = arith.constant 0 : index
      %155 = vector.load %arg2[%c0_132, %154, %c2_133, %c0_134] : memref<1x34x34x128xbf16, #tpu.memory_space<vmem>>, vector<1x1x32x128xbf16>
      %156 = vector.shape_cast %155 : vector<1x1x32x128xbf16> to vector<1x32x128xbf16>
      %157 = vector.shape_cast %156 : vector<1x32x128xbf16> to vector<32x128xbf16>
      %158 = tpu.concatenate %145, %151, %157 in 1 : vector<32x128xbf16>, vector<32x128xbf16>, vector<32x128xbf16> -> vector<32x384xbf16>
      %c0_135 = arith.constant 0 : index
      %c0_136 = arith.constant 0 : index
      %c0_137 = arith.constant 0 : index
      %159 = vector.load %arg3[%c0_135, %c0_136, %c0_137] : memref<3x384x128xbf16, #tpu.memory_space<vmem>>, vector<1x384x128xbf16>
      %160 = vector.shape_cast %159 : vector<1x384x128xbf16> to vector<384x128xbf16>
      %cst_138 = arith.constant dense<0.000000e+00> : vector<32x128xf32>
      %161 = tpu.matmul %158, %160, %cst_138 {dimension_numbers = #tpu.dot_dimension_numbers<[1], [0], [0], [1], [0, 0, 1, 1], [], []>} : vector<32x384xbf16>, vector<384x128xbf16>, vector<32x128xf32> -> vector<32x128xf32>
      %c1_i32_139 = arith.constant 1 : i32
      %162 = arith.muli %139, %c1_i32_139 : i32
      %c1_i32_140 = arith.constant 1 : i32
      %163 = arith.addi %162, %c1_i32_140 : i32
      %c0_141 = arith.constant 0 : index
      %164 = arith.index_cast %163 : i32 to index
      %c0_142 = arith.constant 0 : index
      %c0_143 = arith.constant 0 : index
      %165 = vector.load %arg2[%c0_141, %164, %c0_142, %c0_143] : memref<1x34x34x128xbf16, #tpu.memory_space<vmem>>, vector<1x1x32x128xbf16>
      %166 = vector.shape_cast %165 : vector<1x1x32x128xbf16> to vector<1x32x128xbf16>
      %167 = vector.shape_cast %166 : vector<1x32x128xbf16> to vector<32x128xbf16>
      %c1_i32_144 = arith.constant 1 : i32
      %168 = arith.muli %139, %c1_i32_144 : i32
      %c1_i32_145 = arith.constant 1 : i32
      %169 = arith.addi %168, %c1_i32_145 : i32
      %c0_146 = arith.constant 0 : index
      %170 = arith.index_cast %169 : i32 to index
      %c1_147 = arith.constant 1 : index
      %c0_148 = arith.constant 0 : index
      %171 = vector.load %arg2[%c0_146, %170, %c1_147, %c0_148] : memref<1x34x34x128xbf16, #tpu.memory_space<vmem>>, vector<1x1x32x128xbf16>
      %172 = vector.shape_cast %171 : vector<1x1x32x128xbf16> to vector<1x32x128xbf16>
      %173 = vector.shape_cast %172 : vector<1x32x128xbf16> to vector<32x128xbf16>
      %c1_i32_149 = arith.constant 1 : i32
      %174 = arith.muli %139, %c1_i32_149 : i32
      %c1_i32_150 = arith.constant 1 : i32
      %175 = arith.addi %174, %c1_i32_150 : i32
      %c0_151 = arith.constant 0 : index
      %176 = arith.index_cast %175 : i32 to index
      %c2_152 = arith.constant 2 : index
      %c0_153 = arith.constant 0 : index
      %177 = vector.load %arg2[%c0_151, %176, %c2_152, %c0_153] : memref<1x34x34x128xbf16, #tpu.memory_space<vmem>>, vector<1x1x32x128xbf16>
      %178 = vector.shape_cast %177 : vector<1x1x32x128xbf16> to vector<1x32x128xbf16>
      %179 = vector.shape_cast %178 : vector<1x32x128xbf16> to vector<32x128xbf16>
      %180 = tpu.concatenate %167, %173, %179 in 1 : vector<32x128xbf16>, vector<32x128xbf16>, vector<32x128xbf16> -> vector<32x384xbf16>
      %c1_154 = arith.constant 1 : index
      %c0_155 = arith.constant 0 : index
      %c0_156 = arith.constant 0 : index
      %181 = vector.load %arg3[%c1_154, %c0_155, %c0_156] : memref<3x384x128xbf16, #tpu.memory_space<vmem>>, vector<1x384x128xbf16>
      %182 = vector.shape_cast %181 : vector<1x384x128xbf16> to vector<384x128xbf16>
      %cst_157 = arith.constant dense<0.000000e+00> : vector<32x128xf32>
      %183 = tpu.matmul %180, %182, %cst_157 {dimension_numbers = #tpu.dot_dimension_numbers<[1], [0], [0], [1], [0, 0, 1, 1], [], []>} : vector<32x384xbf16>, vector<384x128xbf16>, vector<32x128xf32> -> vector<32x128xf32>
      %184 = arith.addf %161, %183 : vector<32x128xf32>
      %c1_i32_158 = arith.constant 1 : i32
      %185 = arith.muli %139, %c1_i32_158 : i32
      %c2_i32_159 = arith.constant 2 : i32
      %186 = arith.addi %185, %c2_i32_159 : i32
      %c0_160 = arith.constant 0 : index
      %187 = arith.index_cast %186 : i32 to index
      %c0_161 = arith.constant 0 : index
      %c0_162 = arith.constant 0 : index
      %188 = vector.load %arg2[%c0_160, %187, %c0_161, %c0_162] : memref<1x34x34x128xbf16, #tpu.memory_space<vmem>>, vector<1x1x32x128xbf16>
      %189 = vector.shape_cast %188 : vector<1x1x32x128xbf16> to vector<1x32x128xbf16>
      %190 = vector.shape_cast %189 : vector<1x32x128xbf16> to vector<32x128xbf16>
      %c1_i32_163 = arith.constant 1 : i32
      %191 = arith.muli %139, %c1_i32_163 : i32
      %c2_i32_164 = arith.constant 2 : i32
      %192 = arith.addi %191, %c2_i32_164 : i32
      %c0_165 = arith.constant 0 : index
      %193 = arith.index_cast %192 : i32 to index
      %c1_166 = arith.constant 1 : index
      %c0_167 = arith.constant 0 : index
      %194 = vector.load %arg2[%c0_165, %193, %c1_166, %c0_167] : memref<1x34x34x128xbf16, #tpu.memory_space<vmem>>, vector<1x1x32x128xbf16>
      %195 = vector.shape_cast %194 : vector<1x1x32x128xbf16> to vector<1x32x128xbf16>
      %196 = vector.shape_cast %195 : vector<1x32x128xbf16> to vector<32x128xbf16>
      %c1_i32_168 = arith.constant 1 : i32
      %197 = arith.muli %139, %c1_i32_168 : i32
      %c2_i32_169 = arith.constant 2 : i32
      %198 = arith.addi %197, %c2_i32_169 : i32
      %c0_170 = arith.constant 0 : index
      %199 = arith.index_cast %198 : i32 to index
      %c2_171 = arith.constant 2 : index
      %c0_172 = arith.constant 0 : index
      %200 = vector.load %arg2[%c0_170, %199, %c2_171, %c0_172] : memref<1x34x34x128xbf16, #tpu.memory_space<vmem>>, vector<1x1x32x128xbf16>
      %201 = vector.shape_cast %200 : vector<1x1x32x128xbf16> to vector<1x32x128xbf16>
      %202 = vector.shape_cast %201 : vector<1x32x128xbf16> to vector<32x128xbf16>
      %203 = tpu.concatenate %190, %196, %202 in 1 : vector<32x128xbf16>, vector<32x128xbf16>, vector<32x128xbf16> -> vector<32x384xbf16>
      %c2_173 = arith.constant 2 : index
      %c0_174 = arith.constant 0 : index
      %c0_175 = arith.constant 0 : index
      %204 = vector.load %arg3[%c2_173, %c0_174, %c0_175] : memref<3x384x128xbf16, #tpu.memory_space<vmem>>, vector<1x384x128xbf16>
      %205 = vector.shape_cast %204 : vector<1x384x128xbf16> to vector<384x128xbf16>
      %cst_176 = arith.constant dense<0.000000e+00> : vector<32x128xf32>
      %206 = tpu.matmul %203, %205, %cst_176 {dimension_numbers = #tpu.dot_dimension_numbers<[1], [0], [0], [1], [0, 0, 1, 1], [], []>} : vector<32x384xbf16>, vector<384x128xbf16>, vector<32x128xf32> -> vector<32x128xf32>
      %207 = arith.addf %184, %206 : vector<32x128xf32>
      %c0_177 = arith.constant 0 : index
      %c0_178 = arith.constant 0 : index
      %208 = vector.load %arg4[%c0_177, %c0_178] : memref<1x128xf32, #tpu.memory_space<vmem>>, vector<1x128xf32>
      %209 = vector.broadcast %208 : vector<1x128xf32> to vector<32x128xf32>
      %210 = arith.addf %207, %209 : vector<32x128xf32>
      %cst_179 = arith.constant 0.000000e+00 : f32
      %211 = vector.broadcast %cst_179 : f32 to vector<32x128xf32>
      %212 = arith.maximumf %210, %211 : vector<32x128xf32>
      %213 = vector.shape_cast %212 : vector<32x128xf32> to vector<1x32x128xf32>
      %214 = arith.truncf %213 : vector<1x32x128xf32> to vector<1x32x128xbf16>
      %c0_180 = arith.constant 0 : index
      %c1_181 = arith.constant 1 : index
      %c0_182 = arith.constant 0 : index
      %215 = vector.load %arg10[%c0_180, %c1_181, %c0_182] : memref<10x34x128xbf16, #tpu.memory_space<vmem>>, vector<1x32x128xbf16>
      tpu.vector_store %arg10[%c0_180, %c1_181, %c0_182], %214 {strides = array<i32>} : memref<10x34x128xbf16, #tpu.memory_space<vmem>>, vector<1x32x128xbf16>,
    } else {
    }
    %c3_i32 = arith.constant 3 : i32
    %82 = arith.cmpi slt, %arg1, %c3_i32 : i32
    %83 = arith.extui %82 : i1 to i32
    %c0_i32_62 = arith.constant 0 : i32
    %84 = arith.cmpi ne, %83, %c0_i32_62 : i32
    scf.if %84 {
      %c8_i32_119 = arith.constant 8 : i32
      %139 = arith.addi %0, %c8_i32_119 : i32
      %c1_i32_120 = arith.constant 1 : i32
      %140 = arith.muli %139, %c1_i32_120 : i32
      %c0_i32_121 = arith.constant 0 : i32
      %141 = arith.addi %140, %c0_i32_121 : i32
      %c0_122 = arith.constant 0 : index
      %142 = arith.index_cast %141 : i32 to index
      %c0_123 = arith.constant 0 : index
      %c0_124 = arith.constant 0 : index
      %143 = vector.load %arg2[%c0_122, %142, %c0_123, %c0_124] : memref<1x34x34x128xbf16, #tpu.memory_space<vmem>>, vector<1x1x32x128xbf16>
      %144 = vector.shape_cast %143 : vector<1x1x32x128xbf16> to vector<1x32x128xbf16>
      %145 = vector.shape_cast %144 : vector<1x32x128xbf16> to vector<32x128xbf16>
      %c1_i32_125 = arith.constant 1 : i32
      %146 = arith.muli %139, %c1_i32_125 : i32
      %c0_i32_126 = arith.constant 0 : i32
      %147 = arith.addi %146, %c0_i32_126 : i32
      %c0_127 = arith.constant 0 : index
      %148 = arith.index_cast %147 : i32 to index
      %c1_128 = arith.constant 1 : index
      %c0_129 = arith.constant 0 : index
      %149 = vector.load %arg2[%c0_127, %148, %c1_128, %c0_129] : memref<1x34x34x128xbf16, #tpu.memory_space<vmem>>, vector<1x1x32x128xbf16>
      %150 = vector.shape_cast %149 : vector<1x1x32x128xbf16> to vector<1x32x128xbf16>
      %151 = vector.shape_cast %150 : vector<1x32x128xbf16> to vector<32x128xbf16>
      %c1_i32_130 = arith.constant 1 : i32
      %152 = arith.muli %139, %c1_i32_130 : i32
      %c0_i32_131 = arith.constant 0 : i32
      %153 = arith.addi %152, %c0_i32_131 : i32
      %c0_132 = arith.constant 0 : index
      %154 = arith.index_cast %153 : i32 to index
      %c2_133 = arith.constant 2 : index
      %c0_134 = arith.constant 0 : index
      %155 = vector.load %arg2[%c0_132, %154, %c2_133, %c0_134] : memref<1x34x34x128xbf16, #tpu.memory_space<vmem>>, vector<1x1x32x128xbf16>
      %156 = vector.shape_cast %155 : vector<1x1x32x128xbf16> to vector<1x32x128xbf16>
      %157 = vector.shape_cast %156 : vector<1x32x128xbf16> to vector<32x128xbf16>
      %158 = tpu.concatenate %145, %151, %157 in 1 : vector<32x128xbf16>, vector<32x128xbf16>, vector<32x128xbf16> -> vector<32x384xbf16>
      %c0_135 = arith.constant 0 : index
      %c0_136 = arith.constant 0 : index
      %c0_137 = arith.constant 0 : index
      %159 = vector.load %arg3[%c0_135, %c0_136, %c0_137] : memref<3x384x128xbf16, #tpu.memory_space<vmem>>, vector<1x384x128xbf16>
      %160 = vector.shape_cast %159 : vector<1x384x128xbf16> to vector<384x128xbf16>
      %cst_138 = arith.constant dense<0.000000e+00> : vector<32x128xf32>
      %161 = tpu.matmul %158, %160, %cst_138 {dimension_numbers = #tpu.dot_dimension_numbers<[1], [0], [0], [1], [0, 0, 1, 1], [], []>} : vector<32x384xbf16>, vector<384x128xbf16>, vector<32x128xf32> -> vector<32x128xf32>
      %c1_i32_139 = arith.constant 1 : i32
      %162 = arith.muli %139, %c1_i32_139 : i32
      %c1_i32_140 = arith.constant 1 : i32
      %163 = arith.addi %162, %c1_i32_140 : i32
      %c0_141 = arith.constant 0 : index
      %164 = arith.index_cast %163 : i32 to index
      %c0_142 = arith.constant 0 : index
      %c0_143 = arith.constant 0 : index
      %165 = vector.load %arg2[%c0_141, %164, %c0_142, %c0_143] : memref<1x34x34x128xbf16, #tpu.memory_space<vmem>>, vector<1x1x32x128xbf16>
      %166 = vector.shape_cast %165 : vector<1x1x32x128xbf16> to vector<1x32x128xbf16>
      %167 = vector.shape_cast %166 : vector<1x32x128xbf16> to vector<32x128xbf16>
      %c1_i32_144 = arith.constant 1 : i32
      %168 = arith.muli %139, %c1_i32_144 : i32
      %c1_i32_145 = arith.constant 1 : i32
      %169 = arith.addi %168, %c1_i32_145 : i32
      %c0_146 = arith.constant 0 : index
      %170 = arith.index_cast %169 : i32 to index
      %c1_147 = arith.constant 1 : index
      %c0_148 = arith.constant 0 : index
      %171 = vector.load %arg2[%c0_146, %170, %c1_147, %c0_148] : memref<1x34x34x128xbf16, #tpu.memory_space<vmem>>, vector<1x1x32x128xbf16>
      %172 = vector.shape_cast %171 : vector<1x1x32x128xbf16> to vector<1x32x128xbf16>
      %173 = vector.shape_cast %172 : vector<1x32x128xbf16> to vector<32x128xbf16>
      %c1_i32_149 = arith.constant 1 : i32
      %174 = arith.muli %139, %c1_i32_149 : i32
      %c1_i32_150 = arith.constant 1 : i32
      %175 = arith.addi %174, %c1_i32_150 : i32
      %c0_151 = arith.constant 0 : index
      %176 = arith.index_cast %175 : i32 to index
      %c2_152 = arith.constant 2 : index
      %c0_153 = arith.constant 0 : index
      %177 = vector.load %arg2[%c0_151, %176, %c2_152, %c0_153] : memref<1x34x34x128xbf16, #tpu.memory_space<vmem>>, vector<1x1x32x128xbf16>
      %178 = vector.shape_cast %177 : vector<1x1x32x128xbf16> to vector<1x32x128xbf16>
      %179 = vector.shape_cast %178 : vector<1x32x128xbf16> to vector<32x128xbf16>
      %180 = tpu.concatenate %167, %173, %179 in 1 : vector<32x128xbf16>, vector<32x128xbf16>, vector<32x128xbf16> -> vector<32x384xbf16>
      %c1_154 = arith.constant 1 : index
      %c0_155 = arith.constant 0 : index
      %c0_156 = arith.constant 0 : index
      %181 = vector.load %arg3[%c1_154, %c0_155, %c0_156] : memref<3x384x128xbf16, #tpu.memory_space<vmem>>, vector<1x384x128xbf16>
      %182 = vector.shape_cast %181 : vector<1x384x128xbf16> to vector<384x128xbf16>
      %cst_157 = arith.constant dense<0.000000e+00> : vector<32x128xf32>
      %183 = tpu.matmul %180, %182, %cst_157 {dimension_numbers = #tpu.dot_dimension_numbers<[1], [0], [0], [1], [0, 0, 1, 1], [], []>} : vector<32x384xbf16>, vector<384x128xbf16>, vector<32x128xf32> -> vector<32x128xf32>
      %184 = arith.addf %161, %183 : vector<32x128xf32>
      %c1_i32_158 = arith.constant 1 : i32
      %185 = arith.muli %139, %c1_i32_158 : i32
      %c2_i32_159 = arith.constant 2 : i32
      %186 = arith.addi %185, %c2_i32_159 : i32
      %c0_160 = arith.constant 0 : index
      %187 = arith.index_cast %186 : i32 to index
      %c0_161 = arith.constant 0 : index
      %c0_162 = arith.constant 0 : index
      %188 = vector.load %arg2[%c0_160, %187, %c0_161, %c0_162] : memref<1x34x34x128xbf16, #tpu.memory_space<vmem>>, vector<1x1x32x128xbf16>
      %189 = vector.shape_cast %188 : vector<1x1x32x128xbf16> to vector<1x32x128xbf16>
      %190 = vector.shape_cast %189 : vector<1x32x128xbf16> to vector<32x128xbf16>
      %c1_i32_163 = arith.constant 1 : i32
      %191 = arith.muli %139, %c1_i32_163 : i32
      %c2_i32_164 = arith.constant 2 : i32
      %192 = arith.addi %191, %c2_i32_164 : i32
      %c0_165 = arith.constant 0 : index
      %193 = arith.index_cast %192 : i32 to index
      %c1_166 = arith.constant 1 : index
      %c0_167 = arith.constant 0 : index
      %194 = vector.load %arg2[%c0_165, %193, %c1_166, %c0_167] : memref<1x34x34x128xbf16, #tpu.memory_space<vmem>>, vector<1x1x32x128xbf16>
      %195 = vector.shape_cast %194 : vector<1x1x32x128xbf16> to vector<1x32x128xbf16>
      %196 = vector.shape_cast %195 : vector<1x32x128xbf16> to vector<32x128xbf16>
      %c1_i32_168 = arith.constant 1 : i32
      %197 = arith.muli %139, %c1_i32_168 : i32
      %c2_i32_169 = arith.constant 2 : i32
      %198 = arith.addi %197, %c2_i32_169 : i32
      %c0_170 = arith.constant 0 : index
      %199 = arith.index_cast %198 : i32 to index
      %c2_171 = arith.constant 2 : index
      %c0_172 = arith.constant 0 : index
      %200 = vector.load %arg2[%c0_170, %199, %c2_171, %c0_172] : memref<1x34x34x128xbf16, #tpu.memory_space<vmem>>, vector<1x1x32x128xbf16>
      %201 = vector.shape_cast %200 : vector<1x1x32x128xbf16> to vector<1x32x128xbf16>
      %202 = vector.shape_cast %201 : vector<1x32x128xbf16> to vector<32x128xbf16>
      %203 = tpu.concatenate %190, %196, %202 in 1 : vector<32x128xbf16>, vector<32x128xbf16>, vector<32x128xbf16> -> vector<32x384xbf16>
      %c2_173 = arith.constant 2 : index
      %c0_174 = arith.constant 0 : index
      %c0_175 = arith.constant 0 : index
      %204 = vector.load %arg3[%c2_173, %c0_174, %c0_175] : memref<3x384x128xbf16, #tpu.memory_space<vmem>>, vector<1x384x128xbf16>
      %205 = vector.shape_cast %204 : vector<1x384x128xbf16> to vector<384x128xbf16>
      %cst_176 = arith.constant dense<0.000000e+00> : vector<32x128xf32>
      %206 = tpu.matmul %203, %205, %cst_176 {dimension_numbers = #tpu.dot_dimension_numbers<[1], [0], [0], [1], [0, 0, 1, 1], [], []>} : vector<32x384xbf16>, vector<384x128xbf16>, vector<32x128xf32> -> vector<32x128xf32>
      %207 = arith.addf %184, %206 : vector<32x128xf32>
      %c0_177 = arith.constant 0 : index
      %c0_178 = arith.constant 0 : index
      %208 = vector.load %arg4[%c0_177, %c0_178] : memref<1x128xf32, #tpu.memory_space<vmem>>, vector<1x128xf32>
      %209 = vector.broadcast %208 : vector<1x128xf32> to vector<32x128xf32>
      %210 = arith.addf %207, %209 : vector<32x128xf32>
      %cst_179 = arith.constant 0.000000e+00 : f32
      %211 = vector.broadcast %cst_179 : f32 to vector<32x128xf32>
      %212 = arith.maximumf %210, %211 : vector<32x128xf32>
      %213 = vector.shape_cast %212 : vector<32x128xf32> to vector<1x32x128xf32>
      %214 = arith.truncf %213 : vector<1x32x128xf32> to vector<1x32x128xbf16>
      %c9 = arith.constant 9 : index
      %c1_180 = arith.constant 1 : index
      %c0_181 = arith.constant 0 : index
      %215 = vector.load %arg10[%c9, %c1_180, %c0_181] : memref<10x34x128xbf16, #tpu.memory_space<vmem>>, vector<1x32x128xbf16>
      tpu.vector_store %arg10[%c9, %c1_180, %c0_181], %214 {strides = array<i32>} : memref<10x34x128xbf16, #tpu.memory_space<vmem>>, vector<1x32x128xbf16>,
    } else {
    }
    %c0_63 = arith.constant 0 : index
    %c0_64 = arith.constant 0 : index
    %c0_65 = arith.constant 0 : index
    %85 = vector.load %arg10[%c0_63, %c0_64, %c0_65] : memref<10x34x128xbf16, #tpu.memory_space<vmem>>, vector<8x32x128xbf16>
    %86 = vector.shape_cast %85 : vector<8x32x128xbf16> to vector<256x128xbf16>
    %c0_66 = arith.constant 0 : index
    %c1_67 = arith.constant 1 : index
    %c0_68 = arith.constant 0 : index
    %87 = vector.load %arg10[%c0_66, %c1_67, %c0_68] : memref<10x34x128xbf16, #tpu.memory_space<vmem>>, vector<8x32x128xbf16>
    %88 = vector.shape_cast %87 : vector<8x32x128xbf16> to vector<256x128xbf16>
    %c0_69 = arith.constant 0 : index
    %c2_70 = arith.constant 2 : index
    %c0_71 = arith.constant 0 : index
    %89 = vector.load %arg10[%c0_69, %c2_70, %c0_71] : memref<10x34x128xbf16, #tpu.memory_space<vmem>>, vector<8x32x128xbf16>
    %90 = vector.shape_cast %89 : vector<8x32x128xbf16> to vector<256x128xbf16>
    %91 = tpu.concatenate %86, %88, %90 in 1 : vector<256x128xbf16>, vector<256x128xbf16>, vector<256x128xbf16> -> vector<256x384xbf16>
    %c0_72 = arith.constant 0 : index
    %c0_73 = arith.constant 0 : index
    %c0_74 = arith.constant 0 : index
    %92 = vector.load %arg5[%c0_72, %c0_73, %c0_74] : memref<3x384x128xbf16, #tpu.memory_space<vmem>>, vector<1x384x128xbf16>
    %93 = vector.shape_cast %92 : vector<1x384x128xbf16> to vector<384x128xbf16>
    %cst_75 = arith.constant dense<0.000000e+00> : vector<256x128xf32>
    %94 = tpu.matmul %91, %93, %cst_75 {dimension_numbers = #tpu.dot_dimension_numbers<[1], [0], [0], [1], [0, 0, 1, 1], [], []>} : vector<256x384xbf16>, vector<384x128xbf16>, vector<256x128xf32> -> vector<256x128xf32>
    %c1_76 = arith.constant 1 : index
    %c0_77 = arith.constant 0 : index
    %c0_78 = arith.constant 0 : index
    %95 = vector.load %arg10[%c1_76, %c0_77, %c0_78] : memref<10x34x128xbf16, #tpu.memory_space<vmem>>, vector<8x32x128xbf16>
    %96 = vector.shape_cast %95 : vector<8x32x128xbf16> to vector<256x128xbf16>
    %c1_79 = arith.constant 1 : index
    %c1_80 = arith.constant 1 : index
    %c0_81 = arith.constant 0 : index
    %97 = vector.load %arg10[%c1_79, %c1_80, %c0_81] : memref<10x34x128xbf16, #tpu.memory_space<vmem>>, vector<8x32x128xbf16>
    %98 = vector.shape_cast %97 : vector<8x32x128xbf16> to vector<256x128xbf16>
    %c1_82 = arith.constant 1 : index
    %c2_83 = arith.constant 2 : index
    %c0_84 = arith.constant 0 : index
    %99 = vector.load %arg10[%c1_82, %c2_83, %c0_84] : memref<10x34x128xbf16, #tpu.memory_space<vmem>>, vector<8x32x128xbf16>
    %100 = vector.shape_cast %99 : vector<8x32x128xbf16> to vector<256x128xbf16>
    %101 = tpu.concatenate %96, %98, %100 in 1 : vector<256x128xbf16>, vector<256x128xbf16>, vector<256x128xbf16> -> vector<256x384xbf16>
    %c1_85 = arith.constant 1 : index
    %c0_86 = arith.constant 0 : index
    %c0_87 = arith.constant 0 : index
    %102 = vector.load %arg5[%c1_85, %c0_86, %c0_87] : memref<3x384x128xbf16, #tpu.memory_space<vmem>>, vector<1x384x128xbf16>
    %103 = vector.shape_cast %102 : vector<1x384x128xbf16> to vector<384x128xbf16>
    %cst_88 = arith.constant dense<0.000000e+00> : vector<256x128xf32>
    %104 = tpu.matmul %101, %103, %cst_88 {dimension_numbers = #tpu.dot_dimension_numbers<[1], [0], [0], [1], [0, 0, 1, 1], [], []>} : vector<256x384xbf16>, vector<384x128xbf16>, vector<256x128xf32> -> vector<256x128xf32>
    %105 = arith.addf %94, %104 : vector<256x128xf32>
    %c2_89 = arith.constant 2 : index
    %c0_90 = arith.constant 0 : index
    %c0_91 = arith.constant 0 : index
    %106 = vector.load %arg10[%c2_89, %c0_90, %c0_91] : memref<10x34x128xbf16, #tpu.memory_space<vmem>>, vector<8x32x128xbf16>
    %107 = vector.shape_cast %106 : vector<8x32x128xbf16> to vector<256x128xbf16>
    %c2_92 = arith.constant 2 : index
    %c1_93 = arith.constant 1 : index
    %c0_94 = arith.constant 0 : index
    %108 = vector.load %arg10[%c2_92, %c1_93, %c0_94] : memref<10x34x128xbf16, #tpu.memory_space<vmem>>, vector<8x32x128xbf16>
    %109 = vector.shape_cast %108 : vector<8x32x128xbf16> to vector<256x128xbf16>
    %c2_95 = arith.constant 2 : index
    %c2_96 = arith.constant 2 : index
    %c0_97 = arith.constant 0 : index
    %110 = vector.load %arg10[%c2_95, %c2_96, %c0_97] : memref<10x34x128xbf16, #tpu.memory_space<vmem>>, vector<8x32x128xbf16>
    %111 = vector.shape_cast %110 : vector<8x32x128xbf16> to vector<256x128xbf16>
    %112 = tpu.concatenate %107, %109, %111 in 1 : vector<256x128xbf16>, vector<256x128xbf16>, vector<256x128xbf16> -> vector<256x384xbf16>
    %c2_98 = arith.constant 2 : index
    %c0_99 = arith.constant 0 : index
    %c0_100 = arith.constant 0 : index
    %113 = vector.load %arg5[%c2_98, %c0_99, %c0_100] : memref<3x384x128xbf16, #tpu.memory_space<vmem>>, vector<1x384x128xbf16>
    %114 = vector.shape_cast %113 : vector<1x384x128xbf16> to vector<384x128xbf16>
    %cst_101 = arith.constant dense<0.000000e+00> : vector<256x128xf32>
    %115 = tpu.matmul %112, %114, %cst_101 {dimension_numbers = #tpu.dot_dimension_numbers<[1], [0], [0], [1], [0, 0, 1, 1], [], []>} : vector<256x384xbf16>, vector<384x128xbf16>, vector<256x128xf32> -> vector<256x128xf32>
    %116 = arith.addf %105, %115 : vector<256x128xf32>
    %c0_102 = arith.constant 0 : index
    %c0_103 = arith.constant 0 : index
    %117 = vector.load %arg6[%c0_102, %c0_103] : memref<1x128xf32, #tpu.memory_space<vmem>>, vector<1x128xf32>
    %118 = vector.broadcast %117 : vector<1x128xf32> to vector<256x128xf32>
    %119 = arith.addf %116, %118 : vector<256x128xf32>
    %c1_i32_104 = arith.constant 1 : i32
    %120 = arith.muli %0, %c1_i32_104 : i32
    %c1_i32_105 = arith.constant 1 : i32
    %121 = arith.addi %120, %c1_i32_105 : i32
    %c0_106 = arith.constant 0 : index
    %122 = arith.index_cast %121 : i32 to index
    %c1_107 = arith.constant 1 : index
    %c0_108 = arith.constant 0 : index
    %123 = vector.load %arg2[%c0_106, %122, %c1_107, %c0_108] : memref<1x34x34x128xbf16, #tpu.memory_space<vmem>>, vector<1x8x32x128xbf16>
    %124 = vector.shape_cast %123 : vector<1x8x32x128xbf16> to vector<8x32x128xbf16>
    %125 = vector.shape_cast %124 : vector<8x32x128xbf16> to vector<256x128xbf16>
    %c0_109 = arith.constant 0 : index
    %c0_110 = arith.constant 0 : index
    %126 = vector.load %arg7[%c0_109, %c0_110] : memref<128x128xbf16, #tpu.memory_space<vmem>>, vector<128x128xbf16>
    %cst_111 = arith.constant dense<0.000000e+00> : vector<256x128xf32>
    %127 = tpu.matmul %125, %126, %cst_111 {dimension_numbers = #tpu.dot_dimension_numbers<[1], [0], [0], [1], [0, 0, 1, 1], [], []>} : vector<256x128xbf16>, vector<128x128xbf16>, vector<256x128xf32> -> vector<256x128xf32>
    %c0_112 = arith.constant 0 : index
    %c0_113 = arith.constant 0 : index
    %128 = vector.load %arg8[%c0_112, %c0_113] : memref<1x128xf32, #tpu.memory_space<vmem>>, vector<1x128xf32>
    %129 = vector.broadcast %128 : vector<1x128xf32> to vector<256x128xf32>
    %130 = arith.addf %127, %129 : vector<256x128xf32>
    %131 = arith.addf %119, %130 : vector<256x128xf32>
    %cst_114 = arith.constant 0.000000e+00 : f32
    %132 = vector.broadcast %cst_114 : f32 to vector<256x128xf32>
    %133 = arith.maximumf %131, %132 : vector<256x128xf32>
    %134 = vector.shape_cast %133 : vector<256x128xf32> to vector<8x32x128xf32>
    %135 = arith.truncf %134 : vector<8x32x128xf32> to vector<8x32x128xbf16>
    %c0_115 = arith.constant 0 : index
    %c0_116 = arith.constant 0 : index
    %c0_117 = arith.constant 0 : index
    %c0_118 = arith.constant 0 : index
    %136 = vector.load %arg9[%c0_115, %c0_116, %c0_117, %c0_118] : memref<1x8x32x128xbf16, #tpu.memory_space<vmem>>, vector<1x8x32x128xbf16>
    %137 = vector.shape_cast %136 : vector<1x8x32x128xbf16> to vector<8x32x128xbf16>
    %138 = vector.shape_cast %135 : vector<8x32x128xbf16> to vector<1x8x32x128xbf16>
    tpu.vector_store %arg9[%c0_115, %c0_116, %c0_117, %c0_118], %138 {strides = array<i32>} : memref<1x8x32x128xbf16, #tpu.memory_space<vmem>>, vector<1x8x32x128xbf16>,
    return
  }
  func.func @transform_0(%arg0: i32, %arg1: i32) -> (i32, i32, i32, i32) {
    %c0_i32 = arith.constant 0 : i32
    %c0_i32_0 = arith.constant 0 : i32
    %c0_i32_1 = arith.constant 0 : i32
    %c0_i32_2 = arith.constant 0 : i32
    return %arg0, %c0_i32, %c0_i32_0, %c0_i32_1 : i32, i32, i32, i32
  }
  func.func @transform_1(%arg0: i32, %arg1: i32) -> (i32, i32, i32) {
    %c0_i32 = arith.constant 0 : i32
    %c0_i32_0 = arith.constant 0 : i32
    %c0_i32_1 = arith.constant 0 : i32
    %c0_i32_2 = arith.constant 0 : i32
    return %c0_i32, %c0_i32_0, %c0_i32_1 : i32, i32, i32
  }
  func.func @transform_2(%arg0: i32, %arg1: i32) -> (i32, i32) {
    %c0_i32 = arith.constant 0 : i32
    %c0_i32_0 = arith.constant 0 : i32
    %c0_i32_1 = arith.constant 0 : i32
    return %c0_i32, %c0_i32_0 : i32, i32
  }
  func.func @transform_3(%arg0: i32, %arg1: i32) -> (i32, i32, i32) {
    %c0_i32 = arith.constant 0 : i32
    %c0_i32_0 = arith.constant 0 : i32
    %c0_i32_1 = arith.constant 0 : i32
    %c0_i32_2 = arith.constant 0 : i32
    return %c0_i32, %c0_i32_0, %c0_i32_1 : i32, i32, i32
  }
  func.func @transform_4(%arg0: i32, %arg1: i32) -> (i32, i32) {
    %c0_i32 = arith.constant 0 : i32
    %c0_i32_0 = arith.constant 0 : i32
    %c0_i32_1 = arith.constant 0 : i32
    return %c0_i32, %c0_i32_0 : i32, i32
  }
  func.func @transform_5(%arg0: i32, %arg1: i32) -> (i32, i32) {
    %c0_i32 = arith.constant 0 : i32
    %c0_i32_0 = arith.constant 0 : i32
    %c0_i32_1 = arith.constant 0 : i32
    return %c0_i32, %c0_i32_0 : i32, i32
  }
  func.func @transform_6(%arg0: i32, %arg1: i32) -> (i32, i32) {
    %c0_i32 = arith.constant 0 : i32
    %c0_i32_0 = arith.constant 0 : i32
    %c0_i32_1 = arith.constant 0 : i32
    return %c0_i32, %c0_i32_0 : i32, i32
  }
  func.func @transform_7(%arg0: i32, %arg1: i32) -> (i32, i32, i32, i32) {
    %c0_i32 = arith.constant 0 : i32
    %c0_i32_0 = arith.constant 0 : i32
    %c0_i32_1 = arith.constant 0 : i32
    return %arg0, %arg1, %c0_i32, %c0_i32_0 : i32, i32, i32, i32
  }
}

</mosaic_0001>

<llo_original>
// kernel: basic_block_forward.1
$region0: #{basic_block_forward.1}
  #allocation0 [shape = 'u32[]', space=smem, size = 0x4, offset = 0x4, fixed_abs, tag = 'smem constant byte address 0x4 - core index']
  #allocation1 [shape = 'u32[144,128]{1,0:T(1,128)}', space=vmem, size = 0x12000, scoped, tag = 'internal scratch']
  #allocation2 [shape = 'bf16[10,34,128]{2,1,0:T(8,128)(2,1)}', space=vmem, size = 0x19000, scoped, tag = 'scratch operand']
  %s0 = inlined_call_operand.vmem [shape: bf16[2,34,34,128], index: 0, kind: input, shape index: {}]
  %s1 = inlined_call_operand.vmem [shape: bf16[3,384,128], index: 1, kind: input, shape index: {}]
  %s2 = inlined_call_operand.vmem [shape: f32[1,128], index: 2, kind: input, shape index: {}]
  %s3 = inlined_call_operand.vmem [shape: bf16[3,384,128], index: 3, kind: input, shape index: {}]
  %s4 = inlined_call_operand.vmem [shape: f32[1,128], index: 4, kind: input, shape index: {}]
  %s5 = inlined_call_operand.vmem [shape: bf16[128,128], index: 5, kind: input, shape index: {}]
  %s6 = inlined_call_operand.vmem [shape: f32[1,128], index: 6, kind: input, shape index: {}]
  %s7 = inlined_call_operand.vmem [shape: bf16[2,32,32,128], index: 7, kind: output, shape index: {}]
  %s8 = sld [smem:[#allocation0]]
  $region69: #{basic_block_forward.1} parent=0
    _
  %s10 = ssub.s32 1, %s8
  %s11 = scalar_select 0, %s10, %s8
  loop: start=0, step=1, limit=10
  $region2: #{basic_block_forward.1} parent=0 // loop_pre_header
    _
  $region3: #{basic_block_forward.1} parent=0 // loop_header
    %s13 = sphi 0, %s17
    %p14 = scmp.ge.s32.totalorder %s13, 10
    %s20 = sphi 0, %s32
    %s21 = sphi 0, %s28
    %s22 = sphi 0, %s20
    %s23 = sphi 0, %s21
    %s24 = sphi 0, %s22
    %s25 = sphi 0, %s23
    %s35 = sphi 0, %s37
    %s38 = sphi 0, %s35
    %s39 = sphi 0, %s38
    %s55 = sphi 0, %s39
    %s59 = sphi 0, %s59
    %s61 = sphi 0, %s59
    %s62 = sphi 0, %s61
    %s76 = sphi 0, %s62
    %s80 = sphi 0, %s80
    %s82 = sphi 0, %s80
    %s83 = sphi 0, %s82
    %s97 = sphi 0, %s83
    %s101 = sphi 0, %s101
    %s103 = sphi 0, %s101
    %s104 = sphi 0, %s103
    %s118 = sphi 0, %s104
    %s122 = sphi 0, %s122
    %s124 = sphi 0, %s122
    %s125 = sphi 0, %s124
    %s139 = sphi 0, %s125
    %s143 = sphi 0, %s143
    %s145 = sphi 0, %s143
    %s146 = sphi 0, %s145
    %s160 = sphi 0, %s146
    %s164 = sphi 0, %s164
    %s166 = sphi 0, %s164
    %s167 = sphi 0, %s166
    %s181 = sphi 0, %s167
    %s189 = sphi 0, %s191
    %s192 = sphi 0, %s189
    %s193 = sphi 0, %s192
    %s209 = sphi 0, %s193
  $region4: #{basic_block_forward.1} parent=0 // loop_header_branch
    %16 = sbr.rel (%p14) target = $region8
  $region5: #{basic_block_forward.1} parent=0 // loop_body
    %s18 = ssub.s32 %s13, 1
    %s19 = ssub.s32 %s13, 2
    %s26 = sadd.s32 1, %s21
    %p27 = scmp.ge.s32.totalorder %s26, 4
    %s28 = scalar_select %p27, 0, %s26
    %s29 = sadd.s32 1, %s20
    %s30 = scalar_select %p27, %s29, %s20
    %p31 = scmp.ge.s32.totalorder %s30, 2
    %s32 = scalar_select %p31, 0, %s30
    %s33 = ssub.s32 %s20, %s32
    %p34 = scmp.eq.s32.totalorder %s33, 0
    %s36 = sadd.s32 %s35, 1
    %s37 = scalar_select %p34, %s35, %s36
    %p40 = pneg %p34
    %p41 = scmp.eq.s32.totalorder %s13, 7
    %p42 = por %p40, %p41
    %p43 = scmp.ne.s32.totalorder %s35, %s38
    %p44 = scmp.eq.s32.totalorder %s13, 0
    %p45 = por %p43, %p44
    %p46 = scmp.ne.s32.totalorder %s35, %s38
    %p47 = scmp.eq.s32.totalorder %s18, 7
    %p48 = por %p46, %p47
    %p49 = scmp.ne.s32.totalorder %s38, %s39
    %p50 = scmp.eq.s32.totalorder %s18, 0
    %p51 = por %p49, %p50
    %p52 = scmp.ne.s32.totalorder %s38, %s39
    %p53 = scmp.eq.s32.totalorder %s19, 7
    %p54 = por %p52, %p53
    %p56 = scmp.ne.s32.totalorder %s39, %s55
    %p57 = scmp.eq.s32.totalorder %s19, 0
    %p58 = por %p56, %p57
    %s60 = sadd.s32 %s59, 1
    %p63 = scmp.eq.s32.totalorder %s13, 7
    %p64 = scmp.ne.s32.totalorder %s59, %s61
    %p65 = scmp.eq.s32.totalorder %s13, 0
    %p66 = por %p64, %p65
    %p67 = scmp.ne.s32.totalorder %s59, %s61
    %p68 = scmp.eq.s32.totalorder %s18, 7
    %p69 = por %p67, %p68
    %p70 = scmp.ne.s32.totalorder %s61, %s62
    %p71 = scmp.eq.s32.totalorder %s18, 0
    %p72 = por %p70, %p71
    %p73 = scmp.ne.s32.totalorder %s61, %s62
    %p74 = scmp.eq.s32.totalorder %s19, 7
    %p75 = por %p73, %p74
    %p77 = scmp.ne.s32.totalorder %s62, %s76
    %p78 = scmp.eq.s32.totalorder %s19, 0
    %p79 = por %p77, %p78
    %s81 = sadd.s32 %s80, 1
    %p84 = scmp.eq.s32.totalorder %s13, 7
    %p85 = scmp.ne.s32.totalorder %s80, %s82
    %p86 = scmp.eq.s32.totalorder %s13, 0
    %p87 = por %p85, %p86
    %p88 = scmp.ne.s32.totalorder %s80, %s82
    %p89 = scmp.eq.s32.totalorder %s18, 7
    %p90 = por %p88, %p89
    %p91 = scmp.ne.s32.totalorder %s82, %s83
    %p92 = scmp.eq.s32.totalorder %s18, 0
    %p93 = por %p91, %p92
    %p94 = scmp.ne.s32.totalorder %s82, %s83
    %p95 = scmp.eq.s32.totalorder %s19, 7
    %p96 = por %p94, %p95
    %p98 = scmp.ne.s32.totalorder %s83, %s97
    %p99 = scmp.eq.s32.totalorder %s19, 0
    %p100 = por %p98, %p99
    %s102 = sadd.s32 %s101, 1
    %p105 = scmp.eq.s32.totalorder %s13, 7
    %p106 = scmp.ne.s32.totalorder %s101, %s103
    %p107 = scmp.eq.s32.totalorder %s13, 0
    %p108 = por %p106, %p107
    %p109 = scmp.ne.s32.totalorder %s101, %s103
    %p110 = scmp.eq.s32.totalorder %s18, 7
    %p111 = por %p109, %p110
    %p112 = scmp.ne.s32.totalorder %s103, %s104
    %p113 = scmp.eq.s32.totalorder %s18, 0
    %p114 = por %p112, %p113
    %p115 = scmp.ne.s32.totalorder %s103, %s104
    %p116 = scmp.eq.s32.totalorder %s19, 7
    %p117 = por %p115, %p116
    %p119 = scmp.ne.s32.totalorder %s104, %s118
    %p120 = scmp.eq.s32.totalorder %s19, 0
    %p121 = por %p119, %p120
    %s123 = sadd.s32 %s122, 1
    %p126 = scmp.eq.s32.totalorder %s13, 7
    %p127 = scmp.ne.s32.totalorder %s122, %s124
    %p128 = scmp.eq.s32.totalorder %s13, 0
    %p129 = por %p127, %p128
    %p130 = scmp.ne.s32.totalorder %s122, %s124
    %p131 = scmp.eq.s32.totalorder %s18, 7
    %p132 = por %p130, %p131
    %p133 = scmp.ne.s32.totalorder %s124, %s125
    %p134 = scmp.eq.s32.totalorder %s18, 0
    %p135 = por %p133, %p134
    %p136 = scmp.ne.s32.totalorder %s124, %s125
    %p137 = scmp.eq.s32.totalorder %s19, 7
    %p138 = por %p136, %p137
    %p140 = scmp.ne.s32.totalorder %s125, %s139
    %p141 = scmp.eq.s32.totalorder %s19, 0
    %p142 = por %p140, %p141
    %s144 = sadd.s32 %s143, 1
    %p147 = scmp.eq.s32.totalorder %s13, 7
    %p148 = scmp.ne.s32.totalorder %s143, %s145
    %p149 = scmp.eq.s32.totalorder %s13, 0
    %p150 = por %p148, %p149
    %p151 = scmp.ne.s32.totalorder %s143, %s145
    %p152 = scmp.eq.s32.totalorder %s18, 7
    %p153 = por %p151, %p152
    %p154 = scmp.ne.s32.totalorder %s145, %s146
    %p155 = scmp.eq.s32.totalorder %s18, 0
    %p156 = por %p154, %p155
    %p157 = scmp.ne.s32.totalorder %s145, %s146
    %p158 = scmp.eq.s32.totalorder %s19, 7
    %p159 = por %p157, %p158
    %p161 = scmp.ne.s32.totalorder %s146, %s160
    %p162 = scmp.eq.s32.totalorder %s19, 0
    %p163 = por %p161, %p162
    %s165 = sadd.s32 %s164, 1
    %p168 = scmp.eq.s32.totalorder %s13, 7
    %p169 = scmp.ne.s32.totalorder %s164, %s166
    %p170 = scmp.eq.s32.totalorder %s13, 0
    %p171 = por %p169, %p170
    %p172 = scmp.ne.s32.totalorder %s164, %s166
    %p173 = scmp.eq.s32.totalorder %s18, 7
    %p174 = por %p172, %p173
    %p175 = scmp.ne.s32.totalorder %s166, %s167
    %p176 = scmp.eq.s32.totalorder %s18, 0
    %p177 = por %p175, %p176
    %p178 = scmp.ne.s32.totalorder %s166, %s167
    %p179 = scmp.eq.s32.totalorder %s19, 7
    %p180 = por %p178, %p179
    %p182 = scmp.ne.s32.totalorder %s167, %s181
    %p183 = scmp.eq.s32.totalorder %s19, 0
    %p184 = por %p182, %p183
    %s185 = ssub.s32 %s20, %s32
    %s186 = ssub.s32 %s21, %s28
    %s187 = sor.u32 %s185, %s186
    %p188 = scmp.eq.s32.totalorder %s187, 0
    %s190 = sadd.s32 %s189, 1
    %s191 = scalar_select %p188, %s189, %s190
    %p194 = pneg %p188
    %p195 = scmp.eq.s32.totalorder %s13, 7
    %p196 = por %p194, %p195
    %p197 = scmp.ne.s32.totalorder %s189, %s192
    %p198 = scmp.eq.s32.totalorder %s13, 0
    %p199 = por %p197, %p198
    %p200 = scmp.ne.s32.totalorder %s189, %s192
    %p201 = scmp.eq.s32.totalorder %s18, 7
    %p202 = por %p200, %p201
    %p203 = scmp.ne.s32.totalorder %s192, %s193
    %p204 = scmp.eq.s32.totalorder %s18, 0
    %p205 = por %p203, %p204
    %p206 = scmp.ne.s32.totalorder %s192, %s193
    %p207 = scmp.eq.s32.totalorder %s19, 7
    %p208 = por %p206, %p207
    %p210 = scmp.ne.s32.totalorder %s193, %s209
    %p211 = scmp.eq.s32.totalorder %s19, 0
    %p212 = por %p210, %p211
    %p213 = scmp.le.s32.totalorder 1, %s13
    %p214 = scmp.lt.s32.totalorder %s13, 9
    %p215 = pnand %p213, %p214
    %p216 = pneg %p215
    // Predicated region
    $region9: #{basic_block_forward.1} parent=5 // pred_check
      _
    $region10: #{basic_block_forward.1} parent=5 // pred_check_branch
      %218 = sbr.rel (%p215) target = $region12
    $region11: #{basic_block_forward.1} parent=5 // pred_region
      %s219 = ssub.s32 %s13, 1
      // Predicated region
      $region13: #{basic_block_forward.1} parent=11 // pred_check
        %p220 = pneg %p72
      $region14: #{basic_block_forward.1} parent=11 // pred_check_branch
        %222 = sbr.rel (%p220) target = $region16
      $region15: #{basic_block_forward.1} parent=11 // pred_region
        _
      $region16: #{basic_block_forward.1} parent=11 // pred_fallthru
        _
      // Predicated region
      $region17: #{basic_block_forward.1} parent=11 // pred_check
        %p223 = pneg %p93
      $region18: #{basic_block_forward.1} parent=11 // pred_check_branch
        %225 = sbr.rel (%p223) target = $region20
      $region19: #{basic_block_forward.1} parent=11 // pred_region
        _
      $region20: #{basic_block_forward.1} parent=11 // pred_fallthru
        _
      // Predicated region
      $region21: #{basic_block_forward.1} parent=11 // pred_check
        %p226 = pneg %p114
      $region22: #{basic_block_forward.1} parent=11 // pred_check_branch
        %228 = sbr.rel (%p226) target = $region24
      $region23: #{basic_block_forward.1} parent=11 // pred_region
        _
      $region24: #{basic_block_forward.1} parent=11 // pred_fallthru
        _
      // Predicated region
      $region25: #{basic_block_forward.1} parent=11 // pred_check
        %p229 = pneg %p135
      $region26: #{basic_block_forward.1} parent=11 // pred_check_branch
        %231 = sbr.rel (%p229) target = $region28
      $region27: #{basic_block_forward.1} parent=11 // pred_region
        _
      $region28: #{basic_block_forward.1} parent=11 // pred_fallthru
        _
      // Predicated region
      $region29: #{basic_block_forward.1} parent=11 // pred_check
        %p232 = pneg %p156
      $region30: #{basic_block_forward.1} parent=11 // pred_check_branch
        %234 = sbr.rel (%p232) target = $region32
      $region31: #{basic_block_forward.1} parent=11 // pred_region
        _
      $region32: #{basic_block_forward.1} parent=11 // pred_fallthru
        _
      // Predicated region
      $region33: #{basic_block_forward.1} parent=11 // pred_check
        %p235 = pneg %p177
      $region34: #{basic_block_forward.1} parent=11 // pred_check_branch
        %237 = sbr.rel (%p235) target = $region36
      $region35: #{basic_block_forward.1} parent=11 // pred_region
        _
      $region36: #{basic_block_forward.1} parent=11 // pred_fallthru
        _
    $region12: #{basic_block_forward.1} parent=5 // pred_fallthru
      _
    %p238 = scmp.lt.s32.totalorder %s13, 8
    // Predicated region
    $region37: #{basic_block_forward.1} parent=5 // pred_check
      %p239 = pneg %p238
    $region38: #{basic_block_forward.1} parent=5 // pred_check_branch
      %241 = sbr.rel (%p239) target = $region40
    $region39: #{basic_block_forward.1} parent=5 // pred_region
      // Predicated region
      $region41: #{basic_block_forward.1} parent=39 // pred_check
        %p242 = pneg %p45
      $region42: #{basic_block_forward.1} parent=39 // pred_check_branch
        %244 = sbr.rel (%p242) target = $region44
      $region43: #{basic_block_forward.1} parent=39 // pred_region
        %p245 = scmp.lt.s32.totalorder %s20, 1
        %s246 = scalar_select %p245, %s20, 1
        %s247 = smul.addr %s246, 170
        %s248 = smul.addr %s247, 4
        %s249 = scalar_lea.vmem %s0, %s248
      $region44: #{basic_block_forward.1} parent=39 // pred_fallthru
        _
    $region40: #{basic_block_forward.1} parent=5 // pred_fallthru
      _
    %p250 = scmp.le.s32.totalorder 1, %s13
    %p251 = scmp.lt.s32.totalorder %s13, 9
    %p252 = pnand %p250, %p251
    %p253 = pneg %p252
    // Predicated region
    $region45: #{basic_block_forward.1} parent=5 // pred_check
      _
    $region46: #{basic_block_forward.1} parent=5 // pred_check_branch
      %255 = sbr.rel (%p252) target = $region48
    $region47: #{basic_block_forward.1} parent=5 // pred_region
      %s256 = ssub.s32 %s13, 1
      %p257 = scmp.lt.s32.totalorder %s22, 1
      %s258 = scalar_select %p257, %s22, 1
      %s259 = smul.addr %s258, 170
      %s260 = smul.addr %s259, 4
      %s261 = scalar_lea.vmem %s0, %s260
      %p262 = pneg %p51
      %p263 = pneg %p48
      %p264 = pneg %p72
      %p265 = pneg %p69
      %p266 = pneg %p93
      %p267 = pneg %p90
      %p268 = pneg %p114
      %p269 = pneg %p111
      %p270 = pneg %p135
      %p271 = pneg %p132
      %p272 = pneg %p156
      %p273 = pneg %p153
      %p274 = pneg %p177
      %p275 = pneg %p174
      %p276 = pneg %p205
      %p277 = pneg %p202
      %s278 = smul.u32 8, %s23
      %p279 = scmp.lt.s32.totalorder %s22, 1
      %s280 = scalar_select %p279, %s22, 1
      %p281 = scmp.lt.s32.totalorder %s278, 31
      %s282 = scalar_select %p281, %s278, 31
      %s283 = smul.addr %s282, 4
      %s284 = smul.addr %s280, 128
      %s285 = sadd.s32 %s283, %s284
      %s286 = smul.addr %s285, 4
      %s287 = scalar_lea.vmem %s7, %s286
      %p288 = scmp.lt.s32.totalorder %s22, 1
      %s289 = scalar_select %p288, %s22, 1
      %s290 = smul.addr %s289, 170
      %s291 = smul.addr %s290, 4
      %s292 = scalar_lea.vmem %s0, %s291
      %s293 = smul.u32 8, %s23
      %p294 = scmp.lt.s32.totalorder %s22, 1
      %s295 = scalar_select %p294, %s22, 1
      %p296 = scmp.lt.s32.totalorder %s293, 31
      %s297 = scalar_select %p296, %s293, 31
      %s298 = smul.addr %s297, 4
      %s299 = smul.addr %s295, 128
      %s300 = sadd.s32 %s298, %s299
      %s301 = smul.addr %s300, 4
      %s302 = scalar_lea.vmem %s7, %s301
      %s303 = smul.u32 8, %s23
      %s305 = smul.u32 %s23, 8
      %306 = vst [vmem:[#allocation2] sm:$0xf] 0
      %307 = vst [vmem:[#allocation2 + $0x4] sm:$0xf] 0
      %308 = vst [vmem:[#allocation2 + $0x8] sm:$0xf] 0
      %309 = vst [vmem:[#allocation2 + $0xc] sm:$0xf] 0
      %310 = vst [vmem:[#allocation2 + $0x10] sm:$0x1] 0
      %311 = vst [vmem:[#allocation2 + $0x14] sm:$0xf] 0
      %312 = vst [vmem:[#allocation2 + $0x18] sm:$0xf] 0
      %313 = vst [vmem:[#allocation2 + $0x1c] sm:$0xf] 0
      %314 = vst [vmem:[#allocation2 + $0x20] sm:$0xf] 0
      %315 = vst [vmem:[#allocation2 + $0x24] sm:$0x1] 0
      %316 = vst [vmem:[#allocation2 + $0x28] sm:$0xf] 0
      %317 = vst [vmem:[#allocation2 + $0x2c] sm:$0xf] 0
      %318 = vst [vmem:[#allocation2 + $0x30] sm:$0xf] 0
      %319 = vst [vmem:[#allocation2 + $0x34] sm:$0xf] 0
      %320 = vst [vmem:[#allocation2 + $0x38] sm:$0x1] 0
      %321 = vst [vmem:[#allocation2 + $0x3c] sm:$0xf] 0
      %322 = vst [vmem:[#allocation2 + $0x40] sm:$0xf] 0
      %323 = vst [vmem:[#allocation2 + $0x44] sm:$0xf] 0
      %324 = vst [vmem:[#allocation2 + $0x48] sm:$0xf] 0
      %325 = vst [vmem:[#allocation2 + $0x4c] sm:$0x1] 0
      %326 = vst [vmem:[#allocation2 + $0x50] sm:$0xf] 0
      %327 = vst [vmem:[#allocation2 + $0x54] sm:$0xf] 0
      %328 = vst [vmem:[#allocation2 + $0x58] sm:$0xf] 0
      %329 = vst [vmem:[#allocation2 + $0x5c] sm:$0xf] 0
      %330 = vst [vmem:[#allocation2 + $0x60] sm:$0x1] 0
      %331 = vst [vmem:[#allocation2 + $0x64] sm:$0xf] 0
      %332 = vst [vmem:[#allocation2 + $0x68] sm:$0xf] 0
      %333 = vst [vmem:[#allocation2 + $0x6c] sm:$0xf] 0
      %334 = vst [vmem:[#allocation2 + $0x70] sm:$0xf] 0
      %335 = vst [vmem:[#allocation2 + $0x74] sm:$0x1] 0
      %336 = vst [vmem:[#allocation2 + $0x78] sm:$0xf] 0
      %337 = vst [vmem:[#allocation2 + $0x7c] sm:$0xf] 0
      %338 = vst [vmem:[#allocation2 + $0x80] sm:$0xf] 0
      %339 = vst [vmem:[#allocation2 + $0x84] sm:$0xf] 0
      %340 = vst [vmem:[#allocation2 + $0x88] sm:$0x1] 0
      %341 = vst [vmem:[#allocation2 + $0x8c] sm:$0xf] 0
      %342 = vst [vmem:[#allocation2 + $0x90] sm:$0xf] 0
      %343 = vst [vmem:[#allocation2 + $0x94] sm:$0xf] 0
      %344 = vst [vmem:[#allocation2 + $0x98] sm:$0xf] 0
      %345 = vst [vmem:[#allocation2 + $0x9c] sm:$0x1] 0
      %346 = vst [vmem:[#allocation2 + $0xa0] sm:$0xf] 0
      %347 = vst [vmem:[#allocation2 + $0xa4] sm:$0xf] 0
      %348 = vst [vmem:[#allocation2 + $0xa8] sm:$0xf] 0
      %349 = vst [vmem:[#allocation2 + $0xac] sm:$0xf] 0
      %350 = vst [vmem:[#allocation2 + $0xb0] sm:$0x1] 0
      %351 = vst [vmem:[#allocation2 + $0xb4] sm:$0xf] 0
      %352 = vst [vmem:[#allocation2 + $0xb8] sm:$0xf] 0
      %353 = vst [vmem:[#allocation2 + $0xbc] sm:$0xf] 0
      %354 = vst [vmem:[#allocation2 + $0xc0] sm:$0xf] 0
      %355 = vst [vmem:[#allocation2 + $0xc4] sm:$0x1] 0
      %s356 = smul.u32 %s305, 5
      %s357 = smul.addr %s356, 4
      %s358 = scalar_lea.vmem %s292, %s357
      %v359 = vld [vmem:[%s358] sm:$0xf]
      %v360 = vld [vmem:[%s358 + $0x4] sm:$0xf]
      %v361 = vld [vmem:[%s358 + $0x8] sm:$0xf]
      %v362 = vld [vmem:[%s358 + $0xc] sm:$0xf]
      %v363 = vld [vmem:[%s358 + $0x14] sm:$0xf]
      %v364 = vld [vmem:[%s358 + $0x18] sm:$0xf]
      %v365 = vld [vmem:[%s358 + $0x1c] sm:$0xf]
      %v366 = vld [vmem:[%s358 + $0x20] sm:$0xf]
      %v367 = vld [vmem:[%s358 + $0x28] sm:$0xf]
      %v368 = vld [vmem:[%s358 + $0x2c] sm:$0xf]
      %v369 = vld [vmem:[%s358 + $0x30] sm:$0xf]
      %v370 = vld [vmem:[%s358 + $0x34] sm:$0xf]
      %v371 = vld [vmem:[%s358 + $0x3c] sm:$0xf]
      %v372 = vld [vmem:[%s358 + $0x40] sm:$0xf]
      %v373 = vld [vmem:[%s358 + $0x44] sm:$0xf]
      %v374 = vld [vmem:[%s358 + $0x48] sm:$0xf]
      %v375 = vld [vmem:[%s358 + $0x50] sm:$0xf]
      %v376 = vld [vmem:[%s358 + $0x54] sm:$0xf]
      %v377 = vld [vmem:[%s358 + $0x58] sm:$0xf]
      %v378 = vld [vmem:[%s358 + $0x5c] sm:$0xf]
      %v379 = vld [vmem:[%s358 + $0x64] sm:$0xf]
      %v380 = vld [vmem:[%s358 + $0x68] sm:$0xf]
      %v381 = vld [vmem:[%s358 + $0x6c] sm:$0xf]
      %v382 = vld [vmem:[%s358 + $0x70] sm:$0xf]
      %v383 = vld [vmem:[%s358 + $0x78] sm:$0xf]
      %v384 = vld [vmem:[%s358 + $0x7c] sm:$0xf]
      %v385 = vld [vmem:[%s358 + $0x80] sm:$0xf]
      %v386 = vld [vmem:[%s358 + $0x84] sm:$0xf]
      %v387 = vld [vmem:[%s358 + $0x8c] sm:$0xf]
      %v388 = vld [vmem:[%s358 + $0x90] sm:$0xf]
      %v389 = vld [vmem:[%s358 + $0x94] sm:$0xf]
      %v390 = vld [vmem:[%s358 + $0x98] sm:$0xf]
      %v391 = vld [vmem:[%s358 + $0x10] sm:$0x1]
      %v392 = vld [vmem:[%s358 + $0x24] sm:$0x1]
      %v393 = vld [vmem:[%s358 + $0x38] sm:$0x1]
      %v394 = vld [vmem:[%s358 + $0x4c] sm:$0x1]
      %v395 = vld [vmem:[%s358 + $0x60] sm:$0x1]
      %v396 = vld [vmem:[%s358 + $0x74] sm:$0x1]
      %v397 = vld [vmem:[%s358 + $0x88] sm:$0x1]
      %v398 = vld [vmem:[%s358 + $0x9c] sm:$0x1]
      %vm399 = vsmask.f32 3328
      %vm400 = vsmask.f32 7440
      %vm401 = vmor %vm399, %vm400
      %v403 = vshrl.u32 %v359, 16
      %v405 = vrot.slane %v403, 4
      %v406 = vshll.u32 %v359, 16
      %v408 = vrot.slane %v406, 5
      %v409 = vor.u32 %v405, %v408
      %v410 = vrot.slane %v409, 4
      %v412 = vshll.u32 %v360, 16
      %v414 = vrot.slane %v412, 5
      %v415 = vsel %vm401, %v410, %v414
      %v416 = vshrl.u32 %v360, 16
      %v418 = vrot.slane %v416, 4
      %v419 = vor.u32 %v418, %v414
      %v420 = vrot.slane %v419, 4
      %v422 = vshll.u32 %v361, 16
      %v424 = vrot.slane %v422, 5
      %v425 = vsel %vm401, %v420, %v424
      %v426 = vshrl.u32 %v361, 16
      %v428 = vrot.slane %v426, 4
      %v429 = vor.u32 %v428, %v424
      %v430 = vrot.slane %v429, 4
      %v432 = vshll.u32 %v362, 16
      %v434 = vrot.slane %v432, 5
      %v435 = vsel %vm401, %v430, %v434
      %v436 = vshrl.u32 %v362, 16
      %v438 = vrot.slane %v436, 4
      %v439 = vor.u32 %v438, %v434
      %v440 = vrot.slane %v439, 4
      %v442 = vshll.u32 %v391, 16
      %v444 = vrot.slane %v442, 5
      %v445 = vsel %vm401, %v440, %v444
      %v447 = vshrl.u32 %v363, 16
      %v449 = vrot.slane %v447, 4
      %v450 = vshll.u32 %v363, 16
      %v452 = vrot.slane %v450, 5
      %v453 = vor.u32 %v449, %v452
      %v454 = vrot.slane %v453, 4
      %v456 = vshll.u32 %v364, 16
      %v458 = vrot.slane %v456, 5
      %v459 = vsel %vm401, %v454, %v458
      %v460 = vshrl.u32 %v364, 16
      %v462 = vrot.slane %v460, 4
      %v463 = vor.u32 %v462, %v458
      %v464 = vrot.slane %v463, 4
      %v466 = vshll.u32 %v365, 16
      %v468 = vrot.slane %v466, 5
      %v469 = vsel %vm401, %v464, %v468
      %v470 = vshrl.u32 %v365, 16
      %v472 = vrot.slane %v470, 4
      %v473 = vor.u32 %v472, %v468
      %v474 = vrot.slane %v473, 4
      %v476 = vshll.u32 %v366, 16
      %v478 = vrot.slane %v476, 5
      %v479 = vsel %vm401, %v474, %v478
      %v480 = vshrl.u32 %v366, 16
      %v482 = vrot.slane %v480, 4
      %v483 = vor.u32 %v482, %v478
      %v484 = vrot.slane %v483, 4
      %v486 = vshll.u32 %v392, 16
      %v488 = vrot.slane %v486, 5
      %v489 = vsel %vm401, %v484, %v488
      %v491 = vshrl.u32 %v367, 16
      %v493 = vrot.slane %v491, 4
      %v494 = vshll.u32 %v367, 16
      %v496 = vrot.slane %v494, 5
      %v497 = vor.u32 %v493, %v496
      %v498 = vrot.slane %v497, 4
      %v500 = vshll.u32 %v368, 16
      %v502 = vrot.slane %v500, 5
      %v503 = vsel %vm401, %v498, %v502
      %v504 = vshrl.u32 %v368, 16
      %v506 = vrot.slane %v504, 4
      %v507 = vor.u32 %v506, %v502
      %v508 = vrot.slane %v507, 4
      %v510 = vshll.u32 %v369, 16
      %v512 = vrot.slane %v510, 5
      %v513 = vsel %vm401, %v508, %v512
      %v514 = vshrl.u32 %v369, 16
      %v516 = vrot.slane %v514, 4
      %v517 = vor.u32 %v516, %v512
      %v518 = vrot.slane %v517, 4
      %v520 = vshll.u32 %v370, 16
      %v522 = vrot.slane %v520, 5
      %v523 = vsel %vm401, %v518, %v522
      %v524 = vshrl.u32 %v370, 16
      %v526 = vrot.slane %v524, 4
      %v527 = vor.u32 %v526, %v522
      %v528 = vrot.slane %v527, 4
      %v530 = vshll.u32 %v393, 16
      %v532 = vrot.slane %v530, 5
      %v533 = vsel %vm401, %v528, %v532
      %v535 = vshrl.u32 %v371, 16
      %v537 = vrot.slane %v535, 4
      %v538 = vshll.u32 %v371, 16
      %v540 = vrot.slane %v538, 5
      %v541 = vor.u32 %v537, %v540
      %v542 = vrot.slane %v541, 4
      %v544 = vshll.u32 %v372, 16
      %v546 = vrot.slane %v544, 5
      %v547 = vsel %vm401, %v542, %v546
      %v548 = vshrl.u32 %v372, 16
      %v550 = vrot.slane %v548, 4
      %v551 = vor.u32 %v550, %v546
      %v552 = vrot.slane %v551, 4
      %v554 = vshll.u32 %v373, 16
      %v556 = vrot.slane %v554, 5
      %v557 = vsel %vm401, %v552, %v556
      %v558 = vshrl.u32 %v373, 16
      %v560 = vrot.slane %v558, 4
      %v561 = vor.u32 %v560, %v556
      %v562 = vrot.slane %v561, 4
      %v564 = vshll.u32 %v374, 16
      %v566 = vrot.slane %v564, 5
      %v567 = vsel %vm401, %v562, %v566
      %v568 = vshrl.u32 %v374, 16
      %v570 = vrot.slane %v568, 4
      %v571 = vor.u32 %v570, %v566
      %v572 = vrot.slane %v571, 4
      %v574 = vshll.u32 %v394, 16
      %v576 = vrot.slane %v574, 5
      %v577 = vsel %vm401, %v572, %v576
      %v579 = vshrl.u32 %v375, 16
      %v581 = vrot.slane %v579, 4
      %v582 = vshll.u32 %v375, 16
      %v584 = vrot.slane %v582, 5
      %v585 = vor.u32 %v581, %v584
      %v586 = vrot.slane %v585, 4
      %v588 = vshll.u32 %v376, 16
      %v590 = vrot.slane %v588, 5
      %v591 = vsel %vm401, %v586, %v590
      %v592 = vshrl.u32 %v376, 16
      %v594 = vrot.slane %v592, 4
      %v595 = vor.u32 %v594, %v590
      %v596 = vrot.slane %v595, 4
      %v598 = vshll.u32 %v377, 16
      %v600 = vrot.slane %v598, 5
      %v601 = vsel %vm401, %v596, %v600
      %v602 = vshrl.u32 %v377, 16
      %v604 = vrot.slane %v602, 4
      %v605 = vor.u32 %v604, %v600
      %v606 = vrot.slane %v605, 4
      %v608 = vshll.u32 %v378, 16
      %v610 = vrot.slane %v608, 5
      %v611 = vsel %vm401, %v606, %v610
      %v612 = vshrl.u32 %v378, 16
      %v614 = vrot.slane %v612, 4
      %v615 = vor.u32 %v614, %v610
      %v616 = vrot.slane %v615, 4
      %v618 = vshll.u32 %v395, 16
      %v620 = vrot.slane %v618, 5
      %v621 = vsel %vm401, %v616, %v620
      %v623 = vshrl.u32 %v379, 16
      %v625 = vrot.slane %v623, 4
      %v626 = vshll.u32 %v379, 16
      %v628 = vrot.slane %v626, 5
      %v629 = vor.u32 %v625, %v628
      %v630 = vrot.slane %v629, 4
      %v632 = vshll.u32 %v380, 16
      %v634 = vrot.slane %v632, 5
      %v635 = vsel %vm401, %v630, %v634
      %v636 = vshrl.u32 %v380, 16
      %v638 = vrot.slane %v636, 4
      %v639 = vor.u32 %v638, %v634
      %v640 = vrot.slane %v639, 4
      %v642 = vshll.u32 %v381, 16
      %v644 = vrot.slane %v642, 5
      %v645 = vsel %vm401, %v640, %v644
      %v646 = vshrl.u32 %v381, 16
      %v648 = vrot.slane %v646, 4
      %v649 = vor.u32 %v648, %v644
      %v650 = vrot.slane %v649, 4
      %v652 = vshll.u32 %v382, 16
      %v654 = vrot.slane %v652, 5
      %v655 = vsel %vm401, %v650, %v654
      %v656 = vshrl.u32 %v382, 16
      %v658 = vrot.slane %v656, 4
      %v659 = vor.u32 %v658, %v654
      %v660 = vrot.slane %v659, 4
      %v662 = vshll.u32 %v396, 16
      %v664 = vrot.slane %v662, 5
      %v665 = vsel %vm401, %v660, %v664
      %v667 = vshrl.u32 %v383, 16
      %v669 = vrot.slane %v667, 4
      %v670 = vshll.u32 %v383, 16
      %v672 = vrot.slane %v670, 5
      %v673 = vor.u32 %v669, %v672
      %v674 = vrot.slane %v673, 4
      %v676 = vshll.u32 %v384, 16
      %v678 = vrot.slane %v676, 5
      %v679 = vsel %vm401, %v674, %v678
      %v680 = vshrl.u32 %v384, 16
      %v682 = vrot.slane %v680, 4
      %v683 = vor.u32 %v682, %v678
      %v684 = vrot.slane %v683, 4
      %v686 = vshll.u32 %v385, 16
      %v688 = vrot.slane %v686, 5
      %v689 = vsel %vm401, %v684, %v688
      %v690 = vshrl.u32 %v385, 16
      %v692 = vrot.slane %v690, 4
      %v693 = vor.u32 %v692, %v688
      %v694 = vrot.slane %v693, 4
      %v696 = vshll.u32 %v386, 16
      %v698 = vrot.slane %v696, 5
      %v699 = vsel %vm401, %v694, %v698
      %v700 = vshrl.u32 %v386, 16
      %v702 = vrot.slane %v700, 4
      %v703 = vor.u32 %v702, %v698
      %v704 = vrot.slane %v703, 4
      %v706 = vshll.u32 %v397, 16
      %v708 = vrot.slane %v706, 5
      %v709 = vsel %vm401, %v704, %v708
      %v711 = vshrl.u32 %v387, 16
      %v713 = vrot.slane %v711, 4
      %v714 = vshll.u32 %v387, 16
      %v716 = vrot.slane %v714, 5
      %v717 = vor.u32 %v713, %v716
      %v718 = vrot.slane %v717, 4
      %v720 = vshll.u32 %v388, 16
      %v722 = vrot.slane %v720, 5
      %v723 = vsel %vm401, %v718, %v722
      %v724 = vshrl.u32 %v388, 16
      %v726 = vrot.slane %v724, 4
      %v727 = vor.u32 %v726, %v722
      %v728 = vrot.slane %v727, 4
      %v730 = vshll.u32 %v389, 16
      %v732 = vrot.slane %v730, 5
      %v733 = vsel %vm401, %v728, %v732
      %v734 = vshrl.u32 %v389, 16
      %v736 = vrot.slane %v734, 4
      %v737 = vor.u32 %v736, %v732
      %v738 = vrot.slane %v737, 4
      %v740 = vshll.u32 %v390, 16
      %v742 = vrot.slane %v740, 5
      %v743 = vsel %vm401, %v738, %v742
      %v744 = vshrl.u32 %v390, 16
      %v746 = vrot.slane %v744, 4
      %v747 = vor.u32 %v746, %v742
      %v748 = vrot.slane %v747, 4
      %v750 = vshll.u32 %v398, 16
      %v752 = vrot.slane %v750, 5
      %v753 = vsel %vm401, %v748, %v752
      %v754 = vld [vmem:[%s358] sm:$0xe]
      %v755 = vld [vmem:[%s358 + $0x14] sm:$0xe]
      %v756 = vld [vmem:[%s358 + $0x28] sm:$0xe]
      %v757 = vld [vmem:[%s358 + $0x3c] sm:$0xe]
      %v758 = vld [vmem:[%s358 + $0x50] sm:$0xe]
      %v759 = vld [vmem:[%s358 + $0x64] sm:$0xe]
      %v760 = vld [vmem:[%s358 + $0x78] sm:$0xe]
      %v761 = vld [vmem:[%s358 + $0x8c] sm:$0xe]
      %vm802 = vcmask 1042432
      %vm803 = vcmask 1046532
      %vm804 = vmor %vm802, %vm803
      %v805 = vrot.slane %v754, 5
      %v806 = vrot.slane %v805, 4
      %v807 = vrot.slane %v360, 5
      %v808 = vsel %vm804, %v806, %v807
      %v809 = vrot.slane %v807, 4
      %v810 = vrot.slane %v361, 5
      %v811 = vsel %vm804, %v809, %v810
      %v812 = vrot.slane %v810, 4
      %v813 = vrot.slane %v362, 5
      %v814 = vsel %vm804, %v812, %v813
      %v815 = vrot.slane %v813, 4
      %v816 = vrot.slane %v391, 5
      %v817 = vsel %vm804, %v815, %v816
      %v818 = vrot.slane %v755, 5
      %v819 = vrot.slane %v818, 4
      %v820 = vrot.slane %v364, 5
      %v821 = vsel %vm804, %v819, %v820
      %v822 = vrot.slane %v820, 4
      %v823 = vrot.slane %v365, 5
      %v824 = vsel %vm804, %v822, %v823
      %v825 = vrot.slane %v823, 4
      %v826 = vrot.slane %v366, 5
      %v827 = vsel %vm804, %v825, %v826
      %v828 = vrot.slane %v826, 4
      %v829 = vrot.slane %v392, 5
      %v830 = vsel %vm804, %v828, %v829
      %v831 = vrot.slane %v756, 5
      %v832 = vrot.slane %v831, 4
      %v833 = vrot.slane %v368, 5
      %v834 = vsel %vm804, %v832, %v833
      %v835 = vrot.slane %v833, 4
      %v836 = vrot.slane %v369, 5
      %v837 = vsel %vm804, %v835, %v836
      %v838 = vrot.slane %v836, 4
      %v839 = vrot.slane %v370, 5
      %v840 = vsel %vm804, %v838, %v839
      %v841 = vrot.slane %v839, 4
      %v842 = vrot.slane %v393, 5
      %v843 = vsel %vm804, %v841, %v842
      %v844 = vrot.slane %v757, 5
      %v845 = vrot.slane %v844, 4
      %v846 = vrot.slane %v372, 5
      %v847 = vsel %vm804, %v845, %v846
      %v848 = vrot.slane %v846, 4
      %v849 = vrot.slane %v373, 5
      %v850 = vsel %vm804, %v848, %v849
      %v851 = vrot.slane %v849, 4
      %v852 = vrot.slane %v374, 5
      %v853 = vsel %vm804, %v851, %v852
      %v854 = vrot.slane %v852, 4
      %v855 = vrot.slane %v394, 5
      %v856 = vsel %vm804, %v854, %v855
      %v857 = vrot.slane %v758, 5
      %v858 = vrot.slane %v857, 4
      %v859 = vrot.slane %v376, 5
      %v860 = vsel %vm804, %v858, %v859
      %v861 = vrot.slane %v859, 4
      %v862 = vrot.slane %v377, 5
      %v863 = vsel %vm804, %v861, %v862
      %v864 = vrot.slane %v862, 4
      %v865 = vrot.slane %v378, 5
      %v866 = vsel %vm804, %v864, %v865
      %v867 = vrot.slane %v865, 4
      %v868 = vrot.slane %v395, 5
      %v869 = vsel %vm804, %v867, %v868
      %v870 = vrot.slane %v759, 5
      %v871 = vrot.slane %v870, 4
      %v872 = vrot.slane %v380, 5
      %v873 = vsel %vm804, %v871, %v872
      %v874 = vrot.slane %v872, 4
      %v875 = vrot.slane %v381, 5
      %v876 = vsel %vm804, %v874, %v875
      %v877 = vrot.slane %v875, 4
      %v878 = vrot.slane %v382, 5
      %v879 = vsel %vm804, %v877, %v878
      %v880 = vrot.slane %v878, 4
      %v881 = vrot.slane %v396, 5
      %v882 = vsel %vm804, %v880, %v881
      %v883 = vrot.slane %v760, 5
      %v884 = vrot.slane %v883, 4
      %v885 = vrot.slane %v384, 5
      %v886 = vsel %vm804, %v884, %v885
      %v887 = vrot.slane %v885, 4
      %v888 = vrot.slane %v385, 5
      %v889 = vsel %vm804, %v887, %v888
      %v890 = vrot.slane %v888, 4
      %v891 = vrot.slane %v386, 5
      %v892 = vsel %vm804, %v890, %v891
      %v893 = vrot.slane %v891, 4
      %v894 = vrot.slane %v397, 5
      %v895 = vsel %vm804, %v893, %v894
      %v896 = vrot.slane %v761, 5
      %v897 = vrot.slane %v896, 4
      %v898 = vrot.slane %v388, 5
      %v899 = vsel %vm804, %v897, %v898
      %v900 = vrot.slane %v898, 4
      %v901 = vrot.slane %v389, 5
      %v902 = vsel %vm804, %v900, %v901
      %v903 = vrot.slane %v901, 4
      %v904 = vrot.slane %v390, 5
      %v905 = vsel %vm804, %v903, %v904
      %v906 = vrot.slane %v904, 4
      %v907 = vrot.slane %v398, 5
      %v908 = vsel %vm804, %v906, %v907
      %v917 = vunpack.c.l.b16 %v359
      %v918 = vunpack.c.l.b16 %v360
      %v919 = vunpack.c.l.b16 %v361
      %v920 = vunpack.c.l.b16 %v362
      %v921 = vunpack.c.l.b16 %v363
      %v922 = vunpack.c.l.b16 %v364
      %v923 = vunpack.c.l.b16 %v365
      %v924 = vunpack.c.l.b16 %v366
      %v925 = vunpack.c.l.b16 %v367
      %v926 = vunpack.c.l.b16 %v368
      %v927 = vunpack.c.l.b16 %v369
      %v928 = vunpack.c.l.b16 %v370
      %v929 = vunpack.c.l.b16 %v371
      %v930 = vunpack.c.l.b16 %v372
      %v931 = vunpack.c.l.b16 %v373
      %v932 = vunpack.c.l.b16 %v374
      %v933 = vunpack.c.l.b16 %v375
      %v934 = vunpack.c.l.b16 %v376
      %v935 = vunpack.c.l.b16 %v377
      %v936 = vunpack.c.l.b16 %v378
      %v937 = vunpack.c.l.b16 %v379
      %v938 = vunpack.c.l.b16 %v380
      %v939 = vunpack.c.l.b16 %v381
      %v940 = vunpack.c.l.b16 %v382
      %v941 = vunpack.c.l.b16 %v383
      %v942 = vunpack.c.l.b16 %v384
      %v943 = vunpack.c.l.b16 %v385
      %v944 = vunpack.c.l.b16 %v386
      %v945 = vunpack.c.l.b16 %v387
      %v946 = vunpack.c.l.b16 %v388
      %v947 = vunpack.c.l.b16 %v389
      %v948 = vunpack.c.l.b16 %v390
      %v949 = vpack.c.b16 %v918, %v917
      %v950 = vpack.c.b16 %v920, %v919
      %v951 = vpack.c.b16 %v922, %v921
      %v952 = vpack.c.b16 %v924, %v923
      %v953 = vpack.c.b16 %v926, %v925
      %v954 = vpack.c.b16 %v928, %v927
      %v955 = vpack.c.b16 %v930, %v929
      %v956 = vpack.c.b16 %v932, %v931
      %v957 = vpack.c.b16 %v934, %v933
      %v958 = vpack.c.b16 %v936, %v935
      %v959 = vpack.c.b16 %v938, %v937
      %v960 = vpack.c.b16 %v940, %v939
      %v961 = vpack.c.b16 %v942, %v941
      %v962 = vpack.c.b16 %v944, %v943
      %v963 = vpack.c.b16 %v946, %v945
      %v964 = vpack.c.b16 %v948, %v947
      %v981 = vunpack.c.l.b16 %v415
      %v982 = vunpack.c.l.b16 %v425
      %v983 = vunpack.c.l.b16 %v435
      %v984 = vunpack.c.l.b16 %v445
      %v985 = vunpack.c.l.b16 %v459
      %v986 = vunpack.c.l.b16 %v469
      %v987 = vunpack.c.l.b16 %v479
      %v988 = vunpack.c.l.b16 %v489
      %v989 = vunpack.c.l.b16 %v503
      %v990 = vunpack.c.l.b16 %v513
      %v991 = vunpack.c.l.b16 %v523
      %v992 = vunpack.c.l.b16 %v533
      %v993 = vunpack.c.l.b16 %v547
      %v994 = vunpack.c.l.b16 %v557
      %v995 = vunpack.c.l.b16 %v567
      %v996 = vunpack.c.l.b16 %v577
      %v997 = vunpack.c.l.b16 %v591
      %v998 = vunpack.c.l.b16 %v601
      %v999 = vunpack.c.l.b16 %v611
      %v1000 = vunpack.c.l.b16 %v621
      %v1001 = vunpack.c.l.b16 %v635
      %v1002 = vunpack.c.l.b16 %v645
      %v1003 = vunpack.c.l.b16 %v655
      %v1004 = vunpack.c.l.b16 %v665
      %v1005 = vunpack.c.l.b16 %v679
      %v1006 = vunpack.c.l.b16 %v689
      %v1007 = vunpack.c.l.b16 %v699
      %v1008 = vunpack.c.l.b16 %v709
      %v1009 = vunpack.c.l.b16 %v723
      %v1010 = vunpack.c.l.b16 %v733
      %v1011 = vunpack.c.l.b16 %v743
      %v1012 = vunpack.c.l.b16 %v753
      %v1013 = vpack.c.b16 %v982, %v981
      %v1014 = vpack.c.b16 %v984, %v983
      %v1015 = vpack.c.b16 %v986, %v985
      %v1016 = vpack.c.b16 %v988, %v987
      %v1017 = vpack.c.b16 %v990, %v989
      %v1018 = vpack.c.b16 %v992, %v991
      %v1019 = vpack.c.b16 %v994, %v993
      %v1020 = vpack.c.b16 %v996, %v995
      %v1021 = vpack.c.b16 %v998, %v997
      %v1022 = vpack.c.b16 %v1000, %v999
      %v1023 = vpack.c.b16 %v1002, %v1001
      %v1024 = vpack.c.b16 %v1004, %v1003
      %v1025 = vpack.c.b16 %v1006, %v1005
      %v1026 = vpack.c.b16 %v1008, %v1007
      %v1027 = vpack.c.b16 %v1010, %v1009
      %v1028 = vpack.c.b16 %v1012, %v1011
      %v1045 = vunpack.c.l.b16 %v808
      %v1046 = vunpack.c.l.b16 %v811
      %v1047 = vunpack.c.l.b16 %v814
      %v1048 = vunpack.c.l.b16 %v817
      %v1049 = vunpack.c.l.b16 %v821
      %v1050 = vunpack.c.l.b16 %v824
      %v1051 = vunpack.c.l.b16 %v827
      %v1052 = vunpack.c.l.b16 %v830
      %v1053 = vunpack.c.l.b16 %v834
      %v1054 = vunpack.c.l.b16 %v837
      %v1055 = vunpack.c.l.b16 %v840
      %v1056 = vunpack.c.l.b16 %v843
      %v1057 = vunpack.c.l.b16 %v847
      %v1058 = vunpack.c.l.b16 %v850
      %v1059 = vunpack.c.l.b16 %v853
      %v1060 = vunpack.c.l.b16 %v856
      %v1061 = vunpack.c.l.b16 %v860
      %v1062 = vunpack.c.l.b16 %v863
      %v1063 = vunpack.c.l.b16 %v866
      %v1064 = vunpack.c.l.b16 %v869
      %v1065 = vunpack.c.l.b16 %v873
      %v1066 = vunpack.c.l.b16 %v876
      %v1067 = vunpack.c.l.b16 %v879
      %v1068 = vunpack.c.l.b16 %v882
      %v1069 = vunpack.c.l.b16 %v886
      %v1070 = vunpack.c.l.b16 %v889
      %v1071 = vunpack.c.l.b16 %v892
      %v1072 = vunpack.c.l.b16 %v895
      %v1073 = vunpack.c.l.b16 %v899
      %v1074 = vunpack.c.l.b16 %v902
      %v1075 = vunpack.c.l.b16 %v905
      %v1076 = vunpack.c.l.b16 %v908
      %v1077 = vpack.c.b16 %v1046, %v1045
      %v1078 = vpack.c.b16 %v1048, %v1047
      %v1079 = vpack.c.b16 %v1050, %v1049
      %v1080 = vpack.c.b16 %v1052, %v1051
      %v1081 = vpack.c.b16 %v1054, %v1053
      %v1082 = vpack.c.b16 %v1056, %v1055
      %v1083 = vpack.c.b16 %v1058, %v1057
      %v1084 = vpack.c.b16 %v1060, %v1059
      %v1085 = vpack.c.b16 %v1062, %v1061
      %v1086 = vpack.c.b16 %v1064, %v1063
      %v1087 = vpack.c.b16 %v1066, %v1065
      %v1088 = vpack.c.b16 %v1068, %v1067
      %v1089 = vpack.c.b16 %v1070, %v1069
      %v1090 = vpack.c.b16 %v1072, %v1071
      %v1091 = vpack.c.b16 %v1074, %v1073
      %v1092 = vpack.c.b16 %v1076, %v1075
      %v1109 = vld [vmem:[%s1] sm:$0xf]
      %v1110 = vld [vmem:[%s1 + $0x4] sm:$0xf]
      %v1111 = vld [vmem:[%s1 + $0x8] sm:$0xf]
      %v1112 = vld [vmem:[%s1 + $0xc] sm:$0xf]
      %v1113 = vld [vmem:[%s1 + $0x10] sm:$0xf]
      %v1114 = vld [vmem:[%s1 + $0x14] sm:$0xf]
      %v1115 = vld [vmem:[%s1 + $0x18] sm:$0xf]
      %v1116 = vld [vmem:[%s1 + $0x1c] sm:$0xf]
      %v1117 = vld [vmem:[%s1 + $0x20] sm:$0xf]
      %v1118 = vld [vmem:[%s1 + $0x24] sm:$0xf]
      %v1119 = vld [vmem:[%s1 + $0x28] sm:$0xf]
      %v1120 = vld [vmem:[%s1 + $0x2c] sm:$0xf]
      %v1121 = vld [vmem:[%s1 + $0x30] sm:$0xf]
      %v1122 = vld [vmem:[%s1 + $0x34] sm:$0xf]
      %v1123 = vld [vmem:[%s1 + $0x38] sm:$0xf]
      %v1124 = vld [vmem:[%s1 + $0x3c] sm:$0xf]
      %v1125 = vld [vmem:[%s1 + $0x40] sm:$0xf]
      %v1126 = vld [vmem:[%s1 + $0x44] sm:$0xf]
      %v1127 = vld [vmem:[%s1 + $0x48] sm:$0xf]
      %v1128 = vld [vmem:[%s1 + $0x4c] sm:$0xf]
      %v1129 = vld [vmem:[%s1 + $0x50] sm:$0xf]
      %v1130 = vld [vmem:[%s1 + $0x54] sm:$0xf]
      %v1131 = vld [vmem:[%s1 + $0x58] sm:$0xf]
      %v1132 = vld [vmem:[%s1 + $0x5c] sm:$0xf]
      %v1133 = vld [vmem:[%s1 + $0x60] sm:$0xf]
      %v1134 = vld [vmem:[%s1 + $0x64] sm:$0xf]
      %v1135 = vld [vmem:[%s1 + $0x68] sm:$0xf]
      %v1136 = vld [vmem:[%s1 + $0x6c] sm:$0xf]
      %v1137 = vld [vmem:[%s1 + $0x70] sm:$0xf]
      %v1138 = vld [vmem:[%s1 + $0x74] sm:$0xf]
      %v1139 = vld [vmem:[%s1 + $0x78] sm:$0xf]
      %v1140 = vld [vmem:[%s1 + $0x7c] sm:$0xf]
      %v1141 = vld [vmem:[%s1 + $0x80] sm:$0xf]
      %v1142 = vld [vmem:[%s1 + $0x84] sm:$0xf]
      %v1143 = vld [vmem:[%s1 + $0x88] sm:$0xf]
      %v1144 = vld [vmem:[%s1 + $0x8c] sm:$0xf]
      %v1145 = vld [vmem:[%s1 + $0x90] sm:$0xf]
      %v1146 = vld [vmem:[%s1 + $0x94] sm:$0xf]
      %v1147 = vld [vmem:[%s1 + $0x98] sm:$0xf]
      %v1148 = vld [vmem:[%s1 + $0x9c] sm:$0xf]
      %v1149 = vld [vmem:[%s1 + $0xa0] sm:$0xf]
      %v1150 = vld [vmem:[%s1 + $0xa4] sm:$0xf]
      %v1151 = vld [vmem:[%s1 + $0xa8] sm:$0xf]
      %v1152 = vld [vmem:[%s1 + $0xac] sm:$0xf]
      %v1153 = vld [vmem:[%s1 + $0xb0] sm:$0xf]
      %v1154 = vld [vmem:[%s1 + $0xb4] sm:$0xf]
      %v1155 = vld [vmem:[%s1 + $0xb8] sm:$0xf]
      %v1156 = vld [vmem:[%s1 + $0xbc] sm:$0xf]
      %s1157 = sadd.s32 %s305, 1
      %s1158 = smul.u32 %s1157, 5
      %s1159 = smul.addr %s1158, 4
      %s1160 = scalar_lea.vmem %s292, %s1159
      %v1161 = vld [vmem:[%s1160] sm:$0xf]
      %v1162 = vld [vmem:[%s1160 + $0x4] sm:$0xf]
      %v1163 = vld [vmem:[%s1160 + $0x8] sm:$0xf]
      %v1164 = vld [vmem:[%s1160 + $0xc] sm:$0xf]
      %v1165 = vld [vmem:[%s1160 + $0x14] sm:$0xf]
      %v1166 = vld [vmem:[%s1160 + $0x18] sm:$0xf]
      %v1167 = vld [vmem:[%s1160 + $0x1c] sm:$0xf]
      %v1168 = vld [vmem:[%s1160 + $0x20] sm:$0xf]
      %v1169 = vld [vmem:[%s1160 + $0x28] sm:$0xf]
      %v1170 = vld [vmem:[%s1160 + $0x2c] sm:$0xf]
      %v1171 = vld [vmem:[%s1160 + $0x30] sm:$0xf]
      %v1172 = vld [vmem:[%s1160 + $0x34] sm:$0xf]
      %v1173 = vld [vmem:[%s1160 + $0x3c] sm:$0xf]
      %v1174 = vld [vmem:[%s1160 + $0x40] sm:$0xf]
      %v1175 = vld [vmem:[%s1160 + $0x44] sm:$0xf]
      %v1176 = vld [vmem:[%s1160 + $0x48] sm:$0xf]
      %v1177 = vld [vmem:[%s1160 + $0x50] sm:$0xf]
      %v1178 = vld [vmem:[%s1160 + $0x54] sm:$0xf]
      %v1179 = vld [vmem:[%s1160 + $0x58] sm:$0xf]
      %v1180 = vld [vmem:[%s1160 + $0x5c] sm:$0xf]
      %v1181 = vld [vmem:[%s1160 + $0x64] sm:$0xf]
      %v1182 = vld [vmem:[%s1160 + $0x68] sm:$0xf]
      %v1183 = vld [vmem:[%s1160 + $0x6c] sm:$0xf]
      %v1184 = vld [vmem:[%s1160 + $0x70] sm:$0xf]
      %v1185 = vld [vmem:[%s1160 + $0x78] sm:$0xf]
      %v1186 = vld [vmem:[%s1160 + $0x7c] sm:$0xf]
      %v1187 = vld [vmem:[%s1160 + $0x80] sm:$0xf]
      %v1188 = vld [vmem:[%s1160 + $0x84] sm:$0xf]
      %v1189 = vld [vmem:[%s1160 + $0x8c] sm:$0xf]
      %v1190 = vld [vmem:[%s1160 + $0x90] sm:$0xf]
      %v1191 = vld [vmem:[%s1160 + $0x94] sm:$0xf]
      %v1192 = vld [vmem:[%s1160 + $0x98] sm:$0xf]
      %v1193 = vld [vmem:[%s1160 + $0x10] sm:$0x1]
      %v1194 = vld [vmem:[%s1160 + $0x24] sm:$0x1]
      %v1195 = vld [vmem:[%s1160 + $0x38] sm:$0x1]
      %v1196 = vld [vmem:[%s1160 + $0x4c] sm:$0x1]
      %v1197 = vld [vmem:[%s1160 + $0x60] sm:$0x1]
      %v1198 = vld [vmem:[%s1160 + $0x74] sm:$0x1]
      %v1199 = vld [vmem:[%s1160 + $0x88] sm:$0x1]
      %v1200 = vld [vmem:[%s1160 + $0x9c] sm:$0x1]
      %v1202 = vshrl.u32 %v1161, 16
      %v1204 = vrot.slane %v1202, 4
      %v1205 = vshll.u32 %v1161, 16
      %v1207 = vrot.slane %v1205, 5
      %v1208 = vor.u32 %v1204, %v1207
      %v1209 = vrot.slane %v1208, 4
      %v1211 = vshll.u32 %v1162, 16
      %v1213 = vrot.slane %v1211, 5
      %v1214 = vsel %vm401, %v1209, %v1213
      %v1215 = vshrl.u32 %v1162, 16
      %v1217 = vrot.slane %v1215, 4
      %v1218 = vor.u32 %v1217, %v1213
      %v1219 = vrot.slane %v1218, 4
      %v1221 = vshll.u32 %v1163, 16
      %v1223 = vrot.slane %v1221, 5
      %v1224 = vsel %vm401, %v1219, %v1223
      %v1225 = vshrl.u32 %v1163, 16
      %v1227 = vrot.slane %v1225, 4
      %v1228 = vor.u32 %v1227, %v1223
      %v1229 = vrot.slane %v1228, 4
      %v1231 = vshll.u32 %v1164, 16
      %v1233 = vrot.slane %v1231, 5
      %v1234 = vsel %vm401, %v1229, %v1233
      %v1235 = vshrl.u32 %v1164, 16
      %v1237 = vrot.slane %v1235, 4
      %v1238 = vor.u32 %v1237, %v1233
      %v1239 = vrot.slane %v1238, 4
      %v1241 = vshll.u32 %v1193, 16
      %v1243 = vrot.slane %v1241, 5
      %v1244 = vsel %vm401, %v1239, %v1243
      %v1246 = vshrl.u32 %v1165, 16
      %v1248 = vrot.slane %v1246, 4
      %v1249 = vshll.u32 %v1165, 16
      %v1251 = vrot.slane %v1249, 5
      %v1252 = vor.u32 %v1248, %v1251
      %v1253 = vrot.slane %v1252, 4
      %v1255 = vshll.u32 %v1166, 16
      %v1257 = vrot.slane %v1255, 5
      %v1258 = vsel %vm401, %v1253, %v1257
      %v1259 = vshrl.u32 %v1166, 16
      %v1261 = vrot.slane %v1259, 4
      %v1262 = vor.u32 %v1261, %v1257
      %v1263 = vrot.slane %v1262, 4
      %v1265 = vshll.u32 %v1167, 16
      %v1267 = vrot.slane %v1265, 5
      %v1268 = vsel %vm401, %v1263, %v1267
      %v1269 = vshrl.u32 %v1167, 16
      %v1271 = vrot.slane %v1269, 4
      %v1272 = vor.u32 %v1271, %v1267
      %v1273 = vrot.slane %v1272, 4
      %v1275 = vshll.u32 %v1168, 16
      %v1277 = vrot.slane %v1275, 5
      %v1278 = vsel %vm401, %v1273, %v1277
      %v1279 = vshrl.u32 %v1168, 16
      %v1281 = vrot.slane %v1279, 4
      %v1282 = vor.u32 %v1281, %v1277
      %v1283 = vrot.slane %v1282, 4
      %v1285 = vshll.u32 %v1194, 16
      %v1287 = vrot.slane %v1285, 5
      %v1288 = vsel %vm401, %v1283, %v1287
      %v1290 = vshrl.u32 %v1169, 16
      %v1292 = vrot.slane %v1290, 4
      %v1293 = vshll.u32 %v1169, 16
      %v1295 = vrot.slane %v1293, 5
      %v1296 = vor.u32 %v1292, %v1295
      %v1297 = vrot.slane %v1296, 4
      %v1299 = vshll.u32 %v1170, 16
      %v1301 = vrot.slane %v1299, 5
      %v1302 = vsel %vm401, %v1297, %v1301
      %v1303 = vshrl.u32 %v1170, 16
      %v1305 = vrot.slane %v1303, 4
      %v1306 = vor.u32 %v1305, %v1301
      %v1307 = vrot.slane %v1306, 4
      %v1309 = vshll.u32 %v1171, 16
      %v1311 = vrot.slane %v1309, 5
      %v1312 = vsel %vm401, %v1307, %v1311
      %v1313 = vshrl.u32 %v1171, 16
      %v1315 = vrot.slane %v1313, 4
      %v1316 = vor.u32 %v1315, %v1311
      %v1317 = vrot.slane %v1316, 4
      %v1319 = vshll.u32 %v1172, 16
      %v1321 = vrot.slane %v1319, 5
      %v1322 = vsel %vm401, %v1317, %v1321
      %v1323 = vshrl.u32 %v1172, 16
      %v1325 = vrot.slane %v1323, 4
      %v1326 = vor.u32 %v1325, %v1321
      %v1327 = vrot.slane %v1326, 4
      %v1329 = vshll.u32 %v1195, 16
      %v1331 = vrot.slane %v1329, 5
      %v1332 = vsel %vm401, %v1327, %v1331
      %v1334 = vshrl.u32 %v1173, 16
      %v1336 = vrot.slane %v1334, 4
      %v1337 = vshll.u32 %v1173, 16
      %v1339 = vrot.slane %v1337, 5
      %v1340 = vor.u32 %v1336, %v1339
      %v1341 = vrot.slane %v1340, 4
      %v1343 = vshll.u32 %v1174, 16
      %v1345 = vrot.slane %v1343, 5
      %v1346 = vsel %vm401, %v1341, %v1345
      %v1347 = vshrl.u32 %v1174, 16
      %v1349 = vrot.slane %v1347, 4
      %v1350 = vor.u32 %v1349, %v1345
      %v1351 = vrot.slane %v1350, 4
      %v1353 = vshll.u32 %v1175, 16
      %v1355 = vrot.slane %v1353, 5
      %v1356 = vsel %vm401, %v1351, %v1355
      %v1357 = vshrl.u32 %v1175, 16
      %v1359 = vrot.slane %v1357, 4
      %v1360 = vor.u32 %v1359, %v1355
      %v1361 = vrot.slane %v1360, 4
      %v1363 = vshll.u32 %v1176, 16
      %v1365 = vrot.slane %v1363, 5
      %v1366 = vsel %vm401, %v1361, %v1365
      %v1367 = vshrl.u32 %v1176, 16
      %v1369 = vrot.slane %v1367, 4
      %v1370 = vor.u32 %v1369, %v1365
      %v1371 = vrot.slane %v1370, 4
      %v1373 = vshll.u32 %v1196, 16
      %v1375 = vrot.slane %v1373, 5
      %v1376 = vsel %vm401, %v1371, %v1375
      %v1378 = vshrl.u32 %v1177, 16
      %v1380 = vrot.slane %v1378, 4
      %v1381 = vshll.u32 %v1177, 16
      %v1383 = vrot.slane %v1381, 5
      %v1384 = vor.u32 %v1380, %v1383
      %v1385 = vrot.slane %v1384, 4
      %v1387 = vshll.u32 %v1178, 16
      %v1389 = vrot.slane %v1387, 5
      %v1390 = vsel %vm401, %v1385, %v1389
      %v1391 = vshrl.u32 %v1178, 16
      %v1393 = vrot.slane %v1391, 4
      %v1394 = vor.u32 %v1393, %v1389
      %v1395 = vrot.slane %v1394, 4
      %v1397 = vshll.u32 %v1179, 16
      %v1399 = vrot.slane %v1397, 5
      %v1400 = vsel %vm401, %v1395, %v1399
      %v1401 = vshrl.u32 %v1179, 16
      %v1403 = vrot.slane %v1401, 4
      %v1404 = vor.u32 %v1403, %v1399
      %v1405 = vrot.slane %v1404, 4
      %v1407 = vshll.u32 %v1180, 16
      %v1409 = vrot.slane %v1407, 5
      %v1410 = vsel %vm401, %v1405, %v1409
      %v1411 = vshrl.u32 %v1180, 16
      %v1413 = vrot.slane %v1411, 4
      %v1414 = vor.u32 %v1413, %v1409
      %v1415 = vrot.slane %v1414, 4
      %v1417 = vshll.u32 %v1197, 16
      %v1419 = vrot.slane %v1417, 5
      %v1420 = vsel %vm401, %v1415, %v1419
      %v1422 = vshrl.u32 %v1181, 16
      %v1424 = vrot.slane %v1422, 4
      %v1425 = vshll.u32 %v1181, 16
      %v1427 = vrot.slane %v1425, 5
      %v1428 = vor.u32 %v1424, %v1427
      %v1429 = vrot.slane %v1428, 4
      %v1431 = vshll.u32 %v1182, 16
      %v1433 = vrot.slane %v1431, 5
      %v1434 = vsel %vm401, %v1429, %v1433
      %v1435 = vshrl.u32 %v1182, 16
      %v1437 = vrot.slane %v1435, 4
      %v1438 = vor.u32 %v1437, %v1433
      %v1439 = vrot.slane %v1438, 4
      %v1441 = vshll.u32 %v1183, 16
      %v1443 = vrot.slane %v1441, 5
      %v1444 = vsel %vm401, %v1439, %v1443
      %v1445 = vshrl.u32 %v1183, 16
      %v1447 = vrot.slane %v1445, 4
      %v1448 = vor.u32 %v1447, %v1443
      %v1449 = vrot.slane %v1448, 4
      %v1451 = vshll.u32 %v1184, 16
      %v1453 = vrot.slane %v1451, 5
      %v1454 = vsel %vm401, %v1449, %v1453
      %v1455 = vshrl.u32 %v1184, 16
      %v1457 = vrot.slane %v1455, 4
      %v1458 = vor.u32 %v1457, %v1453
      %v1459 = vrot.slane %v1458, 4
      %v1461 = vshll.u32 %v1198, 16
      %v1463 = vrot.slane %v1461, 5
      %v1464 = vsel %vm401, %v1459, %v1463
      %v1466 = vshrl.u32 %v1185, 16
      %v1468 = vrot.slane %v1466, 4
      %v1469 = vshll.u32 %v1185, 16
      %v1471 = vrot.slane %v1469, 5
      %v1472 = vor.u32 %v1468, %v1471
      %v1473 = vrot.slane %v1472, 4
      %v1475 = vshll.u32 %v1186, 16
      %v1477 = vrot.slane %v1475, 5
      %v1478 = vsel %vm401, %v1473, %v1477
      %v1479 = vshrl.u32 %v1186, 16
      %v1481 = vrot.slane %v1479, 4
      %v1482 = vor.u32 %v1481, %v1477
      %v1483 = vrot.slane %v1482, 4
      %v1485 = vshll.u32 %v1187, 16
      %v1487 = vrot.slane %v1485, 5
      %v1488 = vsel %vm401, %v1483, %v1487
      %v1489 = vshrl.u32 %v1187, 16
      %v1491 = vrot.slane %v1489, 4
      %v1492 = vor.u32 %v1491, %v1487
      %v1493 = vrot.slane %v1492, 4
      %v1495 = vshll.u32 %v1188, 16
      %v1497 = vrot.slane %v1495, 5
      %v1498 = vsel %vm401, %v1493, %v1497
      %v1499 = vshrl.u32 %v1188, 16
      %v1501 = vrot.slane %v1499, 4
      %v1502 = vor.u32 %v1501, %v1497
      %v1503 = vrot.slane %v1502, 4
      %v1505 = vshll.u32 %v1199, 16
      %v1507 = vrot.slane %v1505, 5
      %v1508 = vsel %vm401, %v1503, %v1507
      %v1510 = vshrl.u32 %v1189, 16
      %v1512 = vrot.slane %v1510, 4
      %v1513 = vshll.u32 %v1189, 16
      %v1515 = vrot.slane %v1513, 5
      %v1516 = vor.u32 %v1512, %v1515
      %v1517 = vrot.slane %v1516, 4
      %v1519 = vshll.u32 %v1190, 16
      %v1521 = vrot.slane %v1519, 5
      %v1522 = vsel %vm401, %v1517, %v1521
      %v1523 = vshrl.u32 %v1190, 16
      %v1525 = vrot.slane %v1523, 4
      %v1526 = vor.u32 %v1525, %v1521
      %v1527 = vrot.slane %v1526, 4
      %v1529 = vshll.u32 %v1191, 16
      %v1531 = vrot.slane %v1529, 5
      %v1532 = vsel %vm401, %v1527, %v1531
      %v1533 = vshrl.u32 %v1191, 16
      %v1535 = vrot.slane %v1533, 4
      %v1536 = vor.u32 %v1535, %v1531
      %v1537 = vrot.slane %v1536, 4
      %v1539 = vshll.u32 %v1192, 16
      %v1541 = vrot.slane %v1539, 5
      %v1542 = vsel %vm401, %v1537, %v1541
      %v1543 = vshrl.u32 %v1192, 16
      %v1545 = vrot.slane %v1543, 4
      %v1546 = vor.u32 %v1545, %v1541
      %v1547 = vrot.slane %v1546, 4
      %v1549 = vshll.u32 %v1200, 16
      %v1551 = vrot.slane %v1549, 5
      %v1552 = vsel %vm401, %v1547, %v1551
      %v1553 = vld [vmem:[%s1160] sm:$0xe]
      %v1554 = vld [vmem:[%s1160 + $0x14] sm:$0xe]
      %v1555 = vld [vmem:[%s1160 + $0x28] sm:$0xe]
      %v1556 = vld [vmem:[%s1160 + $0x3c] sm:$0xe]
      %v1557 = vld [vmem:[%s1160 + $0x50] sm:$0xe]
      %v1558 = vld [vmem:[%s1160 + $0x64] sm:$0xe]
      %v1559 = vld [vmem:[%s1160 + $0x78] sm:$0xe]
      %v1560 = vld [vmem:[%s1160 + $0x8c] sm:$0xe]
      %v1601 = vrot.slane %v1553, 5
      %v1602 = vrot.slane %v1601, 4
      %v1603 = vrot.slane %v1162, 5
      %v1604 = vsel %vm804, %v1602, %v1603
      %v1605 = vrot.slane %v1603, 4
      %v1606 = vrot.slane %v1163, 5
      %v1607 = vsel %vm804, %v1605, %v1606
      %v1608 = vrot.slane %v1606, 4
      %v1609 = vrot.slane %v1164, 5
      %v1610 = vsel %vm804, %v1608, %v1609
      %v1611 = vrot.slane %v1609, 4
      %v1612 = vrot.slane %v1193, 5
      %v1613 = vsel %vm804, %v1611, %v1612
      %v1614 = vrot.slane %v1554, 5
      %v1615 = vrot.slane %v1614, 4
      %v1616 = vrot.slane %v1166, 5
      %v1617 = vsel %vm804, %v1615, %v1616
      %v1618 = vrot.slane %v1616, 4
      %v1619 = vrot.slane %v1167, 5
      %v1620 = vsel %vm804, %v1618, %v1619
      %v1621 = vrot.slane %v1619, 4
      %v1622 = vrot.slane %v1168, 5
      %v1623 = vsel %vm804, %v1621, %v1622
      %v1624 = vrot.slane %v1622, 4
      %v1625 = vrot.slane %v1194, 5
      %v1626 = vsel %vm804, %v1624, %v1625
      %v1627 = vrot.slane %v1555, 5
      %v1628 = vrot.slane %v1627, 4
      %v1629 = vrot.slane %v1170, 5
      %v1630 = vsel %vm804, %v1628, %v1629
      %v1631 = vrot.slane %v1629, 4
      %v1632 = vrot.slane %v1171, 5
      %v1633 = vsel %vm804, %v1631, %v1632
      %v1634 = vrot.slane %v1632, 4
      %v1635 = vrot.slane %v1172, 5
      %v1636 = vsel %vm804, %v1634, %v1635
      %v1637 = vrot.slane %v1635, 4
      %v1638 = vrot.slane %v1195, 5
      %v1639 = vsel %vm804, %v1637, %v1638
      %v1640 = vrot.slane %v1556, 5
      %v1641 = vrot.slane %v1640, 4
      %v1642 = vrot.slane %v1174, 5
      %v1643 = vsel %vm804, %v1641, %v1642
      %v1644 = vrot.slane %v1642, 4
      %v1645 = vrot.slane %v1175, 5
      %v1646 = vsel %vm804, %v1644, %v1645
      %v1647 = vrot.slane %v1645, 4
      %v1648 = vrot.slane %v1176, 5
      %v1649 = vsel %vm804, %v1647, %v1648
      %v1650 = vrot.slane %v1648, 4
      %v1651 = vrot.slane %v1196, 5
      %v1652 = vsel %vm804, %v1650, %v1651
      %v1653 = vrot.slane %v1557, 5
      %v1654 = vrot.slane %v1653, 4
      %v1655 = vrot.slane %v1178, 5
      %v1656 = vsel %vm804, %v1654, %v1655
      %v1657 = vrot.slane %v1655, 4
      %v1658 = vrot.slane %v1179, 5
      %v1659 = vsel %vm804, %v1657, %v1658
      %v1660 = vrot.slane %v1658, 4
      %v1661 = vrot.slane %v1180, 5
      %v1662 = vsel %vm804, %v1660, %v1661
      %v1663 = vrot.slane %v1661, 4
      %v1664 = vrot.slane %v1197, 5
      %v1665 = vsel %vm804, %v1663, %v1664
      %v1666 = vrot.slane %v1558, 5
      %v1667 = vrot.slane %v1666, 4
      %v1668 = vrot.slane %v1182, 5
      %v1669 = vsel %vm804, %v1667, %v1668
      %v1670 = vrot.slane %v1668, 4
      %v1671 = vrot.slane %v1183, 5
      %v1672 = vsel %vm804, %v1670, %v1671
      %v1673 = vrot.slane %v1671, 4
      %v1674 = vrot.slane %v1184, 5
      %v1675 = vsel %vm804, %v1673, %v1674
      %v1676 = vrot.slane %v1674, 4
      %v1677 = vrot.slane %v1198, 5
      %v1678 = vsel %vm804, %v1676, %v1677
      %v1679 = vrot.slane %v1559, 5
      %v1680 = vrot.slane %v1679, 4
      %v1681 = vrot.slane %v1186, 5
      %v1682 = vsel %vm804, %v1680, %v1681
      %v1683 = vrot.slane %v1681, 4
      %v1684 = vrot.slane %v1187, 5
      %v1685 = vsel %vm804, %v1683, %v1684
      %v1686 = vrot.slane %v1684, 4
      %v1687 = vrot.slane %v1188, 5
      %v1688 = vsel %vm804, %v1686, %v1687
      %v1689 = vrot.slane %v1687, 4
      %v1690 = vrot.slane %v1199, 5
      %v1691 = vsel %vm804, %v1689, %v1690
      %v1692 = vrot.slane %v1560, 5
      %v1693 = vrot.slane %v1692, 4
      %v1694 = vrot.slane %v1190, 5
      %v1695 = vsel %vm804, %v1693, %v1694
      %v1696 = vrot.slane %v1694, 4
      %v1697 = vrot.slane %v1191, 5
      %v1698 = vsel %vm804, %v1696, %v1697
      %v1699 = vrot.slane %v1697, 4
      %v1700 = vrot.slane %v1192, 5
      %v1701 = vsel %vm804, %v1699, %v1700
      %v1702 = vrot.slane %v1700, 4
      %v1703 = vrot.slane %v1200, 5
      %v1704 = vsel %vm804, %v1702, %v1703
      %v1713 = vunpack.c.l.b16 %v1161
      %v1714 = vunpack.c.l.b16 %v1162
      %v1715 = vunpack.c.l.b16 %v1163
      %v1716 = vunpack.c.l.b16 %v1164
      %v1717 = vunpack.c.l.b16 %v1165
      %v1718 = vunpack.c.l.b16 %v1166
      %v1719 = vunpack.c.l.b16 %v1167
      %v1720 = vunpack.c.l.b16 %v1168
      %v1721 = vunpack.c.l.b16 %v1169
      %v1722 = vunpack.c.l.b16 %v1170
      %v1723 = vunpack.c.l.b16 %v1171
      %v1724 = vunpack.c.l.b16 %v1172
      %v1725 = vunpack.c.l.b16 %v1173
      %v1726 = vunpack.c.l.b16 %v1174
      %v1727 = vunpack.c.l.b16 %v1175
      %v1728 = vunpack.c.l.b16 %v1176
      %v1729 = vunpack.c.l.b16 %v1177
      %v1730 = vunpack.c.l.b16 %v1178
      %v1731 = vunpack.c.l.b16 %v1179
      %v1732 = vunpack.c.l.b16 %v1180
      %v1733 = vunpack.c.l.b16 %v1181
      %v1734 = vunpack.c.l.b16 %v1182
      %v1735 = vunpack.c.l.b16 %v1183
      %v1736 = vunpack.c.l.b16 %v1184
      %v1737 = vunpack.c.l.b16 %v1185
      %v1738 = vunpack.c.l.b16 %v1186
      %v1739 = vunpack.c.l.b16 %v1187
      %v1740 = vunpack.c.l.b16 %v1188
      %v1741 = vunpack.c.l.b16 %v1189
      %v1742 = vunpack.c.l.b16 %v1190
      %v1743 = vunpack.c.l.b16 %v1191
      %v1744 = vunpack.c.l.b16 %v1192
      %v1745 = vpack.c.b16 %v1714, %v1713
      %v1746 = vpack.c.b16 %v1716, %v1715
      %v1747 = vpack.c.b16 %v1718, %v1717
      %v1748 = vpack.c.b16 %v1720, %v1719
      %v1749 = vpack.c.b16 %v1722, %v1721
      %v1750 = vpack.c.b16 %v1724, %v1723
      %v1751 = vpack.c.b16 %v1726, %v1725
      %v1752 = vpack.c.b16 %v1728, %v1727
      %v1753 = vpack.c.b16 %v1730, %v1729
      %v1754 = vpack.c.b16 %v1732, %v1731
      %v1755 = vpack.c.b16 %v1734, %v1733
      %v1756 = vpack.c.b16 %v1736, %v1735
      %v1757 = vpack.c.b16 %v1738, %v1737
      %v1758 = vpack.c.b16 %v1740, %v1739
      %v1759 = vpack.c.b16 %v1742, %v1741
      %v1760 = vpack.c.b16 %v1744, %v1743
      %v1777 = vunpack.c.l.b16 %v1214
      %v1778 = vunpack.c.l.b16 %v1224
      %v1779 = vunpack.c.l.b16 %v1234
      %v1780 = vunpack.c.l.b16 %v1244
      %v1781 = vunpack.c.l.b16 %v1258
      %v1782 = vunpack.c.l.b16 %v1268
      %v1783 = vunpack.c.l.b16 %v1278
      %v1784 = vunpack.c.l.b16 %v1288
      %v1785 = vunpack.c.l.b16 %v1302
      %v1786 = vunpack.c.l.b16 %v1312
      %v1787 = vunpack.c.l.b16 %v1322
      %v1788 = vunpack.c.l.b16 %v1332
      %v1789 = vunpack.c.l.b16 %v1346
      %v1790 = vunpack.c.l.b16 %v1356
      %v1791 = vunpack.c.l.b16 %v1366
      %v1792 = vunpack.c.l.b16 %v1376
      %v1793 = vunpack.c.l.b16 %v1390
      %v1794 = vunpack.c.l.b16 %v1400
      %v1795 = vunpack.c.l.b16 %v1410
      %v1796 = vunpack.c.l.b16 %v1420
      %v1797 = vunpack.c.l.b16 %v1434
      %v1798 = vunpack.c.l.b16 %v1444
      %v1799 = vunpack.c.l.b16 %v1454
      %v1800 = vunpack.c.l.b16 %v1464
      %v1801 = vunpack.c.l.b16 %v1478
      %v1802 = vunpack.c.l.b16 %v1488
      %v1803 = vunpack.c.l.b16 %v1498
      %v1804 = vunpack.c.l.b16 %v1508
      %v1805 = vunpack.c.l.b16 %v1522
      %v1806 = vunpack.c.l.b16 %v1532
      %v1807 = vunpack.c.l.b16 %v1542
      %v1808 = vunpack.c.l.b16 %v1552
      %v1809 = vpack.c.b16 %v1778, %v1777
      %v1810 = vpack.c.b16 %v1780, %v1779
      %v1811 = vpack.c.b16 %v1782, %v1781
      %v1812 = vpack.c.b16 %v1784, %v1783
      %v1813 = vpack.c.b16 %v1786, %v1785
      %v1814 = vpack.c.b16 %v1788, %v1787
      %v1815 = vpack.c.b16 %v1790, %v1789
      %v1816 = vpack.c.b16 %v1792, %v1791
      %v1817 = vpack.c.b16 %v1794, %v1793
      %v1818 = vpack.c.b16 %v1796, %v1795
      %v1819 = vpack.c.b16 %v1798, %v1797
      %v1820 = vpack.c.b16 %v1800, %v1799
      %v1821 = vpack.c.b16 %v1802, %v1801
      %v1822 = vpack.c.b16 %v1804, %v1803
      %v1823 = vpack.c.b16 %v1806, %v1805
      %v1824 = vpack.c.b16 %v1808, %v1807
      %v1841 = vunpack.c.l.b16 %v1604
      %v1842 = vunpack.c.l.b16 %v1607
      %v1843 = vunpack.c.l.b16 %v1610
      %v1844 = vunpack.c.l.b16 %v1613
      %v1845 = vunpack.c.l.b16 %v1617
      %v1846 = vunpack.c.l.b16 %v1620
      %v1847 = vunpack.c.l.b16 %v1623
      %v1848 = vunpack.c.l.b16 %v1626
      %v1849 = vunpack.c.l.b16 %v1630
      %v1850 = vunpack.c.l.b16 %v1633
      %v1851 = vunpack.c.l.b16 %v1636
      %v1852 = vunpack.c.l.b16 %v1639
      %v1853 = vunpack.c.l.b16 %v1643
      %v1854 = vunpack.c.l.b16 %v1646
      %v1855 = vunpack.c.l.b16 %v1649
      %v1856 = vunpack.c.l.b16 %v1652
      %v1857 = vunpack.c.l.b16 %v1656
      %v1858 = vunpack.c.l.b16 %v1659
      %v1859 = vunpack.c.l.b16 %v1662
      %v1860 = vunpack.c.l.b16 %v1665
      %v1861 = vunpack.c.l.b16 %v1669
      %v1862 = vunpack.c.l.b16 %v1672
      %v1863 = vunpack.c.l.b16 %v1675
      %v1864 = vunpack.c.l.b16 %v1678
      %v1865 = vunpack.c.l.b16 %v1682
      %v1866 = vunpack.c.l.b16 %v1685
      %v1867 = vunpack.c.l.b16 %v1688
      %v1868 = vunpack.c.l.b16 %v1691
      %v1869 = vunpack.c.l.b16 %v1695
      %v1870 = vunpack.c.l.b16 %v1698
      %v1871 = vunpack.c.l.b16 %v1701
      %v1872 = vunpack.c.l.b16 %v1704
      %v1873 = vpack.c.b16 %v1842, %v1841
      %v1874 = vpack.c.b16 %v1844, %v1843
      %v1875 = vpack.c.b16 %v1846, %v1845
      %v1876 = vpack.c.b16 %v1848, %v1847
      %v1877 = vpack.c.b16 %v1850, %v1849
      %v1878 = vpack.c.b16 %v1852, %v1851
      %v1879 = vpack.c.b16 %v1854, %v1853
      %v1880 = vpack.c.b16 %v1856, %v1855
      %v1881 = vpack.c.b16 %v1858, %v1857
      %v1882 = vpack.c.b16 %v1860, %v1859
      %v1883 = vpack.c.b16 %v1862, %v1861
      %v1884 = vpack.c.b16 %v1864, %v1863
      %v1885 = vpack.c.b16 %v1866, %v1865
      %v1886 = vpack.c.b16 %v1868, %v1867
      %v1887 = vpack.c.b16 %v1870, %v1869
      %v1888 = vpack.c.b16 %v1872, %v1871
      %s1905 = scalar_lea.vmem %s1, 192
      %v1906 = vld [vmem:[%s1905] sm:$0xf]
      %v1907 = vld [vmem:[%s1905 + $0x4] sm:$0xf]
      %v1908 = vld [vmem:[%s1905 + $0x8] sm:$0xf]
      %v1909 = vld [vmem:[%s1905 + $0xc] sm:$0xf]
      %v1910 = vld [vmem:[%s1905 + $0x10] sm:$0xf]
      %v1911 = vld [vmem:[%s1905 + $0x14] sm:$0xf]
      %v1912 = vld [vmem:[%s1905 + $0x18] sm:$0xf]
      %v1913 = vld [vmem:[%s1905 + $0x1c] sm:$0xf]
      %v1914 = vld [vmem:[%s1905 + $0x20] sm:$0xf]
      %v1915 = vld [vmem:[%s1905 + $0x24] sm:$0xf]
      %v1916 = vld [vmem:[%s1905 + $0x28] sm:$0xf]
      %v1917 = vld [vmem:[%s1905 + $0x2c] sm:$0xf]
      %v1918 = vld [vmem:[%s1905 + $0x30] sm:$0xf]
      %v1919 = vld [vmem:[%s1905 + $0x34] sm:$0xf]
      %v1920 = vld [vmem:[%s1905 + $0x38] sm:$0xf]
      %v1921 = vld [vmem:[%s1905 + $0x3c] sm:$0xf]
      %v1922 = vld [vmem:[%s1905 + $0x40] sm:$0xf]
      %v1923 = vld [vmem:[%s1905 + $0x44] sm:$0xf]
      %v1924 = vld [vmem:[%s1905 + $0x48] sm:$0xf]
      %v1925 = vld [vmem:[%s1905 + $0x4c] sm:$0xf]
      %v1926 = vld [vmem:[%s1905 + $0x50] sm:$0xf]
      %v1927 = vld [vmem:[%s1905 + $0x54] sm:$0xf]
      %v1928 = vld [vmem:[%s1905 + $0x58] sm:$0xf]
      %v1929 = vld [vmem:[%s1905 + $0x5c] sm:$0xf]
      %v1930 = vld [vmem:[%s1905 + $0x60] sm:$0xf]
      %v1931 = vld [vmem:[%s1905 + $0x64] sm:$0xf]
      %v1932 = vld [vmem:[%s1905 + $0x68] sm:$0xf]
      %v1933 = vld [vmem:[%s1905 + $0x6c] sm:$0xf]
      %v1934 = vld [vmem:[%s1905 + $0x70] sm:$0xf]
      %v1935 = vld [vmem:[%s1905 + $0x74] sm:$0xf]
      %v1936 = vld [vmem:[%s1905 + $0x78] sm:$0xf]
      %v1937 = vld [vmem:[%s1905 + $0x7c] sm:$0xf]
      %v1938 = vld [vmem:[%s1905 + $0x80] sm:$0xf]
      %v1939 = vld [vmem:[%s1905 + $0x84] sm:$0xf]
      %v1940 = vld [vmem:[%s1905 + $0x88] sm:$0xf]
      %v1941 = vld [vmem:[%s1905 + $0x8c] sm:$0xf]
      %v1942 = vld [vmem:[%s1905 + $0x90] sm:$0xf]
      %v1943 = vld [vmem:[%s1905 + $0x94] sm:$0xf]
      %v1944 = vld [vmem:[%s1905 + $0x98] sm:$0xf]
      %v1945 = vld [vmem:[%s1905 + $0x9c] sm:$0xf]
      %v1946 = vld [vmem:[%s1905 + $0xa0] sm:$0xf]
      %v1947 = vld [vmem:[%s1905 + $0xa4] sm:$0xf]
      %v1948 = vld [vmem:[%s1905 + $0xa8] sm:$0xf]
      %v1949 = vld [vmem:[%s1905 + $0xac] sm:$0xf]
      %v1950 = vld [vmem:[%s1905 + $0xb0] sm:$0xf]
      %v1951 = vld [vmem:[%s1905 + $0xb4] sm:$0xf]
      %v1952 = vld [vmem:[%s1905 + $0xb8] sm:$0xf]
      %v1953 = vld [vmem:[%s1905 + $0xbc] sm:$0xf]
      %v2002 = vunpack.c.l.b16 %v1906
      %v2003 = vunpack.c.l.b16 %v1907
      %v2004 = vunpack.c.l.b16 %v1908
      %v2005 = vunpack.c.l.b16 %v1909
      %v2006 = vunpack.c.l.b16 %v1910
      %v2007 = vunpack.c.l.b16 %v1911
      %v2008 = vunpack.c.l.b16 %v1912
      %v2009 = vunpack.c.l.b16 %v1913
      %v2010 = vunpack.c.l.b16 %v1914
      %v2011 = vunpack.c.l.b16 %v1915
      %v2012 = vunpack.c.l.b16 %v1916
      %v2013 = vunpack.c.l.b16 %v1917
      %v2014 = vunpack.c.l.b16 %v1918
      %v2015 = vunpack.c.l.b16 %v1919
      %v2016 = vunpack.c.l.b16 %v1920
      %v2017 = vunpack.c.l.b16 %v1921
      %v2018 = vunpack.c.l.b16 %v1922
      %v2019 = vunpack.c.l.b16 %v1923
      %v2020 = vunpack.c.l.b16 %v1924
      %v2021 = vunpack.c.l.b16 %v1925
      %v2022 = vunpack.c.l.b16 %v1926
      %v2023 = vunpack.c.l.b16 %v1927
      %v2024 = vunpack.c.l.b16 %v1928
      %v2025 = vunpack.c.l.b16 %v1929
      %v2026 = vunpack.c.l.b16 %v1930
      %v2027 = vunpack.c.l.b16 %v1931
      %v2028 = vunpack.c.l.b16 %v1932
      %v2029 = vunpack.c.l.b16 %v1933
      %v2030 = vunpack.c.l.b16 %v1934
      %v2031 = vunpack.c.l.b16 %v1935
      %v2032 = vunpack.c.l.b16 %v1936
      %v2033 = vunpack.c.l.b16 %v1937
      %v2034 = vunpack.c.l.b16 %v1938
      %v2035 = vunpack.c.l.b16 %v1939
      %v2036 = vunpack.c.l.b16 %v1940
      %v2037 = vunpack.c.l.b16 %v1941
      %v2038 = vunpack.c.l.b16 %v1942
      %v2039 = vunpack.c.l.b16 %v1943
      %v2040 = vunpack.c.l.b16 %v1944
      %v2041 = vunpack.c.l.b16 %v1945
      %v2042 = vunpack.c.l.b16 %v1946
      %v2043 = vunpack.c.l.b16 %v1947
      %v2044 = vunpack.c.l.b16 %v1948
      %v2045 = vunpack.c.l.b16 %v1949
      %v2046 = vunpack.c.l.b16 %v1950
      %v2047 = vunpack.c.l.b16 %v1951
      %v2048 = vunpack.c.l.b16 %v1952
      %v2049 = vunpack.c.l.b16 %v1953
      %v2050 = vpack.c.b16 %v2003, %v2002
      %v2051 = vpack.c.b16 %v2005, %v2004
      %v2052 = vpack.c.b16 %v2007, %v2006
      %v2053 = vpack.c.b16 %v2009, %v2008
      %v2054 = vpack.c.b16 %v2011, %v2010
      %v2055 = vpack.c.b16 %v2013, %v2012
      %v2056 = vpack.c.b16 %v2015, %v2014
      %v2057 = vpack.c.b16 %v2017, %v2016
      %v2058 = vpack.c.b16 %v2019, %v2018
      %v2059 = vpack.c.b16 %v2021, %v2020
      %v2060 = vpack.c.b16 %v2023, %v2022
      %v2061 = vpack.c.b16 %v2025, %v2024
      %v2062 = vpack.c.b16 %v2027, %v2026
      %v2063 = vpack.c.b16 %v2029, %v2028
      %v2064 = vpack.c.b16 %v2031, %v2030
      %v2065 = vpack.c.b16 %v2033, %v2032
      %v2066 = vpack.c.b16 %v2035, %v2034
      %v2067 = vpack.c.b16 %v2037, %v2036
      %v2068 = vpack.c.b16 %v2039, %v2038
      %v2069 = vpack.c.b16 %v2041, %v2040
      %v2070 = vpack.c.b16 %v2043, %v2042
      %v2071 = vpack.c.b16 %v2045, %v2044
      %v2072 = vpack.c.b16 %v2047, %v2046
      %v2073 = vpack.c.b16 %v2049, %v2048
      %2098 = vmatprep.subr.bf16.mxu0 0
      %2099 = vmatpush1.bf16.msra.mxu0 %v2057
      %2100 = vmatprep.subr.bf16.mxu0 0
      %2101 = vmatpush1.bf16.msra.mxu0 %v2056
      %2102 = vmatprep.subr.bf16.mxu0 0
      %2103 = vmatpush1.bf16.msra.mxu0 %v2055
      %2104 = vmatprep.subr.bf16.mxu0 0
      %2105 = vmatpush1.bf16.msra.mxu0 %v2054
      %2106 = vmatprep.subr.bf16.mxu0 0
      %2107 = vmatpush1.bf16.msra.mxu0 %v2053
      %2108 = vmatprep.subr.bf16.mxu0 0
      %2109 = vmatpush1.bf16.msra.mxu0 %v2052
      %2110 = vmatprep.subr.bf16.mxu0 0
      %2111 = vmatpush1.bf16.msra.mxu0 %v2051
      %2112 = vmatprep.subr.bf16.mxu0 0
      %2113 = vmatpush1.bf16.msra.mxu0 %v2050
      %2114 = vmatprep.subr.bf16.mxu0 0
      %2115 = vmatpush2.bf16.msra.mxu0 %v2065
      %2116 = vmatprep.subr.bf16.mxu0 0
      %2117 = vmatpush2.bf16.msra.mxu0 %v2064
      %2118 = vmatprep.subr.bf16.mxu0 0
      %2119 = vmatpush2.bf16.msra.mxu0 %v2063
      %2120 = vmatprep.subr.bf16.mxu0 0
      %2121 = vmatpush2.bf16.msra.mxu0 %v2062
      %2122 = vmatprep.subr.bf16.mxu0 0
      %2123 = vmatpush2.bf16.msra.mxu0 %v2061
      %2124 = vmatprep.subr.bf16.mxu0 0
      %2125 = vmatpush2.bf16.msra.mxu0 %v2060
      %2126 = vmatprep.subr.bf16.mxu0 0
      %2127 = vmatpush2.bf16.msra.mxu0 %v2059
      %2128 = vmatprep.subr.bf16.mxu0 0
      %2129 = vmatpush2.bf16.msra.mxu0 %v2058
      %2130 = vmatprep.mubr.bf16.mxu0 %v1809
      %2131 = vmatmul.mubr.bf16.gmra.mxu0 %v1745
      %v2132 = vpop.f32.mrf.mxu0
      %v2133 = vadd.f32 0.0, %v2132
      %v2134 = vpop.f32.mrf.mxu0
      %v2135 = vpop.f32.mrf.mxu0
      %v2136 = vadd.f32 0.0, %v2135
      %v2137 = vpop.f32.mrf.mxu0
      %2138 = vmatprep.mubr.bf16.mxu0 %v1810
      %2139 = vmatmul.mubr.bf16.gmra.mxu0 %v1746
      %v2140 = vpop.f32.mrf.mxu0
      %v2141 = vadd.f32 0.0, %v2140
      %v2142 = vpop.f32.mrf.mxu0
      %v2143 = vpop.f32.mrf.mxu0
      %v2144 = vadd.f32 0.0, %v2143
      %v2145 = vpop.f32.mrf.mxu0
      %2146 = vmatprep.mubr.bf16.mxu0 %v1811
      %2147 = vmatmul.mubr.bf16.gmra.mxu0 %v1747
      %v2148 = vpop.f32.mrf.mxu0
      %v2149 = vadd.f32 0.0, %v2148
      %v2150 = vpop.f32.mrf.mxu0
      %v2151 = vpop.f32.mrf.mxu0
      %v2152 = vadd.f32 0.0, %v2151
      %v2153 = vpop.f32.mrf.mxu0
      %2154 = vmatprep.mubr.bf16.mxu0 %v1812
      %2155 = vmatmul.mubr.bf16.gmra.mxu0 %v1748
      %v2156 = vpop.f32.mrf.mxu0
      %v2157 = vadd.f32 0.0, %v2156
      %v2158 = vpop.f32.mrf.mxu0
      %v2159 = vpop.f32.mrf.mxu0
      %v2160 = vadd.f32 0.0, %v2159
      %v2161 = vpop.f32.mrf.mxu0
      %2162 = vmatprep.mubr.bf16.mxu0 %v1813
      %2163 = vmatmul.mubr.bf16.gmra.mxu0 %v1749
      %v2164 = vpop.f32.mrf.mxu0
      %v2165 = vadd.f32 0.0, %v2164
      %v2166 = vpop.f32.mrf.mxu0
      %v2167 = vpop.f32.mrf.mxu0
      %v2168 = vadd.f32 0.0, %v2167
      %v2169 = vpop.f32.mrf.mxu0
      %2170 = vmatprep.mubr.bf16.mxu0 %v1814
      %2171 = vmatmul.mubr.bf16.gmra.mxu0 %v1750
      %v2172 = vpop.f32.mrf.mxu0
      %v2173 = vadd.f32 0.0, %v2172
      %v2174 = vpop.f32.mrf.mxu0
      %v2175 = vpop.f32.mrf.mxu0
      %v2176 = vadd.f32 0.0, %v2175
      %v2177 = vpop.f32.mrf.mxu0
      %2178 = vmatprep.mubr.bf16.mxu0 %v1815
      %2179 = vmatmul.mubr.bf16.gmra.mxu0 %v1751
      %v2180 = vpop.f32.mrf.mxu0
      %v2181 = vadd.f32 0.0, %v2180
      %v2182 = vpop.f32.mrf.mxu0
      %v2183 = vpop.f32.mrf.mxu0
      %v2184 = vadd.f32 0.0, %v2183
      %v2185 = vpop.f32.mrf.mxu0
      %2186 = vmatprep.mubr.bf16.mxu0 %v1816
      %2187 = vmatmul.mubr.bf16.gmra.mxu0 %v1752
      %v2188 = vpop.f32.mrf.mxu0
      %v2189 = vadd.f32 0.0, %v2188
      %v2190 = vpop.f32.mrf.mxu0
      %v2191 = vpop.f32.mrf.mxu0
      %v2192 = vadd.f32 0.0, %v2191
      %v2193 = vpop.f32.mrf.mxu0
      %2194 = vmatprep.mubr.bf16.mxu0 %v1817
      %2195 = vmatmul.mubr.bf16.gmra.mxu0 %v1753
      %v2196 = vpop.f32.mrf.mxu0
      %v2197 = vadd.f32 0.0, %v2196
      %v2198 = vpop.f32.mrf.mxu0
      %v2199 = vpop.f32.mrf.mxu0
      %v2200 = vadd.f32 0.0, %v2199
      %v2201 = vpop.f32.mrf.mxu0
      %2202 = vmatprep.mubr.bf16.mxu0 %v1818
      %2203 = vmatmul.mubr.bf16.gmra.mxu0 %v1754
      %v2204 = vpop.f32.mrf.mxu0
      %v2205 = vadd.f32 0.0, %v2204
      %v2206 = vpop.f32.mrf.mxu0
      %v2207 = vpop.f32.mrf.mxu0
      %v2208 = vadd.f32 0.0, %v2207
      %v2209 = vpop.f32.mrf.mxu0
      %2210 = vmatprep.mubr.bf16.mxu0 %v1819
      %2211 = vmatmul.mubr.bf16.gmra.mxu0 %v1755
      %v2212 = vpop.f32.mrf.mxu0
      %v2213 = vadd.f32 0.0, %v2212
      %v2214 = vpop.f32.mrf.mxu0
      %v2215 = vpop.f32.mrf.mxu0
      %v2216 = vadd.f32 0.0, %v2215
      %v2217 = vpop.f32.mrf.mxu0
      %2218 = vmatprep.mubr.bf16.mxu0 %v1820
      %2219 = vmatmul.mubr.bf16.gmra.mxu0 %v1756
      %v2220 = vpop.f32.mrf.mxu0
      %v2221 = vadd.f32 0.0, %v2220
      %v2222 = vpop.f32.mrf.mxu0
      %v2223 = vpop.f32.mrf.mxu0
      %v2224 = vadd.f32 0.0, %v2223
      %v2225 = vpop.f32.mrf.mxu0
      %2226 = vmatprep.mubr.bf16.mxu0 %v1821
      %2227 = vmatmul.mubr.bf16.gmra.mxu0 %v1757
      %v2228 = vpop.f32.mrf.mxu0
      %v2229 = vadd.f32 0.0, %v2228
      %v2230 = vpop.f32.mrf.mxu0
      %v2231 = vpop.f32.mrf.mxu0
      %v2232 = vadd.f32 0.0, %v2231
      %v2233 = vpop.f32.mrf.mxu0
      %2234 = vmatprep.mubr.bf16.mxu0 %v1822
      %2235 = vmatmul.mubr.bf16.gmra.mxu0 %v1758
      %v2236 = vpop.f32.mrf.mxu0
      %v2237 = vadd.f32 0.0, %v2236
      %v2238 = vpop.f32.mrf.mxu0
      %v2239 = vpop.f32.mrf.mxu0
      %v2240 = vadd.f32 0.0, %v2239
      %v2241 = vpop.f32.mrf.mxu0
      %2242 = vmatprep.mubr.bf16.mxu0 %v1823
      %2243 = vmatmul.mubr.bf16.gmra.mxu0 %v1759
      %v2244 = vpop.f32.mrf.mxu0
      %v2245 = vadd.f32 0.0, %v2244
      %v2246 = vpop.f32.mrf.mxu0
      %v2247 = vpop.f32.mrf.mxu0
      %v2248 = vadd.f32 0.0, %v2247
      %v2249 = vpop.f32.mrf.mxu0
      %2250 = vmatprep.mubr.bf16.mxu0 %v1824
      %2251 = vmatmul.mubr.bf16.gmra.mxu0 %v1760
      %v2252 = vpop.f32.mrf.mxu0
      %v2253 = vadd.f32 0.0, %v2252
      %v2254 = vpop.f32.mrf.mxu0
      %v2255 = vpop.f32.mrf.mxu0
      %v2256 = vadd.f32 0.0, %v2255
      %v2257 = vpop.f32.mrf.mxu0
      %2258 = vdwg.mxu0
      %2259 = vmatprep.subr.bf16.mxu0 0
      %2260 = vmatpush1.bf16.msra.mxu0 %v2073
      %2261 = vmatprep.subr.bf16.mxu0 0
      %2262 = vmatpush1.bf16.msra.mxu0 %v2072
      %2263 = vmatprep.subr.bf16.mxu0 0
      %2264 = vmatpush1.bf16.msra.mxu0 %v2071
      %2265 = vmatprep.subr.bf16.mxu0 0
      %2266 = vmatpush1.bf16.msra.mxu0 %v2070
      %2267 = vmatprep.subr.bf16.mxu0 0
      %2268 = vmatpush1.bf16.msra.mxu0 %v2069
      %2269 = vmatprep.subr.bf16.mxu0 0
      %2270 = vmatpush1.bf16.msra.mxu0 %v2068
      %2271 = vmatprep.subr.bf16.mxu0 0
      %2272 = vmatpush1.bf16.msra.mxu0 %v2067
      %2273 = vmatprep.subr.bf16.mxu0 0
      %2274 = vmatpush1.bf16.msra.mxu0 %v2066
      %2275 = vmatprep.subr.bf16.mxu0 0
      %2276 = vmatpush2.bf16.msra.mxu0 0
      %2277 = vmatprep.subr.bf16.mxu0 0
      %2278 = vmatpush2.bf16.msra.mxu0 0
      %2279 = vmatprep.subr.bf16.mxu0 0
      %2280 = vmatpush2.bf16.msra.mxu0 0
      %2281 = vmatprep.subr.bf16.mxu0 0
      %2282 = vmatpush2.bf16.msra.mxu0 0
      %2283 = vmatprep.subr.bf16.mxu0 0
      %2284 = vmatpush2.bf16.msra.mxu0 0
      %2285 = vmatprep.subr.bf16.mxu0 0
      %2286 = vmatpush2.bf16.msra.mxu0 0
      %2287 = vmatprep.subr.bf16.mxu0 0
      %2288 = vmatpush2.bf16.msra.mxu0 0
      %2289 = vmatprep.subr.bf16.mxu0 0
      %2290 = vmatpush2.bf16.msra.mxu0 0
      %2291 = vmatprep.mubr.bf16.mxu0 0
      %2292 = vmatmul.mubr.bf16.gmra.mxu0 %v1873
      %v2293 = vpop.f32.mrf.mxu0
      %v2294 = vadd.f32 %v2133, %v2293
      %v2295 = vpop.f32.mrf.mxu0
      %v2296 = vpop.f32.mrf.mxu0
      %v2297 = vadd.f32 %v2136, %v2296
      %v2298 = vpop.f32.mrf.mxu0
      %2299 = vmatprep.mubr.bf16.mxu0 0
      %2300 = vmatmul.mubr.bf16.gmra.mxu0 %v1874
      %v2301 = vpop.f32.mrf.mxu0
      %v2302 = vadd.f32 %v2141, %v2301
      %v2303 = vpop.f32.mrf.mxu0
      %v2304 = vpop.f32.mrf.mxu0
      %v2305 = vadd.f32 %v2144, %v2304
      %v2306 = vpop.f32.mrf.mxu0
      %2307 = vmatprep.mubr.bf16.mxu0 0
      %2308 = vmatmul.mubr.bf16.gmra.mxu0 %v1875
      %v2309 = vpop.f32.mrf.mxu0
      %v2310 = vadd.f32 %v2149, %v2309
      %v2311 = vpop.f32.mrf.mxu0
      %v2312 = vpop.f32.mrf.mxu0
      %v2313 = vadd.f32 %v2152, %v2312
      %v2314 = vpop.f32.mrf.mxu0
      %2315 = vmatprep.mubr.bf16.mxu0 0
      %2316 = vmatmul.mubr.bf16.gmra.mxu0 %v1876
      %v2317 = vpop.f32.mrf.mxu0
      %v2318 = vadd.f32 %v2157, %v2317
      %v2319 = vpop.f32.mrf.mxu0
      %v2320 = vpop.f32.mrf.mxu0
      %v2321 = vadd.f32 %v2160, %v2320
      %v2322 = vpop.f32.mrf.mxu0
      %2323 = vmatprep.mubr.bf16.mxu0 0
      %2324 = vmatmul.mubr.bf16.gmra.mxu0 %v1877
      %v2325 = vpop.f32.mrf.mxu0
      %v2326 = vadd.f32 %v2165, %v2325
      %v2327 = vpop.f32.mrf.mxu0
      %v2328 = vpop.f32.mrf.mxu0
      %v2329 = vadd.f32 %v2168, %v2328
      %v2330 = vpop.f32.mrf.mxu0
      %2331 = vmatprep.mubr.bf16.mxu0 0
      %2332 = vmatmul.mubr.bf16.gmra.mxu0 %v1878
      %v2333 = vpop.f32.mrf.mxu0
      %v2334 = vadd.f32 %v2173, %v2333
      %v2335 = vpop.f32.mrf.mxu0
      %v2336 = vpop.f32.mrf.mxu0
      %v2337 = vadd.f32 %v2176, %v2336
      %v2338 = vpop.f32.mrf.mxu0
      %2339 = vmatprep.mubr.bf16.mxu0 0
      %2340 = vmatmul.mubr.bf16.gmra.mxu0 %v1879
      %v2341 = vpop.f32.mrf.mxu0
      %v2342 = vadd.f32 %v2181, %v2341
      %v2343 = vpop.f32.mrf.mxu0
      %v2344 = vpop.f32.mrf.mxu0
      %v2345 = vadd.f32 %v2184, %v2344
      %v2346 = vpop.f32.mrf.mxu0
      %2347 = vmatprep.mubr.bf16.mxu0 0
      %2348 = vmatmul.mubr.bf16.gmra.mxu0 %v1880
      %v2349 = vpop.f32.mrf.mxu0
      %v2350 = vadd.f32 %v2189, %v2349
      %v2351 = vpop.f32.mrf.mxu0
      %v2352 = vpop.f32.mrf.mxu0
      %v2353 = vadd.f32 %v2192, %v2352
      %v2354 = vpop.f32.mrf.mxu0
      %2355 = vmatprep.mubr.bf16.mxu0 0
      %2356 = vmatmul.mubr.bf16.gmra.mxu0 %v1881
      %v2357 = vpop.f32.mrf.mxu0
      %v2358 = vadd.f32 %v2197, %v2357
      %v2359 = vpop.f32.mrf.mxu0
      %v2360 = vpop.f32.mrf.mxu0
      %v2361 = vadd.f32 %v2200, %v2360
      %v2362 = vpop.f32.mrf.mxu0
      %2363 = vmatprep.mubr.bf16.mxu0 0
      %2364 = vmatmul.mubr.bf16.gmra.mxu0 %v1882
      %v2365 = vpop.f32.mrf.mxu0
      %v2366 = vadd.f32 %v2205, %v2365
      %v2367 = vpop.f32.mrf.mxu0
      %v2368 = vpop.f32.mrf.mxu0
      %v2369 = vadd.f32 %v2208, %v2368
      %v2370 = vpop.f32.mrf.mxu0
      %2371 = vmatprep.mubr.bf16.mxu0 0
      %2372 = vmatmul.mubr.bf16.gmra.mxu0 %v1883
      %v2373 = vpop.f32.mrf.mxu0
      %v2374 = vadd.f32 %v2213, %v2373
      %v2375 = vpop.f32.mrf.mxu0
      %v2376 = vpop.f32.mrf.mxu0
      %v2377 = vadd.f32 %v2216, %v2376
      %v2378 = vpop.f32.mrf.mxu0
      %2379 = vmatprep.mubr.bf16.mxu0 0
      %2380 = vmatmul.mubr.bf16.gmra.mxu0 %v1884
      %v2381 = vpop.f32.mrf.mxu0
      %v2382 = vadd.f32 %v2221, %v2381
      %v2383 = vpop.f32.mrf.mxu0
      %v2384 = vpop.f32.mrf.mxu0
      %v2385 = vadd.f32 %v2224, %v2384
      %v2386 = vpop.f32.mrf.mxu0
      %2387 = vmatprep.mubr.bf16.mxu0 0
      %2388 = vmatmul.mubr.bf16.gmra.mxu0 %v1885
      %v2389 = vpop.f32.mrf.mxu0
      %v2390 = vadd.f32 %v2229, %v2389
      %v2391 = vpop.f32.mrf.mxu0
      %v2392 = vpop.f32.mrf.mxu0
      %v2393 = vadd.f32 %v2232, %v2392
      %v2394 = vpop.f32.mrf.mxu0
      %2395 = vmatprep.mubr.bf16.mxu0 0
      %2396 = vmatmul.mubr.bf16.gmra.mxu0 %v1886
      %v2397 = vpop.f32.mrf.mxu0
      %v2398 = vadd.f32 %v2237, %v2397
      %v2399 = vpop.f32.mrf.mxu0
      %v2400 = vpop.f32.mrf.mxu0
      %v2401 = vadd.f32 %v2240, %v2400
      %v2402 = vpop.f32.mrf.mxu0
      %2403 = vmatprep.mubr.bf16.mxu0 0
      %2404 = vmatmul.mubr.bf16.gmra.mxu0 %v1887
      %v2405 = vpop.f32.mrf.mxu0
      %v2406 = vadd.f32 %v2245, %v2405
      %v2407 = vpop.f32.mrf.mxu0
      %v2408 = vpop.f32.mrf.mxu0
      %v2409 = vadd.f32 %v2248, %v2408
      %v2410 = vpop.f32.mrf.mxu0
      %2411 = vmatprep.mubr.bf16.mxu0 0
      %2412 = vmatmul.mubr.bf16.gmra.mxu0 %v1888
      %v2413 = vpop.f32.mrf.mxu0
      %v2414 = vadd.f32 %v2253, %v2413
      %v2415 = vpop.f32.mrf.mxu0
      %v2416 = vpop.f32.mrf.mxu0
      %v2417 = vadd.f32 %v2256, %v2416
      %v2418 = vpop.f32.mrf.mxu0
      %2419 = vdwg.mxu0
      %v2468 = vunpack.c.l.b16 %v1109
      %v2469 = vunpack.c.l.b16 %v1110
      %v2470 = vunpack.c.l.b16 %v1111
      %v2471 = vunpack.c.l.b16 %v1112
      %v2472 = vunpack.c.l.b16 %v1113
      %v2473 = vunpack.c.l.b16 %v1114
      %v2474 = vunpack.c.l.b16 %v1115
      %v2475 = vunpack.c.l.b16 %v1116
      %v2476 = vunpack.c.l.b16 %v1117
      %v2477 = vunpack.c.l.b16 %v1118
      %v2478 = vunpack.c.l.b16 %v1119
      %v2479 = vunpack.c.l.b16 %v1120
      %v2480 = vunpack.c.l.b16 %v1121
      %v2481 = vunpack.c.l.b16 %v1122
      %v2482 = vunpack.c.l.b16 %v1123
      %v2483 = vunpack.c.l.b16 %v1124
      %v2484 = vunpack.c.l.b16 %v1125
      %v2485 = vunpack.c.l.b16 %v1126
      %v2486 = vunpack.c.l.b16 %v1127
      %v2487 = vunpack.c.l.b16 %v1128
      %v2488 = vunpack.c.l.b16 %v1129
      %v2489 = vunpack.c.l.b16 %v1130
      %v2490 = vunpack.c.l.b16 %v1131
      %v2491 = vunpack.c.l.b16 %v1132
      %v2492 = vunpack.c.l.b16 %v1133
      %v2493 = vunpack.c.l.b16 %v1134
      %v2494 = vunpack.c.l.b16 %v1135
      %v2495 = vunpack.c.l.b16 %v1136
      %v2496 = vunpack.c.l.b16 %v1137
      %v2497 = vunpack.c.l.b16 %v1138
      %v2498 = vunpack.c.l.b16 %v1139
      %v2499 = vunpack.c.l.b16 %v1140
      %v2500 = vunpack.c.l.b16 %v1141
      %v2501 = vunpack.c.l.b16 %v1142
      %v2502 = vunpack.c.l.b16 %v1143
      %v2503 = vunpack.c.l.b16 %v1144
      %v2504 = vunpack.c.l.b16 %v1145
      %v2505 = vunpack.c.l.b16 %v1146
      %v2506 = vunpack.c.l.b16 %v1147
      %v2507 = vunpack.c.l.b16 %v1148
      %v2508 = vunpack.c.l.b16 %v1149
      %v2509 = vunpack.c.l.b16 %v1150
      %v2510 = vunpack.c.l.b16 %v1151
      %v2511 = vunpack.c.l.b16 %v1152
      %v2512 = vunpack.c.l.b16 %v1153
      %v2513 = vunpack.c.l.b16 %v1154
      %v2514 = vunpack.c.l.b16 %v1155
      %v2515 = vunpack.c.l.b16 %v1156
      %v2516 = vpack.c.b16 %v2469, %v2468
      %v2517 = vpack.c.b16 %v2471, %v2470
      %v2518 = vpack.c.b16 %v2473, %v2472
      %v2519 = vpack.c.b16 %v2475, %v2474
      %v2520 = vpack.c.b16 %v2477, %v2476
      %v2521 = vpack.c.b16 %v2479, %v2478
      %v2522 = vpack.c.b16 %v2481, %v2480
      %v2523 = vpack.c.b16 %v2483, %v2482
      %v2524 = vpack.c.b16 %v2485, %v2484
      %v2525 = vpack.c.b16 %v2487, %v2486
      %v2526 = vpack.c.b16 %v2489, %v2488
      %v2527 = vpack.c.b16 %v2491, %v2490
      %v2528 = vpack.c.b16 %v2493, %v2492
      %v2529 = vpack.c.b16 %v2495, %v2494
      %v2530 = vpack.c.b16 %v2497, %v2496
      %v2531 = vpack.c.b16 %v2499, %v2498
      %v2532 = vpack.c.b16 %v2501, %v2500
      %v2533 = vpack.c.b16 %v2503, %v2502
      %v2534 = vpack.c.b16 %v2505, %v2504
      %v2535 = vpack.c.b16 %v2507, %v2506
      %v2536 = vpack.c.b16 %v2509, %v2508
      %v2537 = vpack.c.b16 %v2511, %v2510
      %v2538 = vpack.c.b16 %v2513, %v2512
      %v2539 = vpack.c.b16 %v2515, %v2514
      %2564 = vmatprep.subr.bf16.mxu0 0
      %2565 = vmatpush1.bf16.msra.mxu0 %v2523
      %2566 = vmatprep.subr.bf16.mxu0 0
      %2567 = vmatpush1.bf16.msra.mxu0 %v2522
      %2568 = vmatprep.subr.bf16.mxu0 0
      %2569 = vmatpush1.bf16.msra.mxu0 %v2521
      %2570 = vmatprep.subr.bf16.mxu0 0
      %2571 = vmatpush1.bf16.msra.mxu0 %v2520
      %2572 = vmatprep.subr.bf16.mxu0 0
      %2573 = vmatpush1.bf16.msra.mxu0 %v2519
      %2574 = vmatprep.subr.bf16.mxu0 0
      %2575 = vmatpush1.bf16.msra.mxu0 %v2518
      %2576 = vmatprep.subr.bf16.mxu0 0
      %2577 = vmatpush1.bf16.msra.mxu0 %v2517
      %2578 = vmatprep.subr.bf16.mxu0 0
      %2579 = vmatpush1.bf16.msra.mxu0 %v2516
      %2580 = vmatprep.subr.bf16.mxu0 0
      %2581 = vmatpush2.bf16.msra.mxu0 %v2531
      %2582 = vmatprep.subr.bf16.mxu0 0
      %2583 = vmatpush2.bf16.msra.mxu0 %v2530
      %2584 = vmatprep.subr.bf16.mxu0 0
      %2585 = vmatpush2.bf16.msra.mxu0 %v2529
      %2586 = vmatprep.subr.bf16.mxu0 0
      %2587 = vmatpush2.bf16.msra.mxu0 %v2528
      %2588 = vmatprep.subr.bf16.mxu0 0
      %2589 = vmatpush2.bf16.msra.mxu0 %v2527
      %2590 = vmatprep.subr.bf16.mxu0 0
      %2591 = vmatpush2.bf16.msra.mxu0 %v2526
      %2592 = vmatprep.subr.bf16.mxu0 0
      %2593 = vmatpush2.bf16.msra.mxu0 %v2525
      %2594 = vmatprep.subr.bf16.mxu0 0
      %2595 = vmatpush2.bf16.msra.mxu0 %v2524
      %2596 = vmatprep.mubr.bf16.mxu0 %v1013
      %2597 = vmatmul.mubr.bf16.gmra.mxu0 %v949
      %v2598 = vpop.f32.mrf.mxu0
      %v2599 = vadd.f32 %v2294, %v2598
      %v2600 = vpop.f32.mrf.mxu0
      %v2601 = vpop.f32.mrf.mxu0
      %v2602 = vadd.f32 %v2297, %v2601
      %v2603 = vpop.f32.mrf.mxu0
      %2604 = vmatprep.mubr.bf16.mxu0 %v1014
      %2605 = vmatmul.mubr.bf16.gmra.mxu0 %v950
      %v2606 = vpop.f32.mrf.mxu0
      %v2607 = vadd.f32 %v2302, %v2606
      %v2608 = vpop.f32.mrf.mxu0
      %v2609 = vpop.f32.mrf.mxu0
      %v2610 = vadd.f32 %v2305, %v2609
      %v2611 = vpop.f32.mrf.mxu0
      %2612 = vmatprep.mubr.bf16.mxu0 %v1015
      %2613 = vmatmul.mubr.bf16.gmra.mxu0 %v951
      %v2614 = vpop.f32.mrf.mxu0
      %v2615 = vadd.f32 %v2310, %v2614
      %v2616 = vpop.f32.mrf.mxu0
      %v2617 = vpop.f32.mrf.mxu0
      %v2618 = vadd.f32 %v2313, %v2617
      %v2619 = vpop.f32.mrf.mxu0
      %2620 = vmatprep.mubr.bf16.mxu0 %v1016
      %2621 = vmatmul.mubr.bf16.gmra.mxu0 %v952
      %v2622 = vpop.f32.mrf.mxu0
      %v2623 = vadd.f32 %v2318, %v2622
      %v2624 = vpop.f32.mrf.mxu0
      %v2625 = vpop.f32.mrf.mxu0
      %v2626 = vadd.f32 %v2321, %v2625
      %v2627 = vpop.f32.mrf.mxu0
      %2628 = vmatprep.mubr.bf16.mxu0 %v1017
      %2629 = vmatmul.mubr.bf16.gmra.mxu0 %v953
      %v2630 = vpop.f32.mrf.mxu0
      %v2631 = vadd.f32 %v2326, %v2630
      %v2632 = vpop.f32.mrf.mxu0
      %v2633 = vpop.f32.mrf.mxu0
      %v2634 = vadd.f32 %v2329, %v2633
      %v2635 = vpop.f32.mrf.mxu0
      %2636 = vmatprep.mubr.bf16.mxu0 %v1018
      %2637 = vmatmul.mubr.bf16.gmra.mxu0 %v954
      %v2638 = vpop.f32.mrf.mxu0
      %v2639 = vadd.f32 %v2334, %v2638
      %v2640 = vpop.f32.mrf.mxu0
      %v2641 = vpop.f32.mrf.mxu0
      %v2642 = vadd.f32 %v2337, %v2641
      %v2643 = vpop.f32.mrf.mxu0
      %2644 = vmatprep.mubr.bf16.mxu0 %v1019
      %2645 = vmatmul.mubr.bf16.gmra.mxu0 %v955
      %v2646 = vpop.f32.mrf.mxu0
      %v2647 = vadd.f32 %v2342, %v2646
      %v2648 = vpop.f32.mrf.mxu0
      %v2649 = vpop.f32.mrf.mxu0
      %v2650 = vadd.f32 %v2345, %v2649
      %v2651 = vpop.f32.mrf.mxu0
      %2652 = vmatprep.mubr.bf16.mxu0 %v1020
      %2653 = vmatmul.mubr.bf16.gmra.mxu0 %v956
      %v2654 = vpop.f32.mrf.mxu0
      %v2655 = vadd.f32 %v2350, %v2654
      %v2656 = vpop.f32.mrf.mxu0
      %v2657 = vpop.f32.mrf.mxu0
      %v2658 = vadd.f32 %v2353, %v2657
      %v2659 = vpop.f32.mrf.mxu0
      %2660 = vmatprep.mubr.bf16.mxu0 %v1021
      %2661 = vmatmul.mubr.bf16.gmra.mxu0 %v957
      %v2662 = vpop.f32.mrf.mxu0
      %v2663 = vadd.f32 %v2358, %v2662
      %v2664 = vpop.f32.mrf.mxu0
      %v2665 = vpop.f32.mrf.mxu0
      %v2666 = vadd.f32 %v2361, %v2665
      %v2667 = vpop.f32.mrf.mxu0
      %2668 = vmatprep.mubr.bf16.mxu0 %v1022
      %2669 = vmatmul.mubr.bf16.gmra.mxu0 %v958
      %v2670 = vpop.f32.mrf.mxu0
      %v2671 = vadd.f32 %v2366, %v2670
      %v2672 = vpop.f32.mrf.mxu0
      %v2673 = vpop.f32.mrf.mxu0
      %v2674 = vadd.f32 %v2369, %v2673
      %v2675 = vpop.f32.mrf.mxu0
      %2676 = vmatprep.mubr.bf16.mxu0 %v1023
      %2677 = vmatmul.mubr.bf16.gmra.mxu0 %v959
      %v2678 = vpop.f32.mrf.mxu0
      %v2679 = vadd.f32 %v2374, %v2678
      %v2680 = vpop.f32.mrf.mxu0
      %v2681 = vpop.f32.mrf.mxu0
      %v2682 = vadd.f32 %v2377, %v2681
      %v2683 = vpop.f32.mrf.mxu0
      %2684 = vmatprep.mubr.bf16.mxu0 %v1024
      %2685 = vmatmul.mubr.bf16.gmra.mxu0 %v960
      %v2686 = vpop.f32.mrf.mxu0
      %v2687 = vadd.f32 %v2382, %v2686
      %v2688 = vpop.f32.mrf.mxu0
      %v2689 = vpop.f32.mrf.mxu0
      %v2690 = vadd.f32 %v2385, %v2689
      %v2691 = vpop.f32.mrf.mxu0
      %2692 = vmatprep.mubr.bf16.mxu0 %v1025
      %2693 = vmatmul.mubr.bf16.gmra.mxu0 %v961
      %v2694 = vpop.f32.mrf.mxu0
      %v2695 = vadd.f32 %v2390, %v2694
      %v2696 = vpop.f32.mrf.mxu0
      %v2697 = vpop.f32.mrf.mxu0
      %v2698 = vadd.f32 %v2393, %v2697
      %v2699 = vpop.f32.mrf.mxu0
      %2700 = vmatprep.mubr.bf16.mxu0 %v1026
      %2701 = vmatmul.mubr.bf16.gmra.mxu0 %v962
      %v2702 = vpop.f32.mrf.mxu0
      %v2703 = vadd.f32 %v2398, %v2702
      %v2704 = vpop.f32.mrf.mxu0
      %v2705 = vpop.f32.mrf.mxu0
      %v2706 = vadd.f32 %v2401, %v2705
      %v2707 = vpop.f32.mrf.mxu0
      %2708 = vmatprep.mubr.bf16.mxu0 %v1027
      %2709 = vmatmul.mubr.bf16.gmra.mxu0 %v963
      %v2710 = vpop.f32.mrf.mxu0
      %v2711 = vadd.f32 %v2406, %v2710
      %v2712 = vpop.f32.mrf.mxu0
      %v2713 = vpop.f32.mrf.mxu0
      %v2714 = vadd.f32 %v2409, %v2713
      %v2715 = vpop.f32.mrf.mxu0
      %2716 = vmatprep.mubr.bf16.mxu0 %v1028
      %2717 = vmatmul.mubr.bf16.gmra.mxu0 %v964
      %v2718 = vpop.f32.mrf.mxu0
      %v2719 = vadd.f32 %v2414, %v2718
      %v2720 = vpop.f32.mrf.mxu0
      %v2721 = vpop.f32.mrf.mxu0
      %v2722 = vadd.f32 %v2417, %v2721
      %v2723 = vpop.f32.mrf.mxu0
      %2724 = vdwg.mxu0
      %2725 = vmatprep.subr.bf16.mxu0 0
      %2726 = vmatpush1.bf16.msra.mxu0 %v2539
      %2727 = vmatprep.subr.bf16.mxu0 0
      %2728 = vmatpush1.bf16.msra.mxu0 %v2538
      %2729 = vmatprep.subr.bf16.mxu0 0
      %2730 = vmatpush1.bf16.msra.mxu0 %v2537
      %2731 = vmatprep.subr.bf16.mxu0 0
      %2732 = vmatpush1.bf16.msra.mxu0 %v2536
      %2733 = vmatprep.subr.bf16.mxu0 0
      %2734 = vmatpush1.bf16.msra.mxu0 %v2535
      %2735 = vmatprep.subr.bf16.mxu0 0
      %2736 = vmatpush1.bf16.msra.mxu0 %v2534
      %2737 = vmatprep.subr.bf16.mxu0 0
      %2738 = vmatpush1.bf16.msra.mxu0 %v2533
      %2739 = vmatprep.subr.bf16.mxu0 0
      %2740 = vmatpush1.bf16.msra.mxu0 %v2532
      %2741 = vmatprep.subr.bf16.mxu0 0
      %2742 = vmatpush2.bf16.msra.mxu0 0
      %2743 = vmatprep.subr.bf16.mxu0 0
      %2744 = vmatpush2.bf16.msra.mxu0 0
      %2745 = vmatprep.subr.bf16.mxu0 0
      %2746 = vmatpush2.bf16.msra.mxu0 0
      %2747 = vmatprep.subr.bf16.mxu0 0
      %2748 = vmatpush2.bf16.msra.mxu0 0
      %2749 = vmatprep.subr.bf16.mxu0 0
      %2750 = vmatpush2.bf16.msra.mxu0 0
      %2751 = vmatprep.subr.bf16.mxu0 0
      %2752 = vmatpush2.bf16.msra.mxu0 0
      %2753 = vmatprep.subr.bf16.mxu0 0
      %2754 = vmatpush2.bf16.msra.mxu0 0
      %2755 = vmatprep.subr.bf16.mxu0 0
      %2756 = vmatpush2.bf16.msra.mxu0 0
      %2757 = vmatprep.mubr.bf16.mxu0 0
      %2758 = vmatmul.mubr.bf16.gmra.mxu0 %v1077
      %v2759 = vpop.f32.mrf.mxu0
      %v2760 = vadd.f32 %v2599, %v2759
      %v2761 = vpop.f32.mrf.mxu0
      %v2762 = vpop.f32.mrf.mxu0
      %v2763 = vadd.f32 %v2602, %v2762
      %v2764 = vpop.f32.mrf.mxu0
      %2765 = vmatprep.mubr.bf16.mxu0 0
      %2766 = vmatmul.mubr.bf16.gmra.mxu0 %v1078
      %v2767 = vpop.f32.mrf.mxu0
      %v2768 = vadd.f32 %v2607, %v2767
      %v2769 = vpop.f32.mrf.mxu0
      %v2770 = vpop.f32.mrf.mxu0
      %v2771 = vadd.f32 %v2610, %v2770
      %v2772 = vpop.f32.mrf.mxu0
      %2773 = vmatprep.mubr.bf16.mxu0 0
      %2774 = vmatmul.mubr.bf16.gmra.mxu0 %v1079
      %v2775 = vpop.f32.mrf.mxu0
      %v2776 = vadd.f32 %v2615, %v2775
      %v2777 = vpop.f32.mrf.mxu0
      %v2778 = vpop.f32.mrf.mxu0
      %v2779 = vadd.f32 %v2618, %v2778
      %v2780 = vpop.f32.mrf.mxu0
      %2781 = vmatprep.mubr.bf16.mxu0 0
      %2782 = vmatmul.mubr.bf16.gmra.mxu0 %v1080
      %v2783 = vpop.f32.mrf.mxu0
      %v2784 = vadd.f32 %v2623, %v2783
      %v2785 = vpop.f32.mrf.mxu0
      %v2786 = vpop.f32.mrf.mxu0
      %v2787 = vadd.f32 %v2626, %v2786
      %v2788 = vpop.f32.mrf.mxu0
      %2789 = vmatprep.mubr.bf16.mxu0 0
      %2790 = vmatmul.mubr.bf16.gmra.mxu0 %v1081
      %v2791 = vpop.f32.mrf.mxu0
      %v2792 = vadd.f32 %v2631, %v2791
      %v2793 = vpop.f32.mrf.mxu0
      %v2794 = vpop.f32.mrf.mxu0
      %v2795 = vadd.f32 %v2634, %v2794
      %v2796 = vpop.f32.mrf.mxu0
      %2797 = vmatprep.mubr.bf16.mxu0 0
      %2798 = vmatmul.mubr.bf16.gmra.mxu0 %v1082
      %v2799 = vpop.f32.mrf.mxu0
      %v2800 = vadd.f32 %v2639, %v2799
      %v2801 = vpop.f32.mrf.mxu0
      %v2802 = vpop.f32.mrf.mxu0
      %v2803 = vadd.f32 %v2642, %v2802
      %v2804 = vpop.f32.mrf.mxu0
      %2805 = vmatprep.mubr.bf16.mxu0 0
      %2806 = vmatmul.mubr.bf16.gmra.mxu0 %v1083
      %v2807 = vpop.f32.mrf.mxu0
      %v2808 = vadd.f32 %v2647, %v2807
      %v2809 = vpop.f32.mrf.mxu0
      %v2810 = vpop.f32.mrf.mxu0
      %v2811 = vadd.f32 %v2650, %v2810
      %v2812 = vpop.f32.mrf.mxu0
      %2813 = vmatprep.mubr.bf16.mxu0 0
      %2814 = vmatmul.mubr.bf16.gmra.mxu0 %v1084
      %v2815 = vpop.f32.mrf.mxu0
      %v2816 = vadd.f32 %v2655, %v2815
      %v2817 = vpop.f32.mrf.mxu0
      %v2818 = vpop.f32.mrf.mxu0
      %v2819 = vadd.f32 %v2658, %v2818
      %v2820 = vpop.f32.mrf.mxu0
      %2821 = vmatprep.mubr.bf16.mxu0 0
      %2822 = vmatmul.mubr.bf16.gmra.mxu0 %v1085
      %v2823 = vpop.f32.mrf.mxu0
      %v2824 = vadd.f32 %v2663, %v2823
      %v2825 = vpop.f32.mrf.mxu0
      %v2826 = vpop.f32.mrf.mxu0
      %v2827 = vadd.f32 %v2666, %v2826
      %v2828 = vpop.f32.mrf.mxu0
      %2829 = vmatprep.mubr.bf16.mxu0 0
      %2830 = vmatmul.mubr.bf16.gmra.mxu0 %v1086
      %v2831 = vpop.f32.mrf.mxu0
      %v2832 = vadd.f32 %v2671, %v2831
      %v2833 = vpop.f32.mrf.mxu0
      %v2834 = vpop.f32.mrf.mxu0
      %v2835 = vadd.f32 %v2674, %v2834
      %v2836 = vpop.f32.mrf.mxu0
      %2837 = vmatprep.mubr.bf16.mxu0 0
      %2838 = vmatmul.mubr.bf16.gmra.mxu0 %v1087
      %v2839 = vpop.f32.mrf.mxu0
      %v2840 = vadd.f32 %v2679, %v2839
      %v2841 = vpop.f32.mrf.mxu0
      %v2842 = vpop.f32.mrf.mxu0
      %v2843 = vadd.f32 %v2682, %v2842
      %v2844 = vpop.f32.mrf.mxu0
      %2845 = vmatprep.mubr.bf16.mxu0 0
      %2846 = vmatmul.mubr.bf16.gmra.mxu0 %v1088
      %v2847 = vpop.f32.mrf.mxu0
      %v2848 = vadd.f32 %v2687, %v2847
      %v2849 = vpop.f32.mrf.mxu0
      %v2850 = vpop.f32.mrf.mxu0
      %v2851 = vadd.f32 %v2690, %v2850
      %v2852 = vpop.f32.mrf.mxu0
      %2853 = vmatprep.mubr.bf16.mxu0 0
      %2854 = vmatmul.mubr.bf16.gmra.mxu0 %v1089
      %v2855 = vpop.f32.mrf.mxu0
      %v2856 = vadd.f32 %v2695, %v2855
      %v2857 = vpop.f32.mrf.mxu0
      %v2858 = vpop.f32.mrf.mxu0
      %v2859 = vadd.f32 %v2698, %v2858
      %v2860 = vpop.f32.mrf.mxu0
      %2861 = vmatprep.mubr.bf16.mxu0 0
      %2862 = vmatmul.mubr.bf16.gmra.mxu0 %v1090
      %v2863 = vpop.f32.mrf.mxu0
      %v2864 = vadd.f32 %v2703, %v2863
      %v2865 = vpop.f32.mrf.mxu0
      %v2866 = vpop.f32.mrf.mxu0
      %v2867 = vadd.f32 %v2706, %v2866
      %v2868 = vpop.f32.mrf.mxu0
      %2869 = vmatprep.mubr.bf16.mxu0 0
      %2870 = vmatmul.mubr.bf16.gmra.mxu0 %v1091
      %v2871 = vpop.f32.mrf.mxu0
      %v2872 = vadd.f32 %v2711, %v2871
      %v2873 = vpop.f32.mrf.mxu0
      %v2874 = vpop.f32.mrf.mxu0
      %v2875 = vadd.f32 %v2714, %v2874
      %v2876 = vpop.f32.mrf.mxu0
      %2877 = vmatprep.mubr.bf16.mxu0 0
      %2878 = vmatmul.mubr.bf16.gmra.mxu0 %v1092
      %v2879 = vpop.f32.mrf.mxu0
      %v2880 = vadd.f32 %v2719, %v2879
      %v2881 = vpop.f32.mrf.mxu0
      %v2882 = vpop.f32.mrf.mxu0
      %v2883 = vadd.f32 %v2722, %v2882
      %v2884 = vpop.f32.mrf.mxu0
      %2885 = vdwg.mxu0
      %s2886 = sadd.s32 %s305, 2
      %s2887 = smul.u32 %s2886, 5
      %s2888 = smul.addr %s2887, 4
      %s2889 = scalar_lea.vmem %s292, %s2888
      %v2890 = vld [vmem:[%s2889] sm:$0xf]
      %v2891 = vld [vmem:[%s2889 + $0x4] sm:$0xf]
      %v2892 = vld [vmem:[%s2889 + $0x8] sm:$0xf]
      %v2893 = vld [vmem:[%s2889 + $0xc] sm:$0xf]
      %v2894 = vld [vmem:[%s2889 + $0x14] sm:$0xf]
      %v2895 = vld [vmem:[%s2889 + $0x18] sm:$0xf]
      %v2896 = vld [vmem:[%s2889 + $0x1c] sm:$0xf]
      %v2897 = vld [vmem:[%s2889 + $0x20] sm:$0xf]
      %v2898 = vld [vmem:[%s2889 + $0x28] sm:$0xf]
      %v2899 = vld [vmem:[%s2889 + $0x2c] sm:$0xf]
      %v2900 = vld [vmem:[%s2889 + $0x30] sm:$0xf]
      %v2901 = vld [vmem:[%s2889 + $0x34] sm:$0xf]
      %v2902 = vld [vmem:[%s2889 + $0x3c] sm:$0xf]
      %v2903 = vld [vmem:[%s2889 + $0x40] sm:$0xf]
      %v2904 = vld [vmem:[%s2889 + $0x44] sm:$0xf]
      %v2905 = vld [vmem:[%s2889 + $0x48] sm:$0xf]
      %v2906 = vld [vmem:[%s2889 + $0x50] sm:$0xf]
      %v2907 = vld [vmem:[%s2889 + $0x54] sm:$0xf]
      %v2908 = vld [vmem:[%s2889 + $0x58] sm:$0xf]
      %v2909 = vld [vmem:[%s2889 + $0x5c] sm:$0xf]
      %v2910 = vld [vmem:[%s2889 + $0x64] sm:$0xf]
      %v2911 = vld [vmem:[%s2889 + $0x68] sm:$0xf]
      %v2912 = vld [vmem:[%s2889 + $0x6c] sm:$0xf]
      %v2913 = vld [vmem:[%s2889 + $0x70] sm:$0xf]
      %v2914 = vld [vmem:[%s2889 + $0x78] sm:$0xf]
      %v2915 = vld [vmem:[%s2889 + $0x7c] sm:$0xf]
      %v2916 = vld [vmem:[%s2889 + $0x80] sm:$0xf]
      %v2917 = vld [vmem:[%s2889 + $0x84] sm:$0xf]
      %v2918 = vld [vmem:[%s2889 + $0x8c] sm:$0xf]
      %v2919 = vld [vmem:[%s2889 + $0x90] sm:$0xf]
      %v2920 = vld [vmem:[%s2889 + $0x94] sm:$0xf]
      %v2921 = vld [vmem:[%s2889 + $0x98] sm:$0xf]
      %v2922 = vld [vmem:[%s2889 + $0x10] sm:$0x1]
      %v2923 = vld [vmem:[%s2889 + $0x24] sm:$0x1]
      %v2924 = vld [vmem:[%s2889 + $0x38] sm:$0x1]
      %v2925 = vld [vmem:[%s2889 + $0x4c] sm:$0x1]
      %v2926 = vld [vmem:[%s2889 + $0x60] sm:$0x1]
      %v2927 = vld [vmem:[%s2889 + $0x74] sm:$0x1]
      %v2928 = vld [vmem:[%s2889 + $0x88] sm:$0x1]
      %v2929 = vld [vmem:[%s2889 + $0x9c] sm:$0x1]
      %v2931 = vshrl.u32 %v2890, 16
      %v2933 = vrot.slane %v2931, 4
      %v2934 = vshll.u32 %v2890, 16
      %v2936 = vrot.slane %v2934, 5
      %v2937 = vor.u32 %v2933, %v2936
      %v2938 = vrot.slane %v2937, 4
      %v2940 = vshll.u32 %v2891, 16
      %v2942 = vrot.slane %v2940, 5
      %v2943 = vsel %vm401, %v2938, %v2942
      %v2944 = vshrl.u32 %v2891, 16
      %v2946 = vrot.slane %v2944, 4
      %v2947 = vor.u32 %v2946, %v2942
      %v2948 = vrot.slane %v2947, 4
      %v2950 = vshll.u32 %v2892, 16
      %v2952 = vrot.slane %v2950, 5
      %v2953 = vsel %vm401, %v2948, %v2952
      %v2954 = vshrl.u32 %v2892, 16
      %v2956 = vrot.slane %v2954, 4
      %v2957 = vor.u32 %v2956, %v2952
      %v2958 = vrot.slane %v2957, 4
      %v2960 = vshll.u32 %v2893, 16
      %v2962 = vrot.slane %v2960, 5
      %v2963 = vsel %vm401, %v2958, %v2962
      %v2964 = vshrl.u32 %v2893, 16
      %v2966 = vrot.slane %v2964, 4
      %v2967 = vor.u32 %v2966, %v2962
      %v2968 = vrot.slane %v2967, 4
      %v2970 = vshll.u32 %v2922, 16
      %v2972 = vrot.slane %v2970, 5
      %v2973 = vsel %vm401, %v2968, %v2972
      %v2975 = vshrl.u32 %v2894, 16
      %v2977 = vrot.slane %v2975, 4
      %v2978 = vshll.u32 %v2894, 16
      %v2980 = vrot.slane %v2978, 5
      %v2981 = vor.u32 %v2977, %v2980
      %v2982 = vrot.slane %v2981, 4
      %v2984 = vshll.u32 %v2895, 16
      %v2986 = vrot.slane %v2984, 5
      %v2987 = vsel %vm401, %v2982, %v2986
      %v2988 = vshrl.u32 %v2895, 16
      %v2990 = vrot.slane %v2988, 4
      %v2991 = vor.u32 %v2990, %v2986
      %v2992 = vrot.slane %v2991, 4
      %v2994 = vshll.u32 %v2896, 16
      %v2996 = vrot.slane %v2994, 5
      %v2997 = vsel %vm401, %v2992, %v2996
      %v2998 = vshrl.u32 %v2896, 16
      %v3000 = vrot.slane %v2998, 4
      %v3001 = vor.u32 %v3000, %v2996
      %v3002 = vrot.slane %v3001, 4
      %v3004 = vshll.u32 %v2897, 16
      %v3006 = vrot.slane %v3004, 5
      %v3007 = vsel %vm401, %v3002, %v3006
      %v3008 = vshrl.u32 %v2897, 16
      %v3010 = vrot.slane %v3008, 4
      %v3011 = vor.u32 %v3010, %v3006
      %v3012 = vrot.slane %v3011, 4
      %v3014 = vshll.u32 %v2923, 16
      %v3016 = vrot.slane %v3014, 5
      %v3017 = vsel %vm401, %v3012, %v3016
      %v3019 = vshrl.u32 %v2898, 16
      %v3021 = vrot.slane %v3019, 4
      %v3022 = vshll.u32 %v2898, 16
      %v3024 = vrot.slane %v3022, 5
      %v3025 = vor.u32 %v3021, %v3024
      %v3026 = vrot.slane %v3025, 4
      %v3028 = vshll.u32 %v2899, 16
      %v3030 = vrot.slane %v3028, 5
      %v3031 = vsel %vm401, %v3026, %v3030
      %v3032 = vshrl.u32 %v2899, 16
      %v3034 = vrot.slane %v3032, 4
      %v3035 = vor.u32 %v3034, %v3030
      %v3036 = vrot.slane %v3035, 4
      %v3038 = vshll.u32 %v2900, 16
      %v3040 = vrot.slane %v3038, 5
      %v3041 = vsel %vm401, %v3036, %v3040
      %v3042 = vshrl.u32 %v2900, 16
      %v3044 = vrot.slane %v3042, 4
      %v3045 = vor.u32 %v3044, %v3040
      %v3046 = vrot.slane %v3045, 4
      %v3048 = vshll.u32 %v2901, 16
      %v3050 = vrot.slane %v3048, 5
      %v3051 = vsel %vm401, %v3046, %v3050
      %v3052 = vshrl.u32 %v2901, 16
      %v3054 = vrot.slane %v3052, 4
      %v3055 = vor.u32 %v3054, %v3050
      %v3056 = vrot.slane %v3055, 4
      %v3058 = vshll.u32 %v2924, 16
      %v3060 = vrot.slane %v3058, 5
      %v3061 = vsel %vm401, %v3056, %v3060
      %v3063 = vshrl.u32 %v2902, 16
      %v3065 = vrot.slane %v3063, 4
      %v3066 = vshll.u32 %v2902, 16
      %v3068 = vrot.slane %v3066, 5
      %v3069 = vor.u32 %v3065, %v3068
      %v3070 = vrot.slane %v3069, 4
      %v3072 = vshll.u32 %v2903, 16
      %v3074 = vrot.slane %v3072, 5
      %v3075 = vsel %vm401, %v3070, %v3074
      %v3076 = vshrl.u32 %v2903, 16
      %v3078 = vrot.slane %v3076, 4
      %v3079 = vor.u32 %v3078, %v3074
      %v3080 = vrot.slane %v3079, 4
      %v3082 = vshll.u32 %v2904, 16
      %v3084 = vrot.slane %v3082, 5
      %v3085 = vsel %vm401, %v3080, %v3084
      %v3086 = vshrl.u32 %v2904, 16
      %v3088 = vrot.slane %v3086, 4
      %v3089 = vor.u32 %v3088, %v3084
      %v3090 = vrot.slane %v3089, 4
      %v3092 = vshll.u32 %v2905, 16
      %v3094 = vrot.slane %v3092, 5
      %v3095 = vsel %vm401, %v3090, %v3094
      %v3096 = vshrl.u32 %v2905, 16
      %v3098 = vrot.slane %v3096, 4
      %v3099 = vor.u32 %v3098, %v3094
      %v3100 = vrot.slane %v3099, 4
      %v3102 = vshll.u32 %v2925, 16
      %v3104 = vrot.slane %v3102, 5
      %v3105 = vsel %vm401, %v3100, %v3104
      %v3107 = vshrl.u32 %v2906, 16
      %v3109 = vrot.slane %v3107, 4
      %v3110 = vshll.u32 %v2906, 16
      %v3112 = vrot.slane %v3110, 5
      %v3113 = vor.u32 %v3109, %v3112
      %v3114 = vrot.slane %v3113, 4
      %v3116 = vshll.u32 %v2907, 16
      %v3118 = vrot.slane %v3116, 5
      %v3119 = vsel %vm401, %v3114, %v3118
      %v3120 = vshrl.u32 %v2907, 16
      %v3122 = vrot.slane %v3120, 4
      %v3123 = vor.u32 %v3122, %v3118
      %v3124 = vrot.slane %v3123, 4
      %v3126 = vshll.u32 %v2908, 16
      %v3128 = vrot.slane %v3126, 5
      %v3129 = vsel %vm401, %v3124, %v3128
      %v3130 = vshrl.u32 %v2908, 16
      %v3132 = vrot.slane %v3130, 4
      %v3133 = vor.u32 %v3132, %v3128
      %v3134 = vrot.slane %v3133, 4
      %v3136 = vshll.u32 %v2909, 16
      %v3138 = vrot.slane %v3136, 5
      %v3139 = vsel %vm401, %v3134, %v3138
      %v3140 = vshrl.u32 %v2909, 16
      %v3142 = vrot.slane %v3140, 4
      %v3143 = vor.u32 %v3142, %v3138
      %v3144 = vrot.slane %v3143, 4
      %v3146 = vshll.u32 %v2926, 16
      %v3148 = vrot.slane %v3146, 5
      %v3149 = vsel %vm401, %v3144, %v3148
      %v3151 = vshrl.u32 %v2910, 16
      %v3153 = vrot.slane %v3151, 4
      %v3154 = vshll.u32 %v2910, 16
      %v3156 = vrot.slane %v3154, 5
      %v3157 = vor.u32 %v3153, %v3156
      %v3158 = vrot.slane %v3157, 4
      %v3160 = vshll.u32 %v2911, 16
      %v3162 = vrot.slane %v3160, 5
      %v3163 = vsel %vm401, %v3158, %v3162
      %v3164 = vshrl.u32 %v2911, 16
      %v3166 = vrot.slane %v3164, 4
      %v3167 = vor.u32 %v3166, %v3162
      %v3168 = vrot.slane %v3167, 4
      %v3170 = vshll.u32 %v2912, 16
      %v3172 = vrot.slane %v3170, 5
      %v3173 = vsel %vm401, %v3168, %v3172
      %v3174 = vshrl.u32 %v2912, 16
      %v3176 = vrot.slane %v3174, 4
      %v3177 = vor.u32 %v3176, %v3172
      %v3178 = vrot.slane %v3177, 4
      %v3180 = vshll.u32 %v2913, 16
      %v3182 = vrot.slane %v3180, 5
      %v3183 = vsel %vm401, %v3178, %v3182
      %v3184 = vshrl.u32 %v2913, 16
      %v3186 = vrot.slane %v3184, 4
      %v3187 = vor.u32 %v3186, %v3182
      %v3188 = vrot.slane %v3187, 4
      %v3190 = vshll.u32 %v2927, 16
      %v3192 = vrot.slane %v3190, 5
      %v3193 = vsel %vm401, %v3188, %v3192
      %v3195 = vshrl.u32 %v2914, 16
      %v3197 = vrot.slane %v3195, 4
      %v3198 = vshll.u32 %v2914, 16
      %v3200 = vrot.slane %v3198, 5
      %v3201 = vor.u32 %v3197, %v3200
      %v3202 = vrot.slane %v3201, 4
      %v3204 = vshll.u32 %v2915, 16
      %v3206 = vrot.slane %v3204, 5
      %v3207 = vsel %vm401, %v3202, %v3206
      %v3208 = vshrl.u32 %v2915, 16
      %v3210 = vrot.slane %v3208, 4
      %v3211 = vor.u32 %v3210, %v3206
      %v3212 = vrot.slane %v3211, 4
      %v3214 = vshll.u32 %v2916, 16
      %v3216 = vrot.slane %v3214, 5
      %v3217 = vsel %vm401, %v3212, %v3216
      %v3218 = vshrl.u32 %v2916, 16
      %v3220 = vrot.slane %v3218, 4
      %v3221 = vor.u32 %v3220, %v3216
      %v3222 = vrot.slane %v3221, 4
      %v3224 = vshll.u32 %v2917, 16
      %v3226 = vrot.slane %v3224, 5
      %v3227 = vsel %vm401, %v3222, %v3226
      %v3228 = vshrl.u32 %v2917, 16
      %v3230 = vrot.slane %v3228, 4
      %v3231 = vor.u32 %v3230, %v3226
      %v3232 = vrot.slane %v3231, 4
      %v3234 = vshll.u32 %v2928, 16
      %v3236 = vrot.slane %v3234, 5
      %v3237 = vsel %vm401, %v3232, %v3236
      %v3239 = vshrl.u32 %v2918, 16
      %v3241 = vrot.slane %v3239, 4
      %v3242 = vshll.u32 %v2918, 16
      %v3244 = vrot.slane %v3242, 5
      %v3245 = vor.u32 %v3241, %v3244
      %v3246 = vrot.slane %v3245, 4
      %v3248 = vshll.u32 %v2919, 16
      %v3250 = vrot.slane %v3248, 5
      %v3251 = vsel %vm401, %v3246, %v3250
      %v3252 = vshrl.u32 %v2919, 16
      %v3254 = vrot.slane %v3252, 4
      %v3255 = vor.u32 %v3254, %v3250
      %v3256 = vrot.slane %v3255, 4
      %v3258 = vshll.u32 %v2920, 16
      %v3260 = vrot.slane %v3258, 5
      %v3261 = vsel %vm401, %v3256, %v3260
      %v3262 = vshrl.u32 %v2920, 16
      %v3264 = vrot.slane %v3262, 4
      %v3265 = vor.u32 %v3264, %v3260
      %v3266 = vrot.slane %v3265, 4
      %v3268 = vshll.u32 %v2921, 16
      %v3270 = vrot.slane %v3268, 5
      %v3271 = vsel %vm401, %v3266, %v3270
      %v3272 = vshrl.u32 %v2921, 16
      %v3274 = vrot.slane %v3272, 4
      %v3275 = vor.u32 %v3274, %v3270
      %v3276 = vrot.slane %v3275, 4
      %v3278 = vshll.u32 %v2929, 16
      %v3280 = vrot.slane %v3278, 5
      %v3281 = vsel %vm401, %v3276, %v3280
      %v3282 = vld [vmem:[%s2889] sm:$0xe]
      %v3283 = vld [vmem:[%s2889 + $0x14] sm:$0xe]
      %v3284 = vld [vmem:[%s2889 + $0x28] sm:$0xe]
      %v3285 = vld [vmem:[%s2889 + $0x3c] sm:$0xe]
      %v3286 = vld [vmem:[%s2889 + $0x50] sm:$0xe]
      %v3287 = vld [vmem:[%s2889 + $0x64] sm:$0xe]
      %v3288 = vld [vmem:[%s2889 + $0x78] sm:$0xe]
      %v3289 = vld [vmem:[%s2889 + $0x8c] sm:$0xe]
      %v3330 = vrot.slane %v3282, 5
      %v3331 = vrot.slane %v3330, 4
      %v3332 = vrot.slane %v2891, 5
      %v3333 = vsel %vm804, %v3331, %v3332
      %v3334 = vrot.slane %v3332, 4
      %v3335 = vrot.slane %v2892, 5
      %v3336 = vsel %vm804, %v3334, %v3335
      %v3337 = vrot.slane %v3335, 4
      %v3338 = vrot.slane %v2893, 5
      %v3339 = vsel %vm804, %v3337, %v3338
      %v3340 = vrot.slane %v3338, 4
      %v3341 = vrot.slane %v2922, 5
      %v3342 = vsel %vm804, %v3340, %v3341
      %v3343 = vrot.slane %v3283, 5
      %v3344 = vrot.slane %v3343, 4
      %v3345 = vrot.slane %v2895, 5
      %v3346 = vsel %vm804, %v3344, %v3345
      %v3347 = vrot.slane %v3345, 4
      %v3348 = vrot.slane %v2896, 5
      %v3349 = vsel %vm804, %v3347, %v3348
      %v3350 = vrot.slane %v3348, 4
      %v3351 = vrot.slane %v2897, 5
      %v3352 = vsel %vm804, %v3350, %v3351
      %v3353 = vrot.slane %v3351, 4
      %v3354 = vrot.slane %v2923, 5
      %v3355 = vsel %vm804, %v3353, %v3354
      %v3356 = vrot.slane %v3284, 5
      %v3357 = vrot.slane %v3356, 4
      %v3358 = vrot.slane %v2899, 5
      %v3359 = vsel %vm804, %v3357, %v3358
      %v3360 = vrot.slane %v3358, 4
      %v3361 = vrot.slane %v2900, 5
      %v3362 = vsel %vm804, %v3360, %v3361
      %v3363 = vrot.slane %v3361, 4
      %v3364 = vrot.slane %v2901, 5
      %v3365 = vsel %vm804, %v3363, %v3364
      %v3366 = vrot.slane %v3364, 4
      %v3367 = vrot.slane %v2924, 5
      %v3368 = vsel %vm804, %v3366, %v3367
      %v3369 = vrot.slane %v3285, 5
      %v3370 = vrot.slane %v3369, 4
      %v3371 = vrot.slane %v2903, 5
      %v3372 = vsel %vm804, %v3370, %v3371
      %v3373 = vrot.slane %v3371, 4
      %v3374 = vrot.slane %v2904, 5
      %v3375 = vsel %vm804, %v3373, %v3374
      %v3376 = vrot.slane %v3374, 4
      %v3377 = vrot.slane %v2905, 5
      %v3378 = vsel %vm804, %v3376, %v3377
      %v3379 = vrot.slane %v3377, 4
      %v3380 = vrot.slane %v2925, 5
      %v3381 = vsel %vm804, %v3379, %v3380
      %v3382 = vrot.slane %v3286, 5
      %v3383 = vrot.slane %v3382, 4
      %v3384 = vrot.slane %v2907, 5
      %v3385 = vsel %vm804, %v3383, %v3384
      %v3386 = vrot.slane %v3384, 4
      %v3387 = vrot.slane %v2908, 5
      %v3388 = vsel %vm804, %v3386, %v3387
      %v3389 = vrot.slane %v3387, 4
      %v3390 = vrot.slane %v2909, 5
      %v3391 = vsel %vm804, %v3389, %v3390
      %v3392 = vrot.slane %v3390, 4
      %v3393 = vrot.slane %v2926, 5
      %v3394 = vsel %vm804, %v3392, %v3393
      %v3395 = vrot.slane %v3287, 5
      %v3396 = vrot.slane %v3395, 4
      %v3397 = vrot.slane %v2911, 5
      %v3398 = vsel %vm804, %v3396, %v3397
      %v3399 = vrot.slane %v3397, 4
      %v3400 = vrot.slane %v2912, 5
      %v3401 = vsel %vm804, %v3399, %v3400
      %v3402 = vrot.slane %v3400, 4
      %v3403 = vrot.slane %v2913, 5
      %v3404 = vsel %vm804, %v3402, %v3403
      %v3405 = vrot.slane %v3403, 4
      %v3406 = vrot.slane %v2927, 5
      %v3407 = vsel %vm804, %v3405, %v3406
      %v3408 = vrot.slane %v3288, 5
      %v3409 = vrot.slane %v3408, 4
      %v3410 = vrot.slane %v2915, 5
      %v3411 = vsel %vm804, %v3409, %v3410
      %v3412 = vrot.slane %v3410, 4
      %v3413 = vrot.slane %v2916, 5
      %v3414 = vsel %vm804, %v3412, %v3413
      %v3415 = vrot.slane %v3413, 4
      %v3416 = vrot.slane %v2917, 5
      %v3417 = vsel %vm804, %v3415, %v3416
      %v3418 = vrot.slane %v3416, 4
      %v3419 = vrot.slane %v2928, 5
      %v3420 = vsel %vm804, %v3418, %v3419
      %v3421 = vrot.slane %v3289, 5
      %v3422 = vrot.slane %v3421, 4
      %v3423 = vrot.slane %v2919, 5
      %v3424 = vsel %vm804, %v3422, %v3423
      %v3425 = vrot.slane %v3423, 4
      %v3426 = vrot.slane %v2920, 5
      %v3427 = vsel %vm804, %v3425, %v3426
      %v3428 = vrot.slane %v3426, 4
      %v3429 = vrot.slane %v2921, 5
      %v3430 = vsel %vm804, %v3428, %v3429
      %v3431 = vrot.slane %v3429, 4
      %v3432 = vrot.slane %v2929, 5
      %v3433 = vsel %vm804, %v3431, %v3432
      %v3442 = vunpack.c.l.b16 %v2890
      %v3443 = vunpack.c.l.b16 %v2891
      %v3444 = vunpack.c.l.b16 %v2892
      %v3445 = vunpack.c.l.b16 %v2893
      %v3446 = vunpack.c.l.b16 %v2894
      %v3447 = vunpack.c.l.b16 %v2895
      %v3448 = vunpack.c.l.b16 %v2896
      %v3449 = vunpack.c.l.b16 %v2897
      %v3450 = vunpack.c.l.b16 %v2898
      %v3451 = vunpack.c.l.b16 %v2899
      %v3452 = vunpack.c.l.b16 %v2900
      %v3453 = vunpack.c.l.b16 %v2901
      %v3454 = vunpack.c.l.b16 %v2902
      %v3455 = vunpack.c.l.b16 %v2903
      %v3456 = vunpack.c.l.b16 %v2904
      %v3457 = vunpack.c.l.b16 %v2905
      %v3458 = vunpack.c.l.b16 %v2906
      %v3459 = vunpack.c.l.b16 %v2907
      %v3460 = vunpack.c.l.b16 %v2908
      %v3461 = vunpack.c.l.b16 %v2909
      %v3462 = vunpack.c.l.b16 %v2910
      %v3463 = vunpack.c.l.b16 %v2911
      %v3464 = vunpack.c.l.b16 %v2912
      %v3465 = vunpack.c.l.b16 %v2913
      %v3466 = vunpack.c.l.b16 %v2914
      %v3467 = vunpack.c.l.b16 %v2915
      %v3468 = vunpack.c.l.b16 %v2916
      %v3469 = vunpack.c.l.b16 %v2917
      %v3470 = vunpack.c.l.b16 %v2918
      %v3471 = vunpack.c.l.b16 %v2919
      %v3472 = vunpack.c.l.b16 %v2920
      %v3473 = vunpack.c.l.b16 %v2921
      %v3474 = vpack.c.b16 %v3443, %v3442
      %v3475 = vpack.c.b16 %v3445, %v3444
      %v3476 = vpack.c.b16 %v3447, %v3446
      %v3477 = vpack.c.b16 %v3449, %v3448
      %v3478 = vpack.c.b16 %v3451, %v3450
      %v3479 = vpack.c.b16 %v3453, %v3452
      %v3480 = vpack.c.b16 %v3455, %v3454
      %v3481 = vpack.c.b16 %v3457, %v3456
      %v3482 = vpack.c.b16 %v3459, %v3458
      %v3483 = vpack.c.b16 %v3461, %v3460
      %v3484 = vpack.c.b16 %v3463, %v3462
      %v3485 = vpack.c.b16 %v3465, %v3464
      %v3486 = vpack.c.b16 %v3467, %v3466
      %v3487 = vpack.c.b16 %v3469, %v3468
      %v3488 = vpack.c.b16 %v3471, %v3470
      %v3489 = vpack.c.b16 %v3473, %v3472
      %v3506 = vunpack.c.l.b16 %v2943
      %v3507 = vunpack.c.l.b16 %v2953
      %v3508 = vunpack.c.l.b16 %v2963
      %v3509 = vunpack.c.l.b16 %v2973
      %v3510 = vunpack.c.l.b16 %v2987
      %v3511 = vunpack.c.l.b16 %v2997
      %v3512 = vunpack.c.l.b16 %v3007
      %v3513 = vunpack.c.l.b16 %v3017
      %v3514 = vunpack.c.l.b16 %v3031
      %v3515 = vunpack.c.l.b16 %v3041
      %v3516 = vunpack.c.l.b16 %v3051
      %v3517 = vunpack.c.l.b16 %v3061
      %v3518 = vunpack.c.l.b16 %v3075
      %v3519 = vunpack.c.l.b16 %v3085
      %v3520 = vunpack.c.l.b16 %v3095
      %v3521 = vunpack.c.l.b16 %v3105
      %v3522 = vunpack.c.l.b16 %v3119
      %v3523 = vunpack.c.l.b16 %v3129
      %v3524 = vunpack.c.l.b16 %v3139
      %v3525 = vunpack.c.l.b16 %v3149
      %v3526 = vunpack.c.l.b16 %v3163
      %v3527 = vunpack.c.l.b16 %v3173
      %v3528 = vunpack.c.l.b16 %v3183
      %v3529 = vunpack.c.l.b16 %v3193
      %v3530 = vunpack.c.l.b16 %v3207
      %v3531 = vunpack.c.l.b16 %v3217
      %v3532 = vunpack.c.l.b16 %v3227
      %v3533 = vunpack.c.l.b16 %v3237
      %v3534 = vunpack.c.l.b16 %v3251
      %v3535 = vunpack.c.l.b16 %v3261
      %v3536 = vunpack.c.l.b16 %v3271
      %v3537 = vunpack.c.l.b16 %v3281
      %v3538 = vpack.c.b16 %v3507, %v3506
      %v3539 = vpack.c.b16 %v3509, %v3508
      %v3540 = vpack.c.b16 %v3511, %v3510
      %v3541 = vpack.c.b16 %v3513, %v3512
      %v3542 = vpack.c.b16 %v3515, %v3514
      %v3543 = vpack.c.b16 %v3517, %v3516
      %v3544 = vpack.c.b16 %v3519, %v3518
      %v3545 = vpack.c.b16 %v3521, %v3520
      %v3546 = vpack.c.b16 %v3523, %v3522
      %v3547 = vpack.c.b16 %v3525, %v3524
      %v3548 = vpack.c.b16 %v3527, %v3526
      %v3549 = vpack.c.b16 %v3529, %v3528
      %v3550 = vpack.c.b16 %v3531, %v3530
      %v3551 = vpack.c.b16 %v3533, %v3532
      %v3552 = vpack.c.b16 %v3535, %v3534
      %v3553 = vpack.c.b16 %v3537, %v3536
      %v3570 = vunpack.c.l.b16 %v3333
      %v3571 = vunpack.c.l.b16 %v3336
      %v3572 = vunpack.c.l.b16 %v3339
      %v3573 = vunpack.c.l.b16 %v3342
      %v3574 = vunpack.c.l.b16 %v3346
      %v3575 = vunpack.c.l.b16 %v3349
      %v3576 = vunpack.c.l.b16 %v3352
      %v3577 = vunpack.c.l.b16 %v3355
      %v3578 = vunpack.c.l.b16 %v3359
      %v3579 = vunpack.c.l.b16 %v3362
      %v3580 = vunpack.c.l.b16 %v3365
      %v3581 = vunpack.c.l.b16 %v3368
      %v3582 = vunpack.c.l.b16 %v3372
      %v3583 = vunpack.c.l.b16 %v3375
      %v3584 = vunpack.c.l.b16 %v3378
      %v3585 = vunpack.c.l.b16 %v3381
      %v3586 = vunpack.c.l.b16 %v3385
      %v3587 = vunpack.c.l.b16 %v3388
      %v3588 = vunpack.c.l.b16 %v3391
      %v3589 = vunpack.c.l.b16 %v3394
      %v3590 = vunpack.c.l.b16 %v3398
      %v3591 = vunpack.c.l.b16 %v3401
      %v3592 = vunpack.c.l.b16 %v3404
      %v3593 = vunpack.c.l.b16 %v3407
      %v3594 = vunpack.c.l.b16 %v3411
      %v3595 = vunpack.c.l.b16 %v3414
      %v3596 = vunpack.c.l.b16 %v3417
      %v3597 = vunpack.c.l.b16 %v3420
      %v3598 = vunpack.c.l.b16 %v3424
      %v3599 = vunpack.c.l.b16 %v3427
      %v3600 = vunpack.c.l.b16 %v3430
      %v3601 = vunpack.c.l.b16 %v3433
      %v3602 = vpack.c.b16 %v3571, %v3570
      %v3603 = vpack.c.b16 %v3573, %v3572
      %v3604 = vpack.c.b16 %v3575, %v3574
      %v3605 = vpack.c.b16 %v3577, %v3576
      %v3606 = vpack.c.b16 %v3579, %v3578
      %v3607 = vpack.c.b16 %v3581, %v3580
      %v3608 = vpack.c.b16 %v3583, %v3582
      %v3609 = vpack.c.b16 %v3585, %v3584
      %v3610 = vpack.c.b16 %v3587, %v3586
      %v3611 = vpack.c.b16 %v3589, %v3588
      %v3612 = vpack.c.b16 %v3591, %v3590
      %v3613 = vpack.c.b16 %v3593, %v3592
      %v3614 = vpack.c.b16 %v3595, %v3594
      %v3615 = vpack.c.b16 %v3597, %v3596
      %v3616 = vpack.c.b16 %v3599, %v3598
      %v3617 = vpack.c.b16 %v3601, %v3600
      %s3634 = scalar_lea.vmem %s1, 384
      %v3635 = vld [vmem:[%s3634] sm:$0xf]
      %v3636 = vld [vmem:[%s3634 + $0x4] sm:$0xf]
      %v3637 = vld [vmem:[%s3634 + $0x8] sm:$0xf]
      %v3638 = vld [vmem:[%s3634 + $0xc] sm:$0xf]
      %v3639 = vld [vmem:[%s3634 + $0x10] sm:$0xf]
      %v3640 = vld [vmem:[%s3634 + $0x14] sm:$0xf]
      %v3641 = vld [vmem:[%s3634 + $0x18] sm:$0xf]
      %v3642 = vld [vmem:[%s3634 + $0x1c] sm:$0xf]
      %v3643 = vld [vmem:[%s3634 + $0x20] sm:$0xf]
      %v3644 = vld [vmem:[%s3634 + $0x24] sm:$0xf]
      %v3645 = vld [vmem:[%s3634 + $0x28] sm:$0xf]
      %v3646 = vld [vmem:[%s3634 + $0x2c] sm:$0xf]
      %v3647 = vld [vmem:[%s3634 + $0x30] sm:$0xf]
      %v3648 = vld [vmem:[%s3634 + $0x34] sm:$0xf]
      %v3649 = vld [vmem:[%s3634 + $0x38] sm:$0xf]
      %v3650 = vld [vmem:[%s3634 + $0x3c] sm:$0xf]
      %v3651 = vld [vmem:[%s3634 + $0x40] sm:$0xf]
      %v3652 = vld [vmem:[%s3634 + $0x44] sm:$0xf]
      %v3653 = vld [vmem:[%s3634 + $0x48] sm:$0xf]
      %v3654 = vld [vmem:[%s3634 + $0x4c] sm:$0xf]
      %v3655 = vld [vmem:[%s3634 + $0x50] sm:$0xf]
      %v3656 = vld [vmem:[%s3634 + $0x54] sm:$0xf]
      %v3657 = vld [vmem:[%s3634 + $0x58] sm:$0xf]
      %v3658 = vld [vmem:[%s3634 + $0x5c] sm:$0xf]
      %v3659 = vld [vmem:[%s3634 + $0x60] sm:$0xf]
      %v3660 = vld [vmem:[%s3634 + $0x64] sm:$0xf]
      %v3661 = vld [vmem:[%s3634 + $0x68] sm:$0xf]
      %v3662 = vld [vmem:[%s3634 + $0x6c] sm:$0xf]
      %v3663 = vld [vmem:[%s3634 + $0x70] sm:$0xf]
      %v3664 = vld [vmem:[%s3634 + $0x74] sm:$0xf]
      %v3665 = vld [vmem:[%s3634 + $0x78] sm:$0xf]
      %v3666 = vld [vmem:[%s3634 + $0x7c] sm:$0xf]
      %v3667 = vld [vmem:[%s3634 + $0x80] sm:$0xf]
      %v3668 = vld [vmem:[%s3634 + $0x84] sm:$0xf]
      %v3669 = vld [vmem:[%s3634 + $0x88] sm:$0xf]
      %v3670 = vld [vmem:[%s3634 + $0x8c] sm:$0xf]
      %v3671 = vld [vmem:[%s3634 + $0x90] sm:$0xf]
      %v3672 = vld [vmem:[%s3634 + $0x94] sm:$0xf]
      %v3673 = vld [vmem:[%s3634 + $0x98] sm:$0xf]
      %v3674 = vld [vmem:[%s3634 + $0x9c] sm:$0xf]
      %v3675 = vld [vmem:[%s3634 + $0xa0] sm:$0xf]
      %v3676 = vld [vmem:[%s3634 + $0xa4] sm:$0xf]
      %v3677 = vld [vmem:[%s3634 + $0xa8] sm:$0xf]
      %v3678 = vld [vmem:[%s3634 + $0xac] sm:$0xf]
      %v3679 = vld [vmem:[%s3634 + $0xb0] sm:$0xf]
      %v3680 = vld [vmem:[%s3634 + $0xb4] sm:$0xf]
      %v3681 = vld [vmem:[%s3634 + $0xb8] sm:$0xf]
      %v3682 = vld [vmem:[%s3634 + $0xbc] sm:$0xf]
      %v3731 = vunpack.c.l.b16 %v3635
      %v3732 = vunpack.c.l.b16 %v3636
      %v3733 = vunpack.c.l.b16 %v3637
      %v3734 = vunpack.c.l.b16 %v3638
      %v3735 = vunpack.c.l.b16 %v3639
      %v3736 = vunpack.c.l.b16 %v3640
      %v3737 = vunpack.c.l.b16 %v3641
      %v3738 = vunpack.c.l.b16 %v3642
      %v3739 = vunpack.c.l.b16 %v3643
      %v3740 = vunpack.c.l.b16 %v3644
      %v3741 = vunpack.c.l.b16 %v3645
      %v3742 = vunpack.c.l.b16 %v3646
      %v3743 = vunpack.c.l.b16 %v3647
      %v3744 = vunpack.c.l.b16 %v3648
      %v3745 = vunpack.c.l.b16 %v3649
      %v3746 = vunpack.c.l.b16 %v3650
      %v3747 = vunpack.c.l.b16 %v3651
      %v3748 = vunpack.c.l.b16 %v3652
      %v3749 = vunpack.c.l.b16 %v3653
      %v3750 = vunpack.c.l.b16 %v3654
      %v3751 = vunpack.c.l.b16 %v3655
      %v3752 = vunpack.c.l.b16 %v3656
      %v3753 = vunpack.c.l.b16 %v3657
      %v3754 = vunpack.c.l.b16 %v3658
      %v3755 = vunpack.c.l.b16 %v3659
      %v3756 = vunpack.c.l.b16 %v3660
      %v3757 = vunpack.c.l.b16 %v3661
      %v3758 = vunpack.c.l.b16 %v3662
      %v3759 = vunpack.c.l.b16 %v3663
      %v3760 = vunpack.c.l.b16 %v3664
      %v3761 = vunpack.c.l.b16 %v3665
      %v3762 = vunpack.c.l.b16 %v3666
      %v3763 = vunpack.c.l.b16 %v3667
      %v3764 = vunpack.c.l.b16 %v3668
      %v3765 = vunpack.c.l.b16 %v3669
      %v3766 = vunpack.c.l.b16 %v3670
      %v3767 = vunpack.c.l.b16 %v3671
      %v3768 = vunpack.c.l.b16 %v3672
      %v3769 = vunpack.c.l.b16 %v3673
      %v3770 = vunpack.c.l.b16 %v3674
      %v3771 = vunpack.c.l.b16 %v3675
      %v3772 = vunpack.c.l.b16 %v3676
      %v3773 = vunpack.c.l.b16 %v3677
      %v3774 = vunpack.c.l.b16 %v3678
      %v3775 = vunpack.c.l.b16 %v3679
      %v3776 = vunpack.c.l.b16 %v3680
      %v3777 = vunpack.c.l.b16 %v3681
      %v3778 = vunpack.c.l.b16 %v3682
      %v3779 = vpack.c.b16 %v3732, %v3731
      %v3780 = vpack.c.b16 %v3734, %v3733
      %v3781 = vpack.c.b16 %v3736, %v3735
      %v3782 = vpack.c.b16 %v3738, %v3737
      %v3783 = vpack.c.b16 %v3740, %v3739
      %v3784 = vpack.c.b16 %v3742, %v3741
      %v3785 = vpack.c.b16 %v3744, %v3743
      %v3786 = vpack.c.b16 %v3746, %v3745
      %v3787 = vpack.c.b16 %v3748, %v3747
      %v3788 = vpack.c.b16 %v3750, %v3749
      %v3789 = vpack.c.b16 %v3752, %v3751
      %v3790 = vpack.c.b16 %v3754, %v3753
      %v3791 = vpack.c.b16 %v3756, %v3755
      %v3792 = vpack.c.b16 %v3758, %v3757
      %v3793 = vpack.c.b16 %v3760, %v3759
      %v3794 = vpack.c.b16 %v3762, %v3761
      %v3795 = vpack.c.b16 %v3764, %v3763
      %v3796 = vpack.c.b16 %v3766, %v3765
      %v3797 = vpack.c.b16 %v3768, %v3767
      %v3798 = vpack.c.b16 %v3770, %v3769
      %v3799 = vpack.c.b16 %v3772, %v3771
      %v3800 = vpack.c.b16 %v3774, %v3773
      %v3801 = vpack.c.b16 %v3776, %v3775
      %v3802 = vpack.c.b16 %v3778, %v3777
      %3827 = vmatprep.subr.bf16.mxu0 0
      %3828 = vmatpush1.bf16.msra.mxu0 %v3786
      %3829 = vmatprep.subr.bf16.mxu0 0
      %3830 = vmatpush1.bf16.msra.mxu0 %v3785
      %3831 = vmatprep.subr.bf16.mxu0 0
      %3832 = vmatpush1.bf16.msra.mxu0 %v3784
      %3833 = vmatprep.subr.bf16.mxu0 0
      %3834 = vmatpush1.bf16.msra.mxu0 %v3783
      %3835 = vmatprep.subr.bf16.mxu0 0
      %3836 = vmatpush1.bf16.msra.mxu0 %v3782
      %3837 = vmatprep.subr.bf16.mxu0 0
      %3838 = vmatpush1.bf16.msra.mxu0 %v3781
      %3839 = vmatprep.subr.bf16.mxu0 0
      %3840 = vmatpush1.bf16.msra.mxu0 %v3780
      %3841 = vmatprep.subr.bf16.mxu0 0
      %3842 = vmatpush1.bf16.msra.mxu0 %v3779
      %3843 = vmatprep.subr.bf16.mxu0 0
      %3844 = vmatpush2.bf16.msra.mxu0 %v3794
      %3845 = vmatprep.subr.bf16.mxu0 0
      %3846 = vmatpush2.bf16.msra.mxu0 %v3793
      %3847 = vmatprep.subr.bf16.mxu0 0
      %3848 = vmatpush2.bf16.msra.mxu0 %v3792
      %3849 = vmatprep.subr.bf16.mxu0 0
      %3850 = vmatpush2.bf16.msra.mxu0 %v3791
      %3851 = vmatprep.subr.bf16.mxu0 0
      %3852 = vmatpush2.bf16.msra.mxu0 %v3790
      %3853 = vmatprep.subr.bf16.mxu0 0
      %3854 = vmatpush2.bf16.msra.mxu0 %v3789
      %3855 = vmatprep.subr.bf16.mxu0 0
      %3856 = vmatpush2.bf16.msra.mxu0 %v3788
      %3857 = vmatprep.subr.bf16.mxu0 0
      %3858 = vmatpush2.bf16.msra.mxu0 %v3787
      %3859 = vmatprep.mubr.bf16.mxu0 %v3538
      %3860 = vmatmul.mubr.bf16.gmra.mxu0 %v3474
      %v3861 = vpop.f32.mrf.mxu0
      %v3862 = vadd.f32 0.0, %v3861
      %v3863 = vpop.f32.mrf.mxu0
      %v3864 = vpop.f32.mrf.mxu0
      %v3865 = vadd.f32 0.0, %v3864
      %v3866 = vpop.f32.mrf.mxu0
      %3867 = vmatprep.mubr.bf16.mxu0 %v3539
      %3868 = vmatmul.mubr.bf16.gmra.mxu0 %v3475
      %v3869 = vpop.f32.mrf.mxu0
      %v3870 = vadd.f32 0.0, %v3869
      %v3871 = vpop.f32.mrf.mxu0
      %v3872 = vpop.f32.mrf.mxu0
      %v3873 = vadd.f32 0.0, %v3872
      %v3874 = vpop.f32.mrf.mxu0
      %3875 = vmatprep.mubr.bf16.mxu0 %v3540
      %3876 = vmatmul.mubr.bf16.gmra.mxu0 %v3476
      %v3877 = vpop.f32.mrf.mxu0
      %v3878 = vadd.f32 0.0, %v3877
      %v3879 = vpop.f32.mrf.mxu0
      %v3880 = vpop.f32.mrf.mxu0
      %v3881 = vadd.f32 0.0, %v3880
      %v3882 = vpop.f32.mrf.mxu0
      %3883 = vmatprep.mubr.bf16.mxu0 %v3541
      %3884 = vmatmul.mubr.bf16.gmra.mxu0 %v3477
      %v3885 = vpop.f32.mrf.mxu0
      %v3886 = vadd.f32 0.0, %v3885
      %v3887 = vpop.f32.mrf.mxu0
      %v3888 = vpop.f32.mrf.mxu0
      %v3889 = vadd.f32 0.0, %v3888
      %v3890 = vpop.f32.mrf.mxu0
      %3891 = vmatprep.mubr.bf16.mxu0 %v3542
      %3892 = vmatmul.mubr.bf16.gmra.mxu0 %v3478
      %v3893 = vpop.f32.mrf.mxu0
      %v3894 = vadd.f32 0.0, %v3893
      %v3895 = vpop.f32.mrf.mxu0
      %v3896 = vpop.f32.mrf.mxu0
      %v3897 = vadd.f32 0.0, %v3896
      %v3898 = vpop.f32.mrf.mxu0
      %3899 = vmatprep.mubr.bf16.mxu0 %v3543
      %3900 = vmatmul.mubr.bf16.gmra.mxu0 %v3479
      %v3901 = vpop.f32.mrf.mxu0
      %v3902 = vadd.f32 0.0, %v3901
      %v3903 = vpop.f32.mrf.mxu0
      %v3904 = vpop.f32.mrf.mxu0
      %v3905 = vadd.f32 0.0, %v3904
      %v3906 = vpop.f32.mrf.mxu0
      %3907 = vmatprep.mubr.bf16.mxu0 %v3544
      %3908 = vmatmul.mubr.bf16.gmra.mxu0 %v3480
      %v3909 = vpop.f32.mrf.mxu0
      %v3910 = vadd.f32 0.0, %v3909
      %v3911 = vpop.f32.mrf.mxu0
      %v3912 = vpop.f32.mrf.mxu0
      %v3913 = vadd.f32 0.0, %v3912
      %v3914 = vpop.f32.mrf.mxu0
      %3915 = vmatprep.mubr.bf16.mxu0 %v3545
      %3916 = vmatmul.mubr.bf16.gmra.mxu0 %v3481
      %v3917 = vpop.f32.mrf.mxu0
      %v3918 = vadd.f32 0.0, %v3917
      %v3919 = vpop.f32.mrf.mxu0
      %v3920 = vpop.f32.mrf.mxu0
      %v3921 = vadd.f32 0.0, %v3920
      %v3922 = vpop.f32.mrf.mxu0
      %3923 = vmatprep.mubr.bf16.mxu0 %v3546
      %3924 = vmatmul.mubr.bf16.gmra.mxu0 %v3482
      %v3925 = vpop.f32.mrf.mxu0
      %v3926 = vadd.f32 0.0, %v3925
      %v3927 = vpop.f32.mrf.mxu0
      %v3928 = vpop.f32.mrf.mxu0
      %v3929 = vadd.f32 0.0, %v3928
      %v3930 = vpop.f32.mrf.mxu0
      %3931 = vmatprep.mubr.bf16.mxu0 %v3547
      %3932 = vmatmul.mubr.bf16.gmra.mxu0 %v3483
      %v3933 = vpop.f32.mrf.mxu0
      %v3934 = vadd.f32 0.0, %v3933
      %v3935 = vpop.f32.mrf.mxu0
      %v3936 = vpop.f32.mrf.mxu0
      %v3937 = vadd.f32 0.0, %v3936
      %v3938 = vpop.f32.mrf.mxu0
      %3939 = vmatprep.mubr.bf16.mxu0 %v3548
      %3940 = vmatmul.mubr.bf16.gmra.mxu0 %v3484
      %v3941 = vpop.f32.mrf.mxu0
      %v3942 = vadd.f32 0.0, %v3941
      %v3943 = vpop.f32.mrf.mxu0
      %v3944 = vpop.f32.mrf.mxu0
      %v3945 = vadd.f32 0.0, %v3944
      %v3946 = vpop.f32.mrf.mxu0
      %3947 = vmatprep.mubr.bf16.mxu0 %v3549
      %3948 = vmatmul.mubr.bf16.gmra.mxu0 %v3485
      %v3949 = vpop.f32.mrf.mxu0
      %v3950 = vadd.f32 0.0, %v3949
      %v3951 = vpop.f32.mrf.mxu0
      %v3952 = vpop.f32.mrf.mxu0
      %v3953 = vadd.f32 0.0, %v3952
      %v3954 = vpop.f32.mrf.mxu0
      %3955 = vmatprep.mubr.bf16.mxu0 %v3550
      %3956 = vmatmul.mubr.bf16.gmra.mxu0 %v3486
      %v3957 = vpop.f32.mrf.mxu0
      %v3958 = vadd.f32 0.0, %v3957
      %v3959 = vpop.f32.mrf.mxu0
      %v3960 = vpop.f32.mrf.mxu0
      %v3961 = vadd.f32 0.0, %v3960
      %v3962 = vpop.f32.mrf.mxu0
      %3963 = vmatprep.mubr.bf16.mxu0 %v3551
      %3964 = vmatmul.mubr.bf16.gmra.mxu0 %v3487
      %v3965 = vpop.f32.mrf.mxu0
      %v3966 = vadd.f32 0.0, %v3965
      %v3967 = vpop.f32.mrf.mxu0
      %v3968 = vpop.f32.mrf.mxu0
      %v3969 = vadd.f32 0.0, %v3968
      %v3970 = vpop.f32.mrf.mxu0
      %3971 = vmatprep.mubr.bf16.mxu0 %v3552
      %3972 = vmatmul.mubr.bf16.gmra.mxu0 %v3488
      %v3973 = vpop.f32.mrf.mxu0
      %v3974 = vadd.f32 0.0, %v3973
      %v3975 = vpop.f32.mrf.mxu0
      %v3976 = vpop.f32.mrf.mxu0
      %v3977 = vadd.f32 0.0, %v3976
      %v3978 = vpop.f32.mrf.mxu0
      %3979 = vmatprep.mubr.bf16.mxu0 %v3553
      %3980 = vmatmul.mubr.bf16.gmra.mxu0 %v3489
      %v3981 = vpop.f32.mrf.mxu0
      %v3982 = vadd.f32 0.0, %v3981
      %v3983 = vpop.f32.mrf.mxu0
      %v3984 = vpop.f32.mrf.mxu0
      %v3985 = vadd.f32 0.0, %v3984
      %v3986 = vpop.f32.mrf.mxu0
      %3987 = vdwg.mxu0
      %3988 = vmatprep.subr.bf16.mxu0 0
      %3989 = vmatpush1.bf16.msra.mxu0 %v3802
      %3990 = vmatprep.subr.bf16.mxu0 0
      %3991 = vmatpush1.bf16.msra.mxu0 %v3801
      %3992 = vmatprep.subr.bf16.mxu0 0
      %3993 = vmatpush1.bf16.msra.mxu0 %v3800
      %3994 = vmatprep.subr.bf16.mxu0 0
      %3995 = vmatpush1.bf16.msra.mxu0 %v3799
      %3996 = vmatprep.subr.bf16.mxu0 0
      %3997 = vmatpush1.bf16.msra.mxu0 %v3798
      %3998 = vmatprep.subr.bf16.mxu0 0
      %3999 = vmatpush1.bf16.msra.mxu0 %v3797
      %4000 = vmatprep.subr.bf16.mxu0 0
      %4001 = vmatpush1.bf16.msra.mxu0 %v3796
      %4002 = vmatprep.subr.bf16.mxu0 0
      %4003 = vmatpush1.bf16.msra.mxu0 %v3795
      %4004 = vmatprep.subr.bf16.mxu0 0
      %4005 = vmatpush2.bf16.msra.mxu0 0
      %4006 = vmatprep.subr.bf16.mxu0 0
      %4007 = vmatpush2.bf16.msra.mxu0 0
      %4008 = vmatprep.subr.bf16.mxu0 0
      %4009 = vmatpush2.bf16.msra.mxu0 0
      %4010 = vmatprep.subr.bf16.mxu0 0
      %4011 = vmatpush2.bf16.msra.mxu0 0
      %4012 = vmatprep.subr.bf16.mxu0 0
      %4013 = vmatpush2.bf16.msra.mxu0 0
      %4014 = vmatprep.subr.bf16.mxu0 0
      %4015 = vmatpush2.bf16.msra.mxu0 0
      %4016 = vmatprep.subr.bf16.mxu0 0
      %4017 = vmatpush2.bf16.msra.mxu0 0
      %4018 = vmatprep.subr.bf16.mxu0 0
      %4019 = vmatpush2.bf16.msra.mxu0 0
      %4020 = vmatprep.mubr.bf16.mxu0 0
      %4021 = vmatmul.mubr.bf16.gmra.mxu0 %v3602
      %v4022 = vpop.f32.mrf.mxu0
      %v4023 = vadd.f32 %v3862, %v4022
      %v4024 = vpop.f32.mrf.mxu0
      %v4025 = vpop.f32.mrf.mxu0
      %v4026 = vadd.f32 %v3865, %v4025
      %v4027 = vpop.f32.mrf.mxu0
      %4028 = vmatprep.mubr.bf16.mxu0 0
      %4029 = vmatmul.mubr.bf16.gmra.mxu0 %v3603
      %v4030 = vpop.f32.mrf.mxu0
      %v4031 = vadd.f32 %v3870, %v4030
      %v4032 = vpop.f32.mrf.mxu0
      %v4033 = vpop.f32.mrf.mxu0
      %v4034 = vadd.f32 %v3873, %v4033
      %v4035 = vpop.f32.mrf.mxu0
      %4036 = vmatprep.mubr.bf16.mxu0 0
      %4037 = vmatmul.mubr.bf16.gmra.mxu0 %v3604
      %v4038 = vpop.f32.mrf.mxu0
      %v4039 = vadd.f32 %v3878, %v4038
      %v4040 = vpop.f32.mrf.mxu0
      %v4041 = vpop.f32.mrf.mxu0
      %v4042 = vadd.f32 %v3881, %v4041
      %v4043 = vpop.f32.mrf.mxu0
      %4044 = vmatprep.mubr.bf16.mxu0 0
      %4045 = vmatmul.mubr.bf16.gmra.mxu0 %v3605
      %v4046 = vpop.f32.mrf.mxu0
      %v4047 = vadd.f32 %v3886, %v4046
      %v4048 = vpop.f32.mrf.mxu0
      %v4049 = vpop.f32.mrf.mxu0
      %v4050 = vadd.f32 %v3889, %v4049
      %v4051 = vpop.f32.mrf.mxu0
      %4052 = vmatprep.mubr.bf16.mxu0 0
      %4053 = vmatmul.mubr.bf16.gmra.mxu0 %v3606
      %v4054 = vpop.f32.mrf.mxu0
      %v4055 = vadd.f32 %v3894, %v4054
      %v4056 = vpop.f32.mrf.mxu0
      %v4057 = vpop.f32.mrf.mxu0
      %v4058 = vadd.f32 %v3897, %v4057
      %v4059 = vpop.f32.mrf.mxu0
      %4060 = vmatprep.mubr.bf16.mxu0 0
      %4061 = vmatmul.mubr.bf16.gmra.mxu0 %v3607
      %v4062 = vpop.f32.mrf.mxu0
      %v4063 = vadd.f32 %v3902, %v4062
      %v4064 = vpop.f32.mrf.mxu0
      %v4065 = vpop.f32.mrf.mxu0
      %v4066 = vadd.f32 %v3905, %v4065
      %v4067 = vpop.f32.mrf.mxu0
      %4068 = vmatprep.mubr.bf16.mxu0 0
      %4069 = vmatmul.mubr.bf16.gmra.mxu0 %v3608
      %v4070 = vpop.f32.mrf.mxu0
      %v4071 = vadd.f32 %v3910, %v4070
      %v4072 = vpop.f32.mrf.mxu0
      %v4073 = vpop.f32.mrf.mxu0
      %v4074 = vadd.f32 %v3913, %v4073
      %v4075 = vpop.f32.mrf.mxu0
      %4076 = vmatprep.mubr.bf16.mxu0 0
      %4077 = vmatmul.mubr.bf16.gmra.mxu0 %v3609
      %v4078 = vpop.f32.mrf.mxu0
      %v4079 = vadd.f32 %v3918, %v4078
      %v4080 = vpop.f32.mrf.mxu0
      %v4081 = vpop.f32.mrf.mxu0
      %v4082 = vadd.f32 %v3921, %v4081
      %v4083 = vpop.f32.mrf.mxu0
      %4084 = vmatprep.mubr.bf16.mxu0 0
      %4085 = vmatmul.mubr.bf16.gmra.mxu0 %v3610
      %v4086 = vpop.f32.mrf.mxu0
      %v4087 = vadd.f32 %v3926, %v4086
      %v4088 = vpop.f32.mrf.mxu0
      %v4089 = vpop.f32.mrf.mxu0
      %v4090 = vadd.f32 %v3929, %v4089
      %v4091 = vpop.f32.mrf.mxu0
      %4092 = vmatprep.mubr.bf16.mxu0 0
      %4093 = vmatmul.mubr.bf16.gmra.mxu0 %v3611
      %v4094 = vpop.f32.mrf.mxu0
      %v4095 = vadd.f32 %v3934, %v4094
      %v4096 = vpop.f32.mrf.mxu0
      %v4097 = vpop.f32.mrf.mxu0
      %v4098 = vadd.f32 %v3937, %v4097
      %v4099 = vpop.f32.mrf.mxu0
      %4100 = vmatprep.mubr.bf16.mxu0 0
      %4101 = vmatmul.mubr.bf16.gmra.mxu0 %v3612
      %v4102 = vpop.f32.mrf.mxu0
      %v4103 = vadd.f32 %v3942, %v4102
      %v4104 = vpop.f32.mrf.mxu0
      %v4105 = vpop.f32.mrf.mxu0
      %v4106 = vadd.f32 %v3945, %v4105
      %v4107 = vpop.f32.mrf.mxu0
      %4108 = vmatprep.mubr.bf16.mxu0 0
      %4109 = vmatmul.mubr.bf16.gmra.mxu0 %v3613
      %v4110 = vpop.f32.mrf.mxu0
      %v4111 = vadd.f32 %v3950, %v4110
      %v4112 = vpop.f32.mrf.mxu0
      %v4113 = vpop.f32.mrf.mxu0
      %v4114 = vadd.f32 %v3953, %v4113
      %v4115 = vpop.f32.mrf.mxu0
      %4116 = vmatprep.mubr.bf16.mxu0 0
      %4117 = vmatmul.mubr.bf16.gmra.mxu0 %v3614
      %v4118 = vpop.f32.mrf.mxu0
      %v4119 = vadd.f32 %v3958, %v4118
      %v4120 = vpop.f32.mrf.mxu0
      %v4121 = vpop.f32.mrf.mxu0
      %v4122 = vadd.f32 %v3961, %v4121
      %v4123 = vpop.f32.mrf.mxu0
      %4124 = vmatprep.mubr.bf16.mxu0 0
      %4125 = vmatmul.mubr.bf16.gmra.mxu0 %v3615
      %v4126 = vpop.f32.mrf.mxu0
      %v4127 = vadd.f32 %v3966, %v4126
      %v4128 = vpop.f32.mrf.mxu0
      %v4129 = vpop.f32.mrf.mxu0
      %v4130 = vadd.f32 %v3969, %v4129
      %v4131 = vpop.f32.mrf.mxu0
      %4132 = vmatprep.mubr.bf16.mxu0 0
      %4133 = vmatmul.mubr.bf16.gmra.mxu0 %v3616
      %v4134 = vpop.f32.mrf.mxu0
      %v4135 = vadd.f32 %v3974, %v4134
      %v4136 = vpop.f32.mrf.mxu0
      %v4137 = vpop.f32.mrf.mxu0
      %v4138 = vadd.f32 %v3977, %v4137
      %v4139 = vpop.f32.mrf.mxu0
      %4140 = vmatprep.mubr.bf16.mxu0 0
      %4141 = vmatmul.mubr.bf16.gmra.mxu0 %v3617
      %v4142 = vpop.f32.mrf.mxu0
      %v4143 = vadd.f32 %v3982, %v4142
      %v4144 = vpop.f32.mrf.mxu0
      %v4145 = vpop.f32.mrf.mxu0
      %v4146 = vadd.f32 %v3985, %v4145
      %v4147 = vpop.f32.mrf.mxu0
      %4148 = vdwg.mxu0
      %v4149 = vadd.f32 %v2760, %v4023
      %v4150 = vadd.f32 %v2763, %v4026
      %v4151 = vadd.f32 %v2768, %v4031
      %v4152 = vadd.f32 %v2771, %v4034
      %v4153 = vadd.f32 %v2776, %v4039
      %v4154 = vadd.f32 %v2779, %v4042
      %v4155 = vadd.f32 %v2784, %v4047
      %v4156 = vadd.f32 %v2787, %v4050
      %v4157 = vadd.f32 %v2792, %v4055
      %v4158 = vadd.f32 %v2795, %v4058
      %v4159 = vadd.f32 %v2800, %v4063
      %v4160 = vadd.f32 %v2803, %v4066
      %v4161 = vadd.f32 %v2808, %v4071
      %v4162 = vadd.f32 %v2811, %v4074
      %v4163 = vadd.f32 %v2816, %v4079
      %v4164 = vadd.f32 %v2819, %v4082
      %v4165 = vadd.f32 %v2824, %v4087
      %v4166 = vadd.f32 %v2827, %v4090
      %v4167 = vadd.f32 %v2832, %v4095
      %v4168 = vadd.f32 %v2835, %v4098
      %v4169 = vadd.f32 %v2840, %v4103
      %v4170 = vadd.f32 %v2843, %v4106
      %v4171 = vadd.f32 %v2848, %v4111
      %v4172 = vadd.f32 %v2851, %v4114
      %v4173 = vadd.f32 %v2856, %v4119
      %v4174 = vadd.f32 %v2859, %v4122
      %v4175 = vadd.f32 %v2864, %v4127
      %v4176 = vadd.f32 %v2867, %v4130
      %v4177 = vadd.f32 %v2872, %v4135
      %v4178 = vadd.f32 %v2875, %v4138
      %v4179 = vadd.f32 %v2880, %v4143
      %v4180 = vadd.f32 %v2883, %v4146
      %v4181 = vld [vmem:[%s2] sm:$0x1]
      %v4183 = vlaneseq
      %v4184 = vshrl.u32 %v4183, 7
      %v4185 = vsub.s32 0, %v4184
      %v4186 = vrot.slane %v4181, %v4185
      %v4188 = vadd.f32 %v4149, %v4186
      %v4189 = vadd.f32 %v4150, %v4186
      %v4190 = vadd.f32 %v4151, %v4186
      %v4191 = vadd.f32 %v4152, %v4186
      %v4192 = vadd.f32 %v4153, %v4186
      %v4193 = vadd.f32 %v4154, %v4186
      %v4194 = vadd.f32 %v4155, %v4186
      %v4195 = vadd.f32 %v4156, %v4186
      %v4196 = vadd.f32 %v4157, %v4186
      %v4197 = vadd.f32 %v4158, %v4186
      %v4198 = vadd.f32 %v4159, %v4186
      %v4199 = vadd.f32 %v4160, %v4186
      %v4200 = vadd.f32 %v4161, %v4186
      %v4201 = vadd.f32 %v4162, %v4186
      %v4202 = vadd.f32 %v4163, %v4186
      %v4203 = vadd.f32 %v4164, %v4186
      %v4204 = vadd.f32 %v4165, %v4186
      %v4205 = vadd.f32 %v4166, %v4186
      %v4206 = vadd.f32 %v4167, %v4186
      %v4207 = vadd.f32 %v4168, %v4186
      %v4208 = vadd.f32 %v4169, %v4186
      %v4209 = vadd.f32 %v4170, %v4186
      %v4210 = vadd.f32 %v4171, %v4186
      %v4211 = vadd.f32 %v4172, %v4186
      %v4212 = vadd.f32 %v4173, %v4186
      %v4213 = vadd.f32 %v4174, %v4186
      %v4214 = vadd.f32 %v4175, %v4186
      %v4215 = vadd.f32 %v4176, %v4186
      %v4216 = vadd.f32 %v4177, %v4186
      %v4217 = vadd.f32 %v4178, %v4186
      %v4218 = vadd.f32 %v4179, %v4186
      %v4219 = vadd.f32 %v4180, %v4186
      %v4220 = vmax.f32 %v4188, 0.0
      %v4221 = vmax.f32 %v4189, 0.0
      %v4222 = vmax.f32 %v4190, 0.0
      %v4223 = vmax.f32 %v4191, 0.0
      %v4224 = vmax.f32 %v4192, 0.0
      %v4225 = vmax.f32 %v4193, 0.0
      %v4226 = vmax.f32 %v4194, 0.0
      %v4227 = vmax.f32 %v4195, 0.0
      %v4228 = vmax.f32 %v4196, 0.0
      %v4229 = vmax.f32 %v4197, 0.0
      %v4230 = vmax.f32 %v4198, 0.0
      %v4231 = vmax.f32 %v4199, 0.0
      %v4232 = vmax.f32 %v4200, 0.0
      %v4233 = vmax.f32 %v4201, 0.0
      %v4234 = vmax.f32 %v4202, 0.0
      %v4235 = vmax.f32 %v4203, 0.0
      %v4236 = vmax.f32 %v4204, 0.0
      %v4237 = vmax.f32 %v4205, 0.0
      %v4238 = vmax.f32 %v4206, 0.0
      %v4239 = vmax.f32 %v4207, 0.0
      %v4240 = vmax.f32 %v4208, 0.0
      %v4241 = vmax.f32 %v4209, 0.0
      %v4242 = vmax.f32 %v4210, 0.0
      %v4243 = vmax.f32 %v4211, 0.0
      %v4244 = vmax.f32 %v4212, 0.0
      %v4245 = vmax.f32 %v4213, 0.0
      %v4246 = vmax.f32 %v4214, 0.0
      %v4247 = vmax.f32 %v4215, 0.0
      %v4248 = vmax.f32 %v4216, 0.0
      %v4249 = vmax.f32 %v4217, 0.0
      %v4250 = vmax.f32 %v4218, 0.0
      %v4251 = vmax.f32 %v4219, 0.0
      %v4252 = vpack.c.bf16 %v4221, %v4220
      %v4253 = vpack.c.bf16 %v4223, %v4222
      %v4254 = vpack.c.bf16 %v4225, %v4224
      %v4255 = vpack.c.bf16 %v4227, %v4226
      %v4256 = vpack.c.bf16 %v4229, %v4228
      %v4257 = vpack.c.bf16 %v4231, %v4230
      %v4258 = vpack.c.bf16 %v4233, %v4232
      %v4259 = vpack.c.bf16 %v4235, %v4234
      %v4260 = vpack.c.bf16 %v4237, %v4236
      %v4261 = vpack.c.bf16 %v4239, %v4238
      %v4262 = vpack.c.bf16 %v4241, %v4240
      %v4263 = vpack.c.bf16 %v4243, %v4242
      %v4264 = vpack.c.bf16 %v4245, %v4244
      %v4265 = vpack.c.bf16 %v4247, %v4246
      %v4266 = vpack.c.bf16 %v4249, %v4248
      %v4267 = vpack.c.bf16 %v4251, %v4250
      %v4284 = vunpack.c.l.b16 %v4252
      %v4285 = vunpack.c.h.b16 %v4252
      %v4286 = vunpack.c.l.b16 %v4253
      %v4287 = vunpack.c.h.b16 %v4253
      %v4288 = vunpack.c.l.b16 %v4254
      %v4289 = vunpack.c.h.b16 %v4254
      %v4290 = vunpack.c.l.b16 %v4255
      %v4291 = vunpack.c.h.b16 %v4255
      %v4292 = vunpack.c.l.b16 %v4256
      %v4293 = vunpack.c.h.b16 %v4256
      %v4294 = vunpack.c.l.b16 %v4257
      %v4295 = vunpack.c.h.b16 %v4257
      %v4296 = vunpack.c.l.b16 %v4258
      %v4297 = vunpack.c.h.b16 %v4258
      %v4298 = vunpack.c.l.b16 %v4259
      %v4299 = vunpack.c.h.b16 %v4259
      %v4300 = vunpack.c.l.b16 %v4260
      %v4301 = vunpack.c.h.b16 %v4260
      %v4302 = vunpack.c.l.b16 %v4261
      %v4303 = vunpack.c.h.b16 %v4261
      %v4304 = vunpack.c.l.b16 %v4262
      %v4305 = vunpack.c.h.b16 %v4262
      %v4306 = vunpack.c.l.b16 %v4263
      %v4307 = vunpack.c.h.b16 %v4263
      %v4308 = vunpack.c.l.b16 %v4264
      %v4309 = vunpack.c.h.b16 %v4264
      %v4310 = vunpack.c.l.b16 %v4265
      %v4311 = vunpack.c.h.b16 %v4265
      %v4312 = vunpack.c.l.b16 %v4266
      %v4313 = vunpack.c.h.b16 %v4266
      %v4314 = vunpack.c.l.b16 %v4267
      %v4315 = vunpack.c.h.b16 %v4267
      %v4316 = vpack.c.b16 %v4284, %v4284
      %v4317 = vpack.c.b16 %v4285, %v4285
      %v4318 = vpack.c.b16 %v4286, %v4286
      %v4319 = vpack.c.b16 %v4287, %v4287
      %v4320 = vpack.c.b16 %v4288, %v4288
      %v4321 = vpack.c.b16 %v4289, %v4289
      %v4322 = vpack.c.b16 %v4290, %v4290
      %v4323 = vpack.c.b16 %v4291, %v4291
      %v4324 = vpack.c.b16 %v4292, %v4292
      %v4325 = vpack.c.b16 %v4293, %v4293
      %v4326 = vpack.c.b16 %v4294, %v4294
      %v4327 = vpack.c.b16 %v4295, %v4295
      %v4328 = vpack.c.b16 %v4296, %v4296
      %v4329 = vpack.c.b16 %v4297, %v4297
      %v4330 = vpack.c.b16 %v4298, %v4298
      %v4331 = vpack.c.b16 %v4299, %v4299
      %v4332 = vpack.c.b16 %v4300, %v4300
      %v4333 = vpack.c.b16 %v4301, %v4301
      %v4334 = vpack.c.b16 %v4302, %v4302
      %v4335 = vpack.c.b16 %v4303, %v4303
      %v4336 = vpack.c.b16 %v4304, %v4304
      %v4337 = vpack.c.b16 %v4305, %v4305
      %v4338 = vpack.c.b16 %v4306, %v4306
      %v4339 = vpack.c.b16 %v4307, %v4307
      %v4340 = vpack.c.b16 %v4308, %v4308
      %v4341 = vpack.c.b16 %v4309, %v4309
      %v4342 = vpack.c.b16 %v4310, %v4310
      %v4343 = vpack.c.b16 %v4311, %v4311
      %v4344 = vpack.c.b16 %v4312, %v4312
      %v4345 = vpack.c.b16 %v4313, %v4313
      %v4346 = vpack.c.b16 %v4314, %v4314
      %v4347 = vpack.c.b16 %v4315, %v4315
      %vm4348 = vsmask.f32 256
      %vm4349 = vsmask.f32 4368
      %vm4350 = vmor %vm4348, %vm4349
      %v4352 = vshrl.u32 %v4316, 16
      %v4354 = vrot.slane %v4352, 7
      %v4355 = vshll.u32 %v4316, 16
      %v4357 = vor.u32 %v4354, %v4355
      %v4358 = vrot.slane %v4354, 4
      %v4360 = vshrl.u32 %v4317, 16
      %v4362 = vrot.slane %v4360, 7
      %v4363 = vshll.u32 %v4317, 16
      %v4365 = vor.u32 %v4362, %v4363
      %v4366 = vsel %vm4350, %v4358, %v4365
      %v4367 = vrot.slane %v4362, 4
      %v4369 = vshrl.u32 %v4318, 16
      %v4371 = vrot.slane %v4369, 7
      %v4372 = vshll.u32 %v4318, 16
      %v4374 = vor.u32 %v4371, %v4372
      %v4375 = vsel %vm4350, %v4367, %v4374
      %v4376 = vrot.slane %v4371, 4
      %v4378 = vshrl.u32 %v4319, 16
      %v4380 = vrot.slane %v4378, 7
      %v4381 = vshll.u32 %v4319, 16
      %v4383 = vor.u32 %v4380, %v4381
      %v4384 = vsel %vm4350, %v4376, %v4383
      %v4385 = vrot.slane %v4380, 4
      %v4387 = vshrl.u32 %v4320, 16
      %v4389 = vrot.slane %v4387, 7
      %v4390 = vshll.u32 %v4320, 16
      %v4392 = vor.u32 %v4389, %v4390
      %v4393 = vrot.slane %v4389, 4
      %v4395 = vshrl.u32 %v4321, 16
      %v4397 = vrot.slane %v4395, 7
      %v4398 = vshll.u32 %v4321, 16
      %v4400 = vor.u32 %v4397, %v4398
      %v4401 = vsel %vm4350, %v4393, %v4400
      %v4402 = vrot.slane %v4397, 4
      %v4404 = vshrl.u32 %v4322, 16
      %v4406 = vrot.slane %v4404, 7
      %v4407 = vshll.u32 %v4322, 16
      %v4409 = vor.u32 %v4406, %v4407
      %v4410 = vsel %vm4350, %v4402, %v4409
      %v4411 = vrot.slane %v4406, 4
      %v4413 = vshrl.u32 %v4323, 16
      %v4415 = vrot.slane %v4413, 7
      %v4416 = vshll.u32 %v4323, 16
      %v4418 = vor.u32 %v4415, %v4416
      %v4419 = vsel %vm4350, %v4411, %v4418
      %v4420 = vrot.slane %v4415, 4
      %v4422 = vshrl.u32 %v4324, 16
      %v4424 = vrot.slane %v4422, 7
      %v4425 = vshll.u32 %v4324, 16
      %v4427 = vor.u32 %v4424, %v4425
      %v4428 = vrot.slane %v4424, 4
      %v4430 = vshrl.u32 %v4325, 16
      %v4432 = vrot.slane %v4430, 7
      %v4433 = vshll.u32 %v4325, 16
      %v4435 = vor.u32 %v4432, %v4433
      %v4436 = vsel %vm4350, %v4428, %v4435
      %v4437 = vrot.slane %v4432, 4
      %v4439 = vshrl.u32 %v4326, 16
      %v4441 = vrot.slane %v4439, 7
      %v4442 = vshll.u32 %v4326, 16
      %v4444 = vor.u32 %v4441, %v4442
      %v4445 = vsel %vm4350, %v4437, %v4444
      %v4446 = vrot.slane %v4441, 4
      %v4448 = vshrl.u32 %v4327, 16
      %v4450 = vrot.slane %v4448, 7
      %v4451 = vshll.u32 %v4327, 16
      %v4453 = vor.u32 %v4450, %v4451
      %v4454 = vsel %vm4350, %v4446, %v4453
      %v4455 = vrot.slane %v4450, 4
      %v4457 = vshrl.u32 %v4328, 16
      %v4459 = vrot.slane %v4457, 7
      %v4460 = vshll.u32 %v4328, 16
      %v4462 = vor.u32 %v4459, %v4460
      %v4463 = vrot.slane %v4459, 4
      %v4465 = vshrl.u32 %v4329, 16
      %v4467 = vrot.slane %v4465, 7
      %v4468 = vshll.u32 %v4329, 16
      %v4470 = vor.u32 %v4467, %v4468
      %v4471 = vsel %vm4350, %v4463, %v4470
      %v4472 = vrot.slane %v4467, 4
      %v4474 = vshrl.u32 %v4330, 16
      %v4476 = vrot.slane %v4474, 7
      %v4477 = vshll.u32 %v4330, 16
      %v4479 = vor.u32 %v4476, %v4477
      %v4480 = vsel %vm4350, %v4472, %v4479
      %v4481 = vrot.slane %v4476, 4
      %v4483 = vshrl.u32 %v4331, 16
      %v4485 = vrot.slane %v4483, 7
      %v4486 = vshll.u32 %v4331, 16
      %v4488 = vor.u32 %v4485, %v4486
      %v4489 = vsel %vm4350, %v4481, %v4488
      %v4490 = vrot.slane %v4485, 4
      %v4492 = vshrl.u32 %v4332, 16
      %v4494 = vrot.slane %v4492, 7
      %v4495 = vshll.u32 %v4332, 16
      %v4497 = vor.u32 %v4494, %v4495
      %v4498 = vrot.slane %v4494, 4
      %v4500 = vshrl.u32 %v4333, 16
      %v4502 = vrot.slane %v4500, 7
      %v4503 = vshll.u32 %v4333, 16
      %v4505 = vor.u32 %v4502, %v4503
      %v4506 = vsel %vm4350, %v4498, %v4505
      %v4507 = vrot.slane %v4502, 4
      %v4509 = vshrl.u32 %v4334, 16
      %v4511 = vrot.slane %v4509, 7
      %v4512 = vshll.u32 %v4334, 16
      %v4514 = vor.u32 %v4511, %v4512
      %v4515 = vsel %vm4350, %v4507, %v4514
      %v4516 = vrot.slane %v4511, 4
      %v4518 = vshrl.u32 %v4335, 16
      %v4520 = vrot.slane %v4518, 7
      %v4521 = vshll.u32 %v4335, 16
      %v4523 = vor.u32 %v4520, %v4521
      %v4524 = vsel %vm4350, %v4516, %v4523
      %v4525 = vrot.slane %v4520, 4
      %v4527 = vshrl.u32 %v4336, 16
      %v4529 = vrot.slane %v4527, 7
      %v4530 = vshll.u32 %v4336, 16
      %v4532 = vor.u32 %v4529, %v4530
      %v4533 = vrot.slane %v4529, 4
      %v4535 = vshrl.u32 %v4337, 16
      %v4537 = vrot.slane %v4535, 7
      %v4538 = vshll.u32 %v4337, 16
      %v4540 = vor.u32 %v4537, %v4538
      %v4541 = vsel %vm4350, %v4533, %v4540
      %v4542 = vrot.slane %v4537, 4
      %v4544 = vshrl.u32 %v4338, 16
      %v4546 = vrot.slane %v4544, 7
      %v4547 = vshll.u32 %v4338, 16
      %v4549 = vor.u32 %v4546, %v4547
      %v4550 = vsel %vm4350, %v4542, %v4549
      %v4551 = vrot.slane %v4546, 4
      %v4553 = vshrl.u32 %v4339, 16
      %v4555 = vrot.slane %v4553, 7
      %v4556 = vshll.u32 %v4339, 16
      %v4558 = vor.u32 %v4555, %v4556
      %v4559 = vsel %vm4350, %v4551, %v4558
      %v4560 = vrot.slane %v4555, 4
      %v4562 = vshrl.u32 %v4340, 16
      %v4564 = vrot.slane %v4562, 7
      %v4565 = vshll.u32 %v4340, 16
      %v4567 = vor.u32 %v4564, %v4565
      %v4568 = vrot.slane %v4564, 4
      %v4570 = vshrl.u32 %v4341, 16
      %v4572 = vrot.slane %v4570, 7
      %v4573 = vshll.u32 %v4341, 16
      %v4575 = vor.u32 %v4572, %v4573
      %v4576 = vsel %vm4350, %v4568, %v4575
      %v4577 = vrot.slane %v4572, 4
      %v4579 = vshrl.u32 %v4342, 16
      %v4581 = vrot.slane %v4579, 7
      %v4582 = vshll.u32 %v4342, 16
      %v4584 = vor.u32 %v4581, %v4582
      %v4585 = vsel %vm4350, %v4577, %v4584
      %v4586 = vrot.slane %v4581, 4
      %v4588 = vshrl.u32 %v4343, 16
      %v4590 = vrot.slane %v4588, 7
      %v4591 = vshll.u32 %v4343, 16
      %v4593 = vor.u32 %v4590, %v4591
      %v4594 = vsel %vm4350, %v4586, %v4593
      %v4595 = vrot.slane %v4590, 4
      %v4597 = vshrl.u32 %v4344, 16
      %v4599 = vrot.slane %v4597, 7
      %v4600 = vshll.u32 %v4344, 16
      %v4602 = vor.u32 %v4599, %v4600
      %v4603 = vrot.slane %v4599, 4
      %v4605 = vshrl.u32 %v4345, 16
      %v4607 = vrot.slane %v4605, 7
      %v4608 = vshll.u32 %v4345, 16
      %v4610 = vor.u32 %v4607, %v4608
      %v4611 = vsel %vm4350, %v4603, %v4610
      %v4612 = vrot.slane %v4607, 4
      %v4614 = vshrl.u32 %v4346, 16
      %v4616 = vrot.slane %v4614, 7
      %v4617 = vshll.u32 %v4346, 16
      %v4619 = vor.u32 %v4616, %v4617
      %v4620 = vsel %vm4350, %v4612, %v4619
      %v4621 = vrot.slane %v4616, 4
      %v4623 = vshrl.u32 %v4347, 16
      %v4625 = vrot.slane %v4623, 7
      %v4626 = vshll.u32 %v4347, 16
      %v4628 = vor.u32 %v4625, %v4626
      %v4629 = vsel %vm4350, %v4621, %v4628
      %v4630 = vrot.slane %v4625, 4
      %s4671 = scalar_lea.vmem [#allocation2], 20
      %vm4672 = vcmask 1043456
      %vm4673 = vsmask.f32 7938
      %vm4674 = vmand %vm4672, %vm4673
      %v4675 = vld [vmem:[%s4671] sm:$0xf]
      %v4676 = vsel %vm4674, %v4357, %v4675
      %4677 = vst [vmem:[%s4671] sm:$0xf] %v4676
      %4678 = vst [vmem:[%s4671 + $0x4] sm:$0xf] %v4366
      %4679 = vst [vmem:[%s4671 + $0x8] sm:$0xf] %v4375
      %4680 = vst [vmem:[%s4671 + $0xc] sm:$0xf] %v4384
      %vm4681 = vcmask 1040384
      %vm4682 = vmand %vm4681, %vm4348
      %v4683 = vld [vmem:[%s4671 + $0x10] sm:$0x1]
      %v4684 = vsel %vm4682, %v4385, %v4683
      %4685 = vst [vmem:[%s4671 + $0x10] sm:$0x1] %v4684
      %v4686 = vld [vmem:[%s4671 + $0x14] sm:$0xf]
      %v4687 = vsel %vm4674, %v4392, %v4686
      %4688 = vst [vmem:[%s4671 + $0x14] sm:$0xf] %v4687
      %4689 = vst [vmem:[%s4671 + $0x18] sm:$0xf] %v4401
      %4690 = vst [vmem:[%s4671 + $0x1c] sm:$0xf] %v4410
      %4691 = vst [vmem:[%s4671 + $0x20] sm:$0xf] %v4419
      %v4692 = vld [vmem:[%s4671 + $0x24] sm:$0x1]
      %v4693 = vsel %vm4682, %v4420, %v4692
      %4694 = vst [vmem:[%s4671 + $0x24] sm:$0x1] %v4693
      %v4695 = vld [vmem:[%s4671 + $0x28] sm:$0xf]
      %v4696 = vsel %vm4674, %v4427, %v4695
      %4697 = vst [vmem:[%s4671 + $0x28] sm:$0xf] %v4696
      %4698 = vst [vmem:[%s4671 + $0x2c] sm:$0xf] %v4436
      %4699 = vst [vmem:[%s4671 + $0x30] sm:$0xf] %v4445
      %4700 = vst [vmem:[%s4671 + $0x34] sm:$0xf] %v4454
      %v4701 = vld [vmem:[%s4671 + $0x38] sm:$0x1]
      %v4702 = vsel %vm4682, %v4455, %v4701
      %4703 = vst [vmem:[%s4671 + $0x38] sm:$0x1] %v4702
      %v4704 = vld [vmem:[%s4671 + $0x3c] sm:$0xf]
      %v4705 = vsel %vm4674, %v4462, %v4704
      %4706 = vst [vmem:[%s4671 + $0x3c] sm:$0xf] %v4705
      %4707 = vst [vmem:[%s4671 + $0x40] sm:$0xf] %v4471
      %4708 = vst [vmem:[%s4671 + $0x44] sm:$0xf] %v4480
      %4709 = vst [vmem:[%s4671 + $0x48] sm:$0xf] %v4489
      %v4710 = vld [vmem:[%s4671 + $0x4c] sm:$0x1]
      %v4711 = vsel %vm4682, %v4490, %v4710
      %4712 = vst [vmem:[%s4671 + $0x4c] sm:$0x1] %v4711
      %v4713 = vld [vmem:[%s4671 + $0x50] sm:$0xf]
      %v4714 = vsel %vm4674, %v4497, %v4713
      %4715 = vst [vmem:[%s4671 + $0x50] sm:$0xf] %v4714
      %4716 = vst [vmem:[%s4671 + $0x54] sm:$0xf] %v4506
      %4717 = vst [vmem:[%s4671 + $0x58] sm:$0xf] %v4515
      %4718 = vst [vmem:[%s4671 + $0x5c] sm:$0xf] %v4524
      %v4719 = vld [vmem:[%s4671 + $0x60] sm:$0x1]
      %v4720 = vsel %vm4682, %v4525, %v4719
      %4721 = vst [vmem:[%s4671 + $0x60] sm:$0x1] %v4720
      %v4722 = vld [vmem:[%s4671 + $0x64] sm:$0xf]
      %v4723 = vsel %vm4674, %v4532, %v4722
      %4724 = vst [vmem:[%s4671 + $0x64] sm:$0xf] %v4723
      %4725 = vst [vmem:[%s4671 + $0x68] sm:$0xf] %v4541
      %4726 = vst [vmem:[%s4671 + $0x6c] sm:$0xf] %v4550
      %4727 = vst [vmem:[%s4671 + $0x70] sm:$0xf] %v4559
      %v4728 = vld [vmem:[%s4671 + $0x74] sm:$0x1]
      %v4729 = vsel %vm4682, %v4560, %v4728
      %4730 = vst [vmem:[%s4671 + $0x74] sm:$0x1] %v4729
      %v4731 = vld [vmem:[%s4671 + $0x78] sm:$0xf]
      %v4732 = vsel %vm4674, %v4567, %v4731
      %4733 = vst [vmem:[%s4671 + $0x78] sm:$0xf] %v4732
      %4734 = vst [vmem:[%s4671 + $0x7c] sm:$0xf] %v4576
      %4735 = vst [vmem:[%s4671 + $0x80] sm:$0xf] %v4585
      %4736 = vst [vmem:[%s4671 + $0x84] sm:$0xf] %v4594
      %v4737 = vld [vmem:[%s4671 + $0x88] sm:$0x1]
      %v4738 = vsel %vm4682, %v4595, %v4737
      %4739 = vst [vmem:[%s4671 + $0x88] sm:$0x1] %v4738
      %v4740 = vld [vmem:[%s4671 + $0x8c] sm:$0xf]
      %v4741 = vsel %vm4674, %v4602, %v4740
      %4742 = vst [vmem:[%s4671 + $0x8c] sm:$0xf] %v4741
      %4743 = vst [vmem:[%s4671 + $0x90] sm:$0xf] %v4611
      %4744 = vst [vmem:[%s4671 + $0x94] sm:$0xf] %v4620
      %4745 = vst [vmem:[%s4671 + $0x98] sm:$0xf] %v4629
      %v4746 = vld [vmem:[%s4671 + $0x9c] sm:$0x1]
      %v4747 = vsel %vm4682, %v4630, %v4746
      %4748 = vst [vmem:[%s4671 + $0x9c] sm:$0x1] %v4747
      %p4749 = scmp.gt.s32.totalorder %s23, 0
      // Predicated region
      $region49: #{basic_block_forward.1} parent=47 // pred_check
        %p4750 = pneg %p4749
      $region50: #{basic_block_forward.1} parent=47 // pred_check_branch
        %4752 = sbr.rel (%p4750) target = $region52
      $region51: #{basic_block_forward.1} parent=47 // pred_region
        %s4753 = ssub.s32 %s305, 1
        %s4754 = smul.u32 %s4753, 5
        %s4755 = smul.addr %s4754, 4
        %s4756 = scalar_lea.vmem %s292, %s4755
        %v4757 = vld [vmem:[%s4756] sm:$0xf]
        %v4758 = vld [vmem:[%s4756 + $0x4] sm:$0xf]
        %v4759 = vld [vmem:[%s4756 + $0x8] sm:$0xf]
        %v4760 = vld [vmem:[%s4756 + $0xc] sm:$0xf]
        %v4761 = vld [vmem:[%s4756 + $0x10] sm:$0x1]
        %v4762 = vld [vmem:[%s4756] sm:$0xe]
        %v4767 = vunpack.c.l.b16 %v4757
        %v4768 = vunpack.c.l.b16 %v4758
        %v4769 = vunpack.c.l.b16 %v4759
        %v4770 = vunpack.c.l.b16 %v4760
        %v4771 = vpack.c.b16 %v4768, %v4767
        %v4772 = vpack.c.b16 %v4770, %v4769
        %v4776 = vunpack.c.l.b16 %v4761
        %v4777 = vpack.c.b16 %v4776, %v4776
        %vm4778 = vsmask.f32 7424
        %v4780 = vshrl.u32 %v4771, 16
        %v4782 = vshll.u32 %v4771, 16
        %v4784 = vrot.slane %v4782, 1
        %v4785 = vor.u32 %v4780, %v4784
        %v4787 = vshll.u32 %v4772, 16
        %v4789 = vrot.slane %v4787, 1
        %v4790 = vsel %vm4778, %v4785, %v4789
        %v4791 = vshrl.u32 %v4772, 16
        %v4793 = vor.u32 %v4791, %v4789
        %v4795 = vshll.u32 %v4777, 16
        %v4797 = vrot.slane %v4795, 1
        %v4798 = vsel %vm4778, %v4793, %v4797
        %v4802 = vunpack.c.l.b16 %v4762
        %v4803 = vpack.c.b16 %v4768, %v4802
        %vm4804 = vcmask 1046528
        %v4805 = vrot.slane %v4803, 1
        %v4806 = vrot.slane %v4772, 1
        %v4807 = vsel %vm4804, %v4805, %v4806
        %v4808 = vrot.slane %v4777, 1
        %v4809 = vsel %vm4804, %v4806, %v4808
        %v4812 = vld [vmem:[%s1] sm:$0xf]
        %v4813 = vld [vmem:[%s1 + $0x4] sm:$0xf]
        %v4814 = vld [vmem:[%s1 + $0x8] sm:$0xf]
        %v4815 = vld [vmem:[%s1 + $0xc] sm:$0xf]
        %v4816 = vld [vmem:[%s1 + $0x10] sm:$0xf]
        %v4817 = vld [vmem:[%s1 + $0x14] sm:$0xf]
        %v4818 = vld [vmem:[%s1 + $0x18] sm:$0xf]
        %v4819 = vld [vmem:[%s1 + $0x1c] sm:$0xf]
        %v4820 = vld [vmem:[%s1 + $0x20] sm:$0xf]
        %v4821 = vld [vmem:[%s1 + $0x24] sm:$0xf]
        %v4822 = vld [vmem:[%s1 + $0x28] sm:$0xf]
        %v4823 = vld [vmem:[%s1 + $0x2c] sm:$0xf]
        %v4824 = vld [vmem:[%s1 + $0x30] sm:$0xf]
        %v4825 = vld [vmem:[%s1 + $0x34] sm:$0xf]
        %v4826 = vld [vmem:[%s1 + $0x38] sm:$0xf]
        %v4827 = vld [vmem:[%s1 + $0x3c] sm:$0xf]
        %v4828 = vld [vmem:[%s1 + $0x40] sm:$0xf]
        %v4829 = vld [vmem:[%s1 + $0x44] sm:$0xf]
        %v4830 = vld [vmem:[%s1 + $0x48] sm:$0xf]
        %v4831 = vld [vmem:[%s1 + $0x4c] sm:$0xf]
        %v4832 = vld [vmem:[%s1 + $0x50] sm:$0xf]
        %v4833 = vld [vmem:[%s1 + $0x54] sm:$0xf]
        %v4834 = vld [vmem:[%s1 + $0x58] sm:$0xf]
        %v4835 = vld [vmem:[%s1 + $0x5c] sm:$0xf]
        %v4836 = vld [vmem:[%s1 + $0x60] sm:$0xf]
        %v4837 = vld [vmem:[%s1 + $0x64] sm:$0xf]
        %v4838 = vld [vmem:[%s1 + $0x68] sm:$0xf]
        %v4839 = vld [vmem:[%s1 + $0x6c] sm:$0xf]
        %v4840 = vld [vmem:[%s1 + $0x70] sm:$0xf]
        %v4841 = vld [vmem:[%s1 + $0x74] sm:$0xf]
        %v4842 = vld [vmem:[%s1 + $0x78] sm:$0xf]
        %v4843 = vld [vmem:[%s1 + $0x7c] sm:$0xf]
        %v4844 = vld [vmem:[%s1 + $0x80] sm:$0xf]
        %v4845 = vld [vmem:[%s1 + $0x84] sm:$0xf]
        %v4846 = vld [vmem:[%s1 + $0x88] sm:$0xf]
        %v4847 = vld [vmem:[%s1 + $0x8c] sm:$0xf]
        %v4848 = vld [vmem:[%s1 + $0x90] sm:$0xf]
        %v4849 = vld [vmem:[%s1 + $0x94] sm:$0xf]
        %v4850 = vld [vmem:[%s1 + $0x98] sm:$0xf]
        %v4851 = vld [vmem:[%s1 + $0x9c] sm:$0xf]
        %v4852 = vld [vmem:[%s1 + $0xa0] sm:$0xf]
        %v4853 = vld [vmem:[%s1 + $0xa4] sm:$0xf]
        %v4854 = vld [vmem:[%s1 + $0xa8] sm:$0xf]
        %v4855 = vld [vmem:[%s1 + $0xac] sm:$0xf]
        %v4856 = vld [vmem:[%s1 + $0xb0] sm:$0xf]
        %v4857 = vld [vmem:[%s1 + $0xb4] sm:$0xf]
        %v4858 = vld [vmem:[%s1 + $0xb8] sm:$0xf]
        %v4859 = vld [vmem:[%s1 + $0xbc] sm:$0xf]
        %v4860 = vld [vmem:[%s358] sm:$0xf]
        %v4861 = vld [vmem:[%s358 + $0x4] sm:$0xf]
        %v4862 = vld [vmem:[%s358 + $0x8] sm:$0xf]
        %v4863 = vld [vmem:[%s358 + $0xc] sm:$0xf]
        %v4864 = vld [vmem:[%s358 + $0x10] sm:$0x1]
        %v4865 = vld [vmem:[%s358] sm:$0xe]
        %v4870 = vunpack.c.l.b16 %v4860
        %v4871 = vunpack.c.l.b16 %v4861
        %v4872 = vunpack.c.l.b16 %v4862
        %v4873 = vunpack.c.l.b16 %v4863
        %v4874 = vpack.c.b16 %v4871, %v4870
        %v4875 = vpack.c.b16 %v4873, %v4872
        %v4879 = vunpack.c.l.b16 %v4864
        %v4880 = vpack.c.b16 %v4879, %v4879
        %v4882 = vshrl.u32 %v4874, 16
        %v4884 = vshll.u32 %v4874, 16
        %v4886 = vrot.slane %v4884, 1
        %v4887 = vor.u32 %v4882, %v4886
        %v4889 = vshll.u32 %v4875, 16
        %v4891 = vrot.slane %v4889, 1
        %v4892 = vsel %vm4778, %v4887, %v4891
        %v4893 = vshrl.u32 %v4875, 16
        %v4895 = vor.u32 %v4893, %v4891
        %v4897 = vshll.u32 %v4880, 16
        %v4899 = vrot.slane %v4897, 1
        %v4900 = vsel %vm4778, %v4895, %v4899
        %v4904 = vunpack.c.l.b16 %v4865
        %v4905 = vpack.c.b16 %v4871, %v4904
        %v4906 = vrot.slane %v4905, 1
        %v4907 = vrot.slane %v4875, 1
        %v4908 = vsel %vm4804, %v4906, %v4907
        %v4909 = vrot.slane %v4880, 1
        %v4910 = vsel %vm4804, %v4907, %v4909
        %v4913 = vld [vmem:[%s1905] sm:$0xf]
        %v4914 = vld [vmem:[%s1905 + $0x4] sm:$0xf]
        %v4915 = vld [vmem:[%s1905 + $0x8] sm:$0xf]
        %v4916 = vld [vmem:[%s1905 + $0xc] sm:$0xf]
        %v4917 = vld [vmem:[%s1905 + $0x10] sm:$0xf]
        %v4918 = vld [vmem:[%s1905 + $0x14] sm:$0xf]
        %v4919 = vld [vmem:[%s1905 + $0x18] sm:$0xf]
        %v4920 = vld [vmem:[%s1905 + $0x1c] sm:$0xf]
        %v4921 = vld [vmem:[%s1905 + $0x20] sm:$0xf]
        %v4922 = vld [vmem:[%s1905 + $0x24] sm:$0xf]
        %v4923 = vld [vmem:[%s1905 + $0x28] sm:$0xf]
        %v4924 = vld [vmem:[%s1905 + $0x2c] sm:$0xf]
        %v4925 = vld [vmem:[%s1905 + $0x30] sm:$0xf]
        %v4926 = vld [vmem:[%s1905 + $0x34] sm:$0xf]
        %v4927 = vld [vmem:[%s1905 + $0x38] sm:$0xf]
        %v4928 = vld [vmem:[%s1905 + $0x3c] sm:$0xf]
        %v4929 = vld [vmem:[%s1905 + $0x40] sm:$0xf]
        %v4930 = vld [vmem:[%s1905 + $0x44] sm:$0xf]
        %v4931 = vld [vmem:[%s1905 + $0x48] sm:$0xf]
        %v4932 = vld [vmem:[%s1905 + $0x4c] sm:$0xf]
        %v4933 = vld [vmem:[%s1905 + $0x50] sm:$0xf]
        %v4934 = vld [vmem:[%s1905 + $0x54] sm:$0xf]
        %v4935 = vld [vmem:[%s1905 + $0x58] sm:$0xf]
        %v4936 = vld [vmem:[%s1905 + $0x5c] sm:$0xf]
        %v4937 = vld [vmem:[%s1905 + $0x60] sm:$0xf]
        %v4938 = vld [vmem:[%s1905 + $0x64] sm:$0xf]
        %v4939 = vld [vmem:[%s1905 + $0x68] sm:$0xf]
        %v4940 = vld [vmem:[%s1905 + $0x6c] sm:$0xf]
        %v4941 = vld [vmem:[%s1905 + $0x70] sm:$0xf]
        %v4942 = vld [vmem:[%s1905 + $0x74] sm:$0xf]
        %v4943 = vld [vmem:[%s1905 + $0x78] sm:$0xf]
        %v4944 = vld [vmem:[%s1905 + $0x7c] sm:$0xf]
        %v4945 = vld [vmem:[%s1905 + $0x80] sm:$0xf]
        %v4946 = vld [vmem:[%s1905 + $0x84] sm:$0xf]
        %v4947 = vld [vmem:[%s1905 + $0x88] sm:$0xf]
        %v4948 = vld [vmem:[%s1905 + $0x8c] sm:$0xf]
        %v4949 = vld [vmem:[%s1905 + $0x90] sm:$0xf]
        %v4950 = vld [vmem:[%s1905 + $0x94] sm:$0xf]
        %v4951 = vld [vmem:[%s1905 + $0x98] sm:$0xf]
        %v4952 = vld [vmem:[%s1905 + $0x9c] sm:$0xf]
        %v4953 = vld [vmem:[%s1905 + $0xa0] sm:$0xf]
        %v4954 = vld [vmem:[%s1905 + $0xa4] sm:$0xf]
        %v4955 = vld [vmem:[%s1905 + $0xa8] sm:$0xf]
        %v4956 = vld [vmem:[%s1905 + $0xac] sm:$0xf]
        %v4957 = vld [vmem:[%s1905 + $0xb0] sm:$0xf]
        %v4958 = vld [vmem:[%s1905 + $0xb4] sm:$0xf]
        %v4959 = vld [vmem:[%s1905 + $0xb8] sm:$0xf]
        %v4960 = vld [vmem:[%s1905 + $0xbc] sm:$0xf]
        %v5009 = vunpack.c.l.b16 %v4913
        %v5010 = vunpack.c.l.b16 %v4914
        %v5011 = vunpack.c.l.b16 %v4915
        %v5012 = vunpack.c.l.b16 %v4916
        %v5013 = vunpack.c.l.b16 %v4917
        %v5014 = vunpack.c.l.b16 %v4918
        %v5015 = vunpack.c.l.b16 %v4919
        %v5016 = vunpack.c.l.b16 %v4920
        %v5017 = vunpack.c.l.b16 %v4921
        %v5018 = vunpack.c.l.b16 %v4922
        %v5019 = vunpack.c.l.b16 %v4923
        %v5020 = vunpack.c.l.b16 %v4924
        %v5021 = vunpack.c.l.b16 %v4925
        %v5022 = vunpack.c.l.b16 %v4926
        %v5023 = vunpack.c.l.b16 %v4927
        %v5024 = vunpack.c.l.b16 %v4928
        %v5025 = vunpack.c.l.b16 %v4929
        %v5026 = vunpack.c.l.b16 %v4930
        %v5027 = vunpack.c.l.b16 %v4931
        %v5028 = vunpack.c.l.b16 %v4932
        %v5029 = vunpack.c.l.b16 %v4933
        %v5030 = vunpack.c.l.b16 %v4934
        %v5031 = vunpack.c.l.b16 %v4935
        %v5032 = vunpack.c.l.b16 %v4936
        %v5033 = vunpack.c.l.b16 %v4937
        %v5034 = vunpack.c.l.b16 %v4938
        %v5035 = vunpack.c.l.b16 %v4939
        %v5036 = vunpack.c.l.b16 %v4940
        %v5037 = vunpack.c.l.b16 %v4941
        %v5038 = vunpack.c.l.b16 %v4942
        %v5039 = vunpack.c.l.b16 %v4943
        %v5040 = vunpack.c.l.b16 %v4944
        %v5041 = vunpack.c.l.b16 %v4945
        %v5042 = vunpack.c.l.b16 %v4946
        %v5043 = vunpack.c.l.b16 %v4947
        %v5044 = vunpack.c.l.b16 %v4948
        %v5045 = vunpack.c.l.b16 %v4949
        %v5046 = vunpack.c.l.b16 %v4950
        %v5047 = vunpack.c.l.b16 %v4951
        %v5048 = vunpack.c.l.b16 %v4952
        %v5049 = vunpack.c.l.b16 %v4953
        %v5050 = vunpack.c.l.b16 %v4954
        %v5051 = vunpack.c.l.b16 %v4955
        %v5052 = vunpack.c.l.b16 %v4956
        %v5053 = vunpack.c.l.b16 %v4957
        %v5054 = vunpack.c.l.b16 %v4958
        %v5055 = vunpack.c.l.b16 %v4959
        %v5056 = vunpack.c.l.b16 %v4960
        %v5057 = vpack.c.b16 %v5010, %v5009
        %v5058 = vpack.c.b16 %v5012, %v5011
        %v5059 = vpack.c.b16 %v5014, %v5013
        %v5060 = vpack.c.b16 %v5016, %v5015
        %v5061 = vpack.c.b16 %v5018, %v5017
        %v5062 = vpack.c.b16 %v5020, %v5019
        %v5063 = vpack.c.b16 %v5022, %v5021
        %v5064 = vpack.c.b16 %v5024, %v5023
        %v5065 = vpack.c.b16 %v5026, %v5025
        %v5066 = vpack.c.b16 %v5028, %v5027
        %v5067 = vpack.c.b16 %v5030, %v5029
        %v5068 = vpack.c.b16 %v5032, %v5031
        %v5069 = vpack.c.b16 %v5034, %v5033
        %v5070 = vpack.c.b16 %v5036, %v5035
        %v5071 = vpack.c.b16 %v5038, %v5037
        %v5072 = vpack.c.b16 %v5040, %v5039
        %v5073 = vpack.c.b16 %v5042, %v5041
        %v5074 = vpack.c.b16 %v5044, %v5043
        %v5075 = vpack.c.b16 %v5046, %v5045
        %v5076 = vpack.c.b16 %v5048, %v5047
        %v5077 = vpack.c.b16 %v5050, %v5049
        %v5078 = vpack.c.b16 %v5052, %v5051
        %v5079 = vpack.c.b16 %v5054, %v5053
        %v5080 = vpack.c.b16 %v5056, %v5055
        %5105 = vmatprep.subr.bf16.mxu0 0
        %5106 = vmatpush1.bf16.msra.mxu0 %v5064
        %5107 = vmatprep.subr.bf16.mxu0 0
        %5108 = vmatpush1.bf16.msra.mxu0 %v5063
        %5109 = vmatprep.subr.bf16.mxu0 0
        %5110 = vmatpush1.bf16.msra.mxu0 %v5062
        %5111 = vmatprep.subr.bf16.mxu0 0
        %5112 = vmatpush1.bf16.msra.mxu0 %v5061
        %5113 = vmatprep.subr.bf16.mxu0 0
        %5114 = vmatpush1.bf16.msra.mxu0 %v5060
        %5115 = vmatprep.subr.bf16.mxu0 0
        %5116 = vmatpush1.bf16.msra.mxu0 %v5059
        %5117 = vmatprep.subr.bf16.mxu0 0
        %5118 = vmatpush1.bf16.msra.mxu0 %v5058
        %5119 = vmatprep.subr.bf16.mxu0 0
        %5120 = vmatpush1.bf16.msra.mxu0 %v5057
        %5121 = vmatprep.subr.bf16.mxu0 0
        %5122 = vmatpush2.bf16.msra.mxu0 %v5072
        %5123 = vmatprep.subr.bf16.mxu0 0
        %5124 = vmatpush2.bf16.msra.mxu0 %v5071
        %5125 = vmatprep.subr.bf16.mxu0 0
        %5126 = vmatpush2.bf16.msra.mxu0 %v5070
        %5127 = vmatprep.subr.bf16.mxu0 0
        %5128 = vmatpush2.bf16.msra.mxu0 %v5069
        %5129 = vmatprep.subr.bf16.mxu0 0
        %5130 = vmatpush2.bf16.msra.mxu0 %v5068
        %5131 = vmatprep.subr.bf16.mxu0 0
        %5132 = vmatpush2.bf16.msra.mxu0 %v5067
        %5133 = vmatprep.subr.bf16.mxu0 0
        %5134 = vmatpush2.bf16.msra.mxu0 %v5066
        %5135 = vmatprep.subr.bf16.mxu0 0
        %5136 = vmatpush2.bf16.msra.mxu0 %v5065
        %5137 = vmatprep.mubr.bf16.mxu0 %v4892
        %5138 = vmatmul.mubr.bf16.gmra.mxu0 %v4874
        %v5139 = vpop.f32.mrf.mxu0
        %v5140 = vadd.f32 0.0, %v5139
        %v5141 = vpop.f32.mrf.mxu0
        %v5142 = vpop.f32.mrf.mxu0
        %v5143 = vadd.f32 0.0, %v5142
        %v5144 = vpop.f32.mrf.mxu0
        %5145 = vmatprep.mubr.bf16.mxu0 %v4900
        %5146 = vmatmul.mubr.bf16.gmra.mxu0 %v4875
        %v5147 = vpop.f32.mrf.mxu0
        %v5148 = vadd.f32 0.0, %v5147
        %v5149 = vpop.f32.mrf.mxu0
        %v5150 = vpop.f32.mrf.mxu0
        %v5151 = vadd.f32 0.0, %v5150
        %v5152 = vpop.f32.mrf.mxu0
        %5153 = vdwg.mxu0
        %5154 = vmatprep.subr.bf16.mxu0 0
        %5155 = vmatpush1.bf16.msra.mxu0 %v5080
        %5156 = vmatprep.subr.bf16.mxu0 0
        %5157 = vmatpush1.bf16.msra.mxu0 %v5079
        %5158 = vmatprep.subr.bf16.mxu0 0
        %5159 = vmatpush1.bf16.msra.mxu0 %v5078
        %5160 = vmatprep.subr.bf16.mxu0 0
        %5161 = vmatpush1.bf16.msra.mxu0 %v5077
        %5162 = vmatprep.subr.bf16.mxu0 0
        %5163 = vmatpush1.bf16.msra.mxu0 %v5076
        %5164 = vmatprep.subr.bf16.mxu0 0
        %5165 = vmatpush1.bf16.msra.mxu0 %v5075
        %5166 = vmatprep.subr.bf16.mxu0 0
        %5167 = vmatpush1.bf16.msra.mxu0 %v5074
        %5168 = vmatprep.subr.bf16.mxu0 0
        %5169 = vmatpush1.bf16.msra.mxu0 %v5073
        %5170 = vmatprep.subr.bf16.mxu0 0
        %5171 = vmatpush2.bf16.msra.mxu0 0
        %5172 = vmatprep.subr.bf16.mxu0 0
        %5173 = vmatpush2.bf16.msra.mxu0 0
        %5174 = vmatprep.subr.bf16.mxu0 0
        %5175 = vmatpush2.bf16.msra.mxu0 0
        %5176 = vmatprep.subr.bf16.mxu0 0
        %5177 = vmatpush2.bf16.msra.mxu0 0
        %5178 = vmatprep.subr.bf16.mxu0 0
        %5179 = vmatpush2.bf16.msra.mxu0 0
        %5180 = vmatprep.subr.bf16.mxu0 0
        %5181 = vmatpush2.bf16.msra.mxu0 0
        %5182 = vmatprep.subr.bf16.mxu0 0
        %5183 = vmatpush2.bf16.msra.mxu0 0
        %5184 = vmatprep.subr.bf16.mxu0 0
        %5185 = vmatpush2.bf16.msra.mxu0 0
        %5186 = vmatprep.mubr.bf16.mxu0 0
        %5187 = vmatmul.mubr.bf16.gmra.mxu0 %v4908
        %v5188 = vpop.f32.mrf.mxu0
        %v5189 = vadd.f32 %v5140, %v5188
        %v5190 = vpop.f32.mrf.mxu0
        %v5191 = vpop.f32.mrf.mxu0
        %v5192 = vadd.f32 %v5143, %v5191
        %v5193 = vpop.f32.mrf.mxu0
        %5194 = vmatprep.mubr.bf16.mxu0 0
        %5195 = vmatmul.mubr.bf16.gmra.mxu0 %v4910
        %v5196 = vpop.f32.mrf.mxu0
        %v5197 = vadd.f32 %v5148, %v5196
        %v5198 = vpop.f32.mrf.mxu0
        %v5199 = vpop.f32.mrf.mxu0
        %v5200 = vadd.f32 %v5151, %v5199
        %v5201 = vpop.f32.mrf.mxu0
        %5202 = vdwg.mxu0
        %v5251 = vunpack.c.l.b16 %v4812
        %v5252 = vunpack.c.l.b16 %v4813
        %v5253 = vunpack.c.l.b16 %v4814
        %v5254 = vunpack.c.l.b16 %v4815
        %v5255 = vunpack.c.l.b16 %v4816
        %v5256 = vunpack.c.l.b16 %v4817
        %v5257 = vunpack.c.l.b16 %v4818
        %v5258 = vunpack.c.l.b16 %v4819
        %v5259 = vunpack.c.l.b16 %v4820
        %v5260 = vunpack.c.l.b16 %v4821
        %v5261 = vunpack.c.l.b16 %v4822
        %v5262 = vunpack.c.l.b16 %v4823
        %v5263 = vunpack.c.l.b16 %v4824
        %v5264 = vunpack.c.l.b16 %v4825
        %v5265 = vunpack.c.l.b16 %v4826
        %v5266 = vunpack.c.l.b16 %v4827
        %v5267 = vunpack.c.l.b16 %v4828
        %v5268 = vunpack.c.l.b16 %v4829
        %v5269 = vunpack.c.l.b16 %v4830
        %v5270 = vunpack.c.l.b16 %v4831
        %v5271 = vunpack.c.l.b16 %v4832
        %v5272 = vunpack.c.l.b16 %v4833
        %v5273 = vunpack.c.l.b16 %v4834
        %v5274 = vunpack.c.l.b16 %v4835
        %v5275 = vunpack.c.l.b16 %v4836
        %v5276 = vunpack.c.l.b16 %v4837
        %v5277 = vunpack.c.l.b16 %v4838
        %v5278 = vunpack.c.l.b16 %v4839
        %v5279 = vunpack.c.l.b16 %v4840
        %v5280 = vunpack.c.l.b16 %v4841
        %v5281 = vunpack.c.l.b16 %v4842
        %v5282 = vunpack.c.l.b16 %v4843
        %v5283 = vunpack.c.l.b16 %v4844
        %v5284 = vunpack.c.l.b16 %v4845
        %v5285 = vunpack.c.l.b16 %v4846
        %v5286 = vunpack.c.l.b16 %v4847
        %v5287 = vunpack.c.l.b16 %v4848
        %v5288 = vunpack.c.l.b16 %v4849
        %v5289 = vunpack.c.l.b16 %v4850
        %v5290 = vunpack.c.l.b16 %v4851
        %v5291 = vunpack.c.l.b16 %v4852
        %v5292 = vunpack.c.l.b16 %v4853
        %v5293 = vunpack.c.l.b16 %v4854
        %v5294 = vunpack.c.l.b16 %v4855
        %v5295 = vunpack.c.l.b16 %v4856
        %v5296 = vunpack.c.l.b16 %v4857
        %v5297 = vunpack.c.l.b16 %v4858
        %v5298 = vunpack.c.l.b16 %v4859
        %v5299 = vpack.c.b16 %v5252, %v5251
        %v5300 = vpack.c.b16 %v5254, %v5253
        %v5301 = vpack.c.b16 %v5256, %v5255
        %v5302 = vpack.c.b16 %v5258, %v5257
        %v5303 = vpack.c.b16 %v5260, %v5259
        %v5304 = vpack.c.b16 %v5262, %v5261
        %v5305 = vpack.c.b16 %v5264, %v5263
        %v5306 = vpack.c.b16 %v5266, %v5265
        %v5307 = vpack.c.b16 %v5268, %v5267
        %v5308 = vpack.c.b16 %v5270, %v5269
        %v5309 = vpack.c.b16 %v5272, %v5271
        %v5310 = vpack.c.b16 %v5274, %v5273
        %v5311 = vpack.c.b16 %v5276, %v5275
        %v5312 = vpack.c.b16 %v5278, %v5277
        %v5313 = vpack.c.b16 %v5280, %v5279
        %v5314 = vpack.c.b16 %v5282, %v5281
        %v5315 = vpack.c.b16 %v5284, %v5283
        %v5316 = vpack.c.b16 %v5286, %v5285
        %v5317 = vpack.c.b16 %v5288, %v5287
        %v5318 = vpack.c.b16 %v5290, %v5289
        %v5319 = vpack.c.b16 %v5292, %v5291
        %v5320 = vpack.c.b16 %v5294, %v5293
        %v5321 = vpack.c.b16 %v5296, %v5295
        %v5322 = vpack.c.b16 %v5298, %v5297
        %5347 = vmatprep.subr.bf16.mxu0 0
        %5348 = vmatpush1.bf16.msra.mxu0 %v5306
        %5349 = vmatprep.subr.bf16.mxu0 0
        %5350 = vmatpush1.bf16.msra.mxu0 %v5305
        %5351 = vmatprep.subr.bf16.mxu0 0
        %5352 = vmatpush1.bf16.msra.mxu0 %v5304
        %5353 = vmatprep.subr.bf16.mxu0 0
        %5354 = vmatpush1.bf16.msra.mxu0 %v5303
        %5355 = vmatprep.subr.bf16.mxu0 0
        %5356 = vmatpush1.bf16.msra.mxu0 %v5302
        %5357 = vmatprep.subr.bf16.mxu0 0
        %5358 = vmatpush1.bf16.msra.mxu0 %v5301
        %5359 = vmatprep.subr.bf16.mxu0 0
        %5360 = vmatpush1.bf16.msra.mxu0 %v5300
        %5361 = vmatprep.subr.bf16.mxu0 0
        %5362 = vmatpush1.bf16.msra.mxu0 %v5299
        %5363 = vmatprep.subr.bf16.mxu0 0
        %5364 = vmatpush2.bf16.msra.mxu0 %v5314
        %5365 = vmatprep.subr.bf16.mxu0 0
        %5366 = vmatpush2.bf16.msra.mxu0 %v5313
        %5367 = vmatprep.subr.bf16.mxu0 0
        %5368 = vmatpush2.bf16.msra.mxu0 %v5312
        %5369 = vmatprep.subr.bf16.mxu0 0
        %5370 = vmatpush2.bf16.msra.mxu0 %v5311
        %5371 = vmatprep.subr.bf16.mxu0 0
        %5372 = vmatpush2.bf16.msra.mxu0 %v5310
        %5373 = vmatprep.subr.bf16.mxu0 0
        %5374 = vmatpush2.bf16.msra.mxu0 %v5309
        %5375 = vmatprep.subr.bf16.mxu0 0
        %5376 = vmatpush2.bf16.msra.mxu0 %v5308
        %5377 = vmatprep.subr.bf16.mxu0 0
        %5378 = vmatpush2.bf16.msra.mxu0 %v5307
        %5379 = vmatprep.mubr.bf16.mxu0 %v4790
        %5380 = vmatmul.mubr.bf16.gmra.mxu0 %v4771
        %v5381 = vpop.f32.mrf.mxu0
        %v5382 = vadd.f32 %v5189, %v5381
        %v5383 = vpop.f32.mrf.mxu0
        %v5384 = vpop.f32.mrf.mxu0
        %v5385 = vadd.f32 %v5192, %v5384
        %v5386 = vpop.f32.mrf.mxu0
        %5387 = vmatprep.mubr.bf16.mxu0 %v4798
        %5388 = vmatmul.mubr.bf16.gmra.mxu0 %v4772
        %v5389 = vpop.f32.mrf.mxu0
        %v5390 = vadd.f32 %v5197, %v5389
        %v5391 = vpop.f32.mrf.mxu0
        %v5392 = vpop.f32.mrf.mxu0
        %v5393 = vadd.f32 %v5200, %v5392
        %v5394 = vpop.f32.mrf.mxu0
        %5395 = vdwg.mxu0
        %5396 = vmatprep.subr.bf16.mxu0 0
        %5397 = vmatpush1.bf16.msra.mxu0 %v5322
        %5398 = vmatprep.subr.bf16.mxu0 0
        %5399 = vmatpush1.bf16.msra.mxu0 %v5321
        %5400 = vmatprep.subr.bf16.mxu0 0
        %5401 = vmatpush1.bf16.msra.mxu0 %v5320
        %5402 = vmatprep.subr.bf16.mxu0 0
        %5403 = vmatpush1.bf16.msra.mxu0 %v5319
        %5404 = vmatprep.subr.bf16.mxu0 0
        %5405 = vmatpush1.bf16.msra.mxu0 %v5318
        %5406 = vmatprep.subr.bf16.mxu0 0
        %5407 = vmatpush1.bf16.msra.mxu0 %v5317
        %5408 = vmatprep.subr.bf16.mxu0 0
        %5409 = vmatpush1.bf16.msra.mxu0 %v5316
        %5410 = vmatprep.subr.bf16.mxu0 0
        %5411 = vmatpush1.bf16.msra.mxu0 %v5315
        %5412 = vmatprep.subr.bf16.mxu0 0
        %5413 = vmatpush2.bf16.msra.mxu0 0
        %5414 = vmatprep.subr.bf16.mxu0 0
        %5415 = vmatpush2.bf16.msra.mxu0 0
        %5416 = vmatprep.subr.bf16.mxu0 0
        %5417 = vmatpush2.bf16.msra.mxu0 0
        %5418 = vmatprep.subr.bf16.mxu0 0
        %5419 = vmatpush2.bf16.msra.mxu0 0
        %5420 = vmatprep.subr.bf16.mxu0 0
        %5421 = vmatpush2.bf16.msra.mxu0 0
        %5422 = vmatprep.subr.bf16.mxu0 0
        %5423 = vmatpush2.bf16.msra.mxu0 0
        %5424 = vmatprep.subr.bf16.mxu0 0
        %5425 = vmatpush2.bf16.msra.mxu0 0
        %5426 = vmatprep.subr.bf16.mxu0 0
        %5427 = vmatpush2.bf16.msra.mxu0 0
        %5428 = vmatprep.mubr.bf16.mxu0 0
        %5429 = vmatmul.mubr.bf16.gmra.mxu0 %v4807
        %v5430 = vpop.f32.mrf.mxu0
        %v5431 = vadd.f32 %v5382, %v5430
        %v5432 = vpop.f32.mrf.mxu0
        %v5433 = vpop.f32.mrf.mxu0
        %v5434 = vadd.f32 %v5385, %v5433
        %v5435 = vpop.f32.mrf.mxu0
        %5436 = vmatprep.mubr.bf16.mxu0 0
        %5437 = vmatmul.mubr.bf16.gmra.mxu0 %v4809
        %v5438 = vpop.f32.mrf.mxu0
        %v5439 = vadd.f32 %v5390, %v5438
        %v5440 = vpop.f32.mrf.mxu0
        %v5441 = vpop.f32.mrf.mxu0
        %v5442 = vadd.f32 %v5393, %v5441
        %v5443 = vpop.f32.mrf.mxu0
        %5444 = vdwg.mxu0
        %v5445 = vld [vmem:[%s1160] sm:$0xf]
        %v5446 = vld [vmem:[%s1160 + $0x4] sm:$0xf]
        %v5447 = vld [vmem:[%s1160 + $0x8] sm:$0xf]
        %v5448 = vld [vmem:[%s1160 + $0xc] sm:$0xf]
        %v5449 = vld [vmem:[%s1160 + $0x10] sm:$0x1]
        %v5450 = vld [vmem:[%s1160] sm:$0xe]
        %v5455 = vunpack.c.l.b16 %v5445
        %v5456 = vunpack.c.l.b16 %v5446
        %v5457 = vunpack.c.l.b16 %v5447
        %v5458 = vunpack.c.l.b16 %v5448
        %v5459 = vpack.c.b16 %v5456, %v5455
        %v5460 = vpack.c.b16 %v5458, %v5457
        %v5464 = vunpack.c.l.b16 %v5449
        %v5465 = vpack.c.b16 %v5464, %v5464
        %v5467 = vshrl.u32 %v5459, 16
        %v5469 = vshll.u32 %v5459, 16
        %v5471 = vrot.slane %v5469, 1
        %v5472 = vor.u32 %v5467, %v5471
        %v5474 = vshll.u32 %v5460, 16
        %v5476 = vrot.slane %v5474, 1
        %v5477 = vsel %vm4778, %v5472, %v5476
        %v5478 = vshrl.u32 %v5460, 16
        %v5480 = vor.u32 %v5478, %v5476
        %v5482 = vshll.u32 %v5465, 16
        %v5484 = vrot.slane %v5482, 1
        %v5485 = vsel %vm4778, %v5480, %v5484
        %v5489 = vunpack.c.l.b16 %v5450
        %v5490 = vpack.c.b16 %v5456, %v5489
        %v5491 = vrot.slane %v5490, 1
        %v5492 = vrot.slane %v5460, 1
        %v5493 = vsel %vm4804, %v5491, %v5492
        %v5494 = vrot.slane %v5465, 1
        %v5495 = vsel %vm4804, %v5492, %v5494
        %v5498 = vld [vmem:[%s3634] sm:$0xf]
        %v5499 = vld [vmem:[%s3634 + $0x4] sm:$0xf]
        %v5500 = vld [vmem:[%s3634 + $0x8] sm:$0xf]
        %v5501 = vld [vmem:[%s3634 + $0xc] sm:$0xf]
        %v5502 = vld [vmem:[%s3634 + $0x10] sm:$0xf]
        %v5503 = vld [vmem:[%s3634 + $0x14] sm:$0xf]
        %v5504 = vld [vmem:[%s3634 + $0x18] sm:$0xf]
        %v5505 = vld [vmem:[%s3634 + $0x1c] sm:$0xf]
        %v5506 = vld [vmem:[%s3634 + $0x20] sm:$0xf]
        %v5507 = vld [vmem:[%s3634 + $0x24] sm:$0xf]
        %v5508 = vld [vmem:[%s3634 + $0x28] sm:$0xf]
        %v5509 = vld [vmem:[%s3634 + $0x2c] sm:$0xf]
        %v5510 = vld [vmem:[%s3634 + $0x30] sm:$0xf]
        %v5511 = vld [vmem:[%s3634 + $0x34] sm:$0xf]
        %v5512 = vld [vmem:[%s3634 + $0x38] sm:$0xf]
        %v5513 = vld [vmem:[%s3634 + $0x3c] sm:$0xf]
        %v5514 = vld [vmem:[%s3634 + $0x40] sm:$0xf]
        %v5515 = vld [vmem:[%s3634 + $0x44] sm:$0xf]
        %v5516 = vld [vmem:[%s3634 + $0x48] sm:$0xf]
        %v5517 = vld [vmem:[%s3634 + $0x4c] sm:$0xf]
        %v5518 = vld [vmem:[%s3634 + $0x50] sm:$0xf]
        %v5519 = vld [vmem:[%s3634 + $0x54] sm:$0xf]
        %v5520 = vld [vmem:[%s3634 + $0x58] sm:$0xf]
        %v5521 = vld [vmem:[%s3634 + $0x5c] sm:$0xf]
        %v5522 = vld [vmem:[%s3634 + $0x60] sm:$0xf]
        %v5523 = vld [vmem:[%s3634 + $0x64] sm:$0xf]
        %v5524 = vld [vmem:[%s3634 + $0x68] sm:$0xf]
        %v5525 = vld [vmem:[%s3634 + $0x6c] sm:$0xf]
        %v5526 = vld [vmem:[%s3634 + $0x70] sm:$0xf]
        %v5527 = vld [vmem:[%s3634 + $0x74] sm:$0xf]
        %v5528 = vld [vmem:[%s3634 + $0x78] sm:$0xf]
        %v5529 = vld [vmem:[%s3634 + $0x7c] sm:$0xf]
        %v5530 = vld [vmem:[%s3634 + $0x80] sm:$0xf]
        %v5531 = vld [vmem:[%s3634 + $0x84] sm:$0xf]
        %v5532 = vld [vmem:[%s3634 + $0x88] sm:$0xf]
        %v5533 = vld [vmem:[%s3634 + $0x8c] sm:$0xf]
        %v5534 = vld [vmem:[%s3634 + $0x90] sm:$0xf]
        %v5535 = vld [vmem:[%s3634 + $0x94] sm:$0xf]
        %v5536 = vld [vmem:[%s3634 + $0x98] sm:$0xf]
        %v5537 = vld [vmem:[%s3634 + $0x9c] sm:$0xf]
        %v5538 = vld [vmem:[%s3634 + $0xa0] sm:$0xf]
        %v5539 = vld [vmem:[%s3634 + $0xa4] sm:$0xf]
        %v5540 = vld [vmem:[%s3634 + $0xa8] sm:$0xf]
        %v5541 = vld [vmem:[%s3634 + $0xac] sm:$0xf]
        %v5542 = vld [vmem:[%s3634 + $0xb0] sm:$0xf]
        %v5543 = vld [vmem:[%s3634 + $0xb4] sm:$0xf]
        %v5544 = vld [vmem:[%s3634 + $0xb8] sm:$0xf]
        %v5545 = vld [vmem:[%s3634 + $0xbc] sm:$0xf]
        %v5594 = vunpack.c.l.b16 %v5498
        %v5595 = vunpack.c.l.b16 %v5499
        %v5596 = vunpack.c.l.b16 %v5500
        %v5597 = vunpack.c.l.b16 %v5501
        %v5598 = vunpack.c.l.b16 %v5502
        %v5599 = vunpack.c.l.b16 %v5503
        %v5600 = vunpack.c.l.b16 %v5504
        %v5601 = vunpack.c.l.b16 %v5505
        %v5602 = vunpack.c.l.b16 %v5506
        %v5603 = vunpack.c.l.b16 %v5507
        %v5604 = vunpack.c.l.b16 %v5508
        %v5605 = vunpack.c.l.b16 %v5509
        %v5606 = vunpack.c.l.b16 %v5510
        %v5607 = vunpack.c.l.b16 %v5511
        %v5608 = vunpack.c.l.b16 %v5512
        %v5609 = vunpack.c.l.b16 %v5513
        %v5610 = vunpack.c.l.b16 %v5514
        %v5611 = vunpack.c.l.b16 %v5515
        %v5612 = vunpack.c.l.b16 %v5516
        %v5613 = vunpack.c.l.b16 %v5517
        %v5614 = vunpack.c.l.b16 %v5518
        %v5615 = vunpack.c.l.b16 %v5519
        %v5616 = vunpack.c.l.b16 %v5520
        %v5617 = vunpack.c.l.b16 %v5521
        %v5618 = vunpack.c.l.b16 %v5522
        %v5619 = vunpack.c.l.b16 %v5523
        %v5620 = vunpack.c.l.b16 %v5524
        %v5621 = vunpack.c.l.b16 %v5525
        %v5622 = vunpack.c.l.b16 %v5526
        %v5623 = vunpack.c.l.b16 %v5527
        %v5624 = vunpack.c.l.b16 %v5528
        %v5625 = vunpack.c.l.b16 %v5529
        %v5626 = vunpack.c.l.b16 %v5530
        %v5627 = vunpack.c.l.b16 %v5531
        %v5628 = vunpack.c.l.b16 %v5532
        %v5629 = vunpack.c.l.b16 %v5533
        %v5630 = vunpack.c.l.b16 %v5534
        %v5631 = vunpack.c.l.b16 %v5535
        %v5632 = vunpack.c.l.b16 %v5536
        %v5633 = vunpack.c.l.b16 %v5537
        %v5634 = vunpack.c.l.b16 %v5538
        %v5635 = vunpack.c.l.b16 %v5539
        %v5636 = vunpack.c.l.b16 %v5540
        %v5637 = vunpack.c.l.b16 %v5541
        %v5638 = vunpack.c.l.b16 %v5542
        %v5639 = vunpack.c.l.b16 %v5543
        %v5640 = vunpack.c.l.b16 %v5544
        %v5641 = vunpack.c.l.b16 %v5545
        %v5642 = vpack.c.b16 %v5595, %v5594
        %v5643 = vpack.c.b16 %v5597, %v5596
        %v5644 = vpack.c.b16 %v5599, %v5598
        %v5645 = vpack.c.b16 %v5601, %v5600
        %v5646 = vpack.c.b16 %v5603, %v5602
        %v5647 = vpack.c.b16 %v5605, %v5604
        %v5648 = vpack.c.b16 %v5607, %v5606
        %v5649 = vpack.c.b16 %v5609, %v5608
        %v5650 = vpack.c.b16 %v5611, %v5610
        %v5651 = vpack.c.b16 %v5613, %v5612
        %v5652 = vpack.c.b16 %v5615, %v5614
        %v5653 = vpack.c.b16 %v5617, %v5616
        %v5654 = vpack.c.b16 %v5619, %v5618
        %v5655 = vpack.c.b16 %v5621, %v5620
        %v5656 = vpack.c.b16 %v5623, %v5622
        %v5657 = vpack.c.b16 %v5625, %v5624
        %v5658 = vpack.c.b16 %v5627, %v5626
        %v5659 = vpack.c.b16 %v5629, %v5628
        %v5660 = vpack.c.b16 %v5631, %v5630
        %v5661 = vpack.c.b16 %v5633, %v5632
        %v5662 = vpack.c.b16 %v5635, %v5634
        %v5663 = vpack.c.b16 %v5637, %v5636
        %v5664 = vpack.c.b16 %v5639, %v5638
        %v5665 = vpack.c.b16 %v5641, %v5640
        %5690 = vmatprep.subr.bf16.mxu0 0
        %5691 = vmatpush1.bf16.msra.mxu0 %v5649
        %5692 = vmatprep.subr.bf16.mxu0 0
        %5693 = vmatpush1.bf16.msra.mxu0 %v5648
        %5694 = vmatprep.subr.bf16.mxu0 0
        %5695 = vmatpush1.bf16.msra.mxu0 %v5647
        %5696 = vmatprep.subr.bf16.mxu0 0
        %5697 = vmatpush1.bf16.msra.mxu0 %v5646
        %5698 = vmatprep.subr.bf16.mxu0 0
        %5699 = vmatpush1.bf16.msra.mxu0 %v5645
        %5700 = vmatprep.subr.bf16.mxu0 0
        %5701 = vmatpush1.bf16.msra.mxu0 %v5644
        %5702 = vmatprep.subr.bf16.mxu0 0
        %5703 = vmatpush1.bf16.msra.mxu0 %v5643
        %5704 = vmatprep.subr.bf16.mxu0 0
        %5705 = vmatpush1.bf16.msra.mxu0 %v5642
        %5706 = vmatprep.subr.bf16.mxu0 0
        %5707 = vmatpush2.bf16.msra.mxu0 %v5657
        %5708 = vmatprep.subr.bf16.mxu0 0
        %5709 = vmatpush2.bf16.msra.mxu0 %v5656
        %5710 = vmatprep.subr.bf16.mxu0 0
        %5711 = vmatpush2.bf16.msra.mxu0 %v5655
        %5712 = vmatprep.subr.bf16.mxu0 0
        %5713 = vmatpush2.bf16.msra.mxu0 %v5654
        %5714 = vmatprep.subr.bf16.mxu0 0
        %5715 = vmatpush2.bf16.msra.mxu0 %v5653
        %5716 = vmatprep.subr.bf16.mxu0 0
        %5717 = vmatpush2.bf16.msra.mxu0 %v5652
        %5718 = vmatprep.subr.bf16.mxu0 0
        %5719 = vmatpush2.bf16.msra.mxu0 %v5651
        %5720 = vmatprep.subr.bf16.mxu0 0
        %5721 = vmatpush2.bf16.msra.mxu0 %v5650
        %5722 = vmatprep.mubr.bf16.mxu0 %v5477
        %5723 = vmatmul.mubr.bf16.gmra.mxu0 %v5459
        %v5724 = vpop.f32.mrf.mxu0
        %v5725 = vadd.f32 0.0, %v5724
        %v5726 = vpop.f32.mrf.mxu0
        %v5727 = vpop.f32.mrf.mxu0
        %v5728 = vadd.f32 0.0, %v5727
        %v5729 = vpop.f32.mrf.mxu0
        %5730 = vmatprep.mubr.bf16.mxu0 %v5485
        %5731 = vmatmul.mubr.bf16.gmra.mxu0 %v5460
        %v5732 = vpop.f32.mrf.mxu0
        %v5733 = vadd.f32 0.0, %v5732
        %v5734 = vpop.f32.mrf.mxu0
        %v5735 = vpop.f32.mrf.mxu0
        %v5736 = vadd.f32 0.0, %v5735
        %v5737 = vpop.f32.mrf.mxu0
        %5738 = vdwg.mxu0
        %5739 = vmatprep.subr.bf16.mxu0 0
        %5740 = vmatpush1.bf16.msra.mxu0 %v5665
        %5741 = vmatprep.subr.bf16.mxu0 0
        %5742 = vmatpush1.bf16.msra.mxu0 %v5664
        %5743 = vmatprep.subr.bf16.mxu0 0
        %5744 = vmatpush1.bf16.msra.mxu0 %v5663
        %5745 = vmatprep.subr.bf16.mxu0 0
        %5746 = vmatpush1.bf16.msra.mxu0 %v5662
        %5747 = vmatprep.subr.bf16.mxu0 0
        %5748 = vmatpush1.bf16.msra.mxu0 %v5661
        %5749 = vmatprep.subr.bf16.mxu0 0
        %5750 = vmatpush1.bf16.msra.mxu0 %v5660
        %5751 = vmatprep.subr.bf16.mxu0 0
        %5752 = vmatpush1.bf16.msra.mxu0 %v5659
        %5753 = vmatprep.subr.bf16.mxu0 0
        %5754 = vmatpush1.bf16.msra.mxu0 %v5658
        %5755 = vmatprep.subr.bf16.mxu0 0
        %5756 = vmatpush2.bf16.msra.mxu0 0
        %5757 = vmatprep.subr.bf16.mxu0 0
        %5758 = vmatpush2.bf16.msra.mxu0 0
        %5759 = vmatprep.subr.bf16.mxu0 0
        %5760 = vmatpush2.bf16.msra.mxu0 0
        %5761 = vmatprep.subr.bf16.mxu0 0
        %5762 = vmatpush2.bf16.msra.mxu0 0
        %5763 = vmatprep.subr.bf16.mxu0 0
        %5764 = vmatpush2.bf16.msra.mxu0 0
        %5765 = vmatprep.subr.bf16.mxu0 0
        %5766 = vmatpush2.bf16.msra.mxu0 0
        %5767 = vmatprep.subr.bf16.mxu0 0
        %5768 = vmatpush2.bf16.msra.mxu0 0
        %5769 = vmatprep.subr.bf16.mxu0 0
        %5770 = vmatpush2.bf16.msra.mxu0 0
        %5771 = vmatprep.mubr.bf16.mxu0 0
        %5772 = vmatmul.mubr.bf16.gmra.mxu0 %v5493
        %v5773 = vpop.f32.mrf.mxu0
        %v5774 = vadd.f32 %v5725, %v5773
        %v5775 = vpop.f32.mrf.mxu0
        %v5776 = vpop.f32.mrf.mxu0
        %v5777 = vadd.f32 %v5728, %v5776
        %v5778 = vpop.f32.mrf.mxu0
        %5779 = vmatprep.mubr.bf16.mxu0 0
        %5780 = vmatmul.mubr.bf16.gmra.mxu0 %v5495
        %v5781 = vpop.f32.mrf.mxu0
        %v5782 = vadd.f32 %v5733, %v5781
        %v5783 = vpop.f32.mrf.mxu0
        %v5784 = vpop.f32.mrf.mxu0
        %v5785 = vadd.f32 %v5736, %v5784
        %v5786 = vpop.f32.mrf.mxu0
        %5787 = vdwg.mxu0
        %v5788 = vadd.f32 %v5431, %v5774
        %v5789 = vadd.f32 %v5434, %v5777
        %v5790 = vadd.f32 %v5439, %v5782
        %v5791 = vadd.f32 %v5442, %v5785
        %v5792 = vld [vmem:[%s2] sm:$0x1]
        %v5794 = vlaneseq
        %v5795 = vshrl.u32 %v5794, 7
        %v5796 = vsub.s32 0, %v5795
        %v5797 = vrot.slane %v5792, %v5796
        %v5799 = vadd.f32 %v5788, %v5797
        %v5800 = vadd.f32 %v5789, %v5797
        %v5801 = vadd.f32 %v5790, %v5797
        %v5802 = vadd.f32 %v5791, %v5797
        %v5803 = vmax.f32 %v5799, 0.0
        %v5804 = vmax.f32 %v5800, 0.0
        %v5805 = vmax.f32 %v5801, 0.0
        %v5806 = vmax.f32 %v5802, 0.0
        %v5807 = vpack.c.bf16 %v5804, %v5803
        %v5808 = vpack.c.bf16 %v5806, %v5805
        %v5811 = vunpack.c.l.b16 %v5807
        %v5812 = vunpack.c.h.b16 %v5807
        %v5813 = vunpack.c.l.b16 %v5808
        %v5814 = vunpack.c.h.b16 %v5808
        %v5815 = vpack.c.b16 %v5811, %v5811
        %v5816 = vpack.c.b16 %v5812, %v5812
        %v5817 = vpack.c.b16 %v5813, %v5813
        %v5818 = vpack.c.b16 %v5814, %v5814
        %v5820 = vshrl.u32 %v5815, 16
        %v5822 = vrot.slane %v5820, 7
        %v5823 = vshll.u32 %v5815, 16
        %v5825 = vor.u32 %v5822, %v5823
        %v5826 = vrot.slane %v5822, 4
        %v5828 = vshrl.u32 %v5816, 16
        %v5830 = vrot.slane %v5828, 7
        %v5831 = vshll.u32 %v5816, 16
        %v5833 = vor.u32 %v5830, %v5831
        %v5834 = vsel %vm4350, %v5826, %v5833
        %v5835 = vrot.slane %v5830, 4
        %v5837 = vshrl.u32 %v5817, 16
        %v5839 = vrot.slane %v5837, 7
        %v5840 = vshll.u32 %v5817, 16
        %v5842 = vor.u32 %v5839, %v5840
        %v5843 = vsel %vm4350, %v5835, %v5842
        %v5844 = vrot.slane %v5839, 4
        %v5846 = vshrl.u32 %v5818, 16
        %v5848 = vrot.slane %v5846, 7
        %v5849 = vshll.u32 %v5818, 16
        %v5851 = vor.u32 %v5848, %v5849
        %v5852 = vsel %vm4350, %v5844, %v5851
        %v5853 = vrot.slane %v5848, 4
        %v5859 = vld [vmem:[#allocation2] sm:$0xf]
        %v5860 = vsel %vm4674, %v5825, %v5859
        %5861 = vst [vmem:[#allocation2] sm:$0xf] %v5860
        %5862 = vst [vmem:[#allocation2 + $0x4] sm:$0xf] %v5834
        %5863 = vst [vmem:[#allocation2 + $0x8] sm:$0xf] %v5843
        %5864 = vst [vmem:[#allocation2 + $0xc] sm:$0xf] %v5852
        %v5865 = vld [vmem:[#allocation2 + $0x10] sm:$0x1]
        %v5866 = vsel %vm4682, %v5853, %v5865
        %5867 = vst [vmem:[#allocation2 + $0x10] sm:$0x1] %v5866
      $region52: #{basic_block_forward.1} parent=47 // pred_fallthru
        _
      %p5868 = scmp.lt.s32.totalorder %s23, 3
      // Predicated region
      $region53: #{basic_block_forward.1} parent=47 // pred_check
        %p5869 = pneg %p5868
      $region54: #{basic_block_forward.1} parent=47 // pred_check_branch
        %5871 = sbr.rel (%p5869) target = $region56
      $region55: #{basic_block_forward.1} parent=47 // pred_region
        %s5872 = sadd.s32 %s305, 8
        %s5873 = smul.u32 %s5872, 5
        %s5874 = smul.addr %s5873, 4
        %s5875 = scalar_lea.vmem %s292, %s5874
        %v5876 = vld [vmem:[%s5875] sm:$0xf]
        %v5877 = vld [vmem:[%s5875 + $0x4] sm:$0xf]
        %v5878 = vld [vmem:[%s5875 + $0x8] sm:$0xf]
        %v5879 = vld [vmem:[%s5875 + $0xc] sm:$0xf]
        %v5880 = vld [vmem:[%s5875 + $0x10] sm:$0x1]
        %v5881 = vld [vmem:[%s5875] sm:$0xe]
        %v5886 = vunpack.c.l.b16 %v5876
        %v5887 = vunpack.c.l.b16 %v5877
        %v5888 = vunpack.c.l.b16 %v5878
        %v5889 = vunpack.c.l.b16 %v5879
        %v5890 = vpack.c.b16 %v5887, %v5886
        %v5891 = vpack.c.b16 %v5889, %v5888
        %v5895 = vunpack.c.l.b16 %v5880
        %v5896 = vpack.c.b16 %v5895, %v5895
        %vm5897 = vsmask.f32 7424
        %v5899 = vshrl.u32 %v5890, 16
        %v5901 = vshll.u32 %v5890, 16
        %v5903 = vrot.slane %v5901, 1
        %v5904 = vor.u32 %v5899, %v5903
        %v5906 = vshll.u32 %v5891, 16
        %v5908 = vrot.slane %v5906, 1
        %v5909 = vsel %vm5897, %v5904, %v5908
        %v5910 = vshrl.u32 %v5891, 16
        %v5912 = vor.u32 %v5910, %v5908
        %v5914 = vshll.u32 %v5896, 16
        %v5916 = vrot.slane %v5914, 1
        %v5917 = vsel %vm5897, %v5912, %v5916
        %v5921 = vunpack.c.l.b16 %v5881
        %v5922 = vpack.c.b16 %v5887, %v5921
        %vm5923 = vcmask 1046528
        %v5924 = vrot.slane %v5922, 1
        %v5925 = vrot.slane %v5891, 1
        %v5926 = vsel %vm5923, %v5924, %v5925
        %v5927 = vrot.slane %v5896, 1
        %v5928 = vsel %vm5923, %v5925, %v5927
        %v5931 = vld [vmem:[%s1] sm:$0xf]
        %v5932 = vld [vmem:[%s1 + $0x4] sm:$0xf]
        %v5933 = vld [vmem:[%s1 + $0x8] sm:$0xf]
        %v5934 = vld [vmem:[%s1 + $0xc] sm:$0xf]
        %v5935 = vld [vmem:[%s1 + $0x10] sm:$0xf]
        %v5936 = vld [vmem:[%s1 + $0x14] sm:$0xf]
        %v5937 = vld [vmem:[%s1 + $0x18] sm:$0xf]
        %v5938 = vld [vmem:[%s1 + $0x1c] sm:$0xf]
        %v5939 = vld [vmem:[%s1 + $0x20] sm:$0xf]
        %v5940 = vld [vmem:[%s1 + $0x24] sm:$0xf]
        %v5941 = vld [vmem:[%s1 + $0x28] sm:$0xf]
        %v5942 = vld [vmem:[%s1 + $0x2c] sm:$0xf]
        %v5943 = vld [vmem:[%s1 + $0x30] sm:$0xf]
        %v5944 = vld [vmem:[%s1 + $0x34] sm:$0xf]
        %v5945 = vld [vmem:[%s1 + $0x38] sm:$0xf]
        %v5946 = vld [vmem:[%s1 + $0x3c] sm:$0xf]
        %v5947 = vld [vmem:[%s1 + $0x40] sm:$0xf]
        %v5948 = vld [vmem:[%s1 + $0x44] sm:$0xf]
        %v5949 = vld [vmem:[%s1 + $0x48] sm:$0xf]
        %v5950 = vld [vmem:[%s1 + $0x4c] sm:$0xf]
        %v5951 = vld [vmem:[%s1 + $0x50] sm:$0xf]
        %v5952 = vld [vmem:[%s1 + $0x54] sm:$0xf]
        %v5953 = vld [vmem:[%s1 + $0x58] sm:$0xf]
        %v5954 = vld [vmem:[%s1 + $0x5c] sm:$0xf]
        %v5955 = vld [vmem:[%s1 + $0x60] sm:$0xf]
        %v5956 = vld [vmem:[%s1 + $0x64] sm:$0xf]
        %v5957 = vld [vmem:[%s1 + $0x68] sm:$0xf]
        %v5958 = vld [vmem:[%s1 + $0x6c] sm:$0xf]
        %v5959 = vld [vmem:[%s1 + $0x70] sm:$0xf]
        %v5960 = vld [vmem:[%s1 + $0x74] sm:$0xf]
        %v5961 = vld [vmem:[%s1 + $0x78] sm:$0xf]
        %v5962 = vld [vmem:[%s1 + $0x7c] sm:$0xf]
        %v5963 = vld [vmem:[%s1 + $0x80] sm:$0xf]
        %v5964 = vld [vmem:[%s1 + $0x84] sm:$0xf]
        %v5965 = vld [vmem:[%s1 + $0x88] sm:$0xf]
        %v5966 = vld [vmem:[%s1 + $0x8c] sm:$0xf]
        %v5967 = vld [vmem:[%s1 + $0x90] sm:$0xf]
        %v5968 = vld [vmem:[%s1 + $0x94] sm:$0xf]
        %v5969 = vld [vmem:[%s1 + $0x98] sm:$0xf]
        %v5970 = vld [vmem:[%s1 + $0x9c] sm:$0xf]
        %v5971 = vld [vmem:[%s1 + $0xa0] sm:$0xf]
        %v5972 = vld [vmem:[%s1 + $0xa4] sm:$0xf]
        %v5973 = vld [vmem:[%s1 + $0xa8] sm:$0xf]
        %v5974 = vld [vmem:[%s1 + $0xac] sm:$0xf]
        %v5975 = vld [vmem:[%s1 + $0xb0] sm:$0xf]
        %v5976 = vld [vmem:[%s1 + $0xb4] sm:$0xf]
        %v5977 = vld [vmem:[%s1 + $0xb8] sm:$0xf]
        %v5978 = vld [vmem:[%s1 + $0xbc] sm:$0xf]
        %s5979 = sadd.s32 %s305, 9
        %s5980 = smul.u32 %s5979, 5
        %s5981 = smul.addr %s5980, 4
        %s5982 = scalar_lea.vmem %s292, %s5981
        %v5983 = vld [vmem:[%s5982] sm:$0xf]
        %v5984 = vld [vmem:[%s5982 + $0x4] sm:$0xf]
        %v5985 = vld [vmem:[%s5982 + $0x8] sm:$0xf]
        %v5986 = vld [vmem:[%s5982 + $0xc] sm:$0xf]
        %v5987 = vld [vmem:[%s5982 + $0x10] sm:$0x1]
        %v5988 = vld [vmem:[%s5982] sm:$0xe]
        %v5993 = vunpack.c.l.b16 %v5983
        %v5994 = vunpack.c.l.b16 %v5984
        %v5995 = vunpack.c.l.b16 %v5985
        %v5996 = vunpack.c.l.b16 %v5986
        %v5997 = vpack.c.b16 %v5994, %v5993
        %v5998 = vpack.c.b16 %v5996, %v5995
        %v6002 = vunpack.c.l.b16 %v5987
        %v6003 = vpack.c.b16 %v6002, %v6002
        %v6005 = vshrl.u32 %v5997, 16
        %v6007 = vshll.u32 %v5997, 16
        %v6009 = vrot.slane %v6007, 1
        %v6010 = vor.u32 %v6005, %v6009
        %v6012 = vshll.u32 %v5998, 16
        %v6014 = vrot.slane %v6012, 1
        %v6015 = vsel %vm5897, %v6010, %v6014
        %v6016 = vshrl.u32 %v5998, 16
        %v6018 = vor.u32 %v6016, %v6014
        %v6020 = vshll.u32 %v6003, 16
        %v6022 = vrot.slane %v6020, 1
        %v6023 = vsel %vm5897, %v6018, %v6022
        %v6027 = vunpack.c.l.b16 %v5988
        %v6028 = vpack.c.b16 %v5994, %v6027
        %v6029 = vrot.slane %v6028, 1
        %v6030 = vrot.slane %v5998, 1
        %v6031 = vsel %vm5923, %v6029, %v6030
        %v6032 = vrot.slane %v6003, 1
        %v6033 = vsel %vm5923, %v6030, %v6032
        %v6036 = vld [vmem:[%s1905] sm:$0xf]
        %v6037 = vld [vmem:[%s1905 + $0x4] sm:$0xf]
        %v6038 = vld [vmem:[%s1905 + $0x8] sm:$0xf]
        %v6039 = vld [vmem:[%s1905 + $0xc] sm:$0xf]
        %v6040 = vld [vmem:[%s1905 + $0x10] sm:$0xf]
        %v6041 = vld [vmem:[%s1905 + $0x14] sm:$0xf]
        %v6042 = vld [vmem:[%s1905 + $0x18] sm:$0xf]
        %v6043 = vld [vmem:[%s1905 + $0x1c] sm:$0xf]
        %v6044 = vld [vmem:[%s1905 + $0x20] sm:$0xf]
        %v6045 = vld [vmem:[%s1905 + $0x24] sm:$0xf]
        %v6046 = vld [vmem:[%s1905 + $0x28] sm:$0xf]
        %v6047 = vld [vmem:[%s1905 + $0x2c] sm:$0xf]
        %v6048 = vld [vmem:[%s1905 + $0x30] sm:$0xf]
        %v6049 = vld [vmem:[%s1905 + $0x34] sm:$0xf]
        %v6050 = vld [vmem:[%s1905 + $0x38] sm:$0xf]
        %v6051 = vld [vmem:[%s1905 + $0x3c] sm:$0xf]
        %v6052 = vld [vmem:[%s1905 + $0x40] sm:$0xf]
        %v6053 = vld [vmem:[%s1905 + $0x44] sm:$0xf]
        %v6054 = vld [vmem:[%s1905 + $0x48] sm:$0xf]
        %v6055 = vld [vmem:[%s1905 + $0x4c] sm:$0xf]
        %v6056 = vld [vmem:[%s1905 + $0x50] sm:$0xf]
        %v6057 = vld [vmem:[%s1905 + $0x54] sm:$0xf]
        %v6058 = vld [vmem:[%s1905 + $0x58] sm:$0xf]
        %v6059 = vld [vmem:[%s1905 + $0x5c] sm:$0xf]
        %v6060 = vld [vmem:[%s1905 + $0x60] sm:$0xf]
        %v6061 = vld [vmem:[%s1905 + $0x64] sm:$0xf]
        %v6062 = vld [vmem:[%s1905 + $0x68] sm:$0xf]
        %v6063 = vld [vmem:[%s1905 + $0x6c] sm:$0xf]
        %v6064 = vld [vmem:[%s1905 + $0x70] sm:$0xf]
        %v6065 = vld [vmem:[%s1905 + $0x74] sm:$0xf]
        %v6066 = vld [vmem:[%s1905 + $0x78] sm:$0xf]
        %v6067 = vld [vmem:[%s1905 + $0x7c] sm:$0xf]
        %v6068 = vld [vmem:[%s1905 + $0x80] sm:$0xf]
        %v6069 = vld [vmem:[%s1905 + $0x84] sm:$0xf]
        %v6070 = vld [vmem:[%s1905 + $0x88] sm:$0xf]
        %v6071 = vld [vmem:[%s1905 + $0x8c] sm:$0xf]
        %v6072 = vld [vmem:[%s1905 + $0x90] sm:$0xf]
        %v6073 = vld [vmem:[%s1905 + $0x94] sm:$0xf]
        %v6074 = vld [vmem:[%s1905 + $0x98] sm:$0xf]
        %v6075 = vld [vmem:[%s1905 + $0x9c] sm:$0xf]
        %v6076 = vld [vmem:[%s1905 + $0xa0] sm:$0xf]
        %v6077 = vld [vmem:[%s1905 + $0xa4] sm:$0xf]
        %v6078 = vld [vmem:[%s1905 + $0xa8] sm:$0xf]
        %v6079 = vld [vmem:[%s1905 + $0xac] sm:$0xf]
        %v6080 = vld [vmem:[%s1905 + $0xb0] sm:$0xf]
        %v6081 = vld [vmem:[%s1905 + $0xb4] sm:$0xf]
        %v6082 = vld [vmem:[%s1905 + $0xb8] sm:$0xf]
        %v6083 = vld [vmem:[%s1905 + $0xbc] sm:$0xf]
        %v6132 = vunpack.c.l.b16 %v6036
        %v6133 = vunpack.c.l.b16 %v6037
        %v6134 = vunpack.c.l.b16 %v6038
        %v6135 = vunpack.c.l.b16 %v6039
        %v6136 = vunpack.c.l.b16 %v6040
        %v6137 = vunpack.c.l.b16 %v6041
        %v6138 = vunpack.c.l.b16 %v6042
        %v6139 = vunpack.c.l.b16 %v6043
        %v6140 = vunpack.c.l.b16 %v6044
        %v6141 = vunpack.c.l.b16 %v6045
        %v6142 = vunpack.c.l.b16 %v6046
        %v6143 = vunpack.c.l.b16 %v6047
        %v6144 = vunpack.c.l.b16 %v6048
        %v6145 = vunpack.c.l.b16 %v6049
        %v6146 = vunpack.c.l.b16 %v6050
        %v6147 = vunpack.c.l.b16 %v6051
        %v6148 = vunpack.c.l.b16 %v6052
        %v6149 = vunpack.c.l.b16 %v6053
        %v6150 = vunpack.c.l.b16 %v6054
        %v6151 = vunpack.c.l.b16 %v6055
        %v6152 = vunpack.c.l.b16 %v6056
        %v6153 = vunpack.c.l.b16 %v6057
        %v6154 = vunpack.c.l.b16 %v6058
        %v6155 = vunpack.c.l.b16 %v6059
        %v6156 = vunpack.c.l.b16 %v6060
        %v6157 = vunpack.c.l.b16 %v6061
        %v6158 = vunpack.c.l.b16 %v6062
        %v6159 = vunpack.c.l.b16 %v6063
        %v6160 = vunpack.c.l.b16 %v6064
        %v6161 = vunpack.c.l.b16 %v6065
        %v6162 = vunpack.c.l.b16 %v6066
        %v6163 = vunpack.c.l.b16 %v6067
        %v6164 = vunpack.c.l.b16 %v6068
        %v6165 = vunpack.c.l.b16 %v6069
        %v6166 = vunpack.c.l.b16 %v6070
        %v6167 = vunpack.c.l.b16 %v6071
        %v6168 = vunpack.c.l.b16 %v6072
        %v6169 = vunpack.c.l.b16 %v6073
        %v6170 = vunpack.c.l.b16 %v6074
        %v6171 = vunpack.c.l.b16 %v6075
        %v6172 = vunpack.c.l.b16 %v6076
        %v6173 = vunpack.c.l.b16 %v6077
        %v6174 = vunpack.c.l.b16 %v6078
        %v6175 = vunpack.c.l.b16 %v6079
        %v6176 = vunpack.c.l.b16 %v6080
        %v6177 = vunpack.c.l.b16 %v6081
        %v6178 = vunpack.c.l.b16 %v6082
        %v6179 = vunpack.c.l.b16 %v6083
        %v6180 = vpack.c.b16 %v6133, %v6132
        %v6181 = vpack.c.b16 %v6135, %v6134
        %v6182 = vpack.c.b16 %v6137, %v6136
        %v6183 = vpack.c.b16 %v6139, %v6138
        %v6184 = vpack.c.b16 %v6141, %v6140
        %v6185 = vpack.c.b16 %v6143, %v6142
        %v6186 = vpack.c.b16 %v6145, %v6144
        %v6187 = vpack.c.b16 %v6147, %v6146
        %v6188 = vpack.c.b16 %v6149, %v6148
        %v6189 = vpack.c.b16 %v6151, %v6150
        %v6190 = vpack.c.b16 %v6153, %v6152
        %v6191 = vpack.c.b16 %v6155, %v6154
        %v6192 = vpack.c.b16 %v6157, %v6156
        %v6193 = vpack.c.b16 %v6159, %v6158
        %v6194 = vpack.c.b16 %v6161, %v6160
        %v6195 = vpack.c.b16 %v6163, %v6162
        %v6196 = vpack.c.b16 %v6165, %v6164
        %v6197 = vpack.c.b16 %v6167, %v6166
        %v6198 = vpack.c.b16 %v6169, %v6168
        %v6199 = vpack.c.b16 %v6171, %v6170
        %v6200 = vpack.c.b16 %v6173, %v6172
        %v6201 = vpack.c.b16 %v6175, %v6174
        %v6202 = vpack.c.b16 %v6177, %v6176
        %v6203 = vpack.c.b16 %v6179, %v6178
        %6228 = vmatprep.subr.bf16.mxu0 0
        %6229 = vmatpush1.bf16.msra.mxu0 %v6187
        %6230 = vmatprep.subr.bf16.mxu0 0
        %6231 = vmatpush1.bf16.msra.mxu0 %v6186
        %6232 = vmatprep.subr.bf16.mxu0 0
        %6233 = vmatpush1.bf16.msra.mxu0 %v6185
        %6234 = vmatprep.subr.bf16.mxu0 0
        %6235 = vmatpush1.bf16.msra.mxu0 %v6184
        %6236 = vmatprep.subr.bf16.mxu0 0
        %6237 = vmatpush1.bf16.msra.mxu0 %v6183
        %6238 = vmatprep.subr.bf16.mxu0 0
        %6239 = vmatpush1.bf16.msra.mxu0 %v6182
        %6240 = vmatprep.subr.bf16.mxu0 0
        %6241 = vmatpush1.bf16.msra.mxu0 %v6181
        %6242 = vmatprep.subr.bf16.mxu0 0
        %6243 = vmatpush1.bf16.msra.mxu0 %v6180
        %6244 = vmatprep.subr.bf16.mxu0 0
        %6245 = vmatpush2.bf16.msra.mxu0 %v6195
        %6246 = vmatprep.subr.bf16.mxu0 0
        %6247 = vmatpush2.bf16.msra.mxu0 %v6194
        %6248 = vmatprep.subr.bf16.mxu0 0
        %6249 = vmatpush2.bf16.msra.mxu0 %v6193
        %6250 = vmatprep.subr.bf16.mxu0 0
        %6251 = vmatpush2.bf16.msra.mxu0 %v6192
        %6252 = vmatprep.subr.bf16.mxu0 0
        %6253 = vmatpush2.bf16.msra.mxu0 %v6191
        %6254 = vmatprep.subr.bf16.mxu0 0
        %6255 = vmatpush2.bf16.msra.mxu0 %v6190
        %6256 = vmatprep.subr.bf16.mxu0 0
        %6257 = vmatpush2.bf16.msra.mxu0 %v6189
        %6258 = vmatprep.subr.bf16.mxu0 0
        %6259 = vmatpush2.bf16.msra.mxu0 %v6188
        %6260 = vmatprep.mubr.bf16.mxu0 %v6015
        %6261 = vmatmul.mubr.bf16.gmra.mxu0 %v5997
        %v6262 = vpop.f32.mrf.mxu0
        %v6263 = vadd.f32 0.0, %v6262
        %v6264 = vpop.f32.mrf.mxu0
        %v6265 = vpop.f32.mrf.mxu0
        %v6266 = vadd.f32 0.0, %v6265
        %v6267 = vpop.f32.mrf.mxu0
        %6268 = vmatprep.mubr.bf16.mxu0 %v6023
        %6269 = vmatmul.mubr.bf16.gmra.mxu0 %v5998
        %v6270 = vpop.f32.mrf.mxu0
        %v6271 = vadd.f32 0.0, %v6270
        %v6272 = vpop.f32.mrf.mxu0
        %v6273 = vpop.f32.mrf.mxu0
        %v6274 = vadd.f32 0.0, %v6273
        %v6275 = vpop.f32.mrf.mxu0
        %6276 = vdwg.mxu0
        %6277 = vmatprep.subr.bf16.mxu0 0
        %6278 = vmatpush1.bf16.msra.mxu0 %v6203
        %6279 = vmatprep.subr.bf16.mxu0 0
        %6280 = vmatpush1.bf16.msra.mxu0 %v6202
        %6281 = vmatprep.subr.bf16.mxu0 0
        %6282 = vmatpush1.bf16.msra.mxu0 %v6201
        %6283 = vmatprep.subr.bf16.mxu0 0
        %6284 = vmatpush1.bf16.msra.mxu0 %v6200
        %6285 = vmatprep.subr.bf16.mxu0 0
        %6286 = vmatpush1.bf16.msra.mxu0 %v6199
        %6287 = vmatprep.subr.bf16.mxu0 0
        %6288 = vmatpush1.bf16.msra.mxu0 %v6198
        %6289 = vmatprep.subr.bf16.mxu0 0
        %6290 = vmatpush1.bf16.msra.mxu0 %v6197
        %6291 = vmatprep.subr.bf16.mxu0 0
        %6292 = vmatpush1.bf16.msra.mxu0 %v6196
        %6293 = vmatprep.subr.bf16.mxu0 0
        %6294 = vmatpush2.bf16.msra.mxu0 0
        %6295 = vmatprep.subr.bf16.mxu0 0
        %6296 = vmatpush2.bf16.msra.mxu0 0
        %6297 = vmatprep.subr.bf16.mxu0 0
        %6298 = vmatpush2.bf16.msra.mxu0 0
        %6299 = vmatprep.subr.bf16.mxu0 0
        %6300 = vmatpush2.bf16.msra.mxu0 0
        %6301 = vmatprep.subr.bf16.mxu0 0
        %6302 = vmatpush2.bf16.msra.mxu0 0
        %6303 = vmatprep.subr.bf16.mxu0 0
        %6304 = vmatpush2.bf16.msra.mxu0 0
        %6305 = vmatprep.subr.bf16.mxu0 0
        %6306 = vmatpush2.bf16.msra.mxu0 0
        %6307 = vmatprep.subr.bf16.mxu0 0
        %6308 = vmatpush2.bf16.msra.mxu0 0
        %6309 = vmatprep.mubr.bf16.mxu0 0
        %6310 = vmatmul.mubr.bf16.gmra.mxu0 %v6031
        %v6311 = vpop.f32.mrf.mxu0
        %v6312 = vadd.f32 %v6263, %v6311
        %v6313 = vpop.f32.mrf.mxu0
        %v6314 = vpop.f32.mrf.mxu0
        %v6315 = vadd.f32 %v6266, %v6314
        %v6316 = vpop.f32.mrf.mxu0
        %6317 = vmatprep.mubr.bf16.mxu0 0
        %6318 = vmatmul.mubr.bf16.gmra.mxu0 %v6033
        %v6319 = vpop.f32.mrf.mxu0
        %v6320 = vadd.f32 %v6271, %v6319
        %v6321 = vpop.f32.mrf.mxu0
        %v6322 = vpop.f32.mrf.mxu0
        %v6323 = vadd.f32 %v6274, %v6322
        %v6324 = vpop.f32.mrf.mxu0
        %6325 = vdwg.mxu0
        %v6374 = vunpack.c.l.b16 %v5931
        %v6375 = vunpack.c.l.b16 %v5932
        %v6376 = vunpack.c.l.b16 %v5933
        %v6377 = vunpack.c.l.b16 %v5934
        %v6378 = vunpack.c.l.b16 %v5935
        %v6379 = vunpack.c.l.b16 %v5936
        %v6380 = vunpack.c.l.b16 %v5937
        %v6381 = vunpack.c.l.b16 %v5938
        %v6382 = vunpack.c.l.b16 %v5939
        %v6383 = vunpack.c.l.b16 %v5940
        %v6384 = vunpack.c.l.b16 %v5941
        %v6385 = vunpack.c.l.b16 %v5942
        %v6386 = vunpack.c.l.b16 %v5943
        %v6387 = vunpack.c.l.b16 %v5944
        %v6388 = vunpack.c.l.b16 %v5945
        %v6389 = vunpack.c.l.b16 %v5946
        %v6390 = vunpack.c.l.b16 %v5947
        %v6391 = vunpack.c.l.b16 %v5948
        %v6392 = vunpack.c.l.b16 %v5949
        %v6393 = vunpack.c.l.b16 %v5950
        %v6394 = vunpack.c.l.b16 %v5951
        %v6395 = vunpack.c.l.b16 %v5952
        %v6396 = vunpack.c.l.b16 %v5953
        %v6397 = vunpack.c.l.b16 %v5954
        %v6398 = vunpack.c.l.b16 %v5955
        %v6399 = vunpack.c.l.b16 %v5956
        %v6400 = vunpack.c.l.b16 %v5957
        %v6401 = vunpack.c.l.b16 %v5958
        %v6402 = vunpack.c.l.b16 %v5959
        %v6403 = vunpack.c.l.b16 %v5960
        %v6404 = vunpack.c.l.b16 %v5961
        %v6405 = vunpack.c.l.b16 %v5962
        %v6406 = vunpack.c.l.b16 %v5963
        %v6407 = vunpack.c.l.b16 %v5964
        %v6408 = vunpack.c.l.b16 %v5965
        %v6409 = vunpack.c.l.b16 %v5966
        %v6410 = vunpack.c.l.b16 %v5967
        %v6411 = vunpack.c.l.b16 %v5968
        %v6412 = vunpack.c.l.b16 %v5969
        %v6413 = vunpack.c.l.b16 %v5970
        %v6414 = vunpack.c.l.b16 %v5971
        %v6415 = vunpack.c.l.b16 %v5972
        %v6416 = vunpack.c.l.b16 %v5973
        %v6417 = vunpack.c.l.b16 %v5974
        %v6418 = vunpack.c.l.b16 %v5975
        %v6419 = vunpack.c.l.b16 %v5976
        %v6420 = vunpack.c.l.b16 %v5977
        %v6421 = vunpack.c.l.b16 %v5978
        %v6422 = vpack.c.b16 %v6375, %v6374
        %v6423 = vpack.c.b16 %v6377, %v6376
        %v6424 = vpack.c.b16 %v6379, %v6378
        %v6425 = vpack.c.b16 %v6381, %v6380
        %v6426 = vpack.c.b16 %v6383, %v6382
        %v6427 = vpack.c.b16 %v6385, %v6384
        %v6428 = vpack.c.b16 %v6387, %v6386
        %v6429 = vpack.c.b16 %v6389, %v6388
        %v6430 = vpack.c.b16 %v6391, %v6390
        %v6431 = vpack.c.b16 %v6393, %v6392
        %v6432 = vpack.c.b16 %v6395, %v6394
        %v6433 = vpack.c.b16 %v6397, %v6396
        %v6434 = vpack.c.b16 %v6399, %v6398
        %v6435 = vpack.c.b16 %v6401, %v6400
        %v6436 = vpack.c.b16 %v6403, %v6402
        %v6437 = vpack.c.b16 %v6405, %v6404
        %v6438 = vpack.c.b16 %v6407, %v6406
        %v6439 = vpack.c.b16 %v6409, %v6408
        %v6440 = vpack.c.b16 %v6411, %v6410
        %v6441 = vpack.c.b16 %v6413, %v6412
        %v6442 = vpack.c.b16 %v6415, %v6414
        %v6443 = vpack.c.b16 %v6417, %v6416
        %v6444 = vpack.c.b16 %v6419, %v6418
        %v6445 = vpack.c.b16 %v6421, %v6420
        %6470 = vmatprep.subr.bf16.mxu0 0
        %6471 = vmatpush1.bf16.msra.mxu0 %v6429
        %6472 = vmatprep.subr.bf16.mxu0 0
        %6473 = vmatpush1.bf16.msra.mxu0 %v6428
        %6474 = vmatprep.subr.bf16.mxu0 0
        %6475 = vmatpush1.bf16.msra.mxu0 %v6427
        %6476 = vmatprep.subr.bf16.mxu0 0
        %6477 = vmatpush1.bf16.msra.mxu0 %v6426
        %6478 = vmatprep.subr.bf16.mxu0 0
        %6479 = vmatpush1.bf16.msra.mxu0 %v6425
        %6480 = vmatprep.subr.bf16.mxu0 0
        %6481 = vmatpush1.bf16.msra.mxu0 %v6424
        %6482 = vmatprep.subr.bf16.mxu0 0
        %6483 = vmatpush1.bf16.msra.mxu0 %v6423
        %6484 = vmatprep.subr.bf16.mxu0 0
        %6485 = vmatpush1.bf16.msra.mxu0 %v6422
        %6486 = vmatprep.subr.bf16.mxu0 0
        %6487 = vmatpush2.bf16.msra.mxu0 %v6437
        %6488 = vmatprep.subr.bf16.mxu0 0
        %6489 = vmatpush2.bf16.msra.mxu0 %v6436
        %6490 = vmatprep.subr.bf16.mxu0 0
        %6491 = vmatpush2.bf16.msra.mxu0 %v6435
        %6492 = vmatprep.subr.bf16.mxu0 0
        %6493 = vmatpush2.bf16.msra.mxu0 %v6434
        %6494 = vmatprep.subr.bf16.mxu0 0
        %6495 = vmatpush2.bf16.msra.mxu0 %v6433
        %6496 = vmatprep.subr.bf16.mxu0 0
        %6497 = vmatpush2.bf16.msra.mxu0 %v6432
        %6498 = vmatprep.subr.bf16.mxu0 0
        %6499 = vmatpush2.bf16.msra.mxu0 %v6431
        %6500 = vmatprep.subr.bf16.mxu0 0
        %6501 = vmatpush2.bf16.msra.mxu0 %v6430
        %6502 = vmatprep.mubr.bf16.mxu0 %v5909
        %6503 = vmatmul.mubr.bf16.gmra.mxu0 %v5890
        %v6504 = vpop.f32.mrf.mxu0
        %v6505 = vadd.f32 %v6312, %v6504
        %v6506 = vpop.f32.mrf.mxu0
        %v6507 = vpop.f32.mrf.mxu0
        %v6508 = vadd.f32 %v6315, %v6507
        %v6509 = vpop.f32.mrf.mxu0
        %6510 = vmatprep.mubr.bf16.mxu0 %v5917
        %6511 = vmatmul.mubr.bf16.gmra.mxu0 %v5891
        %v6512 = vpop.f32.mrf.mxu0
        %v6513 = vadd.f32 %v6320, %v6512
        %v6514 = vpop.f32.mrf.mxu0
        %v6515 = vpop.f32.mrf.mxu0
        %v6516 = vadd.f32 %v6323, %v6515
        %v6517 = vpop.f32.mrf.mxu0
        %6518 = vdwg.mxu0
        %6519 = vmatprep.subr.bf16.mxu0 0
        %6520 = vmatpush1.bf16.msra.mxu0 %v6445
        %6521 = vmatprep.subr.bf16.mxu0 0
        %6522 = vmatpush1.bf16.msra.mxu0 %v6444
        %6523 = vmatprep.subr.bf16.mxu0 0
        %6524 = vmatpush1.bf16.msra.mxu0 %v6443
        %6525 = vmatprep.subr.bf16.mxu0 0
        %6526 = vmatpush1.bf16.msra.mxu0 %v6442
        %6527 = vmatprep.subr.bf16.mxu0 0
        %6528 = vmatpush1.bf16.msra.mxu0 %v6441
        %6529 = vmatprep.subr.bf16.mxu0 0
        %6530 = vmatpush1.bf16.msra.mxu0 %v6440
        %6531 = vmatprep.subr.bf16.mxu0 0
        %6532 = vmatpush1.bf16.msra.mxu0 %v6439
        %6533 = vmatprep.subr.bf16.mxu0 0
        %6534 = vmatpush1.bf16.msra.mxu0 %v6438
        %6535 = vmatprep.subr.bf16.mxu0 0
        %6536 = vmatpush2.bf16.msra.mxu0 0
        %6537 = vmatprep.subr.bf16.mxu0 0
        %6538 = vmatpush2.bf16.msra.mxu0 0
        %6539 = vmatprep.subr.bf16.mxu0 0
        %6540 = vmatpush2.bf16.msra.mxu0 0
        %6541 = vmatprep.subr.bf16.mxu0 0
        %6542 = vmatpush2.bf16.msra.mxu0 0
        %6543 = vmatprep.subr.bf16.mxu0 0
        %6544 = vmatpush2.bf16.msra.mxu0 0
        %6545 = vmatprep.subr.bf16.mxu0 0
        %6546 = vmatpush2.bf16.msra.mxu0 0
        %6547 = vmatprep.subr.bf16.mxu0 0
        %6548 = vmatpush2.bf16.msra.mxu0 0
        %6549 = vmatprep.subr.bf16.mxu0 0
        %6550 = vmatpush2.bf16.msra.mxu0 0
        %6551 = vmatprep.mubr.bf16.mxu0 0
        %6552 = vmatmul.mubr.bf16.gmra.mxu0 %v5926
        %v6553 = vpop.f32.mrf.mxu0
        %v6554 = vadd.f32 %v6505, %v6553
        %v6555 = vpop.f32.mrf.mxu0
        %v6556 = vpop.f32.mrf.mxu0
        %v6557 = vadd.f32 %v6508, %v6556
        %v6558 = vpop.f32.mrf.mxu0
        %6559 = vmatprep.mubr.bf16.mxu0 0
        %6560 = vmatmul.mubr.bf16.gmra.mxu0 %v5928
        %v6561 = vpop.f32.mrf.mxu0
        %v6562 = vadd.f32 %v6513, %v6561
        %v6563 = vpop.f32.mrf.mxu0
        %v6564 = vpop.f32.mrf.mxu0
        %v6565 = vadd.f32 %v6516, %v6564
        %v6566 = vpop.f32.mrf.mxu0
        %6567 = vdwg.mxu0
        %s6568 = sadd.s32 %s305, 10
        %s6569 = smul.u32 %s6568, 5
        %s6570 = smul.addr %s6569, 4
        %s6571 = scalar_lea.vmem %s292, %s6570
        %v6572 = vld [vmem:[%s6571] sm:$0xf]
        %v6573 = vld [vmem:[%s6571 + $0x4] sm:$0xf]
        %v6574 = vld [vmem:[%s6571 + $0x8] sm:$0xf]
        %v6575 = vld [vmem:[%s6571 + $0xc] sm:$0xf]
        %v6576 = vld [vmem:[%s6571 + $0x10] sm:$0x1]
        %v6577 = vld [vmem:[%s6571] sm:$0xe]
        %v6582 = vunpack.c.l.b16 %v6572
        %v6583 = vunpack.c.l.b16 %v6573
        %v6584 = vunpack.c.l.b16 %v6574
        %v6585 = vunpack.c.l.b16 %v6575
        %v6586 = vpack.c.b16 %v6583, %v6582
        %v6587 = vpack.c.b16 %v6585, %v6584
        %v6591 = vunpack.c.l.b16 %v6576
        %v6592 = vpack.c.b16 %v6591, %v6591
        %v6594 = vshrl.u32 %v6586, 16
        %v6596 = vshll.u32 %v6586, 16
        %v6598 = vrot.slane %v6596, 1
        %v6599 = vor.u32 %v6594, %v6598
        %v6601 = vshll.u32 %v6587, 16
        %v6603 = vrot.slane %v6601, 1
        %v6604 = vsel %vm5897, %v6599, %v6603
        %v6605 = vshrl.u32 %v6587, 16
        %v6607 = vor.u32 %v6605, %v6603
        %v6609 = vshll.u32 %v6592, 16
        %v6611 = vrot.slane %v6609, 1
        %v6612 = vsel %vm5897, %v6607, %v6611
        %v6616 = vunpack.c.l.b16 %v6577
        %v6617 = vpack.c.b16 %v6583, %v6616
        %v6618 = vrot.slane %v6617, 1
        %v6619 = vrot.slane %v6587, 1
        %v6620 = vsel %vm5923, %v6618, %v6619
        %v6621 = vrot.slane %v6592, 1
        %v6622 = vsel %vm5923, %v6619, %v6621
        %v6625 = vld [vmem:[%s3634] sm:$0xf]
        %v6626 = vld [vmem:[%s3634 + $0x4] sm:$0xf]
        %v6627 = vld [vmem:[%s3634 + $0x8] sm:$0xf]
        %v6628 = vld [vmem:[%s3634 + $0xc] sm:$0xf]
        %v6629 = vld [vmem:[%s3634 + $0x10] sm:$0xf]
        %v6630 = vld [vmem:[%s3634 + $0x14] sm:$0xf]
        %v6631 = vld [vmem:[%s3634 + $0x18] sm:$0xf]
        %v6632 = vld [vmem:[%s3634 + $0x1c] sm:$0xf]
        %v6633 = vld [vmem:[%s3634 + $0x20] sm:$0xf]
        %v6634 = vld [vmem:[%s3634 + $0x24] sm:$0xf]
        %v6635 = vld [vmem:[%s3634 + $0x28] sm:$0xf]
        %v6636 = vld [vmem:[%s3634 + $0x2c] sm:$0xf]
        %v6637 = vld [vmem:[%s3634 + $0x30] sm:$0xf]
        %v6638 = vld [vmem:[%s3634 + $0x34] sm:$0xf]
        %v6639 = vld [vmem:[%s3634 + $0x38] sm:$0xf]
        %v6640 = vld [vmem:[%s3634 + $0x3c] sm:$0xf]
        %v6641 = vld [vmem:[%s3634 + $0x40] sm:$0xf]
        %v6642 = vld [vmem:[%s3634 + $0x44] sm:$0xf]
        %v6643 = vld [vmem:[%s3634 + $0x48] sm:$0xf]
        %v6644 = vld [vmem:[%s3634 + $0x4c] sm:$0xf]
        %v6645 = vld [vmem:[%s3634 + $0x50] sm:$0xf]
        %v6646 = vld [vmem:[%s3634 + $0x54] sm:$0xf]
        %v6647 = vld [vmem:[%s3634 + $0x58] sm:$0xf]
        %v6648 = vld [vmem:[%s3634 + $0x5c] sm:$0xf]
        %v6649 = vld [vmem:[%s3634 + $0x60] sm:$0xf]
        %v6650 = vld [vmem:[%s3634 + $0x64] sm:$0xf]
        %v6651 = vld [vmem:[%s3634 + $0x68] sm:$0xf]
        %v6652 = vld [vmem:[%s3634 + $0x6c] sm:$0xf]
        %v6653 = vld [vmem:[%s3634 + $0x70] sm:$0xf]
        %v6654 = vld [vmem:[%s3634 + $0x74] sm:$0xf]
        %v6655 = vld [vmem:[%s3634 + $0x78] sm:$0xf]
        %v6656 = vld [vmem:[%s3634 + $0x7c] sm:$0xf]
        %v6657 = vld [vmem:[%s3634 + $0x80] sm:$0xf]
        %v6658 = vld [vmem:[%s3634 + $0x84] sm:$0xf]
        %v6659 = vld [vmem:[%s3634 + $0x88] sm:$0xf]
        %v6660 = vld [vmem:[%s3634 + $0x8c] sm:$0xf]
        %v6661 = vld [vmem:[%s3634 + $0x90] sm:$0xf]
        %v6662 = vld [vmem:[%s3634 + $0x94] sm:$0xf]
        %v6663 = vld [vmem:[%s3634 + $0x98] sm:$0xf]
        %v6664 = vld [vmem:[%s3634 + $0x9c] sm:$0xf]
        %v6665 = vld [vmem:[%s3634 + $0xa0] sm:$0xf]
        %v6666 = vld [vmem:[%s3634 + $0xa4] sm:$0xf]
        %v6667 = vld [vmem:[%s3634 + $0xa8] sm:$0xf]
        %v6668 = vld [vmem:[%s3634 + $0xac] sm:$0xf]
        %v6669 = vld [vmem:[%s3634 + $0xb0] sm:$0xf]
        %v6670 = vld [vmem:[%s3634 + $0xb4] sm:$0xf]
        %v6671 = vld [vmem:[%s3634 + $0xb8] sm:$0xf]
        %v6672 = vld [vmem:[%s3634 + $0xbc] sm:$0xf]
        %v6721 = vunpack.c.l.b16 %v6625
        %v6722 = vunpack.c.l.b16 %v6626
        %v6723 = vunpack.c.l.b16 %v6627
        %v6724 = vunpack.c.l.b16 %v6628
        %v6725 = vunpack.c.l.b16 %v6629
        %v6726 = vunpack.c.l.b16 %v6630
        %v6727 = vunpack.c.l.b16 %v6631
        %v6728 = vunpack.c.l.b16 %v6632
        %v6729 = vunpack.c.l.b16 %v6633
        %v6730 = vunpack.c.l.b16 %v6634
        %v6731 = vunpack.c.l.b16 %v6635
        %v6732 = vunpack.c.l.b16 %v6636
        %v6733 = vunpack.c.l.b16 %v6637
        %v6734 = vunpack.c.l.b16 %v6638
        %v6735 = vunpack.c.l.b16 %v6639
        %v6736 = vunpack.c.l.b16 %v6640
        %v6737 = vunpack.c.l.b16 %v6641
        %v6738 = vunpack.c.l.b16 %v6642
        %v6739 = vunpack.c.l.b16 %v6643
        %v6740 = vunpack.c.l.b16 %v6644
        %v6741 = vunpack.c.l.b16 %v6645
        %v6742 = vunpack.c.l.b16 %v6646
        %v6743 = vunpack.c.l.b16 %v6647
        %v6744 = vunpack.c.l.b16 %v6648
        %v6745 = vunpack.c.l.b16 %v6649
        %v6746 = vunpack.c.l.b16 %v6650
        %v6747 = vunpack.c.l.b16 %v6651
        %v6748 = vunpack.c.l.b16 %v6652
        %v6749 = vunpack.c.l.b16 %v6653
        %v6750 = vunpack.c.l.b16 %v6654
        %v6751 = vunpack.c.l.b16 %v6655
        %v6752 = vunpack.c.l.b16 %v6656
        %v6753 = vunpack.c.l.b16 %v6657
        %v6754 = vunpack.c.l.b16 %v6658
        %v6755 = vunpack.c.l.b16 %v6659
        %v6756 = vunpack.c.l.b16 %v6660
        %v6757 = vunpack.c.l.b16 %v6661
        %v6758 = vunpack.c.l.b16 %v6662
        %v6759 = vunpack.c.l.b16 %v6663
        %v6760 = vunpack.c.l.b16 %v6664
        %v6761 = vunpack.c.l.b16 %v6665
        %v6762 = vunpack.c.l.b16 %v6666
        %v6763 = vunpack.c.l.b16 %v6667
        %v6764 = vunpack.c.l.b16 %v6668
        %v6765 = vunpack.c.l.b16 %v6669
        %v6766 = vunpack.c.l.b16 %v6670
        %v6767 = vunpack.c.l.b16 %v6671
        %v6768 = vunpack.c.l.b16 %v6672
        %v6769 = vpack.c.b16 %v6722, %v6721
        %v6770 = vpack.c.b16 %v6724, %v6723
        %v6771 = vpack.c.b16 %v6726, %v6725
        %v6772 = vpack.c.b16 %v6728, %v6727
        %v6773 = vpack.c.b16 %v6730, %v6729
        %v6774 = vpack.c.b16 %v6732, %v6731
        %v6775 = vpack.c.b16 %v6734, %v6733
        %v6776 = vpack.c.b16 %v6736, %v6735
        %v6777 = vpack.c.b16 %v6738, %v6737
        %v6778 = vpack.c.b16 %v6740, %v6739
        %v6779 = vpack.c.b16 %v6742, %v6741
        %v6780 = vpack.c.b16 %v6744, %v6743
        %v6781 = vpack.c.b16 %v6746, %v6745
        %v6782 = vpack.c.b16 %v6748, %v6747
        %v6783 = vpack.c.b16 %v6750, %v6749
        %v6784 = vpack.c.b16 %v6752, %v6751
        %v6785 = vpack.c.b16 %v6754, %v6753
        %v6786 = vpack.c.b16 %v6756, %v6755
        %v6787 = vpack.c.b16 %v6758, %v6757
        %v6788 = vpack.c.b16 %v6760, %v6759
        %v6789 = vpack.c.b16 %v6762, %v6761
        %v6790 = vpack.c.b16 %v6764, %v6763
        %v6791 = vpack.c.b16 %v6766, %v6765
        %v6792 = vpack.c.b16 %v6768, %v6767
        %6817 = vmatprep.subr.bf16.mxu0 0
        %6818 = vmatpush1.bf16.msra.mxu0 %v6776
        %6819 = vmatprep.subr.bf16.mxu0 0
        %6820 = vmatpush1.bf16.msra.mxu0 %v6775
        %6821 = vmatprep.subr.bf16.mxu0 0
        %6822 = vmatpush1.bf16.msra.mxu0 %v6774
        %6823 = vmatprep.subr.bf16.mxu0 0
        %6824 = vmatpush1.bf16.msra.mxu0 %v6773
        %6825 = vmatprep.subr.bf16.mxu0 0
        %6826 = vmatpush1.bf16.msra.mxu0 %v6772
        %6827 = vmatprep.subr.bf16.mxu0 0
        %6828 = vmatpush1.bf16.msra.mxu0 %v6771
        %6829 = vmatprep.subr.bf16.mxu0 0
        %6830 = vmatpush1.bf16.msra.mxu0 %v6770
        %6831 = vmatprep.subr.bf16.mxu0 0
        %6832 = vmatpush1.bf16.msra.mxu0 %v6769
        %6833 = vmatprep.subr.bf16.mxu0 0
        %6834 = vmatpush2.bf16.msra.mxu0 %v6784
        %6835 = vmatprep.subr.bf16.mxu0 0
        %6836 = vmatpush2.bf16.msra.mxu0 %v6783
        %6837 = vmatprep.subr.bf16.mxu0 0
        %6838 = vmatpush2.bf16.msra.mxu0 %v6782
        %6839 = vmatprep.subr.bf16.mxu0 0
        %6840 = vmatpush2.bf16.msra.mxu0 %v6781
        %6841 = vmatprep.subr.bf16.mxu0 0
        %6842 = vmatpush2.bf16.msra.mxu0 %v6780
        %6843 = vmatprep.subr.bf16.mxu0 0
        %6844 = vmatpush2.bf16.msra.mxu0 %v6779
        %6845 = vmatprep.subr.bf16.mxu0 0
        %6846 = vmatpush2.bf16.msra.mxu0 %v6778
        %6847 = vmatprep.subr.bf16.mxu0 0
        %6848 = vmatpush2.bf16.msra.mxu0 %v6777
        %6849 = vmatprep.mubr.bf16.mxu0 %v6604
        %6850 = vmatmul.mubr.bf16.gmra.mxu0 %v6586
        %v6851 = vpop.f32.mrf.mxu0
        %v6852 = vadd.f32 0.0, %v6851
        %v6853 = vpop.f32.mrf.mxu0
        %v6854 = vpop.f32.mrf.mxu0
        %v6855 = vadd.f32 0.0, %v6854
        %v6856 = vpop.f32.mrf.mxu0
        %6857 = vmatprep.mubr.bf16.mxu0 %v6612
        %6858 = vmatmul.mubr.bf16.gmra.mxu0 %v6587
        %v6859 = vpop.f32.mrf.mxu0
        %v6860 = vadd.f32 0.0, %v6859
        %v6861 = vpop.f32.mrf.mxu0
        %v6862 = vpop.f32.mrf.mxu0
        %v6863 = vadd.f32 0.0, %v6862
        %v6864 = vpop.f32.mrf.mxu0
        %6865 = vdwg.mxu0
        %6866 = vmatprep.subr.bf16.mxu0 0
        %6867 = vmatpush1.bf16.msra.mxu0 %v6792
        %6868 = vmatprep.subr.bf16.mxu0 0
        %6869 = vmatpush1.bf16.msra.mxu0 %v6791
        %6870 = vmatprep.subr.bf16.mxu0 0
        %6871 = vmatpush1.bf16.msra.mxu0 %v6790
        %6872 = vmatprep.subr.bf16.mxu0 0
        %6873 = vmatpush1.bf16.msra.mxu0 %v6789
        %6874 = vmatprep.subr.bf16.mxu0 0
        %6875 = vmatpush1.bf16.msra.mxu0 %v6788
        %6876 = vmatprep.subr.bf16.mxu0 0
        %6877 = vmatpush1.bf16.msra.mxu0 %v6787
        %6878 = vmatprep.subr.bf16.mxu0 0
        %6879 = vmatpush1.bf16.msra.mxu0 %v6786
        %6880 = vmatprep.subr.bf16.mxu0 0
        %6881 = vmatpush1.bf16.msra.mxu0 %v6785
        %6882 = vmatprep.subr.bf16.mxu0 0
        %6883 = vmatpush2.bf16.msra.mxu0 0
        %6884 = vmatprep.subr.bf16.mxu0 0
        %6885 = vmatpush2.bf16.msra.mxu0 0
        %6886 = vmatprep.subr.bf16.mxu0 0
        %6887 = vmatpush2.bf16.msra.mxu0 0
        %6888 = vmatprep.subr.bf16.mxu0 0
        %6889 = vmatpush2.bf16.msra.mxu0 0
        %6890 = vmatprep.subr.bf16.mxu0 0
        %6891 = vmatpush2.bf16.msra.mxu0 0
        %6892 = vmatprep.subr.bf16.mxu0 0
        %6893 = vmatpush2.bf16.msra.mxu0 0
        %6894 = vmatprep.subr.bf16.mxu0 0
        %6895 = vmatpush2.bf16.msra.mxu0 0
        %6896 = vmatprep.subr.bf16.mxu0 0
        %6897 = vmatpush2.bf16.msra.mxu0 0
        %6898 = vmatprep.mubr.bf16.mxu0 0
        %6899 = vmatmul.mubr.bf16.gmra.mxu0 %v6620
        %v6900 = vpop.f32.mrf.mxu0
        %v6901 = vadd.f32 %v6852, %v6900
        %v6902 = vpop.f32.mrf.mxu0
        %v6903 = vpop.f32.mrf.mxu0
        %v6904 = vadd.f32 %v6855, %v6903
        %v6905 = vpop.f32.mrf.mxu0
        %6906 = vmatprep.mubr.bf16.mxu0 0
        %6907 = vmatmul.mubr.bf16.gmra.mxu0 %v6622
        %v6908 = vpop.f32.mrf.mxu0
        %v6909 = vadd.f32 %v6860, %v6908
        %v6910 = vpop.f32.mrf.mxu0
        %v6911 = vpop.f32.mrf.mxu0
        %v6912 = vadd.f32 %v6863, %v6911
        %v6913 = vpop.f32.mrf.mxu0
        %6914 = vdwg.mxu0
        %v6915 = vadd.f32 %v6554, %v6901
        %v6916 = vadd.f32 %v6557, %v6904
        %v6917 = vadd.f32 %v6562, %v6909
        %v6918 = vadd.f32 %v6565, %v6912
        %v6919 = vld [vmem:[%s2] sm:$0x1]
        %v6921 = vlaneseq
        %v6922 = vshrl.u32 %v6921, 7
        %v6923 = vsub.s32 0, %v6922
        %v6924 = vrot.slane %v6919, %v6923
        %v6926 = vadd.f32 %v6915, %v6924
        %v6927 = vadd.f32 %v6916, %v6924
        %v6928 = vadd.f32 %v6917, %v6924
        %v6929 = vadd.f32 %v6918, %v6924
        %v6930 = vmax.f32 %v6926, 0.0
        %v6931 = vmax.f32 %v6927, 0.0
        %v6932 = vmax.f32 %v6928, 0.0
        %v6933 = vmax.f32 %v6929, 0.0
        %v6934 = vpack.c.bf16 %v6931, %v6930
        %v6935 = vpack.c.bf16 %v6933, %v6932
        %v6938 = vunpack.c.l.b16 %v6934
        %v6939 = vunpack.c.h.b16 %v6934
        %v6940 = vunpack.c.l.b16 %v6935
        %v6941 = vunpack.c.h.b16 %v6935
        %v6942 = vpack.c.b16 %v6938, %v6938
        %v6943 = vpack.c.b16 %v6939, %v6939
        %v6944 = vpack.c.b16 %v6940, %v6940
        %v6945 = vpack.c.b16 %v6941, %v6941
        %v6947 = vshrl.u32 %v6942, 16
        %v6949 = vrot.slane %v6947, 7
        %v6950 = vshll.u32 %v6942, 16
        %v6952 = vor.u32 %v6949, %v6950
        %v6953 = vrot.slane %v6949, 4
        %v6955 = vshrl.u32 %v6943, 16
        %v6957 = vrot.slane %v6955, 7
        %v6958 = vshll.u32 %v6943, 16
        %v6960 = vor.u32 %v6957, %v6958
        %v6961 = vsel %vm4350, %v6953, %v6960
        %v6962 = vrot.slane %v6957, 4
        %v6964 = vshrl.u32 %v6944, 16
        %v6966 = vrot.slane %v6964, 7
        %v6967 = vshll.u32 %v6944, 16
        %v6969 = vor.u32 %v6966, %v6967
        %v6970 = vsel %vm4350, %v6962, %v6969
        %v6971 = vrot.slane %v6966, 4
        %v6973 = vshrl.u32 %v6945, 16
        %v6975 = vrot.slane %v6973, 7
        %v6976 = vshll.u32 %v6945, 16
        %v6978 = vor.u32 %v6975, %v6976
        %v6979 = vsel %vm4350, %v6971, %v6978
        %v6980 = vrot.slane %v6975, 4
        %s6986 = scalar_lea.vmem [#allocation2], 180
        %v6987 = vld [vmem:[%s6986] sm:$0xf]
        %v6988 = vsel %vm4674, %v6952, %v6987
        %6989 = vst [vmem:[%s6986] sm:$0xf] %v6988
        %6990 = vst [vmem:[%s6986 + $0x4] sm:$0xf] %v6961
        %6991 = vst [vmem:[%s6986 + $0x8] sm:$0xf] %v6970
        %6992 = vst [vmem:[%s6986 + $0xc] sm:$0xf] %v6979
        %v6993 = vld [vmem:[%s6986 + $0x10] sm:$0x1]
        %v6994 = vsel %vm4682, %v6980, %v6993
        %6995 = vst [vmem:[%s6986 + $0x10] sm:$0x1] %v6994
      $region56: #{basic_block_forward.1} parent=47 // pred_fallthru
        _
      %v6996 = vld [vmem:[#allocation2] sm:$0xf]
      %v6997 = vld [vmem:[#allocation2 + $0x4] sm:$0xf]
      %v6998 = vld [vmem:[#allocation2 + $0x8] sm:$0xf]
      %v6999 = vld [vmem:[#allocation2 + $0xc] sm:$0xf]
      %v7000 = vld [vmem:[#allocation2 + $0x14] sm:$0xf]
      %v7001 = vld [vmem:[#allocation2 + $0x18] sm:$0xf]
      %v7002 = vld [vmem:[#allocation2 + $0x1c] sm:$0xf]
      %v7003 = vld [vmem:[#allocation2 + $0x20] sm:$0xf]
      %v7004 = vld [vmem:[#allocation2 + $0x28] sm:$0xf]
      %v7005 = vld [vmem:[#allocation2 + $0x2c] sm:$0xf]
      %v7006 = vld [vmem:[#allocation2 + $0x30] sm:$0xf]
      %v7007 = vld [vmem:[#allocation2 + $0x34] sm:$0xf]
      %v7008 = vld [vmem:[#allocation2 + $0x3c] sm:$0xf]
      %v7009 = vld [vmem:[#allocation2 + $0x40] sm:$0xf]
      %v7010 = vld [vmem:[#allocation2 + $0x44] sm:$0xf]
      %v7011 = vld [vmem:[#allocation2 + $0x48] sm:$0xf]
      %v7012 = vld [vmem:[#allocation2 + $0x50] sm:$0xf]
      %v7013 = vld [vmem:[#allocation2 + $0x54] sm:$0xf]
      %v7014 = vld [vmem:[#allocation2 + $0x58] sm:$0xf]
      %v7015 = vld [vmem:[#allocation2 + $0x5c] sm:$0xf]
      %v7016 = vld [vmem:[#allocation2 + $0x64] sm:$0xf]
      %v7017 = vld [vmem:[#allocation2 + $0x68] sm:$0xf]
      %v7018 = vld [vmem:[#allocation2 + $0x6c] sm:$0xf]
      %v7019 = vld [vmem:[#allocation2 + $0x70] sm:$0xf]
      %v7020 = vld [vmem:[#allocation2 + $0x78] sm:$0xf]
      %v7021 = vld [vmem:[#allocation2 + $0x7c] sm:$0xf]
      %v7022 = vld [vmem:[#allocation2 + $0x80] sm:$0xf]
      %v7023 = vld [vmem:[#allocation2 + $0x84] sm:$0xf]
      %v7024 = vld [vmem:[#allocation2 + $0x8c] sm:$0xf]
      %v7025 = vld [vmem:[#allocation2 + $0x90] sm:$0xf]
      %v7026 = vld [vmem:[#allocation2 + $0x94] sm:$0xf]
      %v7027 = vld [vmem:[#allocation2 + $0x98] sm:$0xf]
      %v7028 = vld [vmem:[#allocation2 + $0x10] sm:$0x1]
      %v7029 = vld [vmem:[#allocation2 + $0x24] sm:$0x1]
      %v7030 = vld [vmem:[#allocation2 + $0x38] sm:$0x1]
      %v7031 = vld [vmem:[#allocation2 + $0x4c] sm:$0x1]
      %v7032 = vld [vmem:[#allocation2 + $0x60] sm:$0x1]
      %v7033 = vld [vmem:[#allocation2 + $0x74] sm:$0x1]
      %v7034 = vld [vmem:[#allocation2 + $0x88] sm:$0x1]
      %v7035 = vld [vmem:[#allocation2 + $0x9c] sm:$0x1]
      %v7037 = vshrl.u32 %v6996, 16
      %v7039 = vrot.slane %v7037, 4
      %v7040 = vshll.u32 %v6996, 16
      %v7042 = vrot.slane %v7040, 5
      %v7043 = vor.u32 %v7039, %v7042
      %v7044 = vrot.slane %v7043, 4
      %v7046 = vshll.u32 %v6997, 16
      %v7048 = vrot.slane %v7046, 5
      %v7049 = vsel %vm401, %v7044, %v7048
      %v7050 = vshrl.u32 %v6997, 16
      %v7052 = vrot.slane %v7050, 4
      %v7053 = vor.u32 %v7052, %v7048
      %v7054 = vrot.slane %v7053, 4
      %v7056 = vshll.u32 %v6998, 16
      %v7058 = vrot.slane %v7056, 5
      %v7059 = vsel %vm401, %v7054, %v7058
      %v7060 = vshrl.u32 %v6998, 16
      %v7062 = vrot.slane %v7060, 4
      %v7063 = vor.u32 %v7062, %v7058
      %v7064 = vrot.slane %v7063, 4
      %v7066 = vshll.u32 %v6999, 16
      %v7068 = vrot.slane %v7066, 5
      %v7069 = vsel %vm401, %v7064, %v7068
      %v7070 = vshrl.u32 %v6999, 16
      %v7072 = vrot.slane %v7070, 4
      %v7073 = vor.u32 %v7072, %v7068
      %v7074 = vrot.slane %v7073, 4
      %v7076 = vshll.u32 %v7028, 16
      %v7078 = vrot.slane %v7076, 5
      %v7079 = vsel %vm401, %v7074, %v7078
      %v7081 = vshrl.u32 %v7000, 16
      %v7083 = vrot.slane %v7081, 4
      %v7084 = vshll.u32 %v7000, 16
      %v7086 = vrot.slane %v7084, 5
      %v7087 = vor.u32 %v7083, %v7086
      %v7088 = vrot.slane %v7087, 4
      %v7090 = vshll.u32 %v7001, 16
      %v7092 = vrot.slane %v7090, 5
      %v7093 = vsel %vm401, %v7088, %v7092
      %v7094 = vshrl.u32 %v7001, 16
      %v7096 = vrot.slane %v7094, 4
      %v7097 = vor.u32 %v7096, %v7092
      %v7098 = vrot.slane %v7097, 4
      %v7100 = vshll.u32 %v7002, 16
      %v7102 = vrot.slane %v7100, 5
      %v7103 = vsel %vm401, %v7098, %v7102
      %v7104 = vshrl.u32 %v7002, 16
      %v7106 = vrot.slane %v7104, 4
      %v7107 = vor.u32 %v7106, %v7102
      %v7108 = vrot.slane %v7107, 4
      %v7110 = vshll.u32 %v7003, 16
      %v7112 = vrot.slane %v7110, 5
      %v7113 = vsel %vm401, %v7108, %v7112
      %v7114 = vshrl.u32 %v7003, 16
      %v7116 = vrot.slane %v7114, 4
      %v7117 = vor.u32 %v7116, %v7112
      %v7118 = vrot.slane %v7117, 4
      %v7120 = vshll.u32 %v7029, 16
      %v7122 = vrot.slane %v7120, 5
      %v7123 = vsel %vm401, %v7118, %v7122
      %v7125 = vshrl.u32 %v7004, 16
      %v7127 = vrot.slane %v7125, 4
      %v7128 = vshll.u32 %v7004, 16
      %v7130 = vrot.slane %v7128, 5
      %v7131 = vor.u32 %v7127, %v7130
      %v7132 = vrot.slane %v7131, 4
      %v7134 = vshll.u32 %v7005, 16
      %v7136 = vrot.slane %v7134, 5
      %v7137 = vsel %vm401, %v7132, %v7136
      %v7138 = vshrl.u32 %v7005, 16
      %v7140 = vrot.slane %v7138, 4
      %v7141 = vor.u32 %v7140, %v7136
      %v7142 = vrot.slane %v7141, 4
      %v7144 = vshll.u32 %v7006, 16
      %v7146 = vrot.slane %v7144, 5
      %v7147 = vsel %vm401, %v7142, %v7146
      %v7148 = vshrl.u32 %v7006, 16
      %v7150 = vrot.slane %v7148, 4
      %v7151 = vor.u32 %v7150, %v7146
      %v7152 = vrot.slane %v7151, 4
      %v7154 = vshll.u32 %v7007, 16
      %v7156 = vrot.slane %v7154, 5
      %v7157 = vsel %vm401, %v7152, %v7156
      %v7158 = vshrl.u32 %v7007, 16
      %v7160 = vrot.slane %v7158, 4
      %v7161 = vor.u32 %v7160, %v7156
      %v7162 = vrot.slane %v7161, 4
      %v7164 = vshll.u32 %v7030, 16
      %v7166 = vrot.slane %v7164, 5
      %v7167 = vsel %vm401, %v7162, %v7166
      %v7169 = vshrl.u32 %v7008, 16
      %v7171 = vrot.slane %v7169, 4
      %v7172 = vshll.u32 %v7008, 16
      %v7174 = vrot.slane %v7172, 5
      %v7175 = vor.u32 %v7171, %v7174
      %v7176 = vrot.slane %v7175, 4
      %v7178 = vshll.u32 %v7009, 16
      %v7180 = vrot.slane %v7178, 5
      %v7181 = vsel %vm401, %v7176, %v7180
      %v7182 = vshrl.u32 %v7009, 16
      %v7184 = vrot.slane %v7182, 4
      %v7185 = vor.u32 %v7184, %v7180
      %v7186 = vrot.slane %v7185, 4
      %v7188 = vshll.u32 %v7010, 16
      %v7190 = vrot.slane %v7188, 5
      %v7191 = vsel %vm401, %v7186, %v7190
      %v7192 = vshrl.u32 %v7010, 16
      %v7194 = vrot.slane %v7192, 4
      %v7195 = vor.u32 %v7194, %v7190
      %v7196 = vrot.slane %v7195, 4
      %v7198 = vshll.u32 %v7011, 16
      %v7200 = vrot.slane %v7198, 5
      %v7201 = vsel %vm401, %v7196, %v7200
      %v7202 = vshrl.u32 %v7011, 16
      %v7204 = vrot.slane %v7202, 4
      %v7205 = vor.u32 %v7204, %v7200
      %v7206 = vrot.slane %v7205, 4
      %v7208 = vshll.u32 %v7031, 16
      %v7210 = vrot.slane %v7208, 5
      %v7211 = vsel %vm401, %v7206, %v7210
      %v7213 = vshrl.u32 %v7012, 16
      %v7215 = vrot.slane %v7213, 4
      %v7216 = vshll.u32 %v7012, 16
      %v7218 = vrot.slane %v7216, 5
      %v7219 = vor.u32 %v7215, %v7218
      %v7220 = vrot.slane %v7219, 4
      %v7222 = vshll.u32 %v7013, 16
      %v7224 = vrot.slane %v7222, 5
      %v7225 = vsel %vm401, %v7220, %v7224
      %v7226 = vshrl.u32 %v7013, 16
      %v7228 = vrot.slane %v7226, 4
      %v7229 = vor.u32 %v7228, %v7224
      %v7230 = vrot.slane %v7229, 4
      %v7232 = vshll.u32 %v7014, 16
      %v7234 = vrot.slane %v7232, 5
      %v7235 = vsel %vm401, %v7230, %v7234
      %v7236 = vshrl.u32 %v7014, 16
      %v7238 = vrot.slane %v7236, 4
      %v7239 = vor.u32 %v7238, %v7234
      %v7240 = vrot.slane %v7239, 4
      %v7242 = vshll.u32 %v7015, 16
      %v7244 = vrot.slane %v7242, 5
      %v7245 = vsel %vm401, %v7240, %v7244
      %v7246 = vshrl.u32 %v7015, 16
      %v7248 = vrot.slane %v7246, 4
      %v7249 = vor.u32 %v7248, %v7244
      %v7250 = vrot.slane %v7249, 4
      %v7252 = vshll.u32 %v7032, 16
      %v7254 = vrot.slane %v7252, 5
      %v7255 = vsel %vm401, %v7250, %v7254
      %v7257 = vshrl.u32 %v7016, 16
      %v7259 = vrot.slane %v7257, 4
      %v7260 = vshll.u32 %v7016, 16
      %v7262 = vrot.slane %v7260, 5
      %v7263 = vor.u32 %v7259, %v7262
      %v7264 = vrot.slane %v7263, 4
      %v7266 = vshll.u32 %v7017, 16
      %v7268 = vrot.slane %v7266, 5
      %v7269 = vsel %vm401, %v7264, %v7268
      %v7270 = vshrl.u32 %v7017, 16
      %v7272 = vrot.slane %v7270, 4
      %v7273 = vor.u32 %v7272, %v7268
      %v7274 = vrot.slane %v7273, 4
      %v7276 = vshll.u32 %v7018, 16
      %v7278 = vrot.slane %v7276, 5
      %v7279 = vsel %vm401, %v7274, %v7278
      %v7280 = vshrl.u32 %v7018, 16
      %v7282 = vrot.slane %v7280, 4
      %v7283 = vor.u32 %v7282, %v7278
      %v7284 = vrot.slane %v7283, 4
      %v7286 = vshll.u32 %v7019, 16
      %v7288 = vrot.slane %v7286, 5
      %v7289 = vsel %vm401, %v7284, %v7288
      %v7290 = vshrl.u32 %v7019, 16
      %v7292 = vrot.slane %v7290, 4
      %v7293 = vor.u32 %v7292, %v7288
      %v7294 = vrot.slane %v7293, 4
      %v7296 = vshll.u32 %v7033, 16
      %v7298 = vrot.slane %v7296, 5
      %v7299 = vsel %vm401, %v7294, %v7298
      %v7301 = vshrl.u32 %v7020, 16
      %v7303 = vrot.slane %v7301, 4
      %v7304 = vshll.u32 %v7020, 16
      %v7306 = vrot.slane %v7304, 5
      %v7307 = vor.u32 %v7303, %v7306
      %v7308 = vrot.slane %v7307, 4
      %v7310 = vshll.u32 %v7021, 16
      %v7312 = vrot.slane %v7310, 5
      %v7313 = vsel %vm401, %v7308, %v7312
      %v7314 = vshrl.u32 %v7021, 16
      %v7316 = vrot.slane %v7314, 4
      %v7317 = vor.u32 %v7316, %v7312
      %v7318 = vrot.slane %v7317, 4
      %v7320 = vshll.u32 %v7022, 16
      %v7322 = vrot.slane %v7320, 5
      %v7323 = vsel %vm401, %v7318, %v7322
      %v7324 = vshrl.u32 %v7022, 16
      %v7326 = vrot.slane %v7324, 4
      %v7327 = vor.u32 %v7326, %v7322
      %v7328 = vrot.slane %v7327, 4
      %v7330 = vshll.u32 %v7023, 16
      %v7332 = vrot.slane %v7330, 5
      %v7333 = vsel %vm401, %v7328, %v7332
      %v7334 = vshrl.u32 %v7023, 16
      %v7336 = vrot.slane %v7334, 4
      %v7337 = vor.u32 %v7336, %v7332
      %v7338 = vrot.slane %v7337, 4
      %v7340 = vshll.u32 %v7034, 16
      %v7342 = vrot.slane %v7340, 5
      %v7343 = vsel %vm401, %v7338, %v7342
      %v7345 = vshrl.u32 %v7024, 16
      %v7347 = vrot.slane %v7345, 4
      %v7348 = vshll.u32 %v7024, 16
      %v7350 = vrot.slane %v7348, 5
      %v7351 = vor.u32 %v7347, %v7350
      %v7352 = vrot.slane %v7351, 4
      %v7354 = vshll.u32 %v7025, 16
      %v7356 = vrot.slane %v7354, 5
      %v7357 = vsel %vm401, %v7352, %v7356
      %v7358 = vshrl.u32 %v7025, 16
      %v7360 = vrot.slane %v7358, 4
      %v7361 = vor.u32 %v7360, %v7356
      %v7362 = vrot.slane %v7361, 4
      %v7364 = vshll.u32 %v7026, 16
      %v7366 = vrot.slane %v7364, 5
      %v7367 = vsel %vm401, %v7362, %v7366
      %v7368 = vshrl.u32 %v7026, 16
      %v7370 = vrot.slane %v7368, 4
      %v7371 = vor.u32 %v7370, %v7366
      %v7372 = vrot.slane %v7371, 4
      %v7374 = vshll.u32 %v7027, 16
      %v7376 = vrot.slane %v7374, 5
      %v7377 = vsel %vm401, %v7372, %v7376
      %v7378 = vshrl.u32 %v7027, 16
      %v7380 = vrot.slane %v7378, 4
      %v7381 = vor.u32 %v7380, %v7376
      %v7382 = vrot.slane %v7381, 4
      %v7384 = vshll.u32 %v7035, 16
      %v7386 = vrot.slane %v7384, 5
      %v7387 = vsel %vm401, %v7382, %v7386
      %v7388 = vld [vmem:[#allocation2] sm:$0xe]
      %v7389 = vld [vmem:[#allocation2 + $0x14] sm:$0xe]
      %v7390 = vld [vmem:[#allocation2 + $0x28] sm:$0xe]
      %v7391 = vld [vmem:[#allocation2 + $0x3c] sm:$0xe]
      %v7392 = vld [vmem:[#allocation2 + $0x50] sm:$0xe]
      %v7393 = vld [vmem:[#allocation2 + $0x64] sm:$0xe]
      %v7394 = vld [vmem:[#allocation2 + $0x78] sm:$0xe]
      %v7395 = vld [vmem:[#allocation2 + $0x8c] sm:$0xe]
      %v7436 = vrot.slane %v7388, 5
      %v7437 = vrot.slane %v7436, 4
      %v7438 = vrot.slane %v6997, 5
      %v7439 = vsel %vm804, %v7437, %v7438
      %v7440 = vrot.slane %v7438, 4
      %v7441 = vrot.slane %v6998, 5
      %v7442 = vsel %vm804, %v7440, %v7441
      %v7443 = vrot.slane %v7441, 4
      %v7444 = vrot.slane %v6999, 5
      %v7445 = vsel %vm804, %v7443, %v7444
      %v7446 = vrot.slane %v7444, 4
      %v7447 = vrot.slane %v7028, 5
      %v7448 = vsel %vm804, %v7446, %v7447
      %v7449 = vrot.slane %v7389, 5
      %v7450 = vrot.slane %v7449, 4
      %v7451 = vrot.slane %v7001, 5
      %v7452 = vsel %vm804, %v7450, %v7451
      %v7453 = vrot.slane %v7451, 4
      %v7454 = vrot.slane %v7002, 5
      %v7455 = vsel %vm804, %v7453, %v7454
      %v7456 = vrot.slane %v7454, 4
      %v7457 = vrot.slane %v7003, 5
      %v7458 = vsel %vm804, %v7456, %v7457
      %v7459 = vrot.slane %v7457, 4
      %v7460 = vrot.slane %v7029, 5
      %v7461 = vsel %vm804, %v7459, %v7460
      %v7462 = vrot.slane %v7390, 5
      %v7463 = vrot.slane %v7462, 4
      %v7464 = vrot.slane %v7005, 5
      %v7465 = vsel %vm804, %v7463, %v7464
      %v7466 = vrot.slane %v7464, 4
      %v7467 = vrot.slane %v7006, 5
      %v7468 = vsel %vm804, %v7466, %v7467
      %v7469 = vrot.slane %v7467, 4
      %v7470 = vrot.slane %v7007, 5
      %v7471 = vsel %vm804, %v7469, %v7470
      %v7472 = vrot.slane %v7470, 4
      %v7473 = vrot.slane %v7030, 5
      %v7474 = vsel %vm804, %v7472, %v7473
      %v7475 = vrot.slane %v7391, 5
      %v7476 = vrot.slane %v7475, 4
      %v7477 = vrot.slane %v7009, 5
      %v7478 = vsel %vm804, %v7476, %v7477
      %v7479 = vrot.slane %v7477, 4
      %v7480 = vrot.slane %v7010, 5
      %v7481 = vsel %vm804, %v7479, %v7480
      %v7482 = vrot.slane %v7480, 4
      %v7483 = vrot.slane %v7011, 5
      %v7484 = vsel %vm804, %v7482, %v7483
      %v7485 = vrot.slane %v7483, 4
      %v7486 = vrot.slane %v7031, 5
      %v7487 = vsel %vm804, %v7485, %v7486
      %v7488 = vrot.slane %v7392, 5
      %v7489 = vrot.slane %v7488, 4
      %v7490 = vrot.slane %v7013, 5
      %v7491 = vsel %vm804, %v7489, %v7490
      %v7492 = vrot.slane %v7490, 4
      %v7493 = vrot.slane %v7014, 5
      %v7494 = vsel %vm804, %v7492, %v7493
      %v7495 = vrot.slane %v7493, 4
      %v7496 = vrot.slane %v7015, 5
      %v7497 = vsel %vm804, %v7495, %v7496
      %v7498 = vrot.slane %v7496, 4
      %v7499 = vrot.slane %v7032, 5
      %v7500 = vsel %vm804, %v7498, %v7499
      %v7501 = vrot.slane %v7393, 5
      %v7502 = vrot.slane %v7501, 4
      %v7503 = vrot.slane %v7017, 5
      %v7504 = vsel %vm804, %v7502, %v7503
      %v7505 = vrot.slane %v7503, 4
      %v7506 = vrot.slane %v7018, 5
      %v7507 = vsel %vm804, %v7505, %v7506
      %v7508 = vrot.slane %v7506, 4
      %v7509 = vrot.slane %v7019, 5
      %v7510 = vsel %vm804, %v7508, %v7509
      %v7511 = vrot.slane %v7509, 4
      %v7512 = vrot.slane %v7033, 5
      %v7513 = vsel %vm804, %v7511, %v7512
      %v7514 = vrot.slane %v7394, 5
      %v7515 = vrot.slane %v7514, 4
      %v7516 = vrot.slane %v7021, 5
      %v7517 = vsel %vm804, %v7515, %v7516
      %v7518 = vrot.slane %v7516, 4
      %v7519 = vrot.slane %v7022, 5
      %v7520 = vsel %vm804, %v7518, %v7519
      %v7521 = vrot.slane %v7519, 4
      %v7522 = vrot.slane %v7023, 5
      %v7523 = vsel %vm804, %v7521, %v7522
      %v7524 = vrot.slane %v7522, 4
      %v7525 = vrot.slane %v7034, 5
      %v7526 = vsel %vm804, %v7524, %v7525
      %v7527 = vrot.slane %v7395, 5
      %v7528 = vrot.slane %v7527, 4
      %v7529 = vrot.slane %v7025, 5
      %v7530 = vsel %vm804, %v7528, %v7529
      %v7531 = vrot.slane %v7529, 4
      %v7532 = vrot.slane %v7026, 5
      %v7533 = vsel %vm804, %v7531, %v7532
      %v7534 = vrot.slane %v7532, 4
      %v7535 = vrot.slane %v7027, 5
      %v7536 = vsel %vm804, %v7534, %v7535
      %v7537 = vrot.slane %v7535, 4
      %v7538 = vrot.slane %v7035, 5
      %v7539 = vsel %vm804, %v7537, %v7538
      %v7548 = vunpack.c.l.b16 %v6996
      %v7549 = vunpack.c.l.b16 %v6997
      %v7550 = vunpack.c.l.b16 %v6998
      %v7551 = vunpack.c.l.b16 %v6999
      %v7552 = vunpack.c.l.b16 %v7000
      %v7553 = vunpack.c.l.b16 %v7001
      %v7554 = vunpack.c.l.b16 %v7002
      %v7555 = vunpack.c.l.b16 %v7003
      %v7556 = vunpack.c.l.b16 %v7004
      %v7557 = vunpack.c.l.b16 %v7005
      %v7558 = vunpack.c.l.b16 %v7006
      %v7559 = vunpack.c.l.b16 %v7007
      %v7560 = vunpack.c.l.b16 %v7008
      %v7561 = vunpack.c.l.b16 %v7009
      %v7562 = vunpack.c.l.b16 %v7010
      %v7563 = vunpack.c.l.b16 %v7011
      %v7564 = vunpack.c.l.b16 %v7012
      %v7565 = vunpack.c.l.b16 %v7013
      %v7566 = vunpack.c.l.b16 %v7014
      %v7567 = vunpack.c.l.b16 %v7015
      %v7568 = vunpack.c.l.b16 %v7016
      %v7569 = vunpack.c.l.b16 %v7017
      %v7570 = vunpack.c.l.b16 %v7018
      %v7571 = vunpack.c.l.b16 %v7019
      %v7572 = vunpack.c.l.b16 %v7020
      %v7573 = vunpack.c.l.b16 %v7021
      %v7574 = vunpack.c.l.b16 %v7022
      %v7575 = vunpack.c.l.b16 %v7023
      %v7576 = vunpack.c.l.b16 %v7024
      %v7577 = vunpack.c.l.b16 %v7025
      %v7578 = vunpack.c.l.b16 %v7026
      %v7579 = vunpack.c.l.b16 %v7027
      %v7580 = vpack.c.b16 %v7549, %v7548
      %v7581 = vpack.c.b16 %v7551, %v7550
      %v7582 = vpack.c.b16 %v7553, %v7552
      %v7583 = vpack.c.b16 %v7555, %v7554
      %v7584 = vpack.c.b16 %v7557, %v7556
      %v7585 = vpack.c.b16 %v7559, %v7558
      %v7586 = vpack.c.b16 %v7561, %v7560
      %v7587 = vpack.c.b16 %v7563, %v7562
      %v7588 = vpack.c.b16 %v7565, %v7564
      %v7589 = vpack.c.b16 %v7567, %v7566
      %v7590 = vpack.c.b16 %v7569, %v7568
      %v7591 = vpack.c.b16 %v7571, %v7570
      %v7592 = vpack.c.b16 %v7573, %v7572
      %v7593 = vpack.c.b16 %v7575, %v7574
      %v7594 = vpack.c.b16 %v7577, %v7576
      %v7595 = vpack.c.b16 %v7579, %v7578
      %v7612 = vunpack.c.l.b16 %v7049
      %v7613 = vunpack.c.l.b16 %v7059
      %v7614 = vunpack.c.l.b16 %v7069
      %v7615 = vunpack.c.l.b16 %v7079
      %v7616 = vunpack.c.l.b16 %v7093
      %v7617 = vunpack.c.l.b16 %v7103
      %v7618 = vunpack.c.l.b16 %v7113
      %v7619 = vunpack.c.l.b16 %v7123
      %v7620 = vunpack.c.l.b16 %v7137
      %v7621 = vunpack.c.l.b16 %v7147
      %v7622 = vunpack.c.l.b16 %v7157
      %v7623 = vunpack.c.l.b16 %v7167
      %v7624 = vunpack.c.l.b16 %v7181
      %v7625 = vunpack.c.l.b16 %v7191
      %v7626 = vunpack.c.l.b16 %v7201
      %v7627 = vunpack.c.l.b16 %v7211
      %v7628 = vunpack.c.l.b16 %v7225
      %v7629 = vunpack.c.l.b16 %v7235
      %v7630 = vunpack.c.l.b16 %v7245
      %v7631 = vunpack.c.l.b16 %v7255
      %v7632 = vunpack.c.l.b16 %v7269
      %v7633 = vunpack.c.l.b16 %v7279
      %v7634 = vunpack.c.l.b16 %v7289
      %v7635 = vunpack.c.l.b16 %v7299
      %v7636 = vunpack.c.l.b16 %v7313
      %v7637 = vunpack.c.l.b16 %v7323
      %v7638 = vunpack.c.l.b16 %v7333
      %v7639 = vunpack.c.l.b16 %v7343
      %v7640 = vunpack.c.l.b16 %v7357
      %v7641 = vunpack.c.l.b16 %v7367
      %v7642 = vunpack.c.l.b16 %v7377
      %v7643 = vunpack.c.l.b16 %v7387
      %v7644 = vpack.c.b16 %v7613, %v7612
      %v7645 = vpack.c.b16 %v7615, %v7614
      %v7646 = vpack.c.b16 %v7617, %v7616
      %v7647 = vpack.c.b16 %v7619, %v7618
      %v7648 = vpack.c.b16 %v7621, %v7620
      %v7649 = vpack.c.b16 %v7623, %v7622
      %v7650 = vpack.c.b16 %v7625, %v7624
      %v7651 = vpack.c.b16 %v7627, %v7626
      %v7652 = vpack.c.b16 %v7629, %v7628
      %v7653 = vpack.c.b16 %v7631, %v7630
      %v7654 = vpack.c.b16 %v7633, %v7632
      %v7655 = vpack.c.b16 %v7635, %v7634
      %v7656 = vpack.c.b16 %v7637, %v7636
      %v7657 = vpack.c.b16 %v7639, %v7638
      %v7658 = vpack.c.b16 %v7641, %v7640
      %v7659 = vpack.c.b16 %v7643, %v7642
      %v7676 = vunpack.c.l.b16 %v7439
      %v7677 = vunpack.c.l.b16 %v7442
      %v7678 = vunpack.c.l.b16 %v7445
      %v7679 = vunpack.c.l.b16 %v7448
      %v7680 = vunpack.c.l.b16 %v7452
      %v7681 = vunpack.c.l.b16 %v7455
      %v7682 = vunpack.c.l.b16 %v7458
      %v7683 = vunpack.c.l.b16 %v7461
      %v7684 = vunpack.c.l.b16 %v7465
      %v7685 = vunpack.c.l.b16 %v7468
      %v7686 = vunpack.c.l.b16 %v7471
      %v7687 = vunpack.c.l.b16 %v7474
      %v7688 = vunpack.c.l.b16 %v7478
      %v7689 = vunpack.c.l.b16 %v7481
      %v7690 = vunpack.c.l.b16 %v7484
      %v7691 = vunpack.c.l.b16 %v7487
      %v7692 = vunpack.c.l.b16 %v7491
      %v7693 = vunpack.c.l.b16 %v7494
      %v7694 = vunpack.c.l.b16 %v7497
      %v7695 = vunpack.c.l.b16 %v7500
      %v7696 = vunpack.c.l.b16 %v7504
      %v7697 = vunpack.c.l.b16 %v7507
      %v7698 = vunpack.c.l.b16 %v7510
      %v7699 = vunpack.c.l.b16 %v7513
      %v7700 = vunpack.c.l.b16 %v7517
      %v7701 = vunpack.c.l.b16 %v7520
      %v7702 = vunpack.c.l.b16 %v7523
      %v7703 = vunpack.c.l.b16 %v7526
      %v7704 = vunpack.c.l.b16 %v7530
      %v7705 = vunpack.c.l.b16 %v7533
      %v7706 = vunpack.c.l.b16 %v7536
      %v7707 = vunpack.c.l.b16 %v7539
      %v7708 = vpack.c.b16 %v7677, %v7676
      %v7709 = vpack.c.b16 %v7679, %v7678
      %v7710 = vpack.c.b16 %v7681, %v7680
      %v7711 = vpack.c.b16 %v7683, %v7682
      %v7712 = vpack.c.b16 %v7685, %v7684
      %v7713 = vpack.c.b16 %v7687, %v7686
      %v7714 = vpack.c.b16 %v7689, %v7688
      %v7715 = vpack.c.b16 %v7691, %v7690
      %v7716 = vpack.c.b16 %v7693, %v7692
      %v7717 = vpack.c.b16 %v7695, %v7694
      %v7718 = vpack.c.b16 %v7697, %v7696
      %v7719 = vpack.c.b16 %v7699, %v7698
      %v7720 = vpack.c.b16 %v7701, %v7700
      %v7721 = vpack.c.b16 %v7703, %v7702
      %v7722 = vpack.c.b16 %v7705, %v7704
      %v7723 = vpack.c.b16 %v7707, %v7706
      %v7740 = vld [vmem:[%s3] sm:$0xf]
      %v7741 = vld [vmem:[%s3 + $0x4] sm:$0xf]
      %v7742 = vld [vmem:[%s3 + $0x8] sm:$0xf]
      %v7743 = vld [vmem:[%s3 + $0xc] sm:$0xf]
      %v7744 = vld [vmem:[%s3 + $0x10] sm:$0xf]
      %v7745 = vld [vmem:[%s3 + $0x14] sm:$0xf]
      %v7746 = vld [vmem:[%s3 + $0x18] sm:$0xf]
      %v7747 = vld [vmem:[%s3 + $0x1c] sm:$0xf]
      %v7748 = vld [vmem:[%s3 + $0x20] sm:$0xf]
      %v7749 = vld [vmem:[%s3 + $0x24] sm:$0xf]
      %v7750 = vld [vmem:[%s3 + $0x28] sm:$0xf]
      %v7751 = vld [vmem:[%s3 + $0x2c] sm:$0xf]
      %v7752 = vld [vmem:[%s3 + $0x30] sm:$0xf]
      %v7753 = vld [vmem:[%s3 + $0x34] sm:$0xf]
      %v7754 = vld [vmem:[%s3 + $0x38] sm:$0xf]
      %v7755 = vld [vmem:[%s3 + $0x3c] sm:$0xf]
      %v7756 = vld [vmem:[%s3 + $0x40] sm:$0xf]
      %v7757 = vld [vmem:[%s3 + $0x44] sm:$0xf]
      %v7758 = vld [vmem:[%s3 + $0x48] sm:$0xf]
      %v7759 = vld [vmem:[%s3 + $0x4c] sm:$0xf]
      %v7760 = vld [vmem:[%s3 + $0x50] sm:$0xf]
      %v7761 = vld [vmem:[%s3 + $0x54] sm:$0xf]
      %v7762 = vld [vmem:[%s3 + $0x58] sm:$0xf]
      %v7763 = vld [vmem:[%s3 + $0x5c] sm:$0xf]
      %v7764 = vld [vmem:[%s3 + $0x60] sm:$0xf]
      %v7765 = vld [vmem:[%s3 + $0x64] sm:$0xf]
      %v7766 = vld [vmem:[%s3 + $0x68] sm:$0xf]
      %v7767 = vld [vmem:[%s3 + $0x6c] sm:$0xf]
      %v7768 = vld [vmem:[%s3 + $0x70] sm:$0xf]
      %v7769 = vld [vmem:[%s3 + $0x74] sm:$0xf]
      %v7770 = vld [vmem:[%s3 + $0x78] sm:$0xf]
      %v7771 = vld [vmem:[%s3 + $0x7c] sm:$0xf]
      %v7772 = vld [vmem:[%s3 + $0x80] sm:$0xf]
      %v7773 = vld [vmem:[%s3 + $0x84] sm:$0xf]
      %v7774 = vld [vmem:[%s3 + $0x88] sm:$0xf]
      %v7775 = vld [vmem:[%s3 + $0x8c] sm:$0xf]
      %v7776 = vld [vmem:[%s3 + $0x90] sm:$0xf]
      %v7777 = vld [vmem:[%s3 + $0x94] sm:$0xf]
      %v7778 = vld [vmem:[%s3 + $0x98] sm:$0xf]
      %v7779 = vld [vmem:[%s3 + $0x9c] sm:$0xf]
      %v7780 = vld [vmem:[%s3 + $0xa0] sm:$0xf]
      %v7781 = vld [vmem:[%s3 + $0xa4] sm:$0xf]
      %v7782 = vld [vmem:[%s3 + $0xa8] sm:$0xf]
      %v7783 = vld [vmem:[%s3 + $0xac] sm:$0xf]
      %v7784 = vld [vmem:[%s3 + $0xb0] sm:$0xf]
      %v7785 = vld [vmem:[%s3 + $0xb4] sm:$0xf]
      %v7786 = vld [vmem:[%s3 + $0xb8] sm:$0xf]
      %v7787 = vld [vmem:[%s3 + $0xbc] sm:$0xf]
      %v7788 = vld [vmem:[%s4671] sm:$0xf]
      %v7789 = vld [vmem:[%s4671 + $0x4] sm:$0xf]
      %v7790 = vld [vmem:[%s4671 + $0x8] sm:$0xf]
      %v7791 = vld [vmem:[%s4671 + $0xc] sm:$0xf]
      %v7792 = vld [vmem:[%s4671 + $0x14] sm:$0xf]
      %v7793 = vld [vmem:[%s4671 + $0x18] sm:$0xf]
      %v7794 = vld [vmem:[%s4671 + $0x1c] sm:$0xf]
      %v7795 = vld [vmem:[%s4671 + $0x20] sm:$0xf]
      %v7796 = vld [vmem:[%s4671 + $0x28] sm:$0xf]
      %v7797 = vld [vmem:[%s4671 + $0x2c] sm:$0xf]
      %v7798 = vld [vmem:[%s4671 + $0x30] sm:$0xf]
      %v7799 = vld [vmem:[%s4671 + $0x34] sm:$0xf]
      %v7800 = vld [vmem:[%s4671 + $0x3c] sm:$0xf]
      %v7801 = vld [vmem:[%s4671 + $0x40] sm:$0xf]
      %v7802 = vld [vmem:[%s4671 + $0x44] sm:$0xf]
      %v7803 = vld [vmem:[%s4671 + $0x48] sm:$0xf]
      %v7804 = vld [vmem:[%s4671 + $0x50] sm:$0xf]
      %v7805 = vld [vmem:[%s4671 + $0x54] sm:$0xf]
      %v7806 = vld [vmem:[%s4671 + $0x58] sm:$0xf]
      %v7807 = vld [vmem:[%s4671 + $0x5c] sm:$0xf]
      %v7808 = vld [vmem:[%s4671 + $0x64] sm:$0xf]
      %v7809 = vld [vmem:[%s4671 + $0x68] sm:$0xf]
      %v7810 = vld [vmem:[%s4671 + $0x6c] sm:$0xf]
      %v7811 = vld [vmem:[%s4671 + $0x70] sm:$0xf]
      %v7812 = vld [vmem:[%s4671 + $0x78] sm:$0xf]
      %v7813 = vld [vmem:[%s4671 + $0x7c] sm:$0xf]
      %v7814 = vld [vmem:[%s4671 + $0x80] sm:$0xf]
      %v7815 = vld [vmem:[%s4671 + $0x84] sm:$0xf]
      %v7816 = vld [vmem:[%s4671 + $0x8c] sm:$0xf]
      %v7817 = vld [vmem:[%s4671 + $0x90] sm:$0xf]
      %v7818 = vld [vmem:[%s4671 + $0x94] sm:$0xf]
      %v7819 = vld [vmem:[%s4671 + $0x98] sm:$0xf]
      %v7820 = vld [vmem:[%s4671 + $0x10] sm:$0x1]
      %v7821 = vld [vmem:[%s4671 + $0x24] sm:$0x1]
      %v7822 = vld [vmem:[%s4671 + $0x38] sm:$0x1]
      %v7823 = vld [vmem:[%s4671 + $0x4c] sm:$0x1]
      %v7824 = vld [vmem:[%s4671 + $0x60] sm:$0x1]
      %v7825 = vld [vmem:[%s4671 + $0x74] sm:$0x1]
      %v7826 = vld [vmem:[%s4671 + $0x88] sm:$0x1]
      %v7827 = vld [vmem:[%s4671 + $0x9c] sm:$0x1]
      %v7829 = vshrl.u32 %v7788, 16
      %v7831 = vrot.slane %v7829, 4
      %v7832 = vshll.u32 %v7788, 16
      %v7834 = vrot.slane %v7832, 5
      %v7835 = vor.u32 %v7831, %v7834
      %v7836 = vrot.slane %v7835, 4
      %v7838 = vshll.u32 %v7789, 16
      %v7840 = vrot.slane %v7838, 5
      %v7841 = vsel %vm401, %v7836, %v7840
      %v7842 = vshrl.u32 %v7789, 16
      %v7844 = vrot.slane %v7842, 4
      %v7845 = vor.u32 %v7844, %v7840
      %v7846 = vrot.slane %v7845, 4
      %v7848 = vshll.u32 %v7790, 16
      %v7850 = vrot.slane %v7848, 5
      %v7851 = vsel %vm401, %v7846, %v7850
      %v7852 = vshrl.u32 %v7790, 16
      %v7854 = vrot.slane %v7852, 4
      %v7855 = vor.u32 %v7854, %v7850
      %v7856 = vrot.slane %v7855, 4
      %v7858 = vshll.u32 %v7791, 16
      %v7860 = vrot.slane %v7858, 5
      %v7861 = vsel %vm401, %v7856, %v7860
      %v7862 = vshrl.u32 %v7791, 16
      %v7864 = vrot.slane %v7862, 4
      %v7865 = vor.u32 %v7864, %v7860
      %v7866 = vrot.slane %v7865, 4
      %v7868 = vshll.u32 %v7820, 16
      %v7870 = vrot.slane %v7868, 5
      %v7871 = vsel %vm401, %v7866, %v7870
      %v7873 = vshrl.u32 %v7792, 16
      %v7875 = vrot.slane %v7873, 4
      %v7876 = vshll.u32 %v7792, 16
      %v7878 = vrot.slane %v7876, 5
      %v7879 = vor.u32 %v7875, %v7878
      %v7880 = vrot.slane %v7879, 4
      %v7882 = vshll.u32 %v7793, 16
      %v7884 = vrot.slane %v7882, 5
      %v7885 = vsel %vm401, %v7880, %v7884
      %v7886 = vshrl.u32 %v7793, 16
      %v7888 = vrot.slane %v7886, 4
      %v7889 = vor.u32 %v7888, %v7884
      %v7890 = vrot.slane %v7889, 4
      %v7892 = vshll.u32 %v7794, 16
      %v7894 = vrot.slane %v7892, 5
      %v7895 = vsel %vm401, %v7890, %v7894
      %v7896 = vshrl.u32 %v7794, 16
      %v7898 = vrot.slane %v7896, 4
      %v7899 = vor.u32 %v7898, %v7894
      %v7900 = vrot.slane %v7899, 4
      %v7902 = vshll.u32 %v7795, 16
      %v7904 = vrot.slane %v7902, 5
      %v7905 = vsel %vm401, %v7900, %v7904
      %v7906 = vshrl.u32 %v7795, 16
      %v7908 = vrot.slane %v7906, 4
      %v7909 = vor.u32 %v7908, %v7904
      %v7910 = vrot.slane %v7909, 4
      %v7912 = vshll.u32 %v7821, 16
      %v7914 = vrot.slane %v7912, 5
      %v7915 = vsel %vm401, %v7910, %v7914
      %v7917 = vshrl.u32 %v7796, 16
      %v7919 = vrot.slane %v7917, 4
      %v7920 = vshll.u32 %v7796, 16
      %v7922 = vrot.slane %v7920, 5
      %v7923 = vor.u32 %v7919, %v7922
      %v7924 = vrot.slane %v7923, 4
      %v7926 = vshll.u32 %v7797, 16
      %v7928 = vrot.slane %v7926, 5
      %v7929 = vsel %vm401, %v7924, %v7928
      %v7930 = vshrl.u32 %v7797, 16
      %v7932 = vrot.slane %v7930, 4
      %v7933 = vor.u32 %v7932, %v7928
      %v7934 = vrot.slane %v7933, 4
      %v7936 = vshll.u32 %v7798, 16
      %v7938 = vrot.slane %v7936, 5
      %v7939 = vsel %vm401, %v7934, %v7938
      %v7940 = vshrl.u32 %v7798, 16
      %v7942 = vrot.slane %v7940, 4
      %v7943 = vor.u32 %v7942, %v7938
      %v7944 = vrot.slane %v7943, 4
      %v7946 = vshll.u32 %v7799, 16
      %v7948 = vrot.slane %v7946, 5
      %v7949 = vsel %vm401, %v7944, %v7948
      %v7950 = vshrl.u32 %v7799, 16
      %v7952 = vrot.slane %v7950, 4
      %v7953 = vor.u32 %v7952, %v7948
      %v7954 = vrot.slane %v7953, 4
      %v7956 = vshll.u32 %v7822, 16
      %v7958 = vrot.slane %v7956, 5
      %v7959 = vsel %vm401, %v7954, %v7958
      %v7961 = vshrl.u32 %v7800, 16
      %v7963 = vrot.slane %v7961, 4
      %v7964 = vshll.u32 %v7800, 16
      %v7966 = vrot.slane %v7964, 5
      %v7967 = vor.u32 %v7963, %v7966
      %v7968 = vrot.slane %v7967, 4
      %v7970 = vshll.u32 %v7801, 16
      %v7972 = vrot.slane %v7970, 5
      %v7973 = vsel %vm401, %v7968, %v7972
      %v7974 = vshrl.u32 %v7801, 16
      %v7976 = vrot.slane %v7974, 4
      %v7977 = vor.u32 %v7976, %v7972
      %v7978 = vrot.slane %v7977, 4
      %v7980 = vshll.u32 %v7802, 16
      %v7982 = vrot.slane %v7980, 5
      %v7983 = vsel %vm401, %v7978, %v7982
      %v7984 = vshrl.u32 %v7802, 16
      %v7986 = vrot.slane %v7984, 4
      %v7987 = vor.u32 %v7986, %v7982
      %v7988 = vrot.slane %v7987, 4
      %v7990 = vshll.u32 %v7803, 16
      %v7992 = vrot.slane %v7990, 5
      %v7993 = vsel %vm401, %v7988, %v7992
      %v7994 = vshrl.u32 %v7803, 16
      %v7996 = vrot.slane %v7994, 4
      %v7997 = vor.u32 %v7996, %v7992
      %v7998 = vrot.slane %v7997, 4
      %v8000 = vshll.u32 %v7823, 16
      %v8002 = vrot.slane %v8000, 5
      %v8003 = vsel %vm401, %v7998, %v8002
      %v8005 = vshrl.u32 %v7804, 16
      %v8007 = vrot.slane %v8005, 4
      %v8008 = vshll.u32 %v7804, 16
      %v8010 = vrot.slane %v8008, 5
      %v8011 = vor.u32 %v8007, %v8010
      %v8012 = vrot.slane %v8011, 4
      %v8014 = vshll.u32 %v7805, 16
      %v8016 = vrot.slane %v8014, 5
      %v8017 = vsel %vm401, %v8012, %v8016
      %v8018 = vshrl.u32 %v7805, 16
      %v8020 = vrot.slane %v8018, 4
      %v8021 = vor.u32 %v8020, %v8016
      %v8022 = vrot.slane %v8021, 4
      %v8024 = vshll.u32 %v7806, 16
      %v8026 = vrot.slane %v8024, 5
      %v8027 = vsel %vm401, %v8022, %v8026
      %v8028 = vshrl.u32 %v7806, 16
      %v8030 = vrot.slane %v8028, 4
      %v8031 = vor.u32 %v8030, %v8026
      %v8032 = vrot.slane %v8031, 4
      %v8034 = vshll.u32 %v7807, 16
      %v8036 = vrot.slane %v8034, 5
      %v8037 = vsel %vm401, %v8032, %v8036
      %v8038 = vshrl.u32 %v7807, 16
      %v8040 = vrot.slane %v8038, 4
      %v8041 = vor.u32 %v8040, %v8036
      %v8042 = vrot.slane %v8041, 4
      %v8044 = vshll.u32 %v7824, 16
      %v8046 = vrot.slane %v8044, 5
      %v8047 = vsel %vm401, %v8042, %v8046
      %v8049 = vshrl.u32 %v7808, 16
      %v8051 = vrot.slane %v8049, 4
      %v8052 = vshll.u32 %v7808, 16
      %v8054 = vrot.slane %v8052, 5
      %v8055 = vor.u32 %v8051, %v8054
      %v8056 = vrot.slane %v8055, 4
      %v8058 = vshll.u32 %v7809, 16
      %v8060 = vrot.slane %v8058, 5
      %v8061 = vsel %vm401, %v8056, %v8060
      %v8062 = vshrl.u32 %v7809, 16
      %v8064 = vrot.slane %v8062, 4
      %v8065 = vor.u32 %v8064, %v8060
      %v8066 = vrot.slane %v8065, 4
      %v8068 = vshll.u32 %v7810, 16
      %v8070 = vrot.slane %v8068, 5
      %v8071 = vsel %vm401, %v8066, %v8070
      %v8072 = vshrl.u32 %v7810, 16
      %v8074 = vrot.slane %v8072, 4
      %v8075 = vor.u32 %v8074, %v8070
      %v8076 = vrot.slane %v8075, 4
      %v8078 = vshll.u32 %v7811, 16
      %v8080 = vrot.slane %v8078, 5
      %v8081 = vsel %vm401, %v8076, %v8080
      %v8082 = vshrl.u32 %v7811, 16
      %v8084 = vrot.slane %v8082, 4
      %v8085 = vor.u32 %v8084, %v8080
      %v8086 = vrot.slane %v8085, 4
      %v8088 = vshll.u32 %v7825, 16
      %v8090 = vrot.slane %v8088, 5
      %v8091 = vsel %vm401, %v8086, %v8090
      %v8093 = vshrl.u32 %v7812, 16
      %v8095 = vrot.slane %v8093, 4
      %v8096 = vshll.u32 %v7812, 16
      %v8098 = vrot.slane %v8096, 5
      %v8099 = vor.u32 %v8095, %v8098
      %v8100 = vrot.slane %v8099, 4
      %v8102 = vshll.u32 %v7813, 16
      %v8104 = vrot.slane %v8102, 5
      %v8105 = vsel %vm401, %v8100, %v8104
      %v8106 = vshrl.u32 %v7813, 16
      %v8108 = vrot.slane %v8106, 4
      %v8109 = vor.u32 %v8108, %v8104
      %v8110 = vrot.slane %v8109, 4
      %v8112 = vshll.u32 %v7814, 16
      %v8114 = vrot.slane %v8112, 5
      %v8115 = vsel %vm401, %v8110, %v8114
      %v8116 = vshrl.u32 %v7814, 16
      %v8118 = vrot.slane %v8116, 4
      %v8119 = vor.u32 %v8118, %v8114
      %v8120 = vrot.slane %v8119, 4
      %v8122 = vshll.u32 %v7815, 16
      %v8124 = vrot.slane %v8122, 5
      %v8125 = vsel %vm401, %v8120, %v8124
      %v8126 = vshrl.u32 %v7815, 16
      %v8128 = vrot.slane %v8126, 4
      %v8129 = vor.u32 %v8128, %v8124
      %v8130 = vrot.slane %v8129, 4
      %v8132 = vshll.u32 %v7826, 16
      %v8134 = vrot.slane %v8132, 5
      %v8135 = vsel %vm401, %v8130, %v8134
      %v8137 = vshrl.u32 %v7816, 16
      %v8139 = vrot.slane %v8137, 4
      %v8140 = vshll.u32 %v7816, 16
      %v8142 = vrot.slane %v8140, 5
      %v8143 = vor.u32 %v8139, %v8142
      %v8144 = vrot.slane %v8143, 4
      %v8146 = vshll.u32 %v7817, 16
      %v8148 = vrot.slane %v8146, 5
      %v8149 = vsel %vm401, %v8144, %v8148
      %v8150 = vshrl.u32 %v7817, 16
      %v8152 = vrot.slane %v8150, 4
      %v8153 = vor.u32 %v8152, %v8148
      %v8154 = vrot.slane %v8153, 4
      %v8156 = vshll.u32 %v7818, 16
      %v8158 = vrot.slane %v8156, 5
      %v8159 = vsel %vm401, %v8154, %v8158
      %v8160 = vshrl.u32 %v7818, 16
      %v8162 = vrot.slane %v8160, 4
      %v8163 = vor.u32 %v8162, %v8158
      %v8164 = vrot.slane %v8163, 4
      %v8166 = vshll.u32 %v7819, 16
      %v8168 = vrot.slane %v8166, 5
      %v8169 = vsel %vm401, %v8164, %v8168
      %v8170 = vshrl.u32 %v7819, 16
      %v8172 = vrot.slane %v8170, 4
      %v8173 = vor.u32 %v8172, %v8168
      %v8174 = vrot.slane %v8173, 4
      %v8176 = vshll.u32 %v7827, 16
      %v8178 = vrot.slane %v8176, 5
      %v8179 = vsel %vm401, %v8174, %v8178
      %v8180 = vld [vmem:[%s4671] sm:$0xe]
      %v8181 = vld [vmem:[%s4671 + $0x14] sm:$0xe]
      %v8182 = vld [vmem:[%s4671 + $0x28] sm:$0xe]
      %v8183 = vld [vmem:[%s4671 + $0x3c] sm:$0xe]
      %v8184 = vld [vmem:[%s4671 + $0x50] sm:$0xe]
      %v8185 = vld [vmem:[%s4671 + $0x64] sm:$0xe]
      %v8186 = vld [vmem:[%s4671 + $0x78] sm:$0xe]
      %v8187 = vld [vmem:[%s4671 + $0x8c] sm:$0xe]
      %v8228 = vrot.slane %v8180, 5
      %v8229 = vrot.slane %v8228, 4
      %v8230 = vrot.slane %v7789, 5
      %v8231 = vsel %vm804, %v8229, %v8230
      %v8232 = vrot.slane %v8230, 4
      %v8233 = vrot.slane %v7790, 5
      %v8234 = vsel %vm804, %v8232, %v8233
      %v8235 = vrot.slane %v8233, 4
      %v8236 = vrot.slane %v7791, 5
      %v8237 = vsel %vm804, %v8235, %v8236
      %v8238 = vrot.slane %v8236, 4
      %v8239 = vrot.slane %v7820, 5
      %v8240 = vsel %vm804, %v8238, %v8239
      %v8241 = vrot.slane %v8181, 5
      %v8242 = vrot.slane %v8241, 4
      %v8243 = vrot.slane %v7793, 5
      %v8244 = vsel %vm804, %v8242, %v8243
      %v8245 = vrot.slane %v8243, 4
      %v8246 = vrot.slane %v7794, 5
      %v8247 = vsel %vm804, %v8245, %v8246
      %v8248 = vrot.slane %v8246, 4
      %v8249 = vrot.slane %v7795, 5
      %v8250 = vsel %vm804, %v8248, %v8249
      %v8251 = vrot.slane %v8249, 4
      %v8252 = vrot.slane %v7821, 5
      %v8253 = vsel %vm804, %v8251, %v8252
      %v8254 = vrot.slane %v8182, 5
      %v8255 = vrot.slane %v8254, 4
      %v8256 = vrot.slane %v7797, 5
      %v8257 = vsel %vm804, %v8255, %v8256
      %v8258 = vrot.slane %v8256, 4
      %v8259 = vrot.slane %v7798, 5
      %v8260 = vsel %vm804, %v8258, %v8259
      %v8261 = vrot.slane %v8259, 4
      %v8262 = vrot.slane %v7799, 5
      %v8263 = vsel %vm804, %v8261, %v8262
      %v8264 = vrot.slane %v8262, 4
      %v8265 = vrot.slane %v7822, 5
      %v8266 = vsel %vm804, %v8264, %v8265
      %v8267 = vrot.slane %v8183, 5
      %v8268 = vrot.slane %v8267, 4
      %v8269 = vrot.slane %v7801, 5
      %v8270 = vsel %vm804, %v8268, %v8269
      %v8271 = vrot.slane %v8269, 4
      %v8272 = vrot.slane %v7802, 5
      %v8273 = vsel %vm804, %v8271, %v8272
      %v8274 = vrot.slane %v8272, 4
      %v8275 = vrot.slane %v7803, 5
      %v8276 = vsel %vm804, %v8274, %v8275
      %v8277 = vrot.slane %v8275, 4
      %v8278 = vrot.slane %v7823, 5
      %v8279 = vsel %vm804, %v8277, %v8278
      %v8280 = vrot.slane %v8184, 5
      %v8281 = vrot.slane %v8280, 4
      %v8282 = vrot.slane %v7805, 5
      %v8283 = vsel %vm804, %v8281, %v8282
      %v8284 = vrot.slane %v8282, 4
      %v8285 = vrot.slane %v7806, 5
      %v8286 = vsel %vm804, %v8284, %v8285
      %v8287 = vrot.slane %v8285, 4
      %v8288 = vrot.slane %v7807, 5
      %v8289 = vsel %vm804, %v8287, %v8288
      %v8290 = vrot.slane %v8288, 4
      %v8291 = vrot.slane %v7824, 5
      %v8292 = vsel %vm804, %v8290, %v8291
      %v8293 = vrot.slane %v8185, 5
      %v8294 = vrot.slane %v8293, 4
      %v8295 = vrot.slane %v7809, 5
      %v8296 = vsel %vm804, %v8294, %v8295
      %v8297 = vrot.slane %v8295, 4
      %v8298 = vrot.slane %v7810, 5
      %v8299 = vsel %vm804, %v8297, %v8298
      %v8300 = vrot.slane %v8298, 4
      %v8301 = vrot.slane %v7811, 5
      %v8302 = vsel %vm804, %v8300, %v8301
      %v8303 = vrot.slane %v8301, 4
      %v8304 = vrot.slane %v7825, 5
      %v8305 = vsel %vm804, %v8303, %v8304
      %v8306 = vrot.slane %v8186, 5
      %v8307 = vrot.slane %v8306, 4
      %v8308 = vrot.slane %v7813, 5
      %v8309 = vsel %vm804, %v8307, %v8308
      %v8310 = vrot.slane %v8308, 4
      %v8311 = vrot.slane %v7814, 5
      %v8312 = vsel %vm804, %v8310, %v8311
      %v8313 = vrot.slane %v8311, 4
      %v8314 = vrot.slane %v7815, 5
      %v8315 = vsel %vm804, %v8313, %v8314
      %v8316 = vrot.slane %v8314, 4
      %v8317 = vrot.slane %v7826, 5
      %v8318 = vsel %vm804, %v8316, %v8317
      %v8319 = vrot.slane %v8187, 5
      %v8320 = vrot.slane %v8319, 4
      %v8321 = vrot.slane %v7817, 5
      %v8322 = vsel %vm804, %v8320, %v8321
      %v8323 = vrot.slane %v8321, 4
      %v8324 = vrot.slane %v7818, 5
      %v8325 = vsel %vm804, %v8323, %v8324
      %v8326 = vrot.slane %v8324, 4
      %v8327 = vrot.slane %v7819, 5
      %v8328 = vsel %vm804, %v8326, %v8327
      %v8329 = vrot.slane %v8327, 4
      %v8330 = vrot.slane %v7827, 5
      %v8331 = vsel %vm804, %v8329, %v8330
      %v8340 = vunpack.c.l.b16 %v7788
      %v8341 = vunpack.c.l.b16 %v7789
      %v8342 = vunpack.c.l.b16 %v7790
      %v8343 = vunpack.c.l.b16 %v7791
      %v8344 = vunpack.c.l.b16 %v7792
      %v8345 = vunpack.c.l.b16 %v7793
      %v8346 = vunpack.c.l.b16 %v7794
      %v8347 = vunpack.c.l.b16 %v7795
      %v8348 = vunpack.c.l.b16 %v7796
      %v8349 = vunpack.c.l.b16 %v7797
      %v8350 = vunpack.c.l.b16 %v7798
      %v8351 = vunpack.c.l.b16 %v7799
      %v8352 = vunpack.c.l.b16 %v7800
      %v8353 = vunpack.c.l.b16 %v7801
      %v8354 = vunpack.c.l.b16 %v7802
      %v8355 = vunpack.c.l.b16 %v7803
      %v8356 = vunpack.c.l.b16 %v7804
      %v8357 = vunpack.c.l.b16 %v7805
      %v8358 = vunpack.c.l.b16 %v7806
      %v8359 = vunpack.c.l.b16 %v7807
      %v8360 = vunpack.c.l.b16 %v7808
      %v8361 = vunpack.c.l.b16 %v7809
      %v8362 = vunpack.c.l.b16 %v7810
      %v8363 = vunpack.c.l.b16 %v7811
      %v8364 = vunpack.c.l.b16 %v7812
      %v8365 = vunpack.c.l.b16 %v7813
      %v8366 = vunpack.c.l.b16 %v7814
      %v8367 = vunpack.c.l.b16 %v7815
      %v8368 = vunpack.c.l.b16 %v7816
      %v8369 = vunpack.c.l.b16 %v7817
      %v8370 = vunpack.c.l.b16 %v7818
      %v8371 = vunpack.c.l.b16 %v7819
      %v8372 = vpack.c.b16 %v8341, %v8340
      %v8373 = vpack.c.b16 %v8343, %v8342
      %v8374 = vpack.c.b16 %v8345, %v8344
      %v8375 = vpack.c.b16 %v8347, %v8346
      %v8376 = vpack.c.b16 %v8349, %v8348
      %v8377 = vpack.c.b16 %v8351, %v8350
      %v8378 = vpack.c.b16 %v8353, %v8352
      %v8379 = vpack.c.b16 %v8355, %v8354
      %v8380 = vpack.c.b16 %v8357, %v8356
      %v8381 = vpack.c.b16 %v8359, %v8358
      %v8382 = vpack.c.b16 %v8361, %v8360
      %v8383 = vpack.c.b16 %v8363, %v8362
      %v8384 = vpack.c.b16 %v8365, %v8364
      %v8385 = vpack.c.b16 %v8367, %v8366
      %v8386 = vpack.c.b16 %v8369, %v8368
      %v8387 = vpack.c.b16 %v8371, %v8370
      %v8404 = vunpack.c.l.b16 %v7841
      %v8405 = vunpack.c.l.b16 %v7851
      %v8406 = vunpack.c.l.b16 %v7861
      %v8407 = vunpack.c.l.b16 %v7871
      %v8408 = vunpack.c.l.b16 %v7885
      %v8409 = vunpack.c.l.b16 %v7895
      %v8410 = vunpack.c.l.b16 %v7905
      %v8411 = vunpack.c.l.b16 %v7915
      %v8412 = vunpack.c.l.b16 %v7929
      %v8413 = vunpack.c.l.b16 %v7939
      %v8414 = vunpack.c.l.b16 %v7949
      %v8415 = vunpack.c.l.b16 %v7959
      %v8416 = vunpack.c.l.b16 %v7973
      %v8417 = vunpack.c.l.b16 %v7983
      %v8418 = vunpack.c.l.b16 %v7993
      %v8419 = vunpack.c.l.b16 %v8003
      %v8420 = vunpack.c.l.b16 %v8017
      %v8421 = vunpack.c.l.b16 %v8027
      %v8422 = vunpack.c.l.b16 %v8037
      %v8423 = vunpack.c.l.b16 %v8047
      %v8424 = vunpack.c.l.b16 %v8061
      %v8425 = vunpack.c.l.b16 %v8071
      %v8426 = vunpack.c.l.b16 %v8081
      %v8427 = vunpack.c.l.b16 %v8091
      %v8428 = vunpack.c.l.b16 %v8105
      %v8429 = vunpack.c.l.b16 %v8115
      %v8430 = vunpack.c.l.b16 %v8125
      %v8431 = vunpack.c.l.b16 %v8135
      %v8432 = vunpack.c.l.b16 %v8149
      %v8433 = vunpack.c.l.b16 %v8159
      %v8434 = vunpack.c.l.b16 %v8169
      %v8435 = vunpack.c.l.b16 %v8179
      %v8436 = vpack.c.b16 %v8405, %v8404
      %v8437 = vpack.c.b16 %v8407, %v8406
      %v8438 = vpack.c.b16 %v8409, %v8408
      %v8439 = vpack.c.b16 %v8411, %v8410
      %v8440 = vpack.c.b16 %v8413, %v8412
      %v8441 = vpack.c.b16 %v8415, %v8414
      %v8442 = vpack.c.b16 %v8417, %v8416
      %v8443 = vpack.c.b16 %v8419, %v8418
      %v8444 = vpack.c.b16 %v8421, %v8420
      %v8445 = vpack.c.b16 %v8423, %v8422
      %v8446 = vpack.c.b16 %v8425, %v8424
      %v8447 = vpack.c.b16 %v8427, %v8426
      %v8448 = vpack.c.b16 %v8429, %v8428
      %v8449 = vpack.c.b16 %v8431, %v8430
      %v8450 = vpack.c.b16 %v8433, %v8432
      %v8451 = vpack.c.b16 %v8435, %v8434
      %v8468 = vunpack.c.l.b16 %v8231
      %v8469 = vunpack.c.l.b16 %v8234
      %v8470 = vunpack.c.l.b16 %v8237
      %v8471 = vunpack.c.l.b16 %v8240
      %v8472 = vunpack.c.l.b16 %v8244
      %v8473 = vunpack.c.l.b16 %v8247
      %v8474 = vunpack.c.l.b16 %v8250
      %v8475 = vunpack.c.l.b16 %v8253
      %v8476 = vunpack.c.l.b16 %v8257
      %v8477 = vunpack.c.l.b16 %v8260
      %v8478 = vunpack.c.l.b16 %v8263
      %v8479 = vunpack.c.l.b16 %v8266
      %v8480 = vunpack.c.l.b16 %v8270
      %v8481 = vunpack.c.l.b16 %v8273
      %v8482 = vunpack.c.l.b16 %v8276
      %v8483 = vunpack.c.l.b16 %v8279
      %v8484 = vunpack.c.l.b16 %v8283
      %v8485 = vunpack.c.l.b16 %v8286
      %v8486 = vunpack.c.l.b16 %v8289
      %v8487 = vunpack.c.l.b16 %v8292
      %v8488 = vunpack.c.l.b16 %v8296
      %v8489 = vunpack.c.l.b16 %v8299
      %v8490 = vunpack.c.l.b16 %v8302
      %v8491 = vunpack.c.l.b16 %v8305
      %v8492 = vunpack.c.l.b16 %v8309
      %v8493 = vunpack.c.l.b16 %v8312
      %v8494 = vunpack.c.l.b16 %v8315
      %v8495 = vunpack.c.l.b16 %v8318
      %v8496 = vunpack.c.l.b16 %v8322
      %v8497 = vunpack.c.l.b16 %v8325
      %v8498 = vunpack.c.l.b16 %v8328
      %v8499 = vunpack.c.l.b16 %v8331
      %v8500 = vpack.c.b16 %v8469, %v8468
      %v8501 = vpack.c.b16 %v8471, %v8470
      %v8502 = vpack.c.b16 %v8473, %v8472
      %v8503 = vpack.c.b16 %v8475, %v8474
      %v8504 = vpack.c.b16 %v8477, %v8476
      %v8505 = vpack.c.b16 %v8479, %v8478
      %v8506 = vpack.c.b16 %v8481, %v8480
      %v8507 = vpack.c.b16 %v8483, %v8482
      %v8508 = vpack.c.b16 %v8485, %v8484
      %v8509 = vpack.c.b16 %v8487, %v8486
      %v8510 = vpack.c.b16 %v8489, %v8488
      %v8511 = vpack.c.b16 %v8491, %v8490
      %v8512 = vpack.c.b16 %v8493, %v8492
      %v8513 = vpack.c.b16 %v8495, %v8494
      %v8514 = vpack.c.b16 %v8497, %v8496
      %v8515 = vpack.c.b16 %v8499, %v8498
      %s8532 = scalar_lea.vmem %s3, 192
      %v8533 = vld [vmem:[%s8532] sm:$0xf]
      %v8534 = vld [vmem:[%s8532 + $0x4] sm:$0xf]
      %v8535 = vld [vmem:[%s8532 + $0x8] sm:$0xf]
      %v8536 = vld [vmem:[%s8532 + $0xc] sm:$0xf]
      %v8537 = vld [vmem:[%s8532 + $0x10] sm:$0xf]
      %v8538 = vld [vmem:[%s8532 + $0x14] sm:$0xf]
      %v8539 = vld [vmem:[%s8532 + $0x18] sm:$0xf]
      %v8540 = vld [vmem:[%s8532 + $0x1c] sm:$0xf]
      %v8541 = vld [vmem:[%s8532 + $0x20] sm:$0xf]
      %v8542 = vld [vmem:[%s8532 + $0x24] sm:$0xf]
      %v8543 = vld [vmem:[%s8532 + $0x28] sm:$0xf]
      %v8544 = vld [vmem:[%s8532 + $0x2c] sm:$0xf]
      %v8545 = vld [vmem:[%s8532 + $0x30] sm:$0xf]
      %v8546 = vld [vmem:[%s8532 + $0x34] sm:$0xf]
      %v8547 = vld [vmem:[%s8532 + $0x38] sm:$0xf]
      %v8548 = vld [vmem:[%s8532 + $0x3c] sm:$0xf]
      %v8549 = vld [vmem:[%s8532 + $0x40] sm:$0xf]
      %v8550 = vld [vmem:[%s8532 + $0x44] sm:$0xf]
      %v8551 = vld [vmem:[%s8532 + $0x48] sm:$0xf]
      %v8552 = vld [vmem:[%s8532 + $0x4c] sm:$0xf]
      %v8553 = vld [vmem:[%s8532 + $0x50] sm:$0xf]
      %v8554 = vld [vmem:[%s8532 + $0x54] sm:$0xf]
      %v8555 = vld [vmem:[%s8532 + $0x58] sm:$0xf]
      %v8556 = vld [vmem:[%s8532 + $0x5c] sm:$0xf]
      %v8557 = vld [vmem:[%s8532 + $0x60] sm:$0xf]
      %v8558 = vld [vmem:[%s8532 + $0x64] sm:$0xf]
      %v8559 = vld [vmem:[%s8532 + $0x68] sm:$0xf]
      %v8560 = vld [vmem:[%s8532 + $0x6c] sm:$0xf]
      %v8561 = vld [vmem:[%s8532 + $0x70] sm:$0xf]
      %v8562 = vld [vmem:[%s8532 + $0x74] sm:$0xf]
      %v8563 = vld [vmem:[%s8532 + $0x78] sm:$0xf]
      %v8564 = vld [vmem:[%s8532 + $0x7c] sm:$0xf]
      %v8565 = vld [vmem:[%s8532 + $0x80] sm:$0xf]
      %v8566 = vld [vmem:[%s8532 + $0x84] sm:$0xf]
      %v8567 = vld [vmem:[%s8532 + $0x88] sm:$0xf]
      %v8568 = vld [vmem:[%s8532 + $0x8c] sm:$0xf]
      %v8569 = vld [vmem:[%s8532 + $0x90] sm:$0xf]
      %v8570 = vld [vmem:[%s8532 + $0x94] sm:$0xf]
      %v8571 = vld [vmem:[%s8532 + $0x98] sm:$0xf]
      %v8572 = vld [vmem:[%s8532 + $0x9c] sm:$0xf]
      %v8573 = vld [vmem:[%s8532 + $0xa0] sm:$0xf]
      %v8574 = vld [vmem:[%s8532 + $0xa4] sm:$0xf]
      %v8575 = vld [vmem:[%s8532 + $0xa8] sm:$0xf]
      %v8576 = vld [vmem:[%s8532 + $0xac] sm:$0xf]
      %v8577 = vld [vmem:[%s8532 + $0xb0] sm:$0xf]
      %v8578 = vld [vmem:[%s8532 + $0xb4] sm:$0xf]
      %v8579 = vld [vmem:[%s8532 + $0xb8] sm:$0xf]
      %v8580 = vld [vmem:[%s8532 + $0xbc] sm:$0xf]
      %v8629 = vunpack.c.l.b16 %v8533
      %v8630 = vunpack.c.l.b16 %v8534
      %v8631 = vunpack.c.l.b16 %v8535
      %v8632 = vunpack.c.l.b16 %v8536
      %v8633 = vunpack.c.l.b16 %v8537
      %v8634 = vunpack.c.l.b16 %v8538
      %v8635 = vunpack.c.l.b16 %v8539
      %v8636 = vunpack.c.l.b16 %v8540
      %v8637 = vunpack.c.l.b16 %v8541
      %v8638 = vunpack.c.l.b16 %v8542
      %v8639 = vunpack.c.l.b16 %v8543
      %v8640 = vunpack.c.l.b16 %v8544
      %v8641 = vunpack.c.l.b16 %v8545
      %v8642 = vunpack.c.l.b16 %v8546
      %v8643 = vunpack.c.l.b16 %v8547
      %v8644 = vunpack.c.l.b16 %v8548
      %v8645 = vunpack.c.l.b16 %v8549
      %v8646 = vunpack.c.l.b16 %v8550
      %v8647 = vunpack.c.l.b16 %v8551
      %v8648 = vunpack.c.l.b16 %v8552
      %v8649 = vunpack.c.l.b16 %v8553
      %v8650 = vunpack.c.l.b16 %v8554
      %v8651 = vunpack.c.l.b16 %v8555
      %v8652 = vunpack.c.l.b16 %v8556
      %v8653 = vunpack.c.l.b16 %v8557
      %v8654 = vunpack.c.l.b16 %v8558
      %v8655 = vunpack.c.l.b16 %v8559
      %v8656 = vunpack.c.l.b16 %v8560
      %v8657 = vunpack.c.l.b16 %v8561
      %v8658 = vunpack.c.l.b16 %v8562
      %v8659 = vunpack.c.l.b16 %v8563
      %v8660 = vunpack.c.l.b16 %v8564
      %v8661 = vunpack.c.l.b16 %v8565
      %v8662 = vunpack.c.l.b16 %v8566
      %v8663 = vunpack.c.l.b16 %v8567
      %v8664 = vunpack.c.l.b16 %v8568
      %v8665 = vunpack.c.l.b16 %v8569
      %v8666 = vunpack.c.l.b16 %v8570
      %v8667 = vunpack.c.l.b16 %v8571
      %v8668 = vunpack.c.l.b16 %v8572
      %v8669 = vunpack.c.l.b16 %v8573
      %v8670 = vunpack.c.l.b16 %v8574
      %v8671 = vunpack.c.l.b16 %v8575
      %v8672 = vunpack.c.l.b16 %v8576
      %v8673 = vunpack.c.l.b16 %v8577
      %v8674 = vunpack.c.l.b16 %v8578
      %v8675 = vunpack.c.l.b16 %v8579
      %v8676 = vunpack.c.l.b16 %v8580
      %v8677 = vpack.c.b16 %v8630, %v8629
      %v8678 = vpack.c.b16 %v8632, %v8631
      %v8679 = vpack.c.b16 %v8634, %v8633
      %v8680 = vpack.c.b16 %v8636, %v8635
      %v8681 = vpack.c.b16 %v8638, %v8637
      %v8682 = vpack.c.b16 %v8640, %v8639
      %v8683 = vpack.c.b16 %v8642, %v8641
      %v8684 = vpack.c.b16 %v8644, %v8643
      %v8685 = vpack.c.b16 %v8646, %v8645
      %v8686 = vpack.c.b16 %v8648, %v8647
      %v8687 = vpack.c.b16 %v8650, %v8649
      %v8688 = vpack.c.b16 %v8652, %v8651
      %v8689 = vpack.c.b16 %v8654, %v8653
      %v8690 = vpack.c.b16 %v8656, %v8655
      %v8691 = vpack.c.b16 %v8658, %v8657
      %v8692 = vpack.c.b16 %v8660, %v8659
      %v8693 = vpack.c.b16 %v8662, %v8661
      %v8694 = vpack.c.b16 %v8664, %v8663
      %v8695 = vpack.c.b16 %v8666, %v8665
      %v8696 = vpack.c.b16 %v8668, %v8667
      %v8697 = vpack.c.b16 %v8670, %v8669
      %v8698 = vpack.c.b16 %v8672, %v8671
      %v8699 = vpack.c.b16 %v8674, %v8673
      %v8700 = vpack.c.b16 %v8676, %v8675
      %8725 = vmatprep.subr.bf16.mxu0 0
      %8726 = vmatpush1.bf16.msra.mxu0 %v8684
      %8727 = vmatprep.subr.bf16.mxu0 0
      %8728 = vmatpush1.bf16.msra.mxu0 %v8683
      %8729 = vmatprep.subr.bf16.mxu0 0
      %8730 = vmatpush1.bf16.msra.mxu0 %v8682
      %8731 = vmatprep.subr.bf16.mxu0 0
      %8732 = vmatpush1.bf16.msra.mxu0 %v8681
      %8733 = vmatprep.subr.bf16.mxu0 0
      %8734 = vmatpush1.bf16.msra.mxu0 %v8680
      %8735 = vmatprep.subr.bf16.mxu0 0
      %8736 = vmatpush1.bf16.msra.mxu0 %v8679
      %8737 = vmatprep.subr.bf16.mxu0 0
      %8738 = vmatpush1.bf16.msra.mxu0 %v8678
      %8739 = vmatprep.subr.bf16.mxu0 0
      %8740 = vmatpush1.bf16.msra.mxu0 %v8677
      %8741 = vmatprep.subr.bf16.mxu0 0
      %8742 = vmatpush2.bf16.msra.mxu0 %v8692
      %8743 = vmatprep.subr.bf16.mxu0 0
      %8744 = vmatpush2.bf16.msra.mxu0 %v8691
      %8745 = vmatprep.subr.bf16.mxu0 0
      %8746 = vmatpush2.bf16.msra.mxu0 %v8690
      %8747 = vmatprep.subr.bf16.mxu0 0
      %8748 = vmatpush2.bf16.msra.mxu0 %v8689
      %8749 = vmatprep.subr.bf16.mxu0 0
      %8750 = vmatpush2.bf16.msra.mxu0 %v8688
      %8751 = vmatprep.subr.bf16.mxu0 0
      %8752 = vmatpush2.bf16.msra.mxu0 %v8687
      %8753 = vmatprep.subr.bf16.mxu0 0
      %8754 = vmatpush2.bf16.msra.mxu0 %v8686
      %8755 = vmatprep.subr.bf16.mxu0 0
      %8756 = vmatpush2.bf16.msra.mxu0 %v8685
      %8757 = vmatprep.mubr.bf16.mxu0 %v8436
      %8758 = vmatmul.mubr.bf16.gmra.mxu0 %v8372
      %v8759 = vpop.f32.mrf.mxu0
      %v8760 = vadd.f32 0.0, %v8759
      %v8761 = vpop.f32.mrf.mxu0
      %v8762 = vpop.f32.mrf.mxu0
      %v8763 = vadd.f32 0.0, %v8762
      %v8764 = vpop.f32.mrf.mxu0
      %8765 = vmatprep.mubr.bf16.mxu0 %v8437
      %8766 = vmatmul.mubr.bf16.gmra.mxu0 %v8373
      %v8767 = vpop.f32.mrf.mxu0
      %v8768 = vadd.f32 0.0, %v8767
      %v8769 = vpop.f32.mrf.mxu0
      %v8770 = vpop.f32.mrf.mxu0
      %v8771 = vadd.f32 0.0, %v8770
      %v8772 = vpop.f32.mrf.mxu0
      %8773 = vmatprep.mubr.bf16.mxu0 %v8438
      %8774 = vmatmul.mubr.bf16.gmra.mxu0 %v8374
      %v8775 = vpop.f32.mrf.mxu0
      %v8776 = vadd.f32 0.0, %v8775
      %v8777 = vpop.f32.mrf.mxu0
      %v8778 = vpop.f32.mrf.mxu0
      %v8779 = vadd.f32 0.0, %v8778
      %v8780 = vpop.f32.mrf.mxu0
      %8781 = vmatprep.mubr.bf16.mxu0 %v8439
      %8782 = vmatmul.mubr.bf16.gmra.mxu0 %v8375
      %v8783 = vpop.f32.mrf.mxu0
      %v8784 = vadd.f32 0.0, %v8783
      %v8785 = vpop.f32.mrf.mxu0
      %v8786 = vpop.f32.mrf.mxu0
      %v8787 = vadd.f32 0.0, %v8786
      %v8788 = vpop.f32.mrf.mxu0
      %8789 = vmatprep.mubr.bf16.mxu0 %v8440
      %8790 = vmatmul.mubr.bf16.gmra.mxu0 %v8376
      %v8791 = vpop.f32.mrf.mxu0
      %v8792 = vadd.f32 0.0, %v8791
      %v8793 = vpop.f32.mrf.mxu0
      %v8794 = vpop.f32.mrf.mxu0
      %v8795 = vadd.f32 0.0, %v8794
      %v8796 = vpop.f32.mrf.mxu0
      %8797 = vmatprep.mubr.bf16.mxu0 %v8441
      %8798 = vmatmul.mubr.bf16.gmra.mxu0 %v8377
      %v8799 = vpop.f32.mrf.mxu0
      %v8800 = vadd.f32 0.0, %v8799
      %v8801 = vpop.f32.mrf.mxu0
      %v8802 = vpop.f32.mrf.mxu0
      %v8803 = vadd.f32 0.0, %v8802
      %v8804 = vpop.f32.mrf.mxu0
      %8805 = vmatprep.mubr.bf16.mxu0 %v8442
      %8806 = vmatmul.mubr.bf16.gmra.mxu0 %v8378
      %v8807 = vpop.f32.mrf.mxu0
      %v8808 = vadd.f32 0.0, %v8807
      %v8809 = vpop.f32.mrf.mxu0
      %v8810 = vpop.f32.mrf.mxu0
      %v8811 = vadd.f32 0.0, %v8810
      %v8812 = vpop.f32.mrf.mxu0
      %8813 = vmatprep.mubr.bf16.mxu0 %v8443
      %8814 = vmatmul.mubr.bf16.gmra.mxu0 %v8379
      %v8815 = vpop.f32.mrf.mxu0
      %v8816 = vadd.f32 0.0, %v8815
      %v8817 = vpop.f32.mrf.mxu0
      %v8818 = vpop.f32.mrf.mxu0
      %v8819 = vadd.f32 0.0, %v8818
      %v8820 = vpop.f32.mrf.mxu0
      %8821 = vmatprep.mubr.bf16.mxu0 %v8444
      %8822 = vmatmul.mubr.bf16.gmra.mxu0 %v8380
      %v8823 = vpop.f32.mrf.mxu0
      %v8824 = vadd.f32 0.0, %v8823
      %v8825 = vpop.f32.mrf.mxu0
      %v8826 = vpop.f32.mrf.mxu0
      %v8827 = vadd.f32 0.0, %v8826
      %v8828 = vpop.f32.mrf.mxu0
      %8829 = vmatprep.mubr.bf16.mxu0 %v8445
      %8830 = vmatmul.mubr.bf16.gmra.mxu0 %v8381
      %v8831 = vpop.f32.mrf.mxu0
      %v8832 = vadd.f32 0.0, %v8831
      %v8833 = vpop.f32.mrf.mxu0
      %v8834 = vpop.f32.mrf.mxu0
      %v8835 = vadd.f32 0.0, %v8834
      %v8836 = vpop.f32.mrf.mxu0
      %8837 = vmatprep.mubr.bf16.mxu0 %v8446
      %8838 = vmatmul.mubr.bf16.gmra.mxu0 %v8382
      %v8839 = vpop.f32.mrf.mxu0
      %v8840 = vadd.f32 0.0, %v8839
      %v8841 = vpop.f32.mrf.mxu0
      %v8842 = vpop.f32.mrf.mxu0
      %v8843 = vadd.f32 0.0, %v8842
      %v8844 = vpop.f32.mrf.mxu0
      %8845 = vmatprep.mubr.bf16.mxu0 %v8447
      %8846 = vmatmul.mubr.bf16.gmra.mxu0 %v8383
      %v8847 = vpop.f32.mrf.mxu0
      %v8848 = vadd.f32 0.0, %v8847
      %v8849 = vpop.f32.mrf.mxu0
      %v8850 = vpop.f32.mrf.mxu0
      %v8851 = vadd.f32 0.0, %v8850
      %v8852 = vpop.f32.mrf.mxu0
      %8853 = vmatprep.mubr.bf16.mxu0 %v8448
      %8854 = vmatmul.mubr.bf16.gmra.mxu0 %v8384
      %v8855 = vpop.f32.mrf.mxu0
      %v8856 = vadd.f32 0.0, %v8855
      %v8857 = vpop.f32.mrf.mxu0
      %v8858 = vpop.f32.mrf.mxu0
      %v8859 = vadd.f32 0.0, %v8858
      %v8860 = vpop.f32.mrf.mxu0
      %8861 = vmatprep.mubr.bf16.mxu0 %v8449
      %8862 = vmatmul.mubr.bf16.gmra.mxu0 %v8385
      %v8863 = vpop.f32.mrf.mxu0
      %v8864 = vadd.f32 0.0, %v8863
      %v8865 = vpop.f32.mrf.mxu0
      %v8866 = vpop.f32.mrf.mxu0
      %v8867 = vadd.f32 0.0, %v8866
      %v8868 = vpop.f32.mrf.mxu0
      %8869 = vmatprep.mubr.bf16.mxu0 %v8450
      %8870 = vmatmul.mubr.bf16.gmra.mxu0 %v8386
      %v8871 = vpop.f32.mrf.mxu0
      %v8872 = vadd.f32 0.0, %v8871
      %v8873 = vpop.f32.mrf.mxu0
      %v8874 = vpop.f32.mrf.mxu0
      %v8875 = vadd.f32 0.0, %v8874
      %v8876 = vpop.f32.mrf.mxu0
      %8877 = vmatprep.mubr.bf16.mxu0 %v8451
      %8878 = vmatmul.mubr.bf16.gmra.mxu0 %v8387
      %v8879 = vpop.f32.mrf.mxu0
      %v8880 = vadd.f32 0.0, %v8879
      %v8881 = vpop.f32.mrf.mxu0
      %v8882 = vpop.f32.mrf.mxu0
      %v8883 = vadd.f32 0.0, %v8882
      %v8884 = vpop.f32.mrf.mxu0
      %8885 = vdwg.mxu0
      %8886 = vmatprep.subr.bf16.mxu0 0
      %8887 = vmatpush1.bf16.msra.mxu0 %v8700
      %8888 = vmatprep.subr.bf16.mxu0 0
      %8889 = vmatpush1.bf16.msra.mxu0 %v8699
      %8890 = vmatprep.subr.bf16.mxu0 0
      %8891 = vmatpush1.bf16.msra.mxu0 %v8698
      %8892 = vmatprep.subr.bf16.mxu0 0
      %8893 = vmatpush1.bf16.msra.mxu0 %v8697
      %8894 = vmatprep.subr.bf16.mxu0 0
      %8895 = vmatpush1.bf16.msra.mxu0 %v8696
      %8896 = vmatprep.subr.bf16.mxu0 0
      %8897 = vmatpush1.bf16.msra.mxu0 %v8695
      %8898 = vmatprep.subr.bf16.mxu0 0
      %8899 = vmatpush1.bf16.msra.mxu0 %v8694
      %8900 = vmatprep.subr.bf16.mxu0 0
      %8901 = vmatpush1.bf16.msra.mxu0 %v8693
      %8902 = vmatprep.subr.bf16.mxu0 0
      %8903 = vmatpush2.bf16.msra.mxu0 0
      %8904 = vmatprep.subr.bf16.mxu0 0
      %8905 = vmatpush2.bf16.msra.mxu0 0
      %8906 = vmatprep.subr.bf16.mxu0 0
      %8907 = vmatpush2.bf16.msra.mxu0 0
      %8908 = vmatprep.subr.bf16.mxu0 0
      %8909 = vmatpush2.bf16.msra.mxu0 0
      %8910 = vmatprep.subr.bf16.mxu0 0
      %8911 = vmatpush2.bf16.msra.mxu0 0
      %8912 = vmatprep.subr.bf16.mxu0 0
      %8913 = vmatpush2.bf16.msra.mxu0 0
      %8914 = vmatprep.subr.bf16.mxu0 0
      %8915 = vmatpush2.bf16.msra.mxu0 0
      %8916 = vmatprep.subr.bf16.mxu0 0
      %8917 = vmatpush2.bf16.msra.mxu0 0
      %8918 = vmatprep.mubr.bf16.mxu0 0
      %8919 = vmatmul.mubr.bf16.gmra.mxu0 %v8500
      %v8920 = vpop.f32.mrf.mxu0
      %v8921 = vadd.f32 %v8760, %v8920
      %v8922 = vpop.f32.mrf.mxu0
      %v8923 = vpop.f32.mrf.mxu0
      %v8924 = vadd.f32 %v8763, %v8923
      %v8925 = vpop.f32.mrf.mxu0
      %8926 = vmatprep.mubr.bf16.mxu0 0
      %8927 = vmatmul.mubr.bf16.gmra.mxu0 %v8501
      %v8928 = vpop.f32.mrf.mxu0
      %v8929 = vadd.f32 %v8768, %v8928
      %v8930 = vpop.f32.mrf.mxu0
      %v8931 = vpop.f32.mrf.mxu0
      %v8932 = vadd.f32 %v8771, %v8931
      %v8933 = vpop.f32.mrf.mxu0
      %8934 = vmatprep.mubr.bf16.mxu0 0
      %8935 = vmatmul.mubr.bf16.gmra.mxu0 %v8502
      %v8936 = vpop.f32.mrf.mxu0
      %v8937 = vadd.f32 %v8776, %v8936
      %v8938 = vpop.f32.mrf.mxu0
      %v8939 = vpop.f32.mrf.mxu0
      %v8940 = vadd.f32 %v8779, %v8939
      %v8941 = vpop.f32.mrf.mxu0
      %8942 = vmatprep.mubr.bf16.mxu0 0
      %8943 = vmatmul.mubr.bf16.gmra.mxu0 %v8503
      %v8944 = vpop.f32.mrf.mxu0
      %v8945 = vadd.f32 %v8784, %v8944
      %v8946 = vpop.f32.mrf.mxu0
      %v8947 = vpop.f32.mrf.mxu0
      %v8948 = vadd.f32 %v8787, %v8947
      %v8949 = vpop.f32.mrf.mxu0
      %8950 = vmatprep.mubr.bf16.mxu0 0
      %8951 = vmatmul.mubr.bf16.gmra.mxu0 %v8504
      %v8952 = vpop.f32.mrf.mxu0
      %v8953 = vadd.f32 %v8792, %v8952
      %v8954 = vpop.f32.mrf.mxu0
      %v8955 = vpop.f32.mrf.mxu0
      %v8956 = vadd.f32 %v8795, %v8955
      %v8957 = vpop.f32.mrf.mxu0
      %8958 = vmatprep.mubr.bf16.mxu0 0
      %8959 = vmatmul.mubr.bf16.gmra.mxu0 %v8505
      %v8960 = vpop.f32.mrf.mxu0
      %v8961 = vadd.f32 %v8800, %v8960
      %v8962 = vpop.f32.mrf.mxu0
      %v8963 = vpop.f32.mrf.mxu0
      %v8964 = vadd.f32 %v8803, %v8963
      %v8965 = vpop.f32.mrf.mxu0
      %8966 = vmatprep.mubr.bf16.mxu0 0
      %8967 = vmatmul.mubr.bf16.gmra.mxu0 %v8506
      %v8968 = vpop.f32.mrf.mxu0
      %v8969 = vadd.f32 %v8808, %v8968
      %v8970 = vpop.f32.mrf.mxu0
      %v8971 = vpop.f32.mrf.mxu0
      %v8972 = vadd.f32 %v8811, %v8971
      %v8973 = vpop.f32.mrf.mxu0
      %8974 = vmatprep.mubr.bf16.mxu0 0
      %8975 = vmatmul.mubr.bf16.gmra.mxu0 %v8507
      %v8976 = vpop.f32.mrf.mxu0
      %v8977 = vadd.f32 %v8816, %v8976
      %v8978 = vpop.f32.mrf.mxu0
      %v8979 = vpop.f32.mrf.mxu0
      %v8980 = vadd.f32 %v8819, %v8979
      %v8981 = vpop.f32.mrf.mxu0
      %8982 = vmatprep.mubr.bf16.mxu0 0
      %8983 = vmatmul.mubr.bf16.gmra.mxu0 %v8508
      %v8984 = vpop.f32.mrf.mxu0
      %v8985 = vadd.f32 %v8824, %v8984
      %v8986 = vpop.f32.mrf.mxu0
      %v8987 = vpop.f32.mrf.mxu0
      %v8988 = vadd.f32 %v8827, %v8987
      %v8989 = vpop.f32.mrf.mxu0
      %8990 = vmatprep.mubr.bf16.mxu0 0
      %8991 = vmatmul.mubr.bf16.gmra.mxu0 %v8509
      %v8992 = vpop.f32.mrf.mxu0
      %v8993 = vadd.f32 %v8832, %v8992
      %v8994 = vpop.f32.mrf.mxu0
      %v8995 = vpop.f32.mrf.mxu0
      %v8996 = vadd.f32 %v8835, %v8995
      %v8997 = vpop.f32.mrf.mxu0
      %8998 = vmatprep.mubr.bf16.mxu0 0
      %8999 = vmatmul.mubr.bf16.gmra.mxu0 %v8510
      %v9000 = vpop.f32.mrf.mxu0
      %v9001 = vadd.f32 %v8840, %v9000
      %v9002 = vpop.f32.mrf.mxu0
      %v9003 = vpop.f32.mrf.mxu0
      %v9004 = vadd.f32 %v8843, %v9003
      %v9005 = vpop.f32.mrf.mxu0
      %9006 = vmatprep.mubr.bf16.mxu0 0
      %9007 = vmatmul.mubr.bf16.gmra.mxu0 %v8511
      %v9008 = vpop.f32.mrf.mxu0
      %v9009 = vadd.f32 %v8848, %v9008
      %v9010 = vpop.f32.mrf.mxu0
      %v9011 = vpop.f32.mrf.mxu0
      %v9012 = vadd.f32 %v8851, %v9011
      %v9013 = vpop.f32.mrf.mxu0
      %9014 = vmatprep.mubr.bf16.mxu0 0
      %9015 = vmatmul.mubr.bf16.gmra.mxu0 %v8512
      %v9016 = vpop.f32.mrf.mxu0
      %v9017 = vadd.f32 %v8856, %v9016
      %v9018 = vpop.f32.mrf.mxu0
      %v9019 = vpop.f32.mrf.mxu0
      %v9020 = vadd.f32 %v8859, %v9019
      %v9021 = vpop.f32.mrf.mxu0
      %9022 = vmatprep.mubr.bf16.mxu0 0
      %9023 = vmatmul.mubr.bf16.gmra.mxu0 %v8513
      %v9024 = vpop.f32.mrf.mxu0
      %v9025 = vadd.f32 %v8864, %v9024
      %v9026 = vpop.f32.mrf.mxu0
      %v9027 = vpop.f32.mrf.mxu0
      %v9028 = vadd.f32 %v8867, %v9027
      %v9029 = vpop.f32.mrf.mxu0
      %9030 = vmatprep.mubr.bf16.mxu0 0
      %9031 = vmatmul.mubr.bf16.gmra.mxu0 %v8514
      %v9032 = vpop.f32.mrf.mxu0
      %v9033 = vadd.f32 %v8872, %v9032
      %v9034 = vpop.f32.mrf.mxu0
      %v9035 = vpop.f32.mrf.mxu0
      %v9036 = vadd.f32 %v8875, %v9035
      %v9037 = vpop.f32.mrf.mxu0
      %9038 = vmatprep.mubr.bf16.mxu0 0
      %9039 = vmatmul.mubr.bf16.gmra.mxu0 %v8515
      %v9040 = vpop.f32.mrf.mxu0
      %v9041 = vadd.f32 %v8880, %v9040
      %v9042 = vpop.f32.mrf.mxu0
      %v9043 = vpop.f32.mrf.mxu0
      %v9044 = vadd.f32 %v8883, %v9043
      %v9045 = vpop.f32.mrf.mxu0
      %9046 = vdwg.mxu0
      %v9095 = vunpack.c.l.b16 %v7740
      %v9096 = vunpack.c.l.b16 %v7741
      %v9097 = vunpack.c.l.b16 %v7742
      %v9098 = vunpack.c.l.b16 %v7743
      %v9099 = vunpack.c.l.b16 %v7744
      %v9100 = vunpack.c.l.b16 %v7745
      %v9101 = vunpack.c.l.b16 %v7746
      %v9102 = vunpack.c.l.b16 %v7747
      %v9103 = vunpack.c.l.b16 %v7748
      %v9104 = vunpack.c.l.b16 %v7749
      %v9105 = vunpack.c.l.b16 %v7750
      %v9106 = vunpack.c.l.b16 %v7751
      %v9107 = vunpack.c.l.b16 %v7752
      %v9108 = vunpack.c.l.b16 %v7753
      %v9109 = vunpack.c.l.b16 %v7754
      %v9110 = vunpack.c.l.b16 %v7755
      %v9111 = vunpack.c.l.b16 %v7756
      %v9112 = vunpack.c.l.b16 %v7757
      %v9113 = vunpack.c.l.b16 %v7758
      %v9114 = vunpack.c.l.b16 %v7759
      %v9115 = vunpack.c.l.b16 %v7760
      %v9116 = vunpack.c.l.b16 %v7761
      %v9117 = vunpack.c.l.b16 %v7762
      %v9118 = vunpack.c.l.b16 %v7763
      %v9119 = vunpack.c.l.b16 %v7764
      %v9120 = vunpack.c.l.b16 %v7765
      %v9121 = vunpack.c.l.b16 %v7766
      %v9122 = vunpack.c.l.b16 %v7767
      %v9123 = vunpack.c.l.b16 %v7768
      %v9124 = vunpack.c.l.b16 %v7769
      %v9125 = vunpack.c.l.b16 %v7770
      %v9126 = vunpack.c.l.b16 %v7771
      %v9127 = vunpack.c.l.b16 %v7772
      %v9128 = vunpack.c.l.b16 %v7773
      %v9129 = vunpack.c.l.b16 %v7774
      %v9130 = vunpack.c.l.b16 %v7775
      %v9131 = vunpack.c.l.b16 %v7776
      %v9132 = vunpack.c.l.b16 %v7777
      %v9133 = vunpack.c.l.b16 %v7778
      %v9134 = vunpack.c.l.b16 %v7779
      %v9135 = vunpack.c.l.b16 %v7780
      %v9136 = vunpack.c.l.b16 %v7781
      %v9137 = vunpack.c.l.b16 %v7782
      %v9138 = vunpack.c.l.b16 %v7783
      %v9139 = vunpack.c.l.b16 %v7784
      %v9140 = vunpack.c.l.b16 %v7785
      %v9141 = vunpack.c.l.b16 %v7786
      %v9142 = vunpack.c.l.b16 %v7787
      %v9143 = vpack.c.b16 %v9096, %v9095
      %v9144 = vpack.c.b16 %v9098, %v9097
      %v9145 = vpack.c.b16 %v9100, %v9099
      %v9146 = vpack.c.b16 %v9102, %v9101
      %v9147 = vpack.c.b16 %v9104, %v9103
      %v9148 = vpack.c.b16 %v9106, %v9105
      %v9149 = vpack.c.b16 %v9108, %v9107
      %v9150 = vpack.c.b16 %v9110, %v9109
      %v9151 = vpack.c.b16 %v9112, %v9111
      %v9152 = vpack.c.b16 %v9114, %v9113
      %v9153 = vpack.c.b16 %v9116, %v9115
      %v9154 = vpack.c.b16 %v9118, %v9117
      %v9155 = vpack.c.b16 %v9120, %v9119
      %v9156 = vpack.c.b16 %v9122, %v9121
      %v9157 = vpack.c.b16 %v9124, %v9123
      %v9158 = vpack.c.b16 %v9126, %v9125
      %v9159 = vpack.c.b16 %v9128, %v9127
      %v9160 = vpack.c.b16 %v9130, %v9129
      %v9161 = vpack.c.b16 %v9132, %v9131
      %v9162 = vpack.c.b16 %v9134, %v9133
      %v9163 = vpack.c.b16 %v9136, %v9135
      %v9164 = vpack.c.b16 %v9138, %v9137
      %v9165 = vpack.c.b16 %v9140, %v9139
      %v9166 = vpack.c.b16 %v9142, %v9141
      %9191 = vmatprep.subr.bf16.mxu0 0
      %9192 = vmatpush1.bf16.msra.mxu0 %v9150
      %9193 = vmatprep.subr.bf16.mxu0 0
      %9194 = vmatpush1.bf16.msra.mxu0 %v9149
      %9195 = vmatprep.subr.bf16.mxu0 0
      %9196 = vmatpush1.bf16.msra.mxu0 %v9148
      %9197 = vmatprep.subr.bf16.mxu0 0
      %9198 = vmatpush1.bf16.msra.mxu0 %v9147
      %9199 = vmatprep.subr.bf16.mxu0 0
      %9200 = vmatpush1.bf16.msra.mxu0 %v9146
      %9201 = vmatprep.subr.bf16.mxu0 0
      %9202 = vmatpush1.bf16.msra.mxu0 %v9145
      %9203 = vmatprep.subr.bf16.mxu0 0
      %9204 = vmatpush1.bf16.msra.mxu0 %v9144
      %9205 = vmatprep.subr.bf16.mxu0 0
      %9206 = vmatpush1.bf16.msra.mxu0 %v9143
      %9207 = vmatprep.subr.bf16.mxu0 0
      %9208 = vmatpush2.bf16.msra.mxu0 %v9158
      %9209 = vmatprep.subr.bf16.mxu0 0
      %9210 = vmatpush2.bf16.msra.mxu0 %v9157
      %9211 = vmatprep.subr.bf16.mxu0 0
      %9212 = vmatpush2.bf16.msra.mxu0 %v9156
      %9213 = vmatprep.subr.bf16.mxu0 0
      %9214 = vmatpush2.bf16.msra.mxu0 %v9155
      %9215 = vmatprep.subr.bf16.mxu0 0
      %9216 = vmatpush2.bf16.msra.mxu0 %v9154
      %9217 = vmatprep.subr.bf16.mxu0 0
      %9218 = vmatpush2.bf16.msra.mxu0 %v9153
      %9219 = vmatprep.subr.bf16.mxu0 0
      %9220 = vmatpush2.bf16.msra.mxu0 %v9152
      %9221 = vmatprep.subr.bf16.mxu0 0
      %9222 = vmatpush2.bf16.msra.mxu0 %v9151
      %9223 = vmatprep.mubr.bf16.mxu0 %v7644
      %9224 = vmatmul.mubr.bf16.gmra.mxu0 %v7580
      %v9225 = vpop.f32.mrf.mxu0
      %v9226 = vadd.f32 %v8921, %v9225
      %v9227 = vpop.f32.mrf.mxu0
      %v9228 = vpop.f32.mrf.mxu0
      %v9229 = vadd.f32 %v8924, %v9228
      %v9230 = vpop.f32.mrf.mxu0
      %9231 = vmatprep.mubr.bf16.mxu0 %v7645
      %9232 = vmatmul.mubr.bf16.gmra.mxu0 %v7581
      %v9233 = vpop.f32.mrf.mxu0
      %v9234 = vadd.f32 %v8929, %v9233
      %v9235 = vpop.f32.mrf.mxu0
      %v9236 = vpop.f32.mrf.mxu0
      %v9237 = vadd.f32 %v8932, %v9236
      %v9238 = vpop.f32.mrf.mxu0
      %9239 = vmatprep.mubr.bf16.mxu0 %v7646
      %9240 = vmatmul.mubr.bf16.gmra.mxu0 %v7582
      %v9241 = vpop.f32.mrf.mxu0
      %v9242 = vadd.f32 %v8937, %v9241
      %v9243 = vpop.f32.mrf.mxu0
      %v9244 = vpop.f32.mrf.mxu0
      %v9245 = vadd.f32 %v8940, %v9244
      %v9246 = vpop.f32.mrf.mxu0
      %9247 = vmatprep.mubr.bf16.mxu0 %v7647
      %9248 = vmatmul.mubr.bf16.gmra.mxu0 %v7583
      %v9249 = vpop.f32.mrf.mxu0
      %v9250 = vadd.f32 %v8945, %v9249
      %v9251 = vpop.f32.mrf.mxu0
      %v9252 = vpop.f32.mrf.mxu0
      %v9253 = vadd.f32 %v8948, %v9252
      %v9254 = vpop.f32.mrf.mxu0
      %9255 = vmatprep.mubr.bf16.mxu0 %v7648
      %9256 = vmatmul.mubr.bf16.gmra.mxu0 %v7584
      %v9257 = vpop.f32.mrf.mxu0
      %v9258 = vadd.f32 %v8953, %v9257
      %v9259 = vpop.f32.mrf.mxu0
      %v9260 = vpop.f32.mrf.mxu0
      %v9261 = vadd.f32 %v8956, %v9260
      %v9262 = vpop.f32.mrf.mxu0
      %9263 = vmatprep.mubr.bf16.mxu0 %v7649
      %9264 = vmatmul.mubr.bf16.gmra.mxu0 %v7585
      %v9265 = vpop.f32.mrf.mxu0
      %v9266 = vadd.f32 %v8961, %v9265
      %v9267 = vpop.f32.mrf.mxu0
      %v9268 = vpop.f32.mrf.mxu0
      %v9269 = vadd.f32 %v8964, %v9268
      %v9270 = vpop.f32.mrf.mxu0
      %9271 = vmatprep.mubr.bf16.mxu0 %v7650
      %9272 = vmatmul.mubr.bf16.gmra.mxu0 %v7586
      %v9273 = vpop.f32.mrf.mxu0
      %v9274 = vadd.f32 %v8969, %v9273
      %v9275 = vpop.f32.mrf.mxu0
      %v9276 = vpop.f32.mrf.mxu0
      %v9277 = vadd.f32 %v8972, %v9276
      %v9278 = vpop.f32.mrf.mxu0
      %9279 = vmatprep.mubr.bf16.mxu0 %v7651
      %9280 = vmatmul.mubr.bf16.gmra.mxu0 %v7587
      %v9281 = vpop.f32.mrf.mxu0
      %v9282 = vadd.f32 %v8977, %v9281
      %v9283 = vpop.f32.mrf.mxu0
      %v9284 = vpop.f32.mrf.mxu0
      %v9285 = vadd.f32 %v8980, %v9284
      %v9286 = vpop.f32.mrf.mxu0
      %9287 = vmatprep.mubr.bf16.mxu0 %v7652
      %9288 = vmatmul.mubr.bf16.gmra.mxu0 %v7588
      %v9289 = vpop.f32.mrf.mxu0
      %v9290 = vadd.f32 %v8985, %v9289
      %v9291 = vpop.f32.mrf.mxu0
      %v9292 = vpop.f32.mrf.mxu0
      %v9293 = vadd.f32 %v8988, %v9292
      %v9294 = vpop.f32.mrf.mxu0
      %9295 = vmatprep.mubr.bf16.mxu0 %v7653
      %9296 = vmatmul.mubr.bf16.gmra.mxu0 %v7589
      %v9297 = vpop.f32.mrf.mxu0
      %v9298 = vadd.f32 %v8993, %v9297
      %v9299 = vpop.f32.mrf.mxu0
      %v9300 = vpop.f32.mrf.mxu0
      %v9301 = vadd.f32 %v8996, %v9300
      %v9302 = vpop.f32.mrf.mxu0
      %9303 = vmatprep.mubr.bf16.mxu0 %v7654
      %9304 = vmatmul.mubr.bf16.gmra.mxu0 %v7590
      %v9305 = vpop.f32.mrf.mxu0
      %v9306 = vadd.f32 %v9001, %v9305
      %v9307 = vpop.f32.mrf.mxu0
      %v9308 = vpop.f32.mrf.mxu0
      %v9309 = vadd.f32 %v9004, %v9308
      %v9310 = vpop.f32.mrf.mxu0
      %9311 = vmatprep.mubr.bf16.mxu0 %v7655
      %9312 = vmatmul.mubr.bf16.gmra.mxu0 %v7591
      %v9313 = vpop.f32.mrf.mxu0
      %v9314 = vadd.f32 %v9009, %v9313
      %v9315 = vpop.f32.mrf.mxu0
      %v9316 = vpop.f32.mrf.mxu0
      %v9317 = vadd.f32 %v9012, %v9316
      %v9318 = vpop.f32.mrf.mxu0
      %9319 = vmatprep.mubr.bf16.mxu0 %v7656
      %9320 = vmatmul.mubr.bf16.gmra.mxu0 %v7592
      %v9321 = vpop.f32.mrf.mxu0
      %v9322 = vadd.f32 %v9017, %v9321
      %v9323 = vpop.f32.mrf.mxu0
      %v9324 = vpop.f32.mrf.mxu0
      %v9325 = vadd.f32 %v9020, %v9324
      %v9326 = vpop.f32.mrf.mxu0
      %9327 = vmatprep.mubr.bf16.mxu0 %v7657
      %9328 = vmatmul.mubr.bf16.gmra.mxu0 %v7593
      %v9329 = vpop.f32.mrf.mxu0
      %v9330 = vadd.f32 %v9025, %v9329
      %v9331 = vpop.f32.mrf.mxu0
      %v9332 = vpop.f32.mrf.mxu0
      %v9333 = vadd.f32 %v9028, %v9332
      %v9334 = vpop.f32.mrf.mxu0
      %9335 = vmatprep.mubr.bf16.mxu0 %v7658
      %9336 = vmatmul.mubr.bf16.gmra.mxu0 %v7594
      %v9337 = vpop.f32.mrf.mxu0
      %v9338 = vadd.f32 %v9033, %v9337
      %v9339 = vpop.f32.mrf.mxu0
      %v9340 = vpop.f32.mrf.mxu0
      %v9341 = vadd.f32 %v9036, %v9340
      %v9342 = vpop.f32.mrf.mxu0
      %9343 = vmatprep.mubr.bf16.mxu0 %v7659
      %9344 = vmatmul.mubr.bf16.gmra.mxu0 %v7595
      %v9345 = vpop.f32.mrf.mxu0
      %v9346 = vadd.f32 %v9041, %v9345
      %v9347 = vpop.f32.mrf.mxu0
      %v9348 = vpop.f32.mrf.mxu0
      %v9349 = vadd.f32 %v9044, %v9348
      %v9350 = vpop.f32.mrf.mxu0
      %9351 = vdwg.mxu0
      %9352 = vmatprep.subr.bf16.mxu0 0
      %9353 = vmatpush1.bf16.msra.mxu0 %v9166
      %9354 = vmatprep.subr.bf16.mxu0 0
      %9355 = vmatpush1.bf16.msra.mxu0 %v9165
      %9356 = vmatprep.subr.bf16.mxu0 0
      %9357 = vmatpush1.bf16.msra.mxu0 %v9164
      %9358 = vmatprep.subr.bf16.mxu0 0
      %9359 = vmatpush1.bf16.msra.mxu0 %v9163
      %9360 = vmatprep.subr.bf16.mxu0 0
      %9361 = vmatpush1.bf16.msra.mxu0 %v9162
      %9362 = vmatprep.subr.bf16.mxu0 0
      %9363 = vmatpush1.bf16.msra.mxu0 %v9161
      %9364 = vmatprep.subr.bf16.mxu0 0
      %9365 = vmatpush1.bf16.msra.mxu0 %v9160
      %9366 = vmatprep.subr.bf16.mxu0 0
      %9367 = vmatpush1.bf16.msra.mxu0 %v9159
      %9368 = vmatprep.subr.bf16.mxu0 0
      %9369 = vmatpush2.bf16.msra.mxu0 0
      %9370 = vmatprep.subr.bf16.mxu0 0
      %9371 = vmatpush2.bf16.msra.mxu0 0
      %9372 = vmatprep.subr.bf16.mxu0 0
      %9373 = vmatpush2.bf16.msra.mxu0 0
      %9374 = vmatprep.subr.bf16.mxu0 0
      %9375 = vmatpush2.bf16.msra.mxu0 0
      %9376 = vmatprep.subr.bf16.mxu0 0
      %9377 = vmatpush2.bf16.msra.mxu0 0
      %9378 = vmatprep.subr.bf16.mxu0 0
      %9379 = vmatpush2.bf16.msra.mxu0 0
      %9380 = vmatprep.subr.bf16.mxu0 0
      %9381 = vmatpush2.bf16.msra.mxu0 0
      %9382 = vmatprep.subr.bf16.mxu0 0
      %9383 = vmatpush2.bf16.msra.mxu0 0
      %9384 = vmatprep.mubr.bf16.mxu0 0
      %9385 = vmatmul.mubr.bf16.gmra.mxu0 %v7708
      %v9386 = vpop.f32.mrf.mxu0
      %v9387 = vadd.f32 %v9226, %v9386
      %v9388 = vpop.f32.mrf.mxu0
      %v9389 = vpop.f32.mrf.mxu0
      %v9390 = vadd.f32 %v9229, %v9389
      %v9391 = vpop.f32.mrf.mxu0
      %9392 = vmatprep.mubr.bf16.mxu0 0
      %9393 = vmatmul.mubr.bf16.gmra.mxu0 %v7709
      %v9394 = vpop.f32.mrf.mxu0
      %v9395 = vadd.f32 %v9234, %v9394
      %v9396 = vpop.f32.mrf.mxu0
      %v9397 = vpop.f32.mrf.mxu0
      %v9398 = vadd.f32 %v9237, %v9397
      %v9399 = vpop.f32.mrf.mxu0
      %9400 = vmatprep.mubr.bf16.mxu0 0
      %9401 = vmatmul.mubr.bf16.gmra.mxu0 %v7710
      %v9402 = vpop.f32.mrf.mxu0
      %v9403 = vadd.f32 %v9242, %v9402
      %v9404 = vpop.f32.mrf.mxu0
      %v9405 = vpop.f32.mrf.mxu0
      %v9406 = vadd.f32 %v9245, %v9405
      %v9407 = vpop.f32.mrf.mxu0
      %9408 = vmatprep.mubr.bf16.mxu0 0
      %9409 = vmatmul.mubr.bf16.gmra.mxu0 %v7711
      %v9410 = vpop.f32.mrf.mxu0
      %v9411 = vadd.f32 %v9250, %v9410
      %v9412 = vpop.f32.mrf.mxu0
      %v9413 = vpop.f32.mrf.mxu0
      %v9414 = vadd.f32 %v9253, %v9413
      %v9415 = vpop.f32.mrf.mxu0
      %9416 = vmatprep.mubr.bf16.mxu0 0
      %9417 = vmatmul.mubr.bf16.gmra.mxu0 %v7712
      %v9418 = vpop.f32.mrf.mxu0
      %v9419 = vadd.f32 %v9258, %v9418
      %v9420 = vpop.f32.mrf.mxu0
      %v9421 = vpop.f32.mrf.mxu0
      %v9422 = vadd.f32 %v9261, %v9421
      %v9423 = vpop.f32.mrf.mxu0
      %9424 = vmatprep.mubr.bf16.mxu0 0
      %9425 = vmatmul.mubr.bf16.gmra.mxu0 %v7713
      %v9426 = vpop.f32.mrf.mxu0
      %v9427 = vadd.f32 %v9266, %v9426
      %v9428 = vpop.f32.mrf.mxu0
      %v9429 = vpop.f32.mrf.mxu0
      %v9430 = vadd.f32 %v9269, %v9429
      %v9431 = vpop.f32.mrf.mxu0
      %9432 = vmatprep.mubr.bf16.mxu0 0
      %9433 = vmatmul.mubr.bf16.gmra.mxu0 %v7714
      %v9434 = vpop.f32.mrf.mxu0
      %v9435 = vadd.f32 %v9274, %v9434
      %v9436 = vpop.f32.mrf.mxu0
      %v9437 = vpop.f32.mrf.mxu0
      %v9438 = vadd.f32 %v9277, %v9437
      %v9439 = vpop.f32.mrf.mxu0
      %9440 = vmatprep.mubr.bf16.mxu0 0
      %9441 = vmatmul.mubr.bf16.gmra.mxu0 %v7715
      %v9442 = vpop.f32.mrf.mxu0
      %v9443 = vadd.f32 %v9282, %v9442
      %v9444 = vpop.f32.mrf.mxu0
      %v9445 = vpop.f32.mrf.mxu0
      %v9446 = vadd.f32 %v9285, %v9445
      %v9447 = vpop.f32.mrf.mxu0
      %9448 = vmatprep.mubr.bf16.mxu0 0
      %9449 = vmatmul.mubr.bf16.gmra.mxu0 %v7716
      %v9450 = vpop.f32.mrf.mxu0
      %v9451 = vadd.f32 %v9290, %v9450
      %v9452 = vpop.f32.mrf.mxu0
      %v9453 = vpop.f32.mrf.mxu0
      %v9454 = vadd.f32 %v9293, %v9453
      %v9455 = vpop.f32.mrf.mxu0
      %9456 = vmatprep.mubr.bf16.mxu0 0
      %9457 = vmatmul.mubr.bf16.gmra.mxu0 %v7717
      %v9458 = vpop.f32.mrf.mxu0
      %v9459 = vadd.f32 %v9298, %v9458
      %v9460 = vpop.f32.mrf.mxu0
      %v9461 = vpop.f32.mrf.mxu0
      %v9462 = vadd.f32 %v9301, %v9461
      %v9463 = vpop.f32.mrf.mxu0
      %9464 = vmatprep.mubr.bf16.mxu0 0
      %9465 = vmatmul.mubr.bf16.gmra.mxu0 %v7718
      %v9466 = vpop.f32.mrf.mxu0
      %v9467 = vadd.f32 %v9306, %v9466
      %v9468 = vpop.f32.mrf.mxu0
      %v9469 = vpop.f32.mrf.mxu0
      %v9470 = vadd.f32 %v9309, %v9469
      %v9471 = vpop.f32.mrf.mxu0
      %9472 = vmatprep.mubr.bf16.mxu0 0
      %9473 = vmatmul.mubr.bf16.gmra.mxu0 %v7719
      %v9474 = vpop.f32.mrf.mxu0
      %v9475 = vadd.f32 %v9314, %v9474
      %v9476 = vpop.f32.mrf.mxu0
      %v9477 = vpop.f32.mrf.mxu0
      %v9478 = vadd.f32 %v9317, %v9477
      %v9479 = vpop.f32.mrf.mxu0
      %9480 = vmatprep.mubr.bf16.mxu0 0
      %9481 = vmatmul.mubr.bf16.gmra.mxu0 %v7720
      %v9482 = vpop.f32.mrf.mxu0
      %v9483 = vadd.f32 %v9322, %v9482
      %v9484 = vpop.f32.mrf.mxu0
      %v9485 = vpop.f32.mrf.mxu0
      %v9486 = vadd.f32 %v9325, %v9485
      %v9487 = vpop.f32.mrf.mxu0
      %9488 = vmatprep.mubr.bf16.mxu0 0
      %9489 = vmatmul.mubr.bf16.gmra.mxu0 %v7721
      %v9490 = vpop.f32.mrf.mxu0
      %v9491 = vadd.f32 %v9330, %v9490
      %v9492 = vpop.f32.mrf.mxu0
      %v9493 = vpop.f32.mrf.mxu0
      %v9494 = vadd.f32 %v9333, %v9493
      %v9495 = vpop.f32.mrf.mxu0
      %9496 = vmatprep.mubr.bf16.mxu0 0
      %9497 = vmatmul.mubr.bf16.gmra.mxu0 %v7722
      %v9498 = vpop.f32.mrf.mxu0
      %v9499 = vadd.f32 %v9338, %v9498
      %v9500 = vpop.f32.mrf.mxu0
      %v9501 = vpop.f32.mrf.mxu0
      %v9502 = vadd.f32 %v9341, %v9501
      %v9503 = vpop.f32.mrf.mxu0
      %9504 = vmatprep.mubr.bf16.mxu0 0
      %9505 = vmatmul.mubr.bf16.gmra.mxu0 %v7723
      %v9506 = vpop.f32.mrf.mxu0
      %v9507 = vadd.f32 %v9346, %v9506
      %v9508 = vpop.f32.mrf.mxu0
      %v9509 = vpop.f32.mrf.mxu0
      %v9510 = vadd.f32 %v9349, %v9509
      %v9511 = vpop.f32.mrf.mxu0
      %9512 = vdwg.mxu0
      %s9513 = scalar_lea.vmem [#allocation2], 40
      %v9514 = vld [vmem:[%s9513] sm:$0xf]
      %v9515 = vld [vmem:[%s9513 + $0x4] sm:$0xf]
      %v9516 = vld [vmem:[%s9513 + $0x8] sm:$0xf]
      %v9517 = vld [vmem:[%s9513 + $0xc] sm:$0xf]
      %v9518 = vld [vmem:[%s9513 + $0x14] sm:$0xf]
      %v9519 = vld [vmem:[%s9513 + $0x18] sm:$0xf]
      %v9520 = vld [vmem:[%s9513 + $0x1c] sm:$0xf]
      %v9521 = vld [vmem:[%s9513 + $0x20] sm:$0xf]
      %v9522 = vld [vmem:[%s9513 + $0x28] sm:$0xf]
      %v9523 = vld [vmem:[%s9513 + $0x2c] sm:$0xf]
      %v9524 = vld [vmem:[%s9513 + $0x30] sm:$0xf]
      %v9525 = vld [vmem:[%s9513 + $0x34] sm:$0xf]
      %v9526 = vld [vmem:[%s9513 + $0x3c] sm:$0xf]
      %v9527 = vld [vmem:[%s9513 + $0x40] sm:$0xf]
      %v9528 = vld [vmem:[%s9513 + $0x44] sm:$0xf]
      %v9529 = vld [vmem:[%s9513 + $0x48] sm:$0xf]
      %v9530 = vld [vmem:[%s9513 + $0x50] sm:$0xf]
      %v9531 = vld [vmem:[%s9513 + $0x54] sm:$0xf]
      %v9532 = vld [vmem:[%s9513 + $0x58] sm:$0xf]
      %v9533 = vld [vmem:[%s9513 + $0x5c] sm:$0xf]
      %v9534 = vld [vmem:[%s9513 + $0x64] sm:$0xf]
      %v9535 = vld [vmem:[%s9513 + $0x68] sm:$0xf]
      %v9536 = vld [vmem:[%s9513 + $0x6c] sm:$0xf]
      %v9537 = vld [vmem:[%s9513 + $0x70] sm:$0xf]
      %v9538 = vld [vmem:[%s9513 + $0x78] sm:$0xf]
      %v9539 = vld [vmem:[%s9513 + $0x7c] sm:$0xf]
      %v9540 = vld [vmem:[%s9513 + $0x80] sm:$0xf]
      %v9541 = vld [vmem:[%s9513 + $0x84] sm:$0xf]
      %v9542 = vld [vmem:[%s9513 + $0x8c] sm:$0xf]
      %v9543 = vld [vmem:[%s9513 + $0x90] sm:$0xf]
      %v9544 = vld [vmem:[%s9513 + $0x94] sm:$0xf]
      %v9545 = vld [vmem:[%s9513 + $0x98] sm:$0xf]
      %v9546 = vld [vmem:[%s9513 + $0x10] sm:$0x1]
      %v9547 = vld [vmem:[%s9513 + $0x24] sm:$0x1]
      %v9548 = vld [vmem:[%s9513 + $0x38] sm:$0x1]
      %v9549 = vld [vmem:[%s9513 + $0x4c] sm:$0x1]
      %v9550 = vld [vmem:[%s9513 + $0x60] sm:$0x1]
      %v9551 = vld [vmem:[%s9513 + $0x74] sm:$0x1]
      %v9552 = vld [vmem:[%s9513 + $0x88] sm:$0x1]
      %v9553 = vld [vmem:[%s9513 + $0x9c] sm:$0x1]
      %v9555 = vshrl.u32 %v9514, 16
      %v9557 = vrot.slane %v9555, 4
      %v9558 = vshll.u32 %v9514, 16
      %v9560 = vrot.slane %v9558, 5
      %v9561 = vor.u32 %v9557, %v9560
      %v9562 = vrot.slane %v9561, 4
      %v9564 = vshll.u32 %v9515, 16
      %v9566 = vrot.slane %v9564, 5
      %v9567 = vsel %vm401, %v9562, %v9566
      %v9568 = vshrl.u32 %v9515, 16
      %v9570 = vrot.slane %v9568, 4
      %v9571 = vor.u32 %v9570, %v9566
      %v9572 = vrot.slane %v9571, 4
      %v9574 = vshll.u32 %v9516, 16
      %v9576 = vrot.slane %v9574, 5
      %v9577 = vsel %vm401, %v9572, %v9576
      %v9578 = vshrl.u32 %v9516, 16
      %v9580 = vrot.slane %v9578, 4
      %v9581 = vor.u32 %v9580, %v9576
      %v9582 = vrot.slane %v9581, 4
      %v9584 = vshll.u32 %v9517, 16
      %v9586 = vrot.slane %v9584, 5
      %v9587 = vsel %vm401, %v9582, %v9586
      %v9588 = vshrl.u32 %v9517, 16
      %v9590 = vrot.slane %v9588, 4
      %v9591 = vor.u32 %v9590, %v9586
      %v9592 = vrot.slane %v9591, 4
      %v9594 = vshll.u32 %v9546, 16
      %v9596 = vrot.slane %v9594, 5
      %v9597 = vsel %vm401, %v9592, %v9596
      %v9599 = vshrl.u32 %v9518, 16
      %v9601 = vrot.slane %v9599, 4
      %v9602 = vshll.u32 %v9518, 16
      %v9604 = vrot.slane %v9602, 5
      %v9605 = vor.u32 %v9601, %v9604
      %v9606 = vrot.slane %v9605, 4
      %v9608 = vshll.u32 %v9519, 16
      %v9610 = vrot.slane %v9608, 5
      %v9611 = vsel %vm401, %v9606, %v9610
      %v9612 = vshrl.u32 %v9519, 16
      %v9614 = vrot.slane %v9612, 4
      %v9615 = vor.u32 %v9614, %v9610
      %v9616 = vrot.slane %v9615, 4
      %v9618 = vshll.u32 %v9520, 16
      %v9620 = vrot.slane %v9618, 5
      %v9621 = vsel %vm401, %v9616, %v9620
      %v9622 = vshrl.u32 %v9520, 16
      %v9624 = vrot.slane %v9622, 4
      %v9625 = vor.u32 %v9624, %v9620
      %v9626 = vrot.slane %v9625, 4
      %v9628 = vshll.u32 %v9521, 16
      %v9630 = vrot.slane %v9628, 5
      %v9631 = vsel %vm401, %v9626, %v9630
      %v9632 = vshrl.u32 %v9521, 16
      %v9634 = vrot.slane %v9632, 4
      %v9635 = vor.u32 %v9634, %v9630
      %v9636 = vrot.slane %v9635, 4
      %v9638 = vshll.u32 %v9547, 16
      %v9640 = vrot.slane %v9638, 5
      %v9641 = vsel %vm401, %v9636, %v9640
      %v9643 = vshrl.u32 %v9522, 16
      %v9645 = vrot.slane %v9643, 4
      %v9646 = vshll.u32 %v9522, 16
      %v9648 = vrot.slane %v9646, 5
      %v9649 = vor.u32 %v9645, %v9648
      %v9650 = vrot.slane %v9649, 4
      %v9652 = vshll.u32 %v9523, 16
      %v9654 = vrot.slane %v9652, 5
      %v9655 = vsel %vm401, %v9650, %v9654
      %v9656 = vshrl.u32 %v9523, 16
      %v9658 = vrot.slane %v9656, 4
      %v9659 = vor.u32 %v9658, %v9654
      %v9660 = vrot.slane %v9659, 4
      %v9662 = vshll.u32 %v9524, 16
      %v9664 = vrot.slane %v9662, 5
      %v9665 = vsel %vm401, %v9660, %v9664
      %v9666 = vshrl.u32 %v9524, 16
      %v9668 = vrot.slane %v9666, 4
      %v9669 = vor.u32 %v9668, %v9664
      %v9670 = vrot.slane %v9669, 4
      %v9672 = vshll.u32 %v9525, 16
      %v9674 = vrot.slane %v9672, 5
      %v9675 = vsel %vm401, %v9670, %v9674
      %v9676 = vshrl.u32 %v9525, 16
      %v9678 = vrot.slane %v9676, 4
      %v9679 = vor.u32 %v9678, %v9674
      %v9680 = vrot.slane %v9679, 4
      %v9682 = vshll.u32 %v9548, 16
      %v9684 = vrot.slane %v9682, 5
      %v9685 = vsel %vm401, %v9680, %v9684
      %v9687 = vshrl.u32 %v9526, 16
      %v9689 = vrot.slane %v9687, 4
      %v9690 = vshll.u32 %v9526, 16
      %v9692 = vrot.slane %v9690, 5
      %v9693 = vor.u32 %v9689, %v9692
      %v9694 = vrot.slane %v9693, 4
      %v9696 = vshll.u32 %v9527, 16
      %v9698 = vrot.slane %v9696, 5
      %v9699 = vsel %vm401, %v9694, %v9698
      %v9700 = vshrl.u32 %v9527, 16
      %v9702 = vrot.slane %v9700, 4
      %v9703 = vor.u32 %v9702, %v9698
      %v9704 = vrot.slane %v9703, 4
      %v9706 = vshll.u32 %v9528, 16
      %v9708 = vrot.slane %v9706, 5
      %v9709 = vsel %vm401, %v9704, %v9708
      %v9710 = vshrl.u32 %v9528, 16
      %v9712 = vrot.slane %v9710, 4
      %v9713 = vor.u32 %v9712, %v9708
      %v9714 = vrot.slane %v9713, 4
      %v9716 = vshll.u32 %v9529, 16
      %v9718 = vrot.slane %v9716, 5
      %v9719 = vsel %vm401, %v9714, %v9718
      %v9720 = vshrl.u32 %v9529, 16
      %v9722 = vrot.slane %v9720, 4
      %v9723 = vor.u32 %v9722, %v9718
      %v9724 = vrot.slane %v9723, 4
      %v9726 = vshll.u32 %v9549, 16
      %v9728 = vrot.slane %v9726, 5
      %v9729 = vsel %vm401, %v9724, %v9728
      %v9731 = vshrl.u32 %v9530, 16
      %v9733 = vrot.slane %v9731, 4
      %v9734 = vshll.u32 %v9530, 16
      %v9736 = vrot.slane %v9734, 5
      %v9737 = vor.u32 %v9733, %v9736
      %v9738 = vrot.slane %v9737, 4
      %v9740 = vshll.u32 %v9531, 16
      %v9742 = vrot.slane %v9740, 5
      %v9743 = vsel %vm401, %v9738, %v9742
      %v9744 = vshrl.u32 %v9531, 16
      %v9746 = vrot.slane %v9744, 4
      %v9747 = vor.u32 %v9746, %v9742
      %v9748 = vrot.slane %v9747, 4
      %v9750 = vshll.u32 %v9532, 16
      %v9752 = vrot.slane %v9750, 5
      %v9753 = vsel %vm401, %v9748, %v9752
      %v9754 = vshrl.u32 %v9532, 16
      %v9756 = vrot.slane %v9754, 4
      %v9757 = vor.u32 %v9756, %v9752
      %v9758 = vrot.slane %v9757, 4
      %v9760 = vshll.u32 %v9533, 16
      %v9762 = vrot.slane %v9760, 5
      %v9763 = vsel %vm401, %v9758, %v9762
      %v9764 = vshrl.u32 %v9533, 16
      %v9766 = vrot.slane %v9764, 4
      %v9767 = vor.u32 %v9766, %v9762
      %v9768 = vrot.slane %v9767, 4
      %v9770 = vshll.u32 %v9550, 16
      %v9772 = vrot.slane %v9770, 5
      %v9773 = vsel %vm401, %v9768, %v9772
      %v9775 = vshrl.u32 %v9534, 16
      %v9777 = vrot.slane %v9775, 4
      %v9778 = vshll.u32 %v9534, 16
      %v9780 = vrot.slane %v9778, 5
      %v9781 = vor.u32 %v9777, %v9780
      %v9782 = vrot.slane %v9781, 4
      %v9784 = vshll.u32 %v9535, 16
      %v9786 = vrot.slane %v9784, 5
      %v9787 = vsel %vm401, %v9782, %v9786
      %v9788 = vshrl.u32 %v9535, 16
      %v9790 = vrot.slane %v9788, 4
      %v9791 = vor.u32 %v9790, %v9786
      %v9792 = vrot.slane %v9791, 4
      %v9794 = vshll.u32 %v9536, 16
      %v9796 = vrot.slane %v9794, 5
      %v9797 = vsel %vm401, %v9792, %v9796
      %v9798 = vshrl.u32 %v9536, 16
      %v9800 = vrot.slane %v9798, 4
      %v9801 = vor.u32 %v9800, %v9796
      %v9802 = vrot.slane %v9801, 4
      %v9804 = vshll.u32 %v9537, 16
      %v9806 = vrot.slane %v9804, 5
      %v9807 = vsel %vm401, %v9802, %v9806
      %v9808 = vshrl.u32 %v9537, 16
      %v9810 = vrot.slane %v9808, 4
      %v9811 = vor.u32 %v9810, %v9806
      %v9812 = vrot.slane %v9811, 4
      %v9814 = vshll.u32 %v9551, 16
      %v9816 = vrot.slane %v9814, 5
      %v9817 = vsel %vm401, %v9812, %v9816
      %v9819 = vshrl.u32 %v9538, 16
      %v9821 = vrot.slane %v9819, 4
      %v9822 = vshll.u32 %v9538, 16
      %v9824 = vrot.slane %v9822, 5
      %v9825 = vor.u32 %v9821, %v9824
      %v9826 = vrot.slane %v9825, 4
      %v9828 = vshll.u32 %v9539, 16
      %v9830 = vrot.slane %v9828, 5
      %v9831 = vsel %vm401, %v9826, %v9830
      %v9832 = vshrl.u32 %v9539, 16
      %v9834 = vrot.slane %v9832, 4
      %v9835 = vor.u32 %v9834, %v9830
      %v9836 = vrot.slane %v9835, 4
      %v9838 = vshll.u32 %v9540, 16
      %v9840 = vrot.slane %v9838, 5
      %v9841 = vsel %vm401, %v9836, %v9840
      %v9842 = vshrl.u32 %v9540, 16
      %v9844 = vrot.slane %v9842, 4
      %v9845 = vor.u32 %v9844, %v9840
      %v9846 = vrot.slane %v9845, 4
      %v9848 = vshll.u32 %v9541, 16
      %v9850 = vrot.slane %v9848, 5
      %v9851 = vsel %vm401, %v9846, %v9850
      %v9852 = vshrl.u32 %v9541, 16
      %v9854 = vrot.slane %v9852, 4
      %v9855 = vor.u32 %v9854, %v9850
      %v9856 = vrot.slane %v9855, 4
      %v9858 = vshll.u32 %v9552, 16
      %v9860 = vrot.slane %v9858, 5
      %v9861 = vsel %vm401, %v9856, %v9860
      %v9863 = vshrl.u32 %v9542, 16
      %v9865 = vrot.slane %v9863, 4
      %v9866 = vshll.u32 %v9542, 16
      %v9868 = vrot.slane %v9866, 5
      %v9869 = vor.u32 %v9865, %v9868
      %v9870 = vrot.slane %v9869, 4
      %v9872 = vshll.u32 %v9543, 16
      %v9874 = vrot.slane %v9872, 5
      %v9875 = vsel %vm401, %v9870, %v9874
      %v9876 = vshrl.u32 %v9543, 16
      %v9878 = vrot.slane %v9876, 4
      %v9879 = vor.u32 %v9878, %v9874
      %v9880 = vrot.slane %v9879, 4
      %v9882 = vshll.u32 %v9544, 16
      %v9884 = vrot.slane %v9882, 5
      %v9885 = vsel %vm401, %v9880, %v9884
      %v9886 = vshrl.u32 %v9544, 16
      %v9888 = vrot.slane %v9886, 4
      %v9889 = vor.u32 %v9888, %v9884
      %v9890 = vrot.slane %v9889, 4
      %v9892 = vshll.u32 %v9545, 16
      %v9894 = vrot.slane %v9892, 5
      %v9895 = vsel %vm401, %v9890, %v9894
      %v9896 = vshrl.u32 %v9545, 16
      %v9898 = vrot.slane %v9896, 4
      %v9899 = vor.u32 %v9898, %v9894
      %v9900 = vrot.slane %v9899, 4
      %v9902 = vshll.u32 %v9553, 16
      %v9904 = vrot.slane %v9902, 5
      %v9905 = vsel %vm401, %v9900, %v9904
      %v9906 = vld [vmem:[%s9513] sm:$0xe]
      %v9907 = vld [vmem:[%s9513 + $0x14] sm:$0xe]
      %v9908 = vld [vmem:[%s9513 + $0x28] sm:$0xe]
      %v9909 = vld [vmem:[%s9513 + $0x3c] sm:$0xe]
      %v9910 = vld [vmem:[%s9513 + $0x50] sm:$0xe]
      %v9911 = vld [vmem:[%s9513 + $0x64] sm:$0xe]
      %v9912 = vld [vmem:[%s9513 + $0x78] sm:$0xe]
      %v9913 = vld [vmem:[%s9513 + $0x8c] sm:$0xe]
      %v9954 = vrot.slane %v9906, 5
      %v9955 = vrot.slane %v9954, 4
      %v9956 = vrot.slane %v9515, 5
      %v9957 = vsel %vm804, %v9955, %v9956
      %v9958 = vrot.slane %v9956, 4
      %v9959 = vrot.slane %v9516, 5
      %v9960 = vsel %vm804, %v9958, %v9959
      %v9961 = vrot.slane %v9959, 4
      %v9962 = vrot.slane %v9517, 5
      %v9963 = vsel %vm804, %v9961, %v9962
      %v9964 = vrot.slane %v9962, 4
      %v9965 = vrot.slane %v9546, 5
      %v9966 = vsel %vm804, %v9964, %v9965
      %v9967 = vrot.slane %v9907, 5
      %v9968 = vrot.slane %v9967, 4
      %v9969 = vrot.slane %v9519, 5
      %v9970 = vsel %vm804, %v9968, %v9969
      %v9971 = vrot.slane %v9969, 4
      %v9972 = vrot.slane %v9520, 5
      %v9973 = vsel %vm804, %v9971, %v9972
      %v9974 = vrot.slane %v9972, 4
      %v9975 = vrot.slane %v9521, 5
      %v9976 = vsel %vm804, %v9974, %v9975
      %v9977 = vrot.slane %v9975, 4
      %v9978 = vrot.slane %v9547, 5
      %v9979 = vsel %vm804, %v9977, %v9978
      %v9980 = vrot.slane %v9908, 5
      %v9981 = vrot.slane %v9980, 4
      %v9982 = vrot.slane %v9523, 5
      %v9983 = vsel %vm804, %v9981, %v9982
      %v9984 = vrot.slane %v9982, 4
      %v9985 = vrot.slane %v9524, 5
      %v9986 = vsel %vm804, %v9984, %v9985
      %v9987 = vrot.slane %v9985, 4
      %v9988 = vrot.slane %v9525, 5
      %v9989 = vsel %vm804, %v9987, %v9988
      %v9990 = vrot.slane %v9988, 4
      %v9991 = vrot.slane %v9548, 5
      %v9992 = vsel %vm804, %v9990, %v9991
      %v9993 = vrot.slane %v9909, 5
      %v9994 = vrot.slane %v9993, 4
      %v9995 = vrot.slane %v9527, 5
      %v9996 = vsel %vm804, %v9994, %v9995
      %v9997 = vrot.slane %v9995, 4
      %v9998 = vrot.slane %v9528, 5
      %v9999 = vsel %vm804, %v9997, %v9998
      %v10000 = vrot.slane %v9998, 4
      %v10001 = vrot.slane %v9529, 5
      %v10002 = vsel %vm804, %v10000, %v10001
      %v10003 = vrot.slane %v10001, 4
      %v10004 = vrot.slane %v9549, 5
      %v10005 = vsel %vm804, %v10003, %v10004
      %v10006 = vrot.slane %v9910, 5
      %v10007 = vrot.slane %v10006, 4
      %v10008 = vrot.slane %v9531, 5
      %v10009 = vsel %vm804, %v10007, %v10008
      %v10010 = vrot.slane %v10008, 4
      %v10011 = vrot.slane %v9532, 5
      %v10012 = vsel %vm804, %v10010, %v10011
      %v10013 = vrot.slane %v10011, 4
      %v10014 = vrot.slane %v9533, 5
      %v10015 = vsel %vm804, %v10013, %v10014
      %v10016 = vrot.slane %v10014, 4
      %v10017 = vrot.slane %v9550, 5
      %v10018 = vsel %vm804, %v10016, %v10017
      %v10019 = vrot.slane %v9911, 5
      %v10020 = vrot.slane %v10019, 4
      %v10021 = vrot.slane %v9535, 5
      %v10022 = vsel %vm804, %v10020, %v10021
      %v10023 = vrot.slane %v10021, 4
      %v10024 = vrot.slane %v9536, 5
      %v10025 = vsel %vm804, %v10023, %v10024
      %v10026 = vrot.slane %v10024, 4
      %v10027 = vrot.slane %v9537, 5
      %v10028 = vsel %vm804, %v10026, %v10027
      %v10029 = vrot.slane %v10027, 4
      %v10030 = vrot.slane %v9551, 5
      %v10031 = vsel %vm804, %v10029, %v10030
      %v10032 = vrot.slane %v9912, 5
      %v10033 = vrot.slane %v10032, 4
      %v10034 = vrot.slane %v9539, 5
      %v10035 = vsel %vm804, %v10033, %v10034
      %v10036 = vrot.slane %v10034, 4
      %v10037 = vrot.slane %v9540, 5
      %v10038 = vsel %vm804, %v10036, %v10037
      %v10039 = vrot.slane %v10037, 4
      %v10040 = vrot.slane %v9541, 5
      %v10041 = vsel %vm804, %v10039, %v10040
      %v10042 = vrot.slane %v10040, 4
      %v10043 = vrot.slane %v9552, 5
      %v10044 = vsel %vm804, %v10042, %v10043
      %v10045 = vrot.slane %v9913, 5
      %v10046 = vrot.slane %v10045, 4
      %v10047 = vrot.slane %v9543, 5
      %v10048 = vsel %vm804, %v10046, %v10047
      %v10049 = vrot.slane %v10047, 4
      %v10050 = vrot.slane %v9544, 5
      %v10051 = vsel %vm804, %v10049, %v10050
      %v10052 = vrot.slane %v10050, 4
      %v10053 = vrot.slane %v9545, 5
      %v10054 = vsel %vm804, %v10052, %v10053
      %v10055 = vrot.slane %v10053, 4
      %v10056 = vrot.slane %v9553, 5
      %v10057 = vsel %vm804, %v10055, %v10056
      %v10066 = vunpack.c.l.b16 %v9514
      %v10067 = vunpack.c.l.b16 %v9515
      %v10068 = vunpack.c.l.b16 %v9516
      %v10069 = vunpack.c.l.b16 %v9517
      %v10070 = vunpack.c.l.b16 %v9518
      %v10071 = vunpack.c.l.b16 %v9519
      %v10072 = vunpack.c.l.b16 %v9520
      %v10073 = vunpack.c.l.b16 %v9521
      %v10074 = vunpack.c.l.b16 %v9522
      %v10075 = vunpack.c.l.b16 %v9523
      %v10076 = vunpack.c.l.b16 %v9524
      %v10077 = vunpack.c.l.b16 %v9525
      %v10078 = vunpack.c.l.b16 %v9526
      %v10079 = vunpack.c.l.b16 %v9527
      %v10080 = vunpack.c.l.b16 %v9528
      %v10081 = vunpack.c.l.b16 %v9529
      %v10082 = vunpack.c.l.b16 %v9530
      %v10083 = vunpack.c.l.b16 %v9531
      %v10084 = vunpack.c.l.b16 %v9532
      %v10085 = vunpack.c.l.b16 %v9533
      %v10086 = vunpack.c.l.b16 %v9534
      %v10087 = vunpack.c.l.b16 %v9535
      %v10088 = vunpack.c.l.b16 %v9536
      %v10089 = vunpack.c.l.b16 %v9537
      %v10090 = vunpack.c.l.b16 %v9538
      %v10091 = vunpack.c.l.b16 %v9539
      %v10092 = vunpack.c.l.b16 %v9540
      %v10093 = vunpack.c.l.b16 %v9541
      %v10094 = vunpack.c.l.b16 %v9542
      %v10095 = vunpack.c.l.b16 %v9543
      %v10096 = vunpack.c.l.b16 %v9544
      %v10097 = vunpack.c.l.b16 %v9545
      %v10098 = vpack.c.b16 %v10067, %v10066
      %v10099 = vpack.c.b16 %v10069, %v10068
      %v10100 = vpack.c.b16 %v10071, %v10070
      %v10101 = vpack.c.b16 %v10073, %v10072
      %v10102 = vpack.c.b16 %v10075, %v10074
      %v10103 = vpack.c.b16 %v10077, %v10076
      %v10104 = vpack.c.b16 %v10079, %v10078
      %v10105 = vpack.c.b16 %v10081, %v10080
      %v10106 = vpack.c.b16 %v10083, %v10082
      %v10107 = vpack.c.b16 %v10085, %v10084
      %v10108 = vpack.c.b16 %v10087, %v10086
      %v10109 = vpack.c.b16 %v10089, %v10088
      %v10110 = vpack.c.b16 %v10091, %v10090
      %v10111 = vpack.c.b16 %v10093, %v10092
      %v10112 = vpack.c.b16 %v10095, %v10094
      %v10113 = vpack.c.b16 %v10097, %v10096
      %v10130 = vunpack.c.l.b16 %v9567
      %v10131 = vunpack.c.l.b16 %v9577
      %v10132 = vunpack.c.l.b16 %v9587
      %v10133 = vunpack.c.l.b16 %v9597
      %v10134 = vunpack.c.l.b16 %v9611
      %v10135 = vunpack.c.l.b16 %v9621
      %v10136 = vunpack.c.l.b16 %v9631
      %v10137 = vunpack.c.l.b16 %v9641
      %v10138 = vunpack.c.l.b16 %v9655
      %v10139 = vunpack.c.l.b16 %v9665
      %v10140 = vunpack.c.l.b16 %v9675
      %v10141 = vunpack.c.l.b16 %v9685
      %v10142 = vunpack.c.l.b16 %v9699
      %v10143 = vunpack.c.l.b16 %v9709
      %v10144 = vunpack.c.l.b16 %v9719
      %v10145 = vunpack.c.l.b16 %v9729
      %v10146 = vunpack.c.l.b16 %v9743
      %v10147 = vunpack.c.l.b16 %v9753
      %v10148 = vunpack.c.l.b16 %v9763
      %v10149 = vunpack.c.l.b16 %v9773
      %v10150 = vunpack.c.l.b16 %v9787
      %v10151 = vunpack.c.l.b16 %v9797
      %v10152 = vunpack.c.l.b16 %v9807
      %v10153 = vunpack.c.l.b16 %v9817
      %v10154 = vunpack.c.l.b16 %v9831
      %v10155 = vunpack.c.l.b16 %v9841
      %v10156 = vunpack.c.l.b16 %v9851
      %v10157 = vunpack.c.l.b16 %v9861
      %v10158 = vunpack.c.l.b16 %v9875
      %v10159 = vunpack.c.l.b16 %v9885
      %v10160 = vunpack.c.l.b16 %v9895
      %v10161 = vunpack.c.l.b16 %v9905
      %v10162 = vpack.c.b16 %v10131, %v10130
      %v10163 = vpack.c.b16 %v10133, %v10132
      %v10164 = vpack.c.b16 %v10135, %v10134
      %v10165 = vpack.c.b16 %v10137, %v10136
      %v10166 = vpack.c.b16 %v10139, %v10138
      %v10167 = vpack.c.b16 %v10141, %v10140
      %v10168 = vpack.c.b16 %v10143, %v10142
      %v10169 = vpack.c.b16 %v10145, %v10144
      %v10170 = vpack.c.b16 %v10147, %v10146
      %v10171 = vpack.c.b16 %v10149, %v10148
      %v10172 = vpack.c.b16 %v10151, %v10150
      %v10173 = vpack.c.b16 %v10153, %v10152
      %v10174 = vpack.c.b16 %v10155, %v10154
      %v10175 = vpack.c.b16 %v10157, %v10156
      %v10176 = vpack.c.b16 %v10159, %v10158
      %v10177 = vpack.c.b16 %v10161, %v10160
      %v10194 = vunpack.c.l.b16 %v9957
      %v10195 = vunpack.c.l.b16 %v9960
      %v10196 = vunpack.c.l.b16 %v9963
      %v10197 = vunpack.c.l.b16 %v9966
      %v10198 = vunpack.c.l.b16 %v9970
      %v10199 = vunpack.c.l.b16 %v9973
      %v10200 = vunpack.c.l.b16 %v9976
      %v10201 = vunpack.c.l.b16 %v9979
      %v10202 = vunpack.c.l.b16 %v9983
      %v10203 = vunpack.c.l.b16 %v9986
      %v10204 = vunpack.c.l.b16 %v9989
      %v10205 = vunpack.c.l.b16 %v9992
      %v10206 = vunpack.c.l.b16 %v9996
      %v10207 = vunpack.c.l.b16 %v9999
      %v10208 = vunpack.c.l.b16 %v10002
      %v10209 = vunpack.c.l.b16 %v10005
      %v10210 = vunpack.c.l.b16 %v10009
      %v10211 = vunpack.c.l.b16 %v10012
      %v10212 = vunpack.c.l.b16 %v10015
      %v10213 = vunpack.c.l.b16 %v10018
      %v10214 = vunpack.c.l.b16 %v10022
      %v10215 = vunpack.c.l.b16 %v10025
      %v10216 = vunpack.c.l.b16 %v10028
      %v10217 = vunpack.c.l.b16 %v10031
      %v10218 = vunpack.c.l.b16 %v10035
      %v10219 = vunpack.c.l.b16 %v10038
      %v10220 = vunpack.c.l.b16 %v10041
      %v10221 = vunpack.c.l.b16 %v10044
      %v10222 = vunpack.c.l.b16 %v10048
      %v10223 = vunpack.c.l.b16 %v10051
      %v10224 = vunpack.c.l.b16 %v10054
      %v10225 = vunpack.c.l.b16 %v10057
      %v10226 = vpack.c.b16 %v10195, %v10194
      %v10227 = vpack.c.b16 %v10197, %v10196
      %v10228 = vpack.c.b16 %v10199, %v10198
      %v10229 = vpack.c.b16 %v10201, %v10200
      %v10230 = vpack.c.b16 %v10203, %v10202
      %v10231 = vpack.c.b16 %v10205, %v10204
      %v10232 = vpack.c.b16 %v10207, %v10206
      %v10233 = vpack.c.b16 %v10209, %v10208
      %v10234 = vpack.c.b16 %v10211, %v10210
      %v10235 = vpack.c.b16 %v10213, %v10212
      %v10236 = vpack.c.b16 %v10215, %v10214
      %v10237 = vpack.c.b16 %v10217, %v10216
      %v10238 = vpack.c.b16 %v10219, %v10218
      %v10239 = vpack.c.b16 %v10221, %v10220
      %v10240 = vpack.c.b16 %v10223, %v10222
      %v10241 = vpack.c.b16 %v10225, %v10224
      %s10258 = scalar_lea.vmem %s3, 384
      %v10259 = vld [vmem:[%s10258] sm:$0xf]
      %v10260 = vld [vmem:[%s10258 + $0x4] sm:$0xf]
      %v10261 = vld [vmem:[%s10258 + $0x8] sm:$0xf]
      %v10262 = vld [vmem:[%s10258 + $0xc] sm:$0xf]
      %v10263 = vld [vmem:[%s10258 + $0x10] sm:$0xf]
      %v10264 = vld [vmem:[%s10258 + $0x14] sm:$0xf]
      %v10265 = vld [vmem:[%s10258 + $0x18] sm:$0xf]
      %v10266 = vld [vmem:[%s10258 + $0x1c] sm:$0xf]
      %v10267 = vld [vmem:[%s10258 + $0x20] sm:$0xf]
      %v10268 = vld [vmem:[%s10258 + $0x24] sm:$0xf]
      %v10269 = vld [vmem:[%s10258 + $0x28] sm:$0xf]
      %v10270 = vld [vmem:[%s10258 + $0x2c] sm:$0xf]
      %v10271 = vld [vmem:[%s10258 + $0x30] sm:$0xf]
      %v10272 = vld [vmem:[%s10258 + $0x34] sm:$0xf]
      %v10273 = vld [vmem:[%s10258 + $0x38] sm:$0xf]
      %v10274 = vld [vmem:[%s10258 + $0x3c] sm:$0xf]
      %v10275 = vld [vmem:[%s10258 + $0x40] sm:$0xf]
      %v10276 = vld [vmem:[%s10258 + $0x44] sm:$0xf]
      %v10277 = vld [vmem:[%s10258 + $0x48] sm:$0xf]
      %v10278 = vld [vmem:[%s10258 + $0x4c] sm:$0xf]
      %v10279 = vld [vmem:[%s10258 + $0x50] sm:$0xf]
      %v10280 = vld [vmem:[%s10258 + $0x54] sm:$0xf]
      %v10281 = vld [vmem:[%s10258 + $0x58] sm:$0xf]
      %v10282 = vld [vmem:[%s10258 + $0x5c] sm:$0xf]
      %v10283 = vld [vmem:[%s10258 + $0x60] sm:$0xf]
      %v10284 = vld [vmem:[%s10258 + $0x64] sm:$0xf]
      %v10285 = vld [vmem:[%s10258 + $0x68] sm:$0xf]
      %v10286 = vld [vmem:[%s10258 + $0x6c] sm:$0xf]
      %v10287 = vld [vmem:[%s10258 + $0x70] sm:$0xf]
      %v10288 = vld [vmem:[%s10258 + $0x74] sm:$0xf]
      %v10289 = vld [vmem:[%s10258 + $0x78] sm:$0xf]
      %v10290 = vld [vmem:[%s10258 + $0x7c] sm:$0xf]
      %v10291 = vld [vmem:[%s10258 + $0x80] sm:$0xf]
      %v10292 = vld [vmem:[%s10258 + $0x84] sm:$0xf]
      %v10293 = vld [vmem:[%s10258 + $0x88] sm:$0xf]
      %v10294 = vld [vmem:[%s10258 + $0x8c] sm:$0xf]
      %v10295 = vld [vmem:[%s10258 + $0x90] sm:$0xf]
      %v10296 = vld [vmem:[%s10258 + $0x94] sm:$0xf]
      %v10297 = vld [vmem:[%s10258 + $0x98] sm:$0xf]
      %v10298 = vld [vmem:[%s10258 + $0x9c] sm:$0xf]
      %v10299 = vld [vmem:[%s10258 + $0xa0] sm:$0xf]
      %v10300 = vld [vmem:[%s10258 + $0xa4] sm:$0xf]
      %v10301 = vld [vmem:[%s10258 + $0xa8] sm:$0xf]
      %v10302 = vld [vmem:[%s10258 + $0xac] sm:$0xf]
      %v10303 = vld [vmem:[%s10258 + $0xb0] sm:$0xf]
      %v10304 = vld [vmem:[%s10258 + $0xb4] sm:$0xf]
      %v10305 = vld [vmem:[%s10258 + $0xb8] sm:$0xf]
      %v10306 = vld [vmem:[%s10258 + $0xbc] sm:$0xf]
      %v10355 = vunpack.c.l.b16 %v10259
      %v10356 = vunpack.c.l.b16 %v10260
      %v10357 = vunpack.c.l.b16 %v10261
      %v10358 = vunpack.c.l.b16 %v10262
      %v10359 = vunpack.c.l.b16 %v10263
      %v10360 = vunpack.c.l.b16 %v10264
      %v10361 = vunpack.c.l.b16 %v10265
      %v10362 = vunpack.c.l.b16 %v10266
      %v10363 = vunpack.c.l.b16 %v10267
      %v10364 = vunpack.c.l.b16 %v10268
      %v10365 = vunpack.c.l.b16 %v10269
      %v10366 = vunpack.c.l.b16 %v10270
      %v10367 = vunpack.c.l.b16 %v10271
      %v10368 = vunpack.c.l.b16 %v10272
      %v10369 = vunpack.c.l.b16 %v10273
      %v10370 = vunpack.c.l.b16 %v10274
      %v10371 = vunpack.c.l.b16 %v10275
      %v10372 = vunpack.c.l.b16 %v10276
      %v10373 = vunpack.c.l.b16 %v10277
      %v10374 = vunpack.c.l.b16 %v10278
      %v10375 = vunpack.c.l.b16 %v10279
      %v10376 = vunpack.c.l.b16 %v10280
      %v10377 = vunpack.c.l.b16 %v10281
      %v10378 = vunpack.c.l.b16 %v10282
      %v10379 = vunpack.c.l.b16 %v10283
      %v10380 = vunpack.c.l.b16 %v10284
      %v10381 = vunpack.c.l.b16 %v10285
      %v10382 = vunpack.c.l.b16 %v10286
      %v10383 = vunpack.c.l.b16 %v10287
      %v10384 = vunpack.c.l.b16 %v10288
      %v10385 = vunpack.c.l.b16 %v10289
      %v10386 = vunpack.c.l.b16 %v10290
      %v10387 = vunpack.c.l.b16 %v10291
      %v10388 = vunpack.c.l.b16 %v10292
      %v10389 = vunpack.c.l.b16 %v10293
      %v10390 = vunpack.c.l.b16 %v10294
      %v10391 = vunpack.c.l.b16 %v10295
      %v10392 = vunpack.c.l.b16 %v10296
      %v10393 = vunpack.c.l.b16 %v10297
      %v10394 = vunpack.c.l.b16 %v10298
      %v10395 = vunpack.c.l.b16 %v10299
      %v10396 = vunpack.c.l.b16 %v10300
      %v10397 = vunpack.c.l.b16 %v10301
      %v10398 = vunpack.c.l.b16 %v10302
      %v10399 = vunpack.c.l.b16 %v10303
      %v10400 = vunpack.c.l.b16 %v10304
      %v10401 = vunpack.c.l.b16 %v10305
      %v10402 = vunpack.c.l.b16 %v10306
      %v10403 = vpack.c.b16 %v10356, %v10355
      %v10404 = vpack.c.b16 %v10358, %v10357
      %v10405 = vpack.c.b16 %v10360, %v10359
      %v10406 = vpack.c.b16 %v10362, %v10361
      %v10407 = vpack.c.b16 %v10364, %v10363
      %v10408 = vpack.c.b16 %v10366, %v10365
      %v10409 = vpack.c.b16 %v10368, %v10367
      %v10410 = vpack.c.b16 %v10370, %v10369
      %v10411 = vpack.c.b16 %v10372, %v10371
      %v10412 = vpack.c.b16 %v10374, %v10373
      %v10413 = vpack.c.b16 %v10376, %v10375
      %v10414 = vpack.c.b16 %v10378, %v10377
      %v10415 = vpack.c.b16 %v10380, %v10379
      %v10416 = vpack.c.b16 %v10382, %v10381
      %v10417 = vpack.c.b16 %v10384, %v10383
      %v10418 = vpack.c.b16 %v10386, %v10385
      %v10419 = vpack.c.b16 %v10388, %v10387
      %v10420 = vpack.c.b16 %v10390, %v10389
      %v10421 = vpack.c.b16 %v10392, %v10391
      %v10422 = vpack.c.b16 %v10394, %v10393
      %v10423 = vpack.c.b16 %v10396, %v10395
      %v10424 = vpack.c.b16 %v10398, %v10397
      %v10425 = vpack.c.b16 %v10400, %v10399
      %v10426 = vpack.c.b16 %v10402, %v10401
      %10451 = vmatprep.subr.bf16.mxu0 0
      %10452 = vmatpush1.bf16.msra.mxu0 %v10410
      %10453 = vmatprep.subr.bf16.mxu0 0
      %10454 = vmatpush1.bf16.msra.mxu0 %v10409
      %10455 = vmatprep.subr.bf16.mxu0 0
      %10456 = vmatpush1.bf16.msra.mxu0 %v10408
      %10457 = vmatprep.subr.bf16.mxu0 0
      %10458 = vmatpush1.bf16.msra.mxu0 %v10407
      %10459 = vmatprep.subr.bf16.mxu0 0
      %10460 = vmatpush1.bf16.msra.mxu0 %v10406
      %10461 = vmatprep.subr.bf16.mxu0 0
      %10462 = vmatpush1.bf16.msra.mxu0 %v10405
      %10463 = vmatprep.subr.bf16.mxu0 0
      %10464 = vmatpush1.bf16.msra.mxu0 %v10404
      %10465 = vmatprep.subr.bf16.mxu0 0
      %10466 = vmatpush1.bf16.msra.mxu0 %v10403
      %10467 = vmatprep.subr.bf16.mxu0 0
      %10468 = vmatpush2.bf16.msra.mxu0 %v10418
      %10469 = vmatprep.subr.bf16.mxu0 0
      %10470 = vmatpush2.bf16.msra.mxu0 %v10417
      %10471 = vmatprep.subr.bf16.mxu0 0
      %10472 = vmatpush2.bf16.msra.mxu0 %v10416
      %10473 = vmatprep.subr.bf16.mxu0 0
      %10474 = vmatpush2.bf16.msra.mxu0 %v10415
      %10475 = vmatprep.subr.bf16.mxu0 0
      %10476 = vmatpush2.bf16.msra.mxu0 %v10414
      %10477 = vmatprep.subr.bf16.mxu0 0
      %10478 = vmatpush2.bf16.msra.mxu0 %v10413
      %10479 = vmatprep.subr.bf16.mxu0 0
      %10480 = vmatpush2.bf16.msra.mxu0 %v10412
      %10481 = vmatprep.subr.bf16.mxu0 0
      %10482 = vmatpush2.bf16.msra.mxu0 %v10411
      %10483 = vmatprep.mubr.bf16.mxu0 %v10162
      %10484 = vmatmul.mubr.bf16.gmra.mxu0 %v10098
      %v10485 = vpop.f32.mrf.mxu0
      %v10486 = vadd.f32 0.0, %v10485
      %v10487 = vpop.f32.mrf.mxu0
      %v10488 = vpop.f32.mrf.mxu0
      %v10489 = vadd.f32 0.0, %v10488
      %v10490 = vpop.f32.mrf.mxu0
      %10491 = vmatprep.mubr.bf16.mxu0 %v10163
      %10492 = vmatmul.mubr.bf16.gmra.mxu0 %v10099
      %v10493 = vpop.f32.mrf.mxu0
      %v10494 = vadd.f32 0.0, %v10493
      %v10495 = vpop.f32.mrf.mxu0
      %v10496 = vpop.f32.mrf.mxu0
      %v10497 = vadd.f32 0.0, %v10496
      %v10498 = vpop.f32.mrf.mxu0
      %10499 = vmatprep.mubr.bf16.mxu0 %v10164
      %10500 = vmatmul.mubr.bf16.gmra.mxu0 %v10100
      %v10501 = vpop.f32.mrf.mxu0
      %v10502 = vadd.f32 0.0, %v10501
      %v10503 = vpop.f32.mrf.mxu0
      %v10504 = vpop.f32.mrf.mxu0
      %v10505 = vadd.f32 0.0, %v10504
      %v10506 = vpop.f32.mrf.mxu0
      %10507 = vmatprep.mubr.bf16.mxu0 %v10165
      %10508 = vmatmul.mubr.bf16.gmra.mxu0 %v10101
      %v10509 = vpop.f32.mrf.mxu0
      %v10510 = vadd.f32 0.0, %v10509
      %v10511 = vpop.f32.mrf.mxu0
      %v10512 = vpop.f32.mrf.mxu0
      %v10513 = vadd.f32 0.0, %v10512
      %v10514 = vpop.f32.mrf.mxu0
      %10515 = vmatprep.mubr.bf16.mxu0 %v10166
      %10516 = vmatmul.mubr.bf16.gmra.mxu0 %v10102
      %v10517 = vpop.f32.mrf.mxu0
      %v10518 = vadd.f32 0.0, %v10517
      %v10519 = vpop.f32.mrf.mxu0
      %v10520 = vpop.f32.mrf.mxu0
      %v10521 = vadd.f32 0.0, %v10520
      %v10522 = vpop.f32.mrf.mxu0
      %10523 = vmatprep.mubr.bf16.mxu0 %v10167
      %10524 = vmatmul.mubr.bf16.gmra.mxu0 %v10103
      %v10525 = vpop.f32.mrf.mxu0
      %v10526 = vadd.f32 0.0, %v10525
      %v10527 = vpop.f32.mrf.mxu0
      %v10528 = vpop.f32.mrf.mxu0
      %v10529 = vadd.f32 0.0, %v10528
      %v10530 = vpop.f32.mrf.mxu0
      %10531 = vmatprep.mubr.bf16.mxu0 %v10168
      %10532 = vmatmul.mubr.bf16.gmra.mxu0 %v10104
      %v10533 = vpop.f32.mrf.mxu0
      %v10534 = vadd.f32 0.0, %v10533
      %v10535 = vpop.f32.mrf.mxu0
      %v10536 = vpop.f32.mrf.mxu0
      %v10537 = vadd.f32 0.0, %v10536
      %v10538 = vpop.f32.mrf.mxu0
      %10539 = vmatprep.mubr.bf16.mxu0 %v10169
      %10540 = vmatmul.mubr.bf16.gmra.mxu0 %v10105
      %v10541 = vpop.f32.mrf.mxu0
      %v10542 = vadd.f32 0.0, %v10541
      %v10543 = vpop.f32.mrf.mxu0
      %v10544 = vpop.f32.mrf.mxu0
      %v10545 = vadd.f32 0.0, %v10544
      %v10546 = vpop.f32.mrf.mxu0
      %10547 = vmatprep.mubr.bf16.mxu0 %v10170
      %10548 = vmatmul.mubr.bf16.gmra.mxu0 %v10106
      %v10549 = vpop.f32.mrf.mxu0
      %v10550 = vadd.f32 0.0, %v10549
      %v10551 = vpop.f32.mrf.mxu0
      %v10552 = vpop.f32.mrf.mxu0
      %v10553 = vadd.f32 0.0, %v10552
      %v10554 = vpop.f32.mrf.mxu0
      %10555 = vmatprep.mubr.bf16.mxu0 %v10171
      %10556 = vmatmul.mubr.bf16.gmra.mxu0 %v10107
      %v10557 = vpop.f32.mrf.mxu0
      %v10558 = vadd.f32 0.0, %v10557
      %v10559 = vpop.f32.mrf.mxu0
      %v10560 = vpop.f32.mrf.mxu0
      %v10561 = vadd.f32 0.0, %v10560
      %v10562 = vpop.f32.mrf.mxu0
      %10563 = vmatprep.mubr.bf16.mxu0 %v10172
      %10564 = vmatmul.mubr.bf16.gmra.mxu0 %v10108
      %v10565 = vpop.f32.mrf.mxu0
      %v10566 = vadd.f32 0.0, %v10565
      %v10567 = vpop.f32.mrf.mxu0
      %v10568 = vpop.f32.mrf.mxu0
      %v10569 = vadd.f32 0.0, %v10568
      %v10570 = vpop.f32.mrf.mxu0
      %10571 = vmatprep.mubr.bf16.mxu0 %v10173
      %10572 = vmatmul.mubr.bf16.gmra.mxu0 %v10109
      %v10573 = vpop.f32.mrf.mxu0
      %v10574 = vadd.f32 0.0, %v10573
      %v10575 = vpop.f32.mrf.mxu0
      %v10576 = vpop.f32.mrf.mxu0
      %v10577 = vadd.f32 0.0, %v10576
      %v10578 = vpop.f32.mrf.mxu0
      %10579 = vmatprep.mubr.bf16.mxu0 %v10174
      %10580 = vmatmul.mubr.bf16.gmra.mxu0 %v10110
      %v10581 = vpop.f32.mrf.mxu0
      %v10582 = vadd.f32 0.0, %v10581
      %v10583 = vpop.f32.mrf.mxu0
      %v10584 = vpop.f32.mrf.mxu0
      %v10585 = vadd.f32 0.0, %v10584
      %v10586 = vpop.f32.mrf.mxu0
      %10587 = vmatprep.mubr.bf16.mxu0 %v10175
      %10588 = vmatmul.mubr.bf16.gmra.mxu0 %v10111
      %v10589 = vpop.f32.mrf.mxu0
      %v10590 = vadd.f32 0.0, %v10589
      %v10591 = vpop.f32.mrf.mxu0
      %v10592 = vpop.f32.mrf.mxu0
      %v10593 = vadd.f32 0.0, %v10592
      %v10594 = vpop.f32.mrf.mxu0
      %10595 = vmatprep.mubr.bf16.mxu0 %v10176
      %10596 = vmatmul.mubr.bf16.gmra.mxu0 %v10112
      %v10597 = vpop.f32.mrf.mxu0
      %v10598 = vadd.f32 0.0, %v10597
      %v10599 = vpop.f32.mrf.mxu0
      %v10600 = vpop.f32.mrf.mxu0
      %v10601 = vadd.f32 0.0, %v10600
      %v10602 = vpop.f32.mrf.mxu0
      %10603 = vmatprep.mubr.bf16.mxu0 %v10177
      %10604 = vmatmul.mubr.bf16.gmra.mxu0 %v10113
      %v10605 = vpop.f32.mrf.mxu0
      %v10606 = vadd.f32 0.0, %v10605
      %v10607 = vpop.f32.mrf.mxu0
      %v10608 = vpop.f32.mrf.mxu0
      %v10609 = vadd.f32 0.0, %v10608
      %v10610 = vpop.f32.mrf.mxu0
      %10611 = vdwg.mxu0
      %10612 = vmatprep.subr.bf16.mxu0 0
      %10613 = vmatpush1.bf16.msra.mxu0 %v10426
      %10614 = vmatprep.subr.bf16.mxu0 0
      %10615 = vmatpush1.bf16.msra.mxu0 %v10425
      %10616 = vmatprep.subr.bf16.mxu0 0
      %10617 = vmatpush1.bf16.msra.mxu0 %v10424
      %10618 = vmatprep.subr.bf16.mxu0 0
      %10619 = vmatpush1.bf16.msra.mxu0 %v10423
      %10620 = vmatprep.subr.bf16.mxu0 0
      %10621 = vmatpush1.bf16.msra.mxu0 %v10422
      %10622 = vmatprep.subr.bf16.mxu0 0
      %10623 = vmatpush1.bf16.msra.mxu0 %v10421
      %10624 = vmatprep.subr.bf16.mxu0 0
      %10625 = vmatpush1.bf16.msra.mxu0 %v10420
      %10626 = vmatprep.subr.bf16.mxu0 0
      %10627 = vmatpush1.bf16.msra.mxu0 %v10419
      %10628 = vmatprep.subr.bf16.mxu0 0
      %10629 = vmatpush2.bf16.msra.mxu0 0
      %10630 = vmatprep.subr.bf16.mxu0 0
      %10631 = vmatpush2.bf16.msra.mxu0 0
      %10632 = vmatprep.subr.bf16.mxu0 0
      %10633 = vmatpush2.bf16.msra.mxu0 0
      %10634 = vmatprep.subr.bf16.mxu0 0
      %10635 = vmatpush2.bf16.msra.mxu0 0
      %10636 = vmatprep.subr.bf16.mxu0 0
      %10637 = vmatpush2.bf16.msra.mxu0 0
      %10638 = vmatprep.subr.bf16.mxu0 0
      %10639 = vmatpush2.bf16.msra.mxu0 0
      %10640 = vmatprep.subr.bf16.mxu0 0
      %10641 = vmatpush2.bf16.msra.mxu0 0
      %10642 = vmatprep.subr.bf16.mxu0 0
      %10643 = vmatpush2.bf16.msra.mxu0 0
      %10644 = vmatprep.mubr.bf16.mxu0 0
      %10645 = vmatmul.mubr.bf16.gmra.mxu0 %v10226
      %v10646 = vpop.f32.mrf.mxu0
      %v10647 = vadd.f32 %v10486, %v10646
      %v10648 = vpop.f32.mrf.mxu0
      %v10649 = vpop.f32.mrf.mxu0
      %v10650 = vadd.f32 %v10489, %v10649
      %v10651 = vpop.f32.mrf.mxu0
      %10652 = vmatprep.mubr.bf16.mxu0 0
      %10653 = vmatmul.mubr.bf16.gmra.mxu0 %v10227
      %v10654 = vpop.f32.mrf.mxu0
      %v10655 = vadd.f32 %v10494, %v10654
      %v10656 = vpop.f32.mrf.mxu0
      %v10657 = vpop.f32.mrf.mxu0
      %v10658 = vadd.f32 %v10497, %v10657
      %v10659 = vpop.f32.mrf.mxu0
      %10660 = vmatprep.mubr.bf16.mxu0 0
      %10661 = vmatmul.mubr.bf16.gmra.mxu0 %v10228
      %v10662 = vpop.f32.mrf.mxu0
      %v10663 = vadd.f32 %v10502, %v10662
      %v10664 = vpop.f32.mrf.mxu0
      %v10665 = vpop.f32.mrf.mxu0
      %v10666 = vadd.f32 %v10505, %v10665
      %v10667 = vpop.f32.mrf.mxu0
      %10668 = vmatprep.mubr.bf16.mxu0 0
      %10669 = vmatmul.mubr.bf16.gmra.mxu0 %v10229
      %v10670 = vpop.f32.mrf.mxu0
      %v10671 = vadd.f32 %v10510, %v10670
      %v10672 = vpop.f32.mrf.mxu0
      %v10673 = vpop.f32.mrf.mxu0
      %v10674 = vadd.f32 %v10513, %v10673
      %v10675 = vpop.f32.mrf.mxu0
      %10676 = vmatprep.mubr.bf16.mxu0 0
      %10677 = vmatmul.mubr.bf16.gmra.mxu0 %v10230
      %v10678 = vpop.f32.mrf.mxu0
      %v10679 = vadd.f32 %v10518, %v10678
      %v10680 = vpop.f32.mrf.mxu0
      %v10681 = vpop.f32.mrf.mxu0
      %v10682 = vadd.f32 %v10521, %v10681
      %v10683 = vpop.f32.mrf.mxu0
      %10684 = vmatprep.mubr.bf16.mxu0 0
      %10685 = vmatmul.mubr.bf16.gmra.mxu0 %v10231
      %v10686 = vpop.f32.mrf.mxu0
      %v10687 = vadd.f32 %v10526, %v10686
      %v10688 = vpop.f32.mrf.mxu0
      %v10689 = vpop.f32.mrf.mxu0
      %v10690 = vadd.f32 %v10529, %v10689
      %v10691 = vpop.f32.mrf.mxu0
      %10692 = vmatprep.mubr.bf16.mxu0 0
      %10693 = vmatmul.mubr.bf16.gmra.mxu0 %v10232
      %v10694 = vpop.f32.mrf.mxu0
      %v10695 = vadd.f32 %v10534, %v10694
      %v10696 = vpop.f32.mrf.mxu0
      %v10697 = vpop.f32.mrf.mxu0
      %v10698 = vadd.f32 %v10537, %v10697
      %v10699 = vpop.f32.mrf.mxu0
      %10700 = vmatprep.mubr.bf16.mxu0 0
      %10701 = vmatmul.mubr.bf16.gmra.mxu0 %v10233
      %v10702 = vpop.f32.mrf.mxu0
      %v10703 = vadd.f32 %v10542, %v10702
      %v10704 = vpop.f32.mrf.mxu0
      %v10705 = vpop.f32.mrf.mxu0
      %v10706 = vadd.f32 %v10545, %v10705
      %v10707 = vpop.f32.mrf.mxu0
      %10708 = vmatprep.mubr.bf16.mxu0 0
      %10709 = vmatmul.mubr.bf16.gmra.mxu0 %v10234
      %v10710 = vpop.f32.mrf.mxu0
      %v10711 = vadd.f32 %v10550, %v10710
      %v10712 = vpop.f32.mrf.mxu0
      %v10713 = vpop.f32.mrf.mxu0
      %v10714 = vadd.f32 %v10553, %v10713
      %v10715 = vpop.f32.mrf.mxu0
      %10716 = vmatprep.mubr.bf16.mxu0 0
      %10717 = vmatmul.mubr.bf16.gmra.mxu0 %v10235
      %v10718 = vpop.f32.mrf.mxu0
      %v10719 = vadd.f32 %v10558, %v10718
      %v10720 = vpop.f32.mrf.mxu0
      %v10721 = vpop.f32.mrf.mxu0
      %v10722 = vadd.f32 %v10561, %v10721
      %v10723 = vpop.f32.mrf.mxu0
      %10724 = vmatprep.mubr.bf16.mxu0 0
      %10725 = vmatmul.mubr.bf16.gmra.mxu0 %v10236
      %v10726 = vpop.f32.mrf.mxu0
      %v10727 = vadd.f32 %v10566, %v10726
      %v10728 = vpop.f32.mrf.mxu0
      %v10729 = vpop.f32.mrf.mxu0
      %v10730 = vadd.f32 %v10569, %v10729
      %v10731 = vpop.f32.mrf.mxu0
      %10732 = vmatprep.mubr.bf16.mxu0 0
      %10733 = vmatmul.mubr.bf16.gmra.mxu0 %v10237
      %v10734 = vpop.f32.mrf.mxu0
      %v10735 = vadd.f32 %v10574, %v10734
      %v10736 = vpop.f32.mrf.mxu0
      %v10737 = vpop.f32.mrf.mxu0
      %v10738 = vadd.f32 %v10577, %v10737
      %v10739 = vpop.f32.mrf.mxu0
      %10740 = vmatprep.mubr.bf16.mxu0 0
      %10741 = vmatmul.mubr.bf16.gmra.mxu0 %v10238
      %v10742 = vpop.f32.mrf.mxu0
      %v10743 = vadd.f32 %v10582, %v10742
      %v10744 = vpop.f32.mrf.mxu0
      %v10745 = vpop.f32.mrf.mxu0
      %v10746 = vadd.f32 %v10585, %v10745
      %v10747 = vpop.f32.mrf.mxu0
      %10748 = vmatprep.mubr.bf16.mxu0 0
      %10749 = vmatmul.mubr.bf16.gmra.mxu0 %v10239
      %v10750 = vpop.f32.mrf.mxu0
      %v10751 = vadd.f32 %v10590, %v10750
      %v10752 = vpop.f32.mrf.mxu0
      %v10753 = vpop.f32.mrf.mxu0
      %v10754 = vadd.f32 %v10593, %v10753
      %v10755 = vpop.f32.mrf.mxu0
      %10756 = vmatprep.mubr.bf16.mxu0 0
      %10757 = vmatmul.mubr.bf16.gmra.mxu0 %v10240
      %v10758 = vpop.f32.mrf.mxu0
      %v10759 = vadd.f32 %v10598, %v10758
      %v10760 = vpop.f32.mrf.mxu0
      %v10761 = vpop.f32.mrf.mxu0
      %v10762 = vadd.f32 %v10601, %v10761
      %v10763 = vpop.f32.mrf.mxu0
      %10764 = vmatprep.mubr.bf16.mxu0 0
      %10765 = vmatmul.mubr.bf16.gmra.mxu0 %v10241
      %v10766 = vpop.f32.mrf.mxu0
      %v10767 = vadd.f32 %v10606, %v10766
      %v10768 = vpop.f32.mrf.mxu0
      %v10769 = vpop.f32.mrf.mxu0
      %v10770 = vadd.f32 %v10609, %v10769
      %v10771 = vpop.f32.mrf.mxu0
      %10772 = vdwg.mxu0
      %v10773 = vadd.f32 %v9387, %v10647
      %v10774 = vadd.f32 %v9390, %v10650
      %v10775 = vadd.f32 %v9395, %v10655
      %v10776 = vadd.f32 %v9398, %v10658
      %v10777 = vadd.f32 %v9403, %v10663
      %v10778 = vadd.f32 %v9406, %v10666
      %v10779 = vadd.f32 %v9411, %v10671
      %v10780 = vadd.f32 %v9414, %v10674
      %v10781 = vadd.f32 %v9419, %v10679
      %v10782 = vadd.f32 %v9422, %v10682
      %v10783 = vadd.f32 %v9427, %v10687
      %v10784 = vadd.f32 %v9430, %v10690
      %v10785 = vadd.f32 %v9435, %v10695
      %v10786 = vadd.f32 %v9438, %v10698
      %v10787 = vadd.f32 %v9443, %v10703
      %v10788 = vadd.f32 %v9446, %v10706
      %v10789 = vadd.f32 %v9451, %v10711
      %v10790 = vadd.f32 %v9454, %v10714
      %v10791 = vadd.f32 %v9459, %v10719
      %v10792 = vadd.f32 %v9462, %v10722
      %v10793 = vadd.f32 %v9467, %v10727
      %v10794 = vadd.f32 %v9470, %v10730
      %v10795 = vadd.f32 %v9475, %v10735
      %v10796 = vadd.f32 %v9478, %v10738
      %v10797 = vadd.f32 %v9483, %v10743
      %v10798 = vadd.f32 %v9486, %v10746
      %v10799 = vadd.f32 %v9491, %v10751
      %v10800 = vadd.f32 %v9494, %v10754
      %v10801 = vadd.f32 %v9499, %v10759
      %v10802 = vadd.f32 %v9502, %v10762
      %v10803 = vadd.f32 %v9507, %v10767
      %v10804 = vadd.f32 %v9510, %v10770
      %v10805 = vld [vmem:[%s4] sm:$0x1]
      %v10807 = vlaneseq
      %v10808 = vshrl.u32 %v10807, 7
      %v10809 = vsub.s32 0, %v10808
      %v10810 = vrot.slane %v10805, %v10809
      %v10812 = vadd.f32 %v10773, %v10810
      %v10813 = vadd.f32 %v10774, %v10810
      %v10814 = vadd.f32 %v10775, %v10810
      %v10815 = vadd.f32 %v10776, %v10810
      %v10816 = vadd.f32 %v10777, %v10810
      %v10817 = vadd.f32 %v10778, %v10810
      %v10818 = vadd.f32 %v10779, %v10810
      %v10819 = vadd.f32 %v10780, %v10810
      %v10820 = vadd.f32 %v10781, %v10810
      %v10821 = vadd.f32 %v10782, %v10810
      %v10822 = vadd.f32 %v10783, %v10810
      %v10823 = vadd.f32 %v10784, %v10810
      %v10824 = vadd.f32 %v10785, %v10810
      %v10825 = vadd.f32 %v10786, %v10810
      %v10826 = vadd.f32 %v10787, %v10810
      %v10827 = vadd.f32 %v10788, %v10810
      %v10828 = vadd.f32 %v10789, %v10810
      %v10829 = vadd.f32 %v10790, %v10810
      %v10830 = vadd.f32 %v10791, %v10810
      %v10831 = vadd.f32 %v10792, %v10810
      %v10832 = vadd.f32 %v10793, %v10810
      %v10833 = vadd.f32 %v10794, %v10810
      %v10834 = vadd.f32 %v10795, %v10810
      %v10835 = vadd.f32 %v10796, %v10810
      %v10836 = vadd.f32 %v10797, %v10810
      %v10837 = vadd.f32 %v10798, %v10810
      %v10838 = vadd.f32 %v10799, %v10810
      %v10839 = vadd.f32 %v10800, %v10810
      %v10840 = vadd.f32 %v10801, %v10810
      %v10841 = vadd.f32 %v10802, %v10810
      %v10842 = vadd.f32 %v10803, %v10810
      %v10843 = vadd.f32 %v10804, %v10810
      %v10844 = vld [vmem:[%s1160] sm:$0xf]
      %v10845 = vld [vmem:[%s1160 + $0x4] sm:$0xf]
      %v10846 = vld [vmem:[%s1160 + $0x8] sm:$0xf]
      %v10847 = vld [vmem:[%s1160 + $0xc] sm:$0xf]
      %v10848 = vld [vmem:[%s1160 + $0x10] sm:$0x1]
      %v10849 = vld [vmem:[%s1160 + $0x14] sm:$0xf]
      %v10850 = vld [vmem:[%s1160 + $0x18] sm:$0xf]
      %v10851 = vld [vmem:[%s1160 + $0x1c] sm:$0xf]
      %v10852 = vld [vmem:[%s1160 + $0x20] sm:$0xf]
      %v10853 = vld [vmem:[%s1160 + $0x24] sm:$0x1]
      %v10854 = vld [vmem:[%s1160 + $0x28] sm:$0xf]
      %v10855 = vld [vmem:[%s1160 + $0x2c] sm:$0xf]
      %v10856 = vld [vmem:[%s1160 + $0x30] sm:$0xf]
      %v10857 = vld [vmem:[%s1160 + $0x34] sm:$0xf]
      %v10858 = vld [vmem:[%s1160 + $0x38] sm:$0x1]
      %v10859 = vld [vmem:[%s1160 + $0x3c] sm:$0xf]
      %v10860 = vld [vmem:[%s1160 + $0x40] sm:$0xf]
      %v10861 = vld [vmem:[%s1160 + $0x44] sm:$0xf]
      %v10862 = vld [vmem:[%s1160 + $0x48] sm:$0xf]
      %v10863 = vld [vmem:[%s1160 + $0x4c] sm:$0x1]
      %v10864 = vld [vmem:[%s1160 + $0x50] sm:$0xf]
      %v10865 = vld [vmem:[%s1160 + $0x54] sm:$0xf]
      %v10866 = vld [vmem:[%s1160 + $0x58] sm:$0xf]
      %v10867 = vld [vmem:[%s1160 + $0x5c] sm:$0xf]
      %v10868 = vld [vmem:[%s1160 + $0x60] sm:$0x1]
      %v10869 = vld [vmem:[%s1160 + $0x64] sm:$0xf]
      %v10870 = vld [vmem:[%s1160 + $0x68] sm:$0xf]
      %v10871 = vld [vmem:[%s1160 + $0x6c] sm:$0xf]
      %v10872 = vld [vmem:[%s1160 + $0x70] sm:$0xf]
      %v10873 = vld [vmem:[%s1160 + $0x74] sm:$0x1]
      %v10874 = vld [vmem:[%s1160 + $0x78] sm:$0xf]
      %v10875 = vld [vmem:[%s1160 + $0x7c] sm:$0xf]
      %v10876 = vld [vmem:[%s1160 + $0x80] sm:$0xf]
      %v10877 = vld [vmem:[%s1160 + $0x84] sm:$0xf]
      %v10878 = vld [vmem:[%s1160 + $0x88] sm:$0x1]
      %v10879 = vld [vmem:[%s1160 + $0x8c] sm:$0xf]
      %v10880 = vld [vmem:[%s1160 + $0x90] sm:$0xf]
      %v10881 = vld [vmem:[%s1160 + $0x94] sm:$0xf]
      %v10882 = vld [vmem:[%s1160 + $0x98] sm:$0xf]
      %v10883 = vld [vmem:[%s1160 + $0x9c] sm:$0x1]
      %v10885 = vshrl.u32 %v10844, 16
      %v10887 = vrot.slane %v10885, 4
      %v10888 = vshll.u32 %v10844, 16
      %v10890 = vrot.slane %v10888, 5
      %v10891 = vor.u32 %v10887, %v10890
      %v10892 = vrot.slane %v10891, 4
      %v10894 = vshll.u32 %v10845, 16
      %v10896 = vrot.slane %v10894, 5
      %v10897 = vsel %vm401, %v10892, %v10896
      %v10898 = vshrl.u32 %v10845, 16
      %v10900 = vrot.slane %v10898, 4
      %v10901 = vor.u32 %v10900, %v10896
      %v10902 = vrot.slane %v10901, 4
      %v10904 = vshll.u32 %v10846, 16
      %v10906 = vrot.slane %v10904, 5
      %v10907 = vsel %vm401, %v10902, %v10906
      %v10908 = vshrl.u32 %v10846, 16
      %v10910 = vrot.slane %v10908, 4
      %v10911 = vor.u32 %v10910, %v10906
      %v10912 = vrot.slane %v10911, 4
      %v10914 = vshll.u32 %v10847, 16
      %v10916 = vrot.slane %v10914, 5
      %v10917 = vsel %vm401, %v10912, %v10916
      %v10918 = vshrl.u32 %v10847, 16
      %v10920 = vrot.slane %v10918, 4
      %v10921 = vor.u32 %v10920, %v10916
      %v10922 = vrot.slane %v10921, 4
      %v10924 = vshll.u32 %v10848, 16
      %v10926 = vrot.slane %v10924, 5
      %v10927 = vsel %vm401, %v10922, %v10926
      %v10929 = vshrl.u32 %v10849, 16
      %v10931 = vrot.slane %v10929, 4
      %v10932 = vshll.u32 %v10849, 16
      %v10934 = vrot.slane %v10932, 5
      %v10935 = vor.u32 %v10931, %v10934
      %v10936 = vrot.slane %v10935, 4
      %v10938 = vshll.u32 %v10850, 16
      %v10940 = vrot.slane %v10938, 5
      %v10941 = vsel %vm401, %v10936, %v10940
      %v10942 = vshrl.u32 %v10850, 16
      %v10944 = vrot.slane %v10942, 4
      %v10945 = vor.u32 %v10944, %v10940
      %v10946 = vrot.slane %v10945, 4
      %v10948 = vshll.u32 %v10851, 16
      %v10950 = vrot.slane %v10948, 5
      %v10951 = vsel %vm401, %v10946, %v10950
      %v10952 = vshrl.u32 %v10851, 16
      %v10954 = vrot.slane %v10952, 4
      %v10955 = vor.u32 %v10954, %v10950
      %v10956 = vrot.slane %v10955, 4
      %v10958 = vshll.u32 %v10852, 16
      %v10960 = vrot.slane %v10958, 5
      %v10961 = vsel %vm401, %v10956, %v10960
      %v10962 = vshrl.u32 %v10852, 16
      %v10964 = vrot.slane %v10962, 4
      %v10965 = vor.u32 %v10964, %v10960
      %v10966 = vrot.slane %v10965, 4
      %v10968 = vshll.u32 %v10853, 16
      %v10970 = vrot.slane %v10968, 5
      %v10971 = vsel %vm401, %v10966, %v10970
      %v10973 = vshrl.u32 %v10854, 16
      %v10975 = vrot.slane %v10973, 4
      %v10976 = vshll.u32 %v10854, 16
      %v10978 = vrot.slane %v10976, 5
      %v10979 = vor.u32 %v10975, %v10978
      %v10980 = vrot.slane %v10979, 4
      %v10982 = vshll.u32 %v10855, 16
      %v10984 = vrot.slane %v10982, 5
      %v10985 = vsel %vm401, %v10980, %v10984
      %v10986 = vshrl.u32 %v10855, 16
      %v10988 = vrot.slane %v10986, 4
      %v10989 = vor.u32 %v10988, %v10984
      %v10990 = vrot.slane %v10989, 4
      %v10992 = vshll.u32 %v10856, 16
      %v10994 = vrot.slane %v10992, 5
      %v10995 = vsel %vm401, %v10990, %v10994
      %v10996 = vshrl.u32 %v10856, 16
      %v10998 = vrot.slane %v10996, 4
      %v10999 = vor.u32 %v10998, %v10994
      %v11000 = vrot.slane %v10999, 4
      %v11002 = vshll.u32 %v10857, 16
      %v11004 = vrot.slane %v11002, 5
      %v11005 = vsel %vm401, %v11000, %v11004
      %v11006 = vshrl.u32 %v10857, 16
      %v11008 = vrot.slane %v11006, 4
      %v11009 = vor.u32 %v11008, %v11004
      %v11010 = vrot.slane %v11009, 4
      %v11012 = vshll.u32 %v10858, 16
      %v11014 = vrot.slane %v11012, 5
      %v11015 = vsel %vm401, %v11010, %v11014
      %v11017 = vshrl.u32 %v10859, 16
      %v11019 = vrot.slane %v11017, 4
      %v11020 = vshll.u32 %v10859, 16
      %v11022 = vrot.slane %v11020, 5
      %v11023 = vor.u32 %v11019, %v11022
      %v11024 = vrot.slane %v11023, 4
      %v11026 = vshll.u32 %v10860, 16
      %v11028 = vrot.slane %v11026, 5
      %v11029 = vsel %vm401, %v11024, %v11028
      %v11030 = vshrl.u32 %v10860, 16
      %v11032 = vrot.slane %v11030, 4
      %v11033 = vor.u32 %v11032, %v11028
      %v11034 = vrot.slane %v11033, 4
      %v11036 = vshll.u32 %v10861, 16
      %v11038 = vrot.slane %v11036, 5
      %v11039 = vsel %vm401, %v11034, %v11038
      %v11040 = vshrl.u32 %v10861, 16
      %v11042 = vrot.slane %v11040, 4
      %v11043 = vor.u32 %v11042, %v11038
      %v11044 = vrot.slane %v11043, 4
      %v11046 = vshll.u32 %v10862, 16
      %v11048 = vrot.slane %v11046, 5
      %v11049 = vsel %vm401, %v11044, %v11048
      %v11050 = vshrl.u32 %v10862, 16
      %v11052 = vrot.slane %v11050, 4
      %v11053 = vor.u32 %v11052, %v11048
      %v11054 = vrot.slane %v11053, 4
      %v11056 = vshll.u32 %v10863, 16
      %v11058 = vrot.slane %v11056, 5
      %v11059 = vsel %vm401, %v11054, %v11058
      %v11061 = vshrl.u32 %v10864, 16
      %v11063 = vrot.slane %v11061, 4
      %v11064 = vshll.u32 %v10864, 16
      %v11066 = vrot.slane %v11064, 5
      %v11067 = vor.u32 %v11063, %v11066
      %v11068 = vrot.slane %v11067, 4
      %v11070 = vshll.u32 %v10865, 16
      %v11072 = vrot.slane %v11070, 5
      %v11073 = vsel %vm401, %v11068, %v11072
      %v11074 = vshrl.u32 %v10865, 16
      %v11076 = vrot.slane %v11074, 4
      %v11077 = vor.u32 %v11076, %v11072
      %v11078 = vrot.slane %v11077, 4
      %v11080 = vshll.u32 %v10866, 16
      %v11082 = vrot.slane %v11080, 5
      %v11083 = vsel %vm401, %v11078, %v11082
      %v11084 = vshrl.u32 %v10866, 16
      %v11086 = vrot.slane %v11084, 4
      %v11087 = vor.u32 %v11086, %v11082
      %v11088 = vrot.slane %v11087, 4
      %v11090 = vshll.u32 %v10867, 16
      %v11092 = vrot.slane %v11090, 5
      %v11093 = vsel %vm401, %v11088, %v11092
      %v11094 = vshrl.u32 %v10867, 16
      %v11096 = vrot.slane %v11094, 4
      %v11097 = vor.u32 %v11096, %v11092
      %v11098 = vrot.slane %v11097, 4
      %v11100 = vshll.u32 %v10868, 16
      %v11102 = vrot.slane %v11100, 5
      %v11103 = vsel %vm401, %v11098, %v11102
      %v11105 = vshrl.u32 %v10869, 16
      %v11107 = vrot.slane %v11105, 4
      %v11108 = vshll.u32 %v10869, 16
      %v11110 = vrot.slane %v11108, 5
      %v11111 = vor.u32 %v11107, %v11110
      %v11112 = vrot.slane %v11111, 4
      %v11114 = vshll.u32 %v10870, 16
      %v11116 = vrot.slane %v11114, 5
      %v11117 = vsel %vm401, %v11112, %v11116
      %v11118 = vshrl.u32 %v10870, 16
      %v11120 = vrot.slane %v11118, 4
      %v11121 = vor.u32 %v11120, %v11116
      %v11122 = vrot.slane %v11121, 4
      %v11124 = vshll.u32 %v10871, 16
      %v11126 = vrot.slane %v11124, 5
      %v11127 = vsel %vm401, %v11122, %v11126
      %v11128 = vshrl.u32 %v10871, 16
      %v11130 = vrot.slane %v11128, 4
      %v11131 = vor.u32 %v11130, %v11126
      %v11132 = vrot.slane %v11131, 4
      %v11134 = vshll.u32 %v10872, 16
      %v11136 = vrot.slane %v11134, 5
      %v11137 = vsel %vm401, %v11132, %v11136
      %v11138 = vshrl.u32 %v10872, 16
      %v11140 = vrot.slane %v11138, 4
      %v11141 = vor.u32 %v11140, %v11136
      %v11142 = vrot.slane %v11141, 4
      %v11144 = vshll.u32 %v10873, 16
      %v11146 = vrot.slane %v11144, 5
      %v11147 = vsel %vm401, %v11142, %v11146
      %v11149 = vshrl.u32 %v10874, 16
      %v11151 = vrot.slane %v11149, 4
      %v11152 = vshll.u32 %v10874, 16
      %v11154 = vrot.slane %v11152, 5
      %v11155 = vor.u32 %v11151, %v11154
      %v11156 = vrot.slane %v11155, 4
      %v11158 = vshll.u32 %v10875, 16
      %v11160 = vrot.slane %v11158, 5
      %v11161 = vsel %vm401, %v11156, %v11160
      %v11162 = vshrl.u32 %v10875, 16
      %v11164 = vrot.slane %v11162, 4
      %v11165 = vor.u32 %v11164, %v11160
      %v11166 = vrot.slane %v11165, 4
      %v11168 = vshll.u32 %v10876, 16
      %v11170 = vrot.slane %v11168, 5
      %v11171 = vsel %vm401, %v11166, %v11170
      %v11172 = vshrl.u32 %v10876, 16
      %v11174 = vrot.slane %v11172, 4
      %v11175 = vor.u32 %v11174, %v11170
      %v11176 = vrot.slane %v11175, 4
      %v11178 = vshll.u32 %v10877, 16
      %v11180 = vrot.slane %v11178, 5
      %v11181 = vsel %vm401, %v11176, %v11180
      %v11182 = vshrl.u32 %v10877, 16
      %v11184 = vrot.slane %v11182, 4
      %v11185 = vor.u32 %v11184, %v11180
      %v11186 = vrot.slane %v11185, 4
      %v11188 = vshll.u32 %v10878, 16
      %v11190 = vrot.slane %v11188, 5
      %v11191 = vsel %vm401, %v11186, %v11190
      %v11193 = vshrl.u32 %v10879, 16
      %v11195 = vrot.slane %v11193, 4
      %v11196 = vshll.u32 %v10879, 16
      %v11198 = vrot.slane %v11196, 5
      %v11199 = vor.u32 %v11195, %v11198
      %v11200 = vrot.slane %v11199, 4
      %v11202 = vshll.u32 %v10880, 16
      %v11204 = vrot.slane %v11202, 5
      %v11205 = vsel %vm401, %v11200, %v11204
      %v11206 = vshrl.u32 %v10880, 16
      %v11208 = vrot.slane %v11206, 4
      %v11209 = vor.u32 %v11208, %v11204
      %v11210 = vrot.slane %v11209, 4
      %v11212 = vshll.u32 %v10881, 16
      %v11214 = vrot.slane %v11212, 5
      %v11215 = vsel %vm401, %v11210, %v11214
      %v11216 = vshrl.u32 %v10881, 16
      %v11218 = vrot.slane %v11216, 4
      %v11219 = vor.u32 %v11218, %v11214
      %v11220 = vrot.slane %v11219, 4
      %v11222 = vshll.u32 %v10882, 16
      %v11224 = vrot.slane %v11222, 5
      %v11225 = vsel %vm401, %v11220, %v11224
      %v11226 = vshrl.u32 %v10882, 16
      %v11228 = vrot.slane %v11226, 4
      %v11229 = vor.u32 %v11228, %v11224
      %v11230 = vrot.slane %v11229, 4
      %v11232 = vshll.u32 %v10883, 16
      %v11234 = vrot.slane %v11232, 5
      %v11235 = vsel %vm401, %v11230, %v11234
      %v11236 = vld [vmem:[%s5] sm:$0xf]
      %v11237 = vld [vmem:[%s5 + $0x4] sm:$0xf]
      %v11238 = vld [vmem:[%s5 + $0x8] sm:$0xf]
      %v11239 = vld [vmem:[%s5 + $0xc] sm:$0xf]
      %v11240 = vld [vmem:[%s5 + $0x10] sm:$0xf]
      %v11241 = vld [vmem:[%s5 + $0x14] sm:$0xf]
      %v11242 = vld [vmem:[%s5 + $0x18] sm:$0xf]
      %v11243 = vld [vmem:[%s5 + $0x1c] sm:$0xf]
      %v11244 = vld [vmem:[%s5 + $0x20] sm:$0xf]
      %v11245 = vld [vmem:[%s5 + $0x24] sm:$0xf]
      %v11246 = vld [vmem:[%s5 + $0x28] sm:$0xf]
      %v11247 = vld [vmem:[%s5 + $0x2c] sm:$0xf]
      %v11248 = vld [vmem:[%s5 + $0x30] sm:$0xf]
      %v11249 = vld [vmem:[%s5 + $0x34] sm:$0xf]
      %v11250 = vld [vmem:[%s5 + $0x38] sm:$0xf]
      %v11251 = vld [vmem:[%s5 + $0x3c] sm:$0xf]
      %v11252 = vld [vmem:[%s6] sm:$0x1]
      %v11254 = vlaneseq
      %v11255 = vshrl.u32 %v11254, 7
      %v11256 = vsub.s32 0, %v11255
      %v11257 = vrot.slane %v11252, %v11256
      %v11259 = vunpack.c.l.b16 %v10897
      %v11260 = vunpack.c.l.b16 %v10907
      %v11261 = vunpack.c.l.b16 %v10917
      %v11262 = vunpack.c.l.b16 %v10927
      %v11263 = vunpack.c.l.b16 %v10941
      %v11264 = vunpack.c.l.b16 %v10951
      %v11265 = vunpack.c.l.b16 %v10961
      %v11266 = vunpack.c.l.b16 %v10971
      %v11267 = vunpack.c.l.b16 %v10985
      %v11268 = vunpack.c.l.b16 %v10995
      %v11269 = vunpack.c.l.b16 %v11005
      %v11270 = vunpack.c.l.b16 %v11015
      %v11271 = vunpack.c.l.b16 %v11029
      %v11272 = vunpack.c.l.b16 %v11039
      %v11273 = vunpack.c.l.b16 %v11049
      %v11274 = vunpack.c.l.b16 %v11059
      %v11275 = vunpack.c.l.b16 %v11073
      %v11276 = vunpack.c.l.b16 %v11083
      %v11277 = vunpack.c.l.b16 %v11093
      %v11278 = vunpack.c.l.b16 %v11103
      %v11279 = vunpack.c.l.b16 %v11117
      %v11280 = vunpack.c.l.b16 %v11127
      %v11281 = vunpack.c.l.b16 %v11137
      %v11282 = vunpack.c.l.b16 %v11147
      %v11283 = vunpack.c.l.b16 %v11161
      %v11284 = vunpack.c.l.b16 %v11171
      %v11285 = vunpack.c.l.b16 %v11181
      %v11286 = vunpack.c.l.b16 %v11191
      %v11287 = vunpack.c.l.b16 %v11205
      %v11288 = vunpack.c.l.b16 %v11215
      %v11289 = vunpack.c.l.b16 %v11225
      %v11290 = vunpack.c.l.b16 %v11235
      %v11291 = vpack.c.b16 %v11260, %v11259
      %v11292 = vpack.c.b16 %v11262, %v11261
      %v11293 = vpack.c.b16 %v11264, %v11263
      %v11294 = vpack.c.b16 %v11266, %v11265
      %v11295 = vpack.c.b16 %v11268, %v11267
      %v11296 = vpack.c.b16 %v11270, %v11269
      %v11297 = vpack.c.b16 %v11272, %v11271
      %v11298 = vpack.c.b16 %v11274, %v11273
      %v11299 = vpack.c.b16 %v11276, %v11275
      %v11300 = vpack.c.b16 %v11278, %v11277
      %v11301 = vpack.c.b16 %v11280, %v11279
      %v11302 = vpack.c.b16 %v11282, %v11281
      %v11303 = vpack.c.b16 %v11284, %v11283
      %v11304 = vpack.c.b16 %v11286, %v11285
      %v11305 = vpack.c.b16 %v11288, %v11287
      %v11306 = vpack.c.b16 %v11290, %v11289
      %v11339 = vunpack.c.l.b16 %v11236
      %v11340 = vunpack.c.l.b16 %v11237
      %v11341 = vunpack.c.l.b16 %v11238
      %v11342 = vunpack.c.l.b16 %v11239
      %v11343 = vunpack.c.l.b16 %v11240
      %v11344 = vunpack.c.l.b16 %v11241
      %v11345 = vunpack.c.l.b16 %v11242
      %v11346 = vunpack.c.l.b16 %v11243
      %v11347 = vunpack.c.l.b16 %v11244
      %v11348 = vunpack.c.l.b16 %v11245
      %v11349 = vunpack.c.l.b16 %v11246
      %v11350 = vunpack.c.l.b16 %v11247
      %v11351 = vunpack.c.l.b16 %v11248
      %v11352 = vunpack.c.l.b16 %v11249
      %v11353 = vunpack.c.l.b16 %v11250
      %v11354 = vunpack.c.l.b16 %v11251
      %v11355 = vpack.c.b16 %v11340, %v11339
      %v11356 = vpack.c.b16 %v11342, %v11341
      %v11357 = vpack.c.b16 %v11344, %v11343
      %v11358 = vpack.c.b16 %v11346, %v11345
      %v11359 = vpack.c.b16 %v11348, %v11347
      %v11360 = vpack.c.b16 %v11350, %v11349
      %v11361 = vpack.c.b16 %v11352, %v11351
      %v11362 = vpack.c.b16 %v11354, %v11353
      %11371 = vmatprep.subr.bf16.mxu0 0
      %11372 = vmatpush1.bf16.msra.mxu0 %v11362
      %11373 = vmatprep.subr.bf16.mxu0 0
      %11374 = vmatpush1.bf16.msra.mxu0 %v11361
      %11375 = vmatprep.subr.bf16.mxu0 0
      %11376 = vmatpush1.bf16.msra.mxu0 %v11360
      %11377 = vmatprep.subr.bf16.mxu0 0
      %11378 = vmatpush1.bf16.msra.mxu0 %v11359
      %11379 = vmatprep.subr.bf16.mxu0 0
      %11380 = vmatpush1.bf16.msra.mxu0 %v11358
      %11381 = vmatprep.subr.bf16.mxu0 0
      %11382 = vmatpush1.bf16.msra.mxu0 %v11357
      %11383 = vmatprep.subr.bf16.mxu0 0
      %11384 = vmatpush1.bf16.msra.mxu0 %v11356
      %11385 = vmatprep.subr.bf16.mxu0 0
      %11386 = vmatpush1.bf16.msra.mxu0 %v11355
      %11387 = vmatprep.subr.bf16.mxu0 0
      %11388 = vmatpush2.bf16.msra.mxu0 0
      %11389 = vmatprep.subr.bf16.mxu0 0
      %11390 = vmatpush2.bf16.msra.mxu0 0
      %11391 = vmatprep.subr.bf16.mxu0 0
      %11392 = vmatpush2.bf16.msra.mxu0 0
      %11393 = vmatprep.subr.bf16.mxu0 0
      %11394 = vmatpush2.bf16.msra.mxu0 0
      %11395 = vmatprep.subr.bf16.mxu0 0
      %11396 = vmatpush2.bf16.msra.mxu0 0
      %11397 = vmatprep.subr.bf16.mxu0 0
      %11398 = vmatpush2.bf16.msra.mxu0 0
      %11399 = vmatprep.subr.bf16.mxu0 0
      %11400 = vmatpush2.bf16.msra.mxu0 0
      %11401 = vmatprep.subr.bf16.mxu0 0
      %11402 = vmatpush2.bf16.msra.mxu0 0
      %11403 = vmatprep.mubr.bf16.mxu0 0
      %11404 = vmatmul.mubr.bf16.gmra.mxu0 %v11291
      %v11405 = vpop.f32.mrf.mxu0
      %v11406 = vadd.f32 %v11257, %v11405
      %v11407 = vpop.f32.mrf.mxu0
      %v11408 = vpop.f32.mrf.mxu0
      %v11409 = vadd.f32 %v11257, %v11408
      %v11410 = vpop.f32.mrf.mxu0
      %11411 = vmatprep.mubr.bf16.mxu0 0
      %11412 = vmatmul.mubr.bf16.gmra.mxu0 %v11292
      %v11413 = vpop.f32.mrf.mxu0
      %v11414 = vadd.f32 %v11257, %v11413
      %v11415 = vpop.f32.mrf.mxu0
      %v11416 = vpop.f32.mrf.mxu0
      %v11417 = vadd.f32 %v11257, %v11416
      %v11418 = vpop.f32.mrf.mxu0
      %11419 = vmatprep.mubr.bf16.mxu0 0
      %11420 = vmatmul.mubr.bf16.gmra.mxu0 %v11293
      %v11421 = vpop.f32.mrf.mxu0
      %v11422 = vadd.f32 %v11257, %v11421
      %v11423 = vpop.f32.mrf.mxu0
      %v11424 = vpop.f32.mrf.mxu0
      %v11425 = vadd.f32 %v11257, %v11424
      %v11426 = vpop.f32.mrf.mxu0
      %11427 = vmatprep.mubr.bf16.mxu0 0
      %11428 = vmatmul.mubr.bf16.gmra.mxu0 %v11294
      %v11429 = vpop.f32.mrf.mxu0
      %v11430 = vadd.f32 %v11257, %v11429
      %v11431 = vpop.f32.mrf.mxu0
      %v11432 = vpop.f32.mrf.mxu0
      %v11433 = vadd.f32 %v11257, %v11432
      %v11434 = vpop.f32.mrf.mxu0
      %11435 = vmatprep.mubr.bf16.mxu0 0
      %11436 = vmatmul.mubr.bf16.gmra.mxu0 %v11295
      %v11437 = vpop.f32.mrf.mxu0
      %v11438 = vadd.f32 %v11257, %v11437
      %v11439 = vpop.f32.mrf.mxu0
      %v11440 = vpop.f32.mrf.mxu0
      %v11441 = vadd.f32 %v11257, %v11440
      %v11442 = vpop.f32.mrf.mxu0
      %11443 = vmatprep.mubr.bf16.mxu0 0
      %11444 = vmatmul.mubr.bf16.gmra.mxu0 %v11296
      %v11445 = vpop.f32.mrf.mxu0
      %v11446 = vadd.f32 %v11257, %v11445
      %v11447 = vpop.f32.mrf.mxu0
      %v11448 = vpop.f32.mrf.mxu0
      %v11449 = vadd.f32 %v11257, %v11448
      %v11450 = vpop.f32.mrf.mxu0
      %11451 = vmatprep.mubr.bf16.mxu0 0
      %11452 = vmatmul.mubr.bf16.gmra.mxu0 %v11297
      %v11453 = vpop.f32.mrf.mxu0
      %v11454 = vadd.f32 %v11257, %v11453
      %v11455 = vpop.f32.mrf.mxu0
      %v11456 = vpop.f32.mrf.mxu0
      %v11457 = vadd.f32 %v11257, %v11456
      %v11458 = vpop.f32.mrf.mxu0
      %11459 = vmatprep.mubr.bf16.mxu0 0
      %11460 = vmatmul.mubr.bf16.gmra.mxu0 %v11298
      %v11461 = vpop.f32.mrf.mxu0
      %v11462 = vadd.f32 %v11257, %v11461
      %v11463 = vpop.f32.mrf.mxu0
      %v11464 = vpop.f32.mrf.mxu0
      %v11465 = vadd.f32 %v11257, %v11464
      %v11466 = vpop.f32.mrf.mxu0
      %11467 = vmatprep.mubr.bf16.mxu0 0
      %11468 = vmatmul.mubr.bf16.gmra.mxu0 %v11299
      %v11469 = vpop.f32.mrf.mxu0
      %v11470 = vadd.f32 %v11257, %v11469
      %v11471 = vpop.f32.mrf.mxu0
      %v11472 = vpop.f32.mrf.mxu0
      %v11473 = vadd.f32 %v11257, %v11472
      %v11474 = vpop.f32.mrf.mxu0
      %11475 = vmatprep.mubr.bf16.mxu0 0
      %11476 = vmatmul.mubr.bf16.gmra.mxu0 %v11300
      %v11477 = vpop.f32.mrf.mxu0
      %v11478 = vadd.f32 %v11257, %v11477
      %v11479 = vpop.f32.mrf.mxu0
      %v11480 = vpop.f32.mrf.mxu0
      %v11481 = vadd.f32 %v11257, %v11480
      %v11482 = vpop.f32.mrf.mxu0
      %11483 = vmatprep.mubr.bf16.mxu0 0
      %11484 = vmatmul.mubr.bf16.gmra.mxu0 %v11301
      %v11485 = vpop.f32.mrf.mxu0
      %v11486 = vadd.f32 %v11257, %v11485
      %v11487 = vpop.f32.mrf.mxu0
      %v11488 = vpop.f32.mrf.mxu0
      %v11489 = vadd.f32 %v11257, %v11488
      %v11490 = vpop.f32.mrf.mxu0
      %11491 = vmatprep.mubr.bf16.mxu0 0
      %11492 = vmatmul.mubr.bf16.gmra.mxu0 %v11302
      %v11493 = vpop.f32.mrf.mxu0
      %v11494 = vadd.f32 %v11257, %v11493
      %v11495 = vpop.f32.mrf.mxu0
      %v11496 = vpop.f32.mrf.mxu0
      %v11497 = vadd.f32 %v11257, %v11496
      %v11498 = vpop.f32.mrf.mxu0
      %11499 = vmatprep.mubr.bf16.mxu0 0
      %11500 = vmatmul.mubr.bf16.gmra.mxu0 %v11303
      %v11501 = vpop.f32.mrf.mxu0
      %v11502 = vadd.f32 %v11257, %v11501
      %v11503 = vpop.f32.mrf.mxu0
      %v11504 = vpop.f32.mrf.mxu0
      %v11505 = vadd.f32 %v11257, %v11504
      %v11506 = vpop.f32.mrf.mxu0
      %11507 = vmatprep.mubr.bf16.mxu0 0
      %11508 = vmatmul.mubr.bf16.gmra.mxu0 %v11304
      %v11509 = vpop.f32.mrf.mxu0
      %v11510 = vadd.f32 %v11257, %v11509
      %v11511 = vpop.f32.mrf.mxu0
      %v11512 = vpop.f32.mrf.mxu0
      %v11513 = vadd.f32 %v11257, %v11512
      %v11514 = vpop.f32.mrf.mxu0
      %11515 = vmatprep.mubr.bf16.mxu0 0
      %11516 = vmatmul.mubr.bf16.gmra.mxu0 %v11305
      %v11517 = vpop.f32.mrf.mxu0
      %v11518 = vadd.f32 %v11257, %v11517
      %v11519 = vpop.f32.mrf.mxu0
      %v11520 = vpop.f32.mrf.mxu0
      %v11521 = vadd.f32 %v11257, %v11520
      %v11522 = vpop.f32.mrf.mxu0
      %11523 = vmatprep.mubr.bf16.mxu0 0
      %11524 = vmatmul.mubr.bf16.gmra.mxu0 %v11306
      %v11525 = vpop.f32.mrf.mxu0
      %v11526 = vadd.f32 %v11257, %v11525
      %v11527 = vpop.f32.mrf.mxu0
      %v11528 = vpop.f32.mrf.mxu0
      %v11529 = vadd.f32 %v11257, %v11528
      %v11530 = vpop.f32.mrf.mxu0
      %11531 = vdwg.mxu0
      %v11532 = vadd.f32 %v10812, %v11406
      %v11533 = vadd.f32 %v10813, %v11409
      %v11534 = vadd.f32 %v10814, %v11414
      %v11535 = vadd.f32 %v10815, %v11417
      %v11536 = vadd.f32 %v10816, %v11422
      %v11537 = vadd.f32 %v10817, %v11425
      %v11538 = vadd.f32 %v10818, %v11430
      %v11539 = vadd.f32 %v10819, %v11433
      %v11540 = vadd.f32 %v10820, %v11438
      %v11541 = vadd.f32 %v10821, %v11441
      %v11542 = vadd.f32 %v10822, %v11446
      %v11543 = vadd.f32 %v10823, %v11449
      %v11544 = vadd.f32 %v10824, %v11454
      %v11545 = vadd.f32 %v10825, %v11457
      %v11546 = vadd.f32 %v10826, %v11462
      %v11547 = vadd.f32 %v10827, %v11465
      %v11548 = vadd.f32 %v10828, %v11470
      %v11549 = vadd.f32 %v10829, %v11473
      %v11550 = vadd.f32 %v10830, %v11478
      %v11551 = vadd.f32 %v10831, %v11481
      %v11552 = vadd.f32 %v10832, %v11486
      %v11553 = vadd.f32 %v10833, %v11489
      %v11554 = vadd.f32 %v10834, %v11494
      %v11555 = vadd.f32 %v10835, %v11497
      %v11556 = vadd.f32 %v10836, %v11502
      %v11557 = vadd.f32 %v10837, %v11505
      %v11558 = vadd.f32 %v10838, %v11510
      %v11559 = vadd.f32 %v10839, %v11513
      %v11560 = vadd.f32 %v10840, %v11518
      %v11561 = vadd.f32 %v10841, %v11521
      %v11562 = vadd.f32 %v10842, %v11526
      %v11563 = vadd.f32 %v10843, %v11529
      %v11564 = vmax.f32 %v11532, 0.0
      %v11565 = vmax.f32 %v11533, 0.0
      %v11566 = vmax.f32 %v11534, 0.0
      %v11567 = vmax.f32 %v11535, 0.0
      %v11568 = vmax.f32 %v11536, 0.0
      %v11569 = vmax.f32 %v11537, 0.0
      %v11570 = vmax.f32 %v11538, 0.0
      %v11571 = vmax.f32 %v11539, 0.0
      %v11572 = vmax.f32 %v11540, 0.0
      %v11573 = vmax.f32 %v11541, 0.0
      %v11574 = vmax.f32 %v11542, 0.0
      %v11575 = vmax.f32 %v11543, 0.0
      %v11576 = vmax.f32 %v11544, 0.0
      %v11577 = vmax.f32 %v11545, 0.0
      %v11578 = vmax.f32 %v11546, 0.0
      %v11579 = vmax.f32 %v11547, 0.0
      %v11580 = vmax.f32 %v11548, 0.0
      %v11581 = vmax.f32 %v11549, 0.0
      %v11582 = vmax.f32 %v11550, 0.0
      %v11583 = vmax.f32 %v11551, 0.0
      %v11584 = vmax.f32 %v11552, 0.0
      %v11585 = vmax.f32 %v11553, 0.0
      %v11586 = vmax.f32 %v11554, 0.0
      %v11587 = vmax.f32 %v11555, 0.0
      %v11588 = vmax.f32 %v11556, 0.0
      %v11589 = vmax.f32 %v11557, 0.0
      %v11590 = vmax.f32 %v11558, 0.0
      %v11591 = vmax.f32 %v11559, 0.0
      %v11592 = vmax.f32 %v11560, 0.0
      %v11593 = vmax.f32 %v11561, 0.0
      %v11594 = vmax.f32 %v11562, 0.0
      %v11595 = vmax.f32 %v11563, 0.0
      %v11596 = vpack.c.bf16 %v11565, %v11564
      %v11597 = vpack.c.bf16 %v11567, %v11566
      %v11598 = vpack.c.bf16 %v11569, %v11568
      %v11599 = vpack.c.bf16 %v11571, %v11570
      %v11600 = vpack.c.bf16 %v11573, %v11572
      %v11601 = vpack.c.bf16 %v11575, %v11574
      %v11602 = vpack.c.bf16 %v11577, %v11576
      %v11603 = vpack.c.bf16 %v11579, %v11578
      %v11604 = vpack.c.bf16 %v11581, %v11580
      %v11605 = vpack.c.bf16 %v11583, %v11582
      %v11606 = vpack.c.bf16 %v11585, %v11584
      %v11607 = vpack.c.bf16 %v11587, %v11586
      %v11608 = vpack.c.bf16 %v11589, %v11588
      %v11609 = vpack.c.bf16 %v11591, %v11590
      %v11610 = vpack.c.bf16 %v11593, %v11592
      %v11611 = vpack.c.bf16 %v11595, %v11594
      %v11628 = vunpack.c.l.b16 %v11596
      %v11629 = vunpack.c.h.b16 %v11596
      %v11630 = vunpack.c.l.b16 %v11597
      %v11631 = vunpack.c.h.b16 %v11597
      %v11632 = vunpack.c.l.b16 %v11598
      %v11633 = vunpack.c.h.b16 %v11598
      %v11634 = vunpack.c.l.b16 %v11599
      %v11635 = vunpack.c.h.b16 %v11599
      %v11636 = vunpack.c.l.b16 %v11600
      %v11637 = vunpack.c.h.b16 %v11600
      %v11638 = vunpack.c.l.b16 %v11601
      %v11639 = vunpack.c.h.b16 %v11601
      %v11640 = vunpack.c.l.b16 %v11602
      %v11641 = vunpack.c.h.b16 %v11602
      %v11642 = vunpack.c.l.b16 %v11603
      %v11643 = vunpack.c.h.b16 %v11603
      %v11644 = vunpack.c.l.b16 %v11604
      %v11645 = vunpack.c.h.b16 %v11604
      %v11646 = vunpack.c.l.b16 %v11605
      %v11647 = vunpack.c.h.b16 %v11605
      %v11648 = vunpack.c.l.b16 %v11606
      %v11649 = vunpack.c.h.b16 %v11606
      %v11650 = vunpack.c.l.b16 %v11607
      %v11651 = vunpack.c.h.b16 %v11607
      %v11652 = vunpack.c.l.b16 %v11608
      %v11653 = vunpack.c.h.b16 %v11608
      %v11654 = vunpack.c.l.b16 %v11609
      %v11655 = vunpack.c.h.b16 %v11609
      %v11656 = vunpack.c.l.b16 %v11610
      %v11657 = vunpack.c.h.b16 %v11610
      %v11658 = vunpack.c.l.b16 %v11611
      %v11659 = vunpack.c.h.b16 %v11611
      %v11660 = vpack.c.b16 %v11628, %v11628
      %v11661 = vpack.c.b16 %v11629, %v11629
      %v11662 = vpack.c.b16 %v11630, %v11630
      %v11663 = vpack.c.b16 %v11631, %v11631
      %v11664 = vpack.c.b16 %v11632, %v11632
      %v11665 = vpack.c.b16 %v11633, %v11633
      %v11666 = vpack.c.b16 %v11634, %v11634
      %v11667 = vpack.c.b16 %v11635, %v11635
      %v11668 = vpack.c.b16 %v11636, %v11636
      %v11669 = vpack.c.b16 %v11637, %v11637
      %v11670 = vpack.c.b16 %v11638, %v11638
      %v11671 = vpack.c.b16 %v11639, %v11639
      %v11672 = vpack.c.b16 %v11640, %v11640
      %v11673 = vpack.c.b16 %v11641, %v11641
      %v11674 = vpack.c.b16 %v11642, %v11642
      %v11675 = vpack.c.b16 %v11643, %v11643
      %v11676 = vpack.c.b16 %v11644, %v11644
      %v11677 = vpack.c.b16 %v11645, %v11645
      %v11678 = vpack.c.b16 %v11646, %v11646
      %v11679 = vpack.c.b16 %v11647, %v11647
      %v11680 = vpack.c.b16 %v11648, %v11648
      %v11681 = vpack.c.b16 %v11649, %v11649
      %v11682 = vpack.c.b16 %v11650, %v11650
      %v11683 = vpack.c.b16 %v11651, %v11651
      %v11684 = vpack.c.b16 %v11652, %v11652
      %v11685 = vpack.c.b16 %v11653, %v11653
      %v11686 = vpack.c.b16 %v11654, %v11654
      %v11687 = vpack.c.b16 %v11655, %v11655
      %v11688 = vpack.c.b16 %v11656, %v11656
      %v11689 = vpack.c.b16 %v11657, %v11657
      %v11690 = vpack.c.b16 %v11658, %v11658
      %v11691 = vpack.c.b16 %v11659, %v11659
      %11724 = vst [vmem:[%s302] sm:$0xf] %v11660
      %11725 = vst [vmem:[%s302 + $0x4] sm:$0xf] %v11661
      %11726 = vst [vmem:[%s302 + $0x8] sm:$0xf] %v11662
      %11727 = vst [vmem:[%s302 + $0xc] sm:$0xf] %v11663
      %11728 = vst [vmem:[%s302 + $0x10] sm:$0xf] %v11664
      %11729 = vst [vmem:[%s302 + $0x14] sm:$0xf] %v11665
      %11730 = vst [vmem:[%s302 + $0x18] sm:$0xf] %v11666
      %11731 = vst [vmem:[%s302 + $0x1c] sm:$0xf] %v11667
      %11732 = vst [vmem:[%s302 + $0x20] sm:$0xf] %v11668
      %11733 = vst [vmem:[%s302 + $0x24] sm:$0xf] %v11669
      %11734 = vst [vmem:[%s302 + $0x28] sm:$0xf] %v11670
      %11735 = vst [vmem:[%s302 + $0x2c] sm:$0xf] %v11671
      %11736 = vst [vmem:[%s302 + $0x30] sm:$0xf] %v11672
      %11737 = vst [vmem:[%s302 + $0x34] sm:$0xf] %v11673
      %11738 = vst [vmem:[%s302 + $0x38] sm:$0xf] %v11674
      %11739 = vst [vmem:[%s302 + $0x3c] sm:$0xf] %v11675
      %11740 = vst [vmem:[%s302 + $0x40] sm:$0xf] %v11676
      %11741 = vst [vmem:[%s302 + $0x44] sm:$0xf] %v11677
      %11742 = vst [vmem:[%s302 + $0x48] sm:$0xf] %v11678
      %11743 = vst [vmem:[%s302 + $0x4c] sm:$0xf] %v11679
      %11744 = vst [vmem:[%s302 + $0x50] sm:$0xf] %v11680
      %11745 = vst [vmem:[%s302 + $0x54] sm:$0xf] %v11681
      %11746 = vst [vmem:[%s302 + $0x58] sm:$0xf] %v11682
      %11747 = vst [vmem:[%s302 + $0x5c] sm:$0xf] %v11683
      %11748 = vst [vmem:[%s302 + $0x60] sm:$0xf] %v11684
      %11749 = vst [vmem:[%s302 + $0x64] sm:$0xf] %v11685
      %11750 = vst [vmem:[%s302 + $0x68] sm:$0xf] %v11686
      %11751 = vst [vmem:[%s302 + $0x6c] sm:$0xf] %v11687
      %11752 = vst [vmem:[%s302 + $0x70] sm:$0xf] %v11688
      %11753 = vst [vmem:[%s302 + $0x74] sm:$0xf] %v11689
      %11754 = vst [vmem:[%s302 + $0x78] sm:$0xf] %v11690
      %11755 = vst [vmem:[%s302 + $0x7c] sm:$0xf] %v11691
      %s11756 = smul.u32 8, %s23
      %p11757 = scmp.lt.s32.totalorder %s22, 1
      %s11758 = scalar_select %p11757, %s22, 1
      %p11759 = scmp.lt.s32.totalorder %s11756, 31
      %s11760 = scalar_select %p11759, %s11756, 31
      %s11761 = smul.addr %s11760, 4
      %s11762 = smul.addr %s11758, 128
      %s11763 = sadd.s32 %s11761, %s11762
      %s11764 = smul.addr %s11763, 4
      %s11765 = scalar_lea.vmem %s7, %s11764
      // Predicated region
      $region57: #{basic_block_forward.1} parent=47 // pred_check
        %p11766 = pneg %p202
      $region58: #{basic_block_forward.1} parent=47 // pred_check_branch
        %11768 = sbr.rel (%p11766) target = $region60
      $region59: #{basic_block_forward.1} parent=47 // pred_region
        %s11769 = smul.u32 8, %s23
      $region60: #{basic_block_forward.1} parent=47 // pred_fallthru
        _
    $region48: #{basic_block_forward.1} parent=5 // pred_fallthru
      _
    %p11770 = scmp.le.s32.totalorder 2, %s13
    // Predicated region
    $region61: #{basic_block_forward.1} parent=5 // pred_check
      %p11771 = pneg %p11770
    $region62: #{basic_block_forward.1} parent=5 // pred_check_branch
      %11773 = sbr.rel (%p11771) target = $region64
    $region63: #{basic_block_forward.1} parent=5 // pred_region
      %s11774 = ssub.s32 %s13, 2
      // Predicated region
      $region65: #{basic_block_forward.1} parent=63 // pred_check
        %p11775 = pneg %p208
      $region66: #{basic_block_forward.1} parent=63 // pred_check_branch
        %11777 = sbr.rel (%p11775) target = $region68
      $region67: #{basic_block_forward.1} parent=63 // pred_region
        %s11778 = smul.u32 8, %s25
        %p11779 = scmp.lt.s32.totalorder %s24, 1
        %s11780 = scalar_select %p11779, %s24, 1
        %p11781 = scmp.lt.s32.totalorder %s11778, 31
        %s11782 = scalar_select %p11781, %s11778, 31
        %s11783 = smul.addr %s11782, 4
        %s11784 = smul.addr %s11780, 128
        %s11785 = sadd.s32 %s11783, %s11784
        %s11786 = smul.addr %s11785, 4
        %s11787 = scalar_lea.vmem %s7, %s11786
      $region68: #{basic_block_forward.1} parent=63 // pred_fallthru
        _
    $region64: #{basic_block_forward.1} parent=5 // pred_fallthru
      _
  $region6: #{basic_block_forward.1} parent=0 // loop_footer
    %s17 = sadd.s32 1, %s13
  $region7: #{basic_block_forward.1} parent=0 // loop_footer_branch
    %12 = sbr.rel target = $region3
  $region8: #{basic_block_forward.1} parent=0 // loop_exit
    _

</llo_original>
